<compile_context>
chip_gen: v5e
topology: v5e:2x2
jax: 0.10.0
libtpu: 0.0.40
codegen_flags: <defaults>
</compile_context>

<pallas_src>
import numpy as np
import jax
import jax.numpy as jnp
from jax.experimental import pallas as pl
from jax.experimental.pallas import tpu as pltpu

D_MODEL = 512
D_PP = 192
D_LL = 192
D_REACT = 128
N_REACT_VOCAB = 8
LN_EPS = 1e-6


def _layer_norm(x, gamma, beta):
    mu = jnp.mean(x, axis=-1, keepdims=True)
    var = jnp.mean((x - mu) ** 2, axis=-1, keepdims=True)
    return (x - mu) * jax.lax.rsqrt(var + LN_EPS) * gamma + beta


def _bf16(x):
    return x.astype(jnp.bfloat16)


def decoder_kernel(
    # scalar prefetch (SMEM)
    react_sref,
    # data
    f_seq_ref, nf_seq_ref, pro_seq_ref, emb_ref,
    # mlp-input projections (pp dense (512,192); ll zero-padded, content at cols 192:384)
    wpp_ref, wll_ref,
    # fuse FFN (input dim 3*d_model) + down_sample
    w1f_ref, b1f_ref, w2f_ref, b2f_ref, gf_ref, bf_ref, wds_ref, bds_ref,
    # shared mlp FFN (input dim d_model)
    w1m_ref, b1m_ref, w2m_ref, b2m_ref, gm_ref, bm_ref,
    # outputs
    out_ref, fm_ref,
    # scratch
    xm_ref,
):
    f32 = jnp.float32
    B = f_seq_ref.shape[0]

    # ---- mean over the sequence axis (axis=1), f32 ----
    f_m = jnp.mean(f_seq_ref[...], axis=1)        # (B, 512)
    nf_m = jnp.mean(nf_seq_ref[...], axis=1)      # (B, 512)
    enc = jnp.mean(pro_seq_ref[...], axis=1)      # (B, 512)

    # ---- fuse FFN on cat(enc, f, nf) -> (B, 1536), then down_sample -> (B, 512) ----
    xcat = jnp.concatenate([enc, f_m, nf_m], axis=-1)          # lane-aligned 512-wide pieces
    h = jnp.dot(_bf16(xcat), w1f_ref[...], preferred_element_type=f32) + b1f_ref[...]
    h = jnp.maximum(h, 0.0)
    y = jnp.dot(_bf16(h), w2f_ref[...], preferred_element_type=f32) + b2f_ref[...]
    y = _layer_norm(y + xcat, gf_ref[...], bf_ref[...])        # dropout omitted (eval mode)
    out_ref[...] = jnp.dot(_bf16(y), wds_ref[...], preferred_element_type=f32) + bds_ref[...]

    # ---- mlp branch: both branches stacked to (2B, 512); weights shared ----
    m2 = jnp.concatenate([f_m, nf_m], axis=0)                  # (2B, 512) rows [0:B]=f, [B:2B]=nf
    ll_part = jnp.dot(_bf16(m2), wll_ref[...], preferred_element_type=f32)    # (2B, 384), cols 0:192 zero
    pp_part = jnp.dot(_bf16(enc), wpp_ref[...], preferred_element_type=f32)   # (B, 192), reused twice

    # assemble x = [pp | ll | react_emb] with lane-aligned stores into VMEM scratch
    xm_ref[:, 0:D_PP + D_LL] = ll_part                         # cols 0:384 (pp region zeroed)
    xm_ref[0:B, 0:D_PP] = pp_part                              # overwrite cols 0:192 with pp
    xm_ref[B:2 * B, 0:D_PP] = pp_part

    # in-kernel embedding gather: one dynamic row load per batch element, then two block stores
    react_rows = [emb_ref[pl.ds(react_sref[b], 1), :] for b in range(B)]      # B x (1, 128)
    react_vec = jnp.concatenate(react_rows, axis=0)                           # (B, 128)
    xm_ref[0:B, D_PP + D_LL:D_MODEL] = react_vec
    xm_ref[B:2 * B, D_PP + D_LL:D_MODEL] = react_vec

    x = xm_ref[...]                                            # (2B, 512) f32 residual
    hh = jnp.dot(_bf16(x), w1m_ref[...], preferred_element_type=f32) + b1m_ref[...]
    hh = jnp.maximum(hh, 0.0)
    yy = jnp.dot(_bf16(hh), w2m_ref[...], preferred_element_type=f32) + b2m_ref[...]
    fm_ref[...] = _layer_norm(yy + x, gm_ref[...], bm_ref[...])   # rows [0:B]=f_out, [B:2B]=nf_out


@jax.jit
def decoder_forward(params, f_seq, nf_seq, pro_seq, react):
    B = f_seq.shape[0]
    react = react.astype(jnp.int32)

    inputs = (
        f_seq, nf_seq, pro_seq, params["react_emb"],
        params["w_pp"], params["w_ll_pad"],
        params["w1f"], params["b1f"], params["w2f"], params["b2f"],
        params["gf"], params["bf"], params["wds"], params["bds"],
        params["w1m"], params["b1m"], params["w2m"], params["b2m"],
        params["gm"], params["bm"],
    )

    def full_spec(x):
        zeros = (0,) * x.ndim
        return pl.BlockSpec(x.shape, lambda i, *_: zeros)

    in_specs = [full_spec(x) for x in inputs]
    out_shape = (
        jax.ShapeDtypeStruct((B, D_MODEL), jnp.float32),
        jax.ShapeDtypeStruct((2 * B, D_MODEL), jnp.float32),
    )
    out_specs = (
        pl.BlockSpec((B, D_MODEL), lambda i, *_: (0, 0)),
        pl.BlockSpec((2 * B, D_MODEL), lambda i, *_: (0, 0)),
    )

    grid_spec = pltpu.PrefetchScalarGridSpec(
        num_scalar_prefetch=1,
        grid=(1,),
        in_specs=in_specs,
        out_specs=out_specs,
        scratch_shapes=[pltpu.VMEM((2 * B, D_MODEL), jnp.float32)],
    )

    out, stacked = pl.pallas_call(
        decoder_kernel,
        out_shape=out_shape,
        grid_spec=grid_spec,
        compiler_params=pltpu.CompilerParams(
            dimension_semantics=("arbitrary",),
            vmem_limit_bytes=32 * 1024 * 1024,
        ),
    )(react, *inputs)

    return out, stacked[:B], stacked[B:]


def init_params(key, d_inner):
    ks = jax.random.split(key, 16)
    bf16 = jnp.bfloat16

    def lin_w(k, fan_in, fan_out):
        s = 1.0 / np.sqrt(fan_in)
        return jax.random.uniform(k, (fan_in, fan_out), jnp.float32, -s, s).astype(bf16)

    def lin_b(k, fan_out):
        return (0.01 * jax.random.normal(k, (1, fan_out))).astype(jnp.float32)

    w_pp = lin_w(ks[0], D_MODEL, D_PP)            # nn.Linear(512,192,bias=False), transposed, bf16
    w_ll = lin_w(ks[1], D_MODEL, D_LL)
    # ll weight placed at output cols [192:384] so the concat store stays lane-aligned
    w_ll_pad = jnp.zeros((D_MODEL, D_PP + D_LL), bf16).at[:, D_PP:D_PP + D_LL].set(w_ll)
    react_emb = jax.random.normal(ks[2], (N_REACT_VOCAB, D_REACT), jnp.float32)

    d3 = 3 * D_MODEL
    return dict(
        w_pp=w_pp, w_ll=w_ll, w_ll_pad=w_ll_pad, react_emb=react_emb,
        # fuse = PositionwiseFeedForward(3*d_model, d_inner)
        w1f=lin_w(ks[3], d3, d_inner), b1f=lin_b(ks[4], d_inner),
        w2f=lin_w(ks[5], d_inner, d3), b2f=lin_b(ks[6], d3),
        gf=jnp.ones((1, d3), jnp.float32), bf=jnp.zeros((1, d3), jnp.float32),
        # down_sample = Linear(3*d_model, d_model)
        wds=lin_w(ks[7], d3, D_MODEL), bds=lin_b(ks[8], D_MODEL),
        # mlp = PositionwiseFeedForward(d_model, d_inner) (shared between branches)
        w1m=lin_w(ks[9], D_MODEL, d_inner), b1m=lin_b(ks[10], d_inner),
        w2m=lin_w(ks[11], d_inner, D_MODEL), b2m=lin_b(ks[12], D_MODEL),
        gm=jnp.ones((1, D_MODEL), jnp.float32), bm=jnp.zeros((1, D_MODEL), jnp.float32),
    )


def decoder_reference(params, f_seq, nf_seq, pro_seq, react):
    """Pure-JAX f32 reference mirroring the PyTorch forward (eval mode)."""
    hp = jax.lax.Precision.HIGHEST
    W = lambda n: params[n].astype(jnp.float32)

    def ln(x, g, b):
        mu = x.mean(-1, keepdims=True)
        var = ((x - mu) ** 2).mean(-1, keepdims=True)
        return (x - mu) / jnp.sqrt(var + LN_EPS) * g + b

    def ffn(x, w1, b1, w2, b2, g, b):
        h = jnp.maximum(jnp.dot(x, w1, precision=hp) + b1, 0.0)
        return ln(jnp.dot(h, w2, precision=hp) + b2 + x, g, b)

    f_m = jnp.mean(f_seq, 1)
    nf_m = jnp.mean(nf_seq, 1)
    enc = jnp.mean(pro_seq, 1)

    xcat = jnp.concatenate([enc, f_m, nf_m], -1)
    fused = ffn(xcat, W("w1f"), params["b1f"], W("w2f"), params["b2f"],
                params["gf"], params["bf"])
    out = jnp.dot(fused, W("wds"), precision=hp) + params["bds"]

    react_vec = params["react_emb"][react]
    x_f = jnp.concatenate([jnp.dot(enc, W("w_pp"), precision=hp),
                           jnp.dot(f_m, W("w_ll"), precision=hp), react_vec], -1)
    x_nf = jnp.concatenate([jnp.dot(enc, W("w_pp"), precision=hp),
                            jnp.dot(nf_m, W("w_ll"), precision=hp), react_vec], -1)
    f_out = ffn(x_f, W("w1m"), params["b1m"], W("w2m"), params["b2m"],
                params["gm"], params["bm"])
    nf_out = ffn(x_nf, W("w1m"), params["b1m"], W("w2m"), params["b2m"],
                 params["gm"], params["bm"])
    return out, f_out, nf_out


if __name__ == "__main__":
    key = jax.random.PRNGKey(0)
    kp, kf, knf, kpro, kr = jax.random.split(key, 5)

    B, S_F, S_NF, S_PRO = 8, 6, 10, 8
    D_INNER = 256

    params = init_params(kp, D_INNER)
    f_seq = jax.random.normal(kf, (B, S_F, D_MODEL), jnp.float32)
    nf_seq = jax.random.normal(knf, (B, S_NF, D_MODEL), jnp.float32)
    pro_seq = jax.random.normal(kpro, (B, S_PRO, D_MODEL), jnp.float32)
    react = jax.random.randint(kr, (B,), 0, N_REACT_VOCAB)

    outs = decoder_forward(params, f_seq, nf_seq, pro_seq, react)
    outs = jax.block_until_ready(outs)

    ref = decoder_reference(params, f_seq, nf_seq, pro_seq, react)
    for got, want in zip(outs, ref):
        np.testing.assert_allclose(np.asarray(got), np.asarray(want), rtol=2e-2, atol=2e-2)

    print("KERNEL_OK")
</pallas_src>

<mosaic_0001>
module attributes {stable_mosaic.version = 11 : i64} {
  func.func @decoder_kernel(%arg0: i32, %arg1: memref<8xi32, #tpu.memory_space<smem>>, %arg2: memref<8x6x512xf32, #tpu.memory_space<vmem>>, %arg3: memref<8x10x512xf32, #tpu.memory_space<vmem>>, %arg4: memref<8x8x512xf32, #tpu.memory_space<vmem>>, %arg5: memref<8x128xf32, #tpu.memory_space<vmem>>, %arg6: memref<512x192xbf16, #tpu.memory_space<vmem>>, %arg7: memref<512x384xbf16, #tpu.memory_space<vmem>>, %arg8: memref<1536x256xbf16, #tpu.memory_space<vmem>>, %arg9: memref<1x256xf32, #tpu.memory_space<vmem>>, %arg10: memref<256x1536xbf16, #tpu.memory_space<vmem>>, %arg11: memref<1x1536xf32, #tpu.memory_space<vmem>>, %arg12: memref<1x1536xf32, #tpu.memory_space<vmem>>, %arg13: memref<1x1536xf32, #tpu.memory_space<vmem>>, %arg14: memref<1536x512xbf16, #tpu.memory_space<vmem>>, %arg15: memref<1x512xf32, #tpu.memory_space<vmem>>, %arg16: memref<512x256xbf16, #tpu.memory_space<vmem>>, %arg17: memref<1x256xf32, #tpu.memory_space<vmem>>, %arg18: memref<256x512xbf16, #tpu.memory_space<vmem>>, %arg19: memref<1x512xf32, #tpu.memory_space<vmem>>, %arg20: memref<1x512xf32, #tpu.memory_space<vmem>>, %arg21: memref<1x512xf32, #tpu.memory_space<vmem>>, %arg22: memref<8x512xf32, #tpu.memory_space<vmem>>, %arg23: memref<16x512xf32, #tpu.memory_space<vmem>>, %arg24: memref<16x512xf32, #tpu.memory_space<vmem>>) attributes {dimension_semantics = [#tpu.dimension_semantics<arbitrary>], iteration_bounds = array<i64: 1>, scalar_prefetch = 1 : i64, scratch_operands = 1 : i64, tpu.core_type = #tpu.core_type<tc>, window_params = [{pipeline_mode = #tpu.pipeline_mode<synchronous>, transform_indices = @transform_0, window_bounds = array<i64: 8, 6, 512>}, {pipeline_mode = #tpu.pipeline_mode<synchronous>, transform_indices = @transform_1, window_bounds = array<i64: 8, 10, 512>}, {pipeline_mode = #tpu.pipeline_mode<synchronous>, transform_indices = @transform_2, window_bounds = array<i64: 8, 8, 512>}, {pipeline_mode = #tpu.pipeline_mode<synchronous>, transform_indices = @transform_3, window_bounds = array<i64: 8, 128>}, {pipeline_mode = #tpu.pipeline_mode<synchronous>, transform_indices = @transform_4, window_bounds = array<i64: 512, 192>}, {pipeline_mode = #tpu.pipeline_mode<synchronous>, transform_indices = @transform_5, window_bounds = array<i64: 512, 384>}, {pipeline_mode = #tpu.pipeline_mode<synchronous>, transform_indices = @transform_6, window_bounds = array<i64: 1536, 256>}, {pipeline_mode = #tpu.pipeline_mode<synchronous>, transform_indices = @transform_7, window_bounds = array<i64: 1, 256>}, {pipeline_mode = #tpu.pipeline_mode<synchronous>, transform_indices = @transform_8, window_bounds = array<i64: 256, 1536>}, {pipeline_mode = #tpu.pipeline_mode<synchronous>, transform_indices = @transform_9, window_bounds = array<i64: 1, 1536>}, {pipeline_mode = #tpu.pipeline_mode<synchronous>, transform_indices = @transform_10, window_bounds = array<i64: 1, 1536>}, {pipeline_mode = #tpu.pipeline_mode<synchronous>, transform_indices = @transform_11, window_bounds = array<i64: 1, 1536>}, {pipeline_mode = #tpu.pipeline_mode<synchronous>, transform_indices = @transform_12, window_bounds = array<i64: 1536, 512>}, {pipeline_mode = #tpu.pipeline_mode<synchronous>, transform_indices = @transform_13, window_bounds = array<i64: 1, 512>}, {pipeline_mode = #tpu.pipeline_mode<synchronous>, transform_indices = @transform_14, window_bounds = array<i64: 512, 256>}, {pipeline_mode = #tpu.pipeline_mode<synchronous>, transform_indices = @transform_15, window_bounds = array<i64: 1, 256>}, {pipeline_mode = #tpu.pipeline_mode<synchronous>, transform_indices = @transform_16, window_bounds = array<i64: 256, 512>}, {pipeline_mode = #tpu.pipeline_mode<synchronous>, transform_indices = @transform_17, window_bounds = array<i64: 1, 512>}, {pipeline_mode = #tpu.pipeline_mode<synchronous>, transform_indices = @transform_18, window_bounds = array<i64: 1, 512>}, {pipeline_mode = #tpu.pipeline_mode<synchronous>, transform_indices = @transform_19, window_bounds = array<i64: 1, 512>}, {pipeline_mode = #tpu.pipeline_mode<synchronous>, transform_indices = @transform_20, window_bounds = array<i64: 8, 512>}, {pipeline_mode = #tpu.pipeline_mode<synchronous>, transform_indices = @transform_21, window_bounds = array<i64: 16, 512>}]} {
    %c0 = arith.constant 0 : index
    %c0_0 = arith.constant 0 : index
    %c0_1 = arith.constant 0 : index
    %0 = vector.load %arg2[%c0, %c0_0, %c0_1] : memref<8x6x512xf32, #tpu.memory_space<vmem>>, vector<8x6x512xf32>
    %cst = arith.constant dense<0.000000e+00> : vector<8x512xf32>
    %1 = vector.multi_reduction <add>, %0, %cst [1] : vector<8x6x512xf32> to vector<8x512xf32>
    %cst_2 = arith.constant 6.000000e+00 : f32
    %2 = vector.broadcast %cst_2 : f32 to vector<8x512xf32>
    %3 = arith.divf %1, %2 : vector<8x512xf32>
    %c0_3 = arith.constant 0 : index
    %c0_4 = arith.constant 0 : index
    %c0_5 = arith.constant 0 : index
    %4 = vector.load %arg3[%c0_3, %c0_4, %c0_5] : memref<8x10x512xf32, #tpu.memory_space<vmem>>, vector<8x10x512xf32>
    %cst_6 = arith.constant dense<0.000000e+00> : vector<8x512xf32>
    %5 = vector.multi_reduction <add>, %4, %cst_6 [1] : vector<8x10x512xf32> to vector<8x512xf32>
    %cst_7 = arith.constant 1.000000e+01 : f32
    %6 = vector.broadcast %cst_7 : f32 to vector<8x512xf32>
    %7 = arith.divf %5, %6 : vector<8x512xf32>
    %c0_8 = arith.constant 0 : index
    %c0_9 = arith.constant 0 : index
    %c0_10 = arith.constant 0 : index
    %8 = vector.load %arg4[%c0_8, %c0_9, %c0_10] : memref<8x8x512xf32, #tpu.memory_space<vmem>>, vector<8x8x512xf32>
    %cst_11 = arith.constant dense<0.000000e+00> : vector<8x512xf32>
    %9 = vector.multi_reduction <add>, %8, %cst_11 [1] : vector<8x8x512xf32> to vector<8x512xf32>
    %cst_12 = arith.constant 8.000000e+00 : f32
    %10 = vector.broadcast %cst_12 : f32 to vector<8x512xf32>
    %11 = arith.divf %9, %10 : vector<8x512xf32>
    %12 = tpu.concatenate %11, %3, %7 in 1 : vector<8x512xf32>, vector<8x512xf32>, vector<8x512xf32> -> vector<8x1536xf32>
    %13 = arith.truncf %12 : vector<8x1536xf32> to vector<8x1536xbf16>
    %c0_13 = arith.constant 0 : index
    %c0_14 = arith.constant 0 : index
    %14 = vector.load %arg8[%c0_13, %c0_14] : memref<1536x256xbf16, #tpu.memory_space<vmem>>, vector<1536x256xbf16>
    %cst_15 = arith.constant dense<0.000000e+00> : vector<8x256xf32>
    %15 = tpu.matmul %13, %14, %cst_15 {dimension_numbers = #tpu.dot_dimension_numbers<[1], [0], [0], [1], [0, 0, 1, 1], [], []>} : vector<8x1536xbf16>, vector<1536x256xbf16>, vector<8x256xf32> -> vector<8x256xf32>
    %c0_16 = arith.constant 0 : index
    %c0_17 = arith.constant 0 : index
    %16 = vector.load %arg9[%c0_16, %c0_17] : memref<1x256xf32, #tpu.memory_space<vmem>>, vector<1x256xf32>
    %17 = vector.broadcast %16 : vector<1x256xf32> to vector<8x256xf32>
    %18 = arith.addf %15, %17 : vector<8x256xf32>
    %cst_18 = arith.constant 0.000000e+00 : f32
    %19 = vector.broadcast %cst_18 : f32 to vector<8x256xf32>
    %20 = arith.maximumf %18, %19 : vector<8x256xf32>
    %21 = arith.truncf %20 : vector<8x256xf32> to vector<8x256xbf16>
    %c0_19 = arith.constant 0 : index
    %c0_20 = arith.constant 0 : index
    %22 = vector.load %arg10[%c0_19, %c0_20] : memref<256x1536xbf16, #tpu.memory_space<vmem>>, vector<256x1536xbf16>
    %cst_21 = arith.constant dense<0.000000e+00> : vector<8x1536xf32>
    %23 = tpu.matmul %21, %22, %cst_21 {dimension_numbers = #tpu.dot_dimension_numbers<[1], [0], [0], [1], [0, 0, 1, 1], [], []>} : vector<8x256xbf16>, vector<256x1536xbf16>, vector<8x1536xf32> -> vector<8x1536xf32>
    %c0_22 = arith.constant 0 : index
    %c0_23 = arith.constant 0 : index
    %24 = vector.load %arg11[%c0_22, %c0_23] : memref<1x1536xf32, #tpu.memory_space<vmem>>, vector<1x1536xf32>
    %25 = vector.broadcast %24 : vector<1x1536xf32> to vector<8x1536xf32>
    %26 = arith.addf %23, %25 : vector<8x1536xf32>
    %27 = arith.addf %26, %12 : vector<8x1536xf32>
    %c0_24 = arith.constant 0 : index
    %c0_25 = arith.constant 0 : index
    %28 = vector.load %arg12[%c0_24, %c0_25] : memref<1x1536xf32, #tpu.memory_space<vmem>>, vector<1x1536xf32>
    %c0_26 = arith.constant 0 : index
    %c0_27 = arith.constant 0 : index
    %29 = vector.load %arg13[%c0_26, %c0_27] : memref<1x1536xf32, #tpu.memory_space<vmem>>, vector<1x1536xf32>
    %cst_28 = arith.constant dense<0.000000e+00> : vector<8xf32>
    %30 = vector.multi_reduction <add>, %27, %cst_28 [1] : vector<8x1536xf32> to vector<8xf32>
    %31 = vector.shape_cast %30 : vector<8xf32> to vector<8x1xf32>
    %cst_29 = arith.constant 1.536000e+03 : f32
    %32 = vector.broadcast %cst_29 : f32 to vector<8x1xf32>
    %33 = arith.divf %31, %32 : vector<8x1xf32>
    %34 = vector.broadcast %33 : vector<8x1xf32> to vector<8x1536xf32>
    %35 = arith.subf %27, %34 : vector<8x1536xf32>
    %36 = arith.mulf %35, %35 : vector<8x1536xf32>
    %cst_30 = arith.constant dense<0.000000e+00> : vector<8xf32>
    %37 = vector.multi_reduction <add>, %36, %cst_30 [1] : vector<8x1536xf32> to vector<8xf32>
    %38 = vector.shape_cast %37 : vector<8xf32> to vector<8x1xf32>
    %cst_31 = arith.constant 1.536000e+03 : f32
    %39 = vector.broadcast %cst_31 : f32 to vector<8x1xf32>
    %40 = arith.divf %38, %39 : vector<8x1xf32>
    %41 = vector.broadcast %33 : vector<8x1xf32> to vector<8x1536xf32>
    %42 = arith.subf %27, %41 : vector<8x1536xf32>
    %cst_32 = arith.constant 9.99999997E-7 : f32
    %43 = vector.broadcast %cst_32 : f32 to vector<8x1xf32>
    %44 = arith.addf %40, %43 : vector<8x1xf32>
    %45 = math.rsqrt %44 : vector<8x1xf32>
    %46 = vector.broadcast %45 : vector<8x1xf32> to vector<8x1536xf32>
    %47 = arith.mulf %42, %46 : vector<8x1536xf32>
    %48 = vector.broadcast %28 : vector<1x1536xf32> to vector<8x1536xf32>
    %49 = arith.mulf %47, %48 : vector<8x1536xf32>
    %50 = vector.broadcast %29 : vector<1x1536xf32> to vector<8x1536xf32>
    %51 = arith.addf %49, %50 : vector<8x1536xf32>
    %52 = arith.truncf %51 : vector<8x1536xf32> to vector<8x1536xbf16>
    %c0_33 = arith.constant 0 : index
    %c0_34 = arith.constant 0 : index
    %53 = vector.load %arg14[%c0_33, %c0_34] : memref<1536x512xbf16, #tpu.memory_space<vmem>>, vector<1536x512xbf16>
    %cst_35 = arith.constant dense<0.000000e+00> : vector<8x512xf32>
    %54 = tpu.matmul %52, %53, %cst_35 {dimension_numbers = #tpu.dot_dimension_numbers<[1], [0], [0], [1], [0, 0, 1, 1], [], []>} : vector<8x1536xbf16>, vector<1536x512xbf16>, vector<8x512xf32> -> vector<8x512xf32>
    %c0_36 = arith.constant 0 : index
    %c0_37 = arith.constant 0 : index
    %55 = vector.load %arg15[%c0_36, %c0_37] : memref<1x512xf32, #tpu.memory_space<vmem>>, vector<1x512xf32>
    %56 = vector.broadcast %55 : vector<1x512xf32> to vector<8x512xf32>
    %57 = arith.addf %54, %56 : vector<8x512xf32>
    %c0_38 = arith.constant 0 : index
    %c0_39 = arith.constant 0 : index
    %58 = vector.load %arg22[%c0_38, %c0_39] : memref<8x512xf32, #tpu.memory_space<vmem>>, vector<8x512xf32>
    tpu.vector_store %arg22[%c0_38, %c0_39], %57 {strides = array<i32>} : memref<8x512xf32, #tpu.memory_space<vmem>>, vector<8x512xf32>,
    %59 = tpu.concatenate %3, %7 in 0 : vector<8x512xf32>, vector<8x512xf32> -> vector<16x512xf32>
    %60 = arith.truncf %59 : vector<16x512xf32> to vector<16x512xbf16>
    %c0_40 = arith.constant 0 : index
    %c0_41 = arith.constant 0 : index
    %61 = vector.load %arg7[%c0_40, %c0_41] : memref<512x384xbf16, #tpu.memory_space<vmem>>, vector<512x384xbf16>
    %cst_42 = arith.constant dense<0.000000e+00> : vector<16x384xf32>
    %62 = tpu.matmul %60, %61, %cst_42 {dimension_numbers = #tpu.dot_dimension_numbers<[1], [0], [0], [1], [0, 0, 1, 1], [], []>} : vector<16x512xbf16>, vector<512x384xbf16>, vector<16x384xf32> -> vector<16x384xf32>
    %63 = arith.truncf %11 : vector<8x512xf32> to vector<8x512xbf16>
    %c0_43 = arith.constant 0 : index
    %c0_44 = arith.constant 0 : index
    %64 = vector.load %arg6[%c0_43, %c0_44] : memref<512x192xbf16, #tpu.memory_space<vmem>>, vector<512x192xbf16>
    %cst_45 = arith.constant dense<0.000000e+00> : vector<8x192xf32>
    %65 = tpu.matmul %63, %64, %cst_45 {dimension_numbers = #tpu.dot_dimension_numbers<[1], [0], [0], [1], [0, 0, 1, 1], [], []>} : vector<8x512xbf16>, vector<512x192xbf16>, vector<8x192xf32> -> vector<8x192xf32>
    %c0_46 = arith.constant 0 : index
    %c0_47 = arith.constant 0 : index
    %66 = vector.load %arg24[%c0_46, %c0_47] : memref<16x512xf32, #tpu.memory_space<vmem>>, vector<16x384xf32>
    tpu.vector_store %arg24[%c0_46, %c0_47], %62 {strides = array<i32>} : memref<16x512xf32, #tpu.memory_space<vmem>>, vector<16x384xf32>,
    %c0_48 = arith.constant 0 : index
    %c0_49 = arith.constant 0 : index
    %67 = vector.load %arg24[%c0_48, %c0_49] : memref<16x512xf32, #tpu.memory_space<vmem>>, vector<8x192xf32>
    tpu.vector_store %arg24[%c0_48, %c0_49], %65 {strides = array<i32>} : memref<16x512xf32, #tpu.memory_space<vmem>>, vector<8x192xf32>,
    %c8 = arith.constant 8 : index
    %c0_50 = arith.constant 0 : index
    %68 = vector.load %arg24[%c8, %c0_50] : memref<16x512xf32, #tpu.memory_space<vmem>>, vector<8x192xf32>
    tpu.vector_store %arg24[%c8, %c0_50], %65 {strides = array<i32>} : memref<16x512xf32, #tpu.memory_space<vmem>>, vector<8x192xf32>,
    %c0_51 = arith.constant 0 : index
    %69 = memref.load %arg1[%c0_51] : memref<8xi32, #tpu.memory_space<smem>>
    %70 = arith.index_cast %69 : i32 to index
    %c0_52 = arith.constant 0 : index
    %71 = vector.load %arg5[%70, %c0_52] : memref<8x128xf32, #tpu.memory_space<vmem>>, vector<1x128xf32>
    %c1 = arith.constant 1 : index
    %72 = memref.load %arg1[%c1] : memref<8xi32, #tpu.memory_space<smem>>
    %73 = arith.index_cast %72 : i32 to index
    %c0_53 = arith.constant 0 : index
    %74 = vector.load %arg5[%73, %c0_53] : memref<8x128xf32, #tpu.memory_space<vmem>>, vector<1x128xf32>
    %c2 = arith.constant 2 : index
    %75 = memref.load %arg1[%c2] : memref<8xi32, #tpu.memory_space<smem>>
    %76 = arith.index_cast %75 : i32 to index
    %c0_54 = arith.constant 0 : index
    %77 = vector.load %arg5[%76, %c0_54] : memref<8x128xf32, #tpu.memory_space<vmem>>, vector<1x128xf32>
    %c3 = arith.constant 3 : index
    %78 = memref.load %arg1[%c3] : memref<8xi32, #tpu.memory_space<smem>>
    %79 = arith.index_cast %78 : i32 to index
    %c0_55 = arith.constant 0 : index
    %80 = vector.load %arg5[%79, %c0_55] : memref<8x128xf32, #tpu.memory_space<vmem>>, vector<1x128xf32>
    %c4 = arith.constant 4 : index
    %81 = memref.load %arg1[%c4] : memref<8xi32, #tpu.memory_space<smem>>
    %82 = arith.index_cast %81 : i32 to index
    %c0_56 = arith.constant 0 : index
    %83 = vector.load %arg5[%82, %c0_56] : memref<8x128xf32, #tpu.memory_space<vmem>>, vector<1x128xf32>
    %c5 = arith.constant 5 : index
    %84 = memref.load %arg1[%c5] : memref<8xi32, #tpu.memory_space<smem>>
    %85 = arith.index_cast %84 : i32 to index
    %c0_57 = arith.constant 0 : index
    %86 = vector.load %arg5[%85, %c0_57] : memref<8x128xf32, #tpu.memory_space<vmem>>, vector<1x128xf32>
    %c6 = arith.constant 6 : index
    %87 = memref.load %arg1[%c6] : memref<8xi32, #tpu.memory_space<smem>>
    %88 = arith.index_cast %87 : i32 to index
    %c0_58 = arith.constant 0 : index
    %89 = vector.load %arg5[%88, %c0_58] : memref<8x128xf32, #tpu.memory_space<vmem>>, vector<1x128xf32>
    %c7 = arith.constant 7 : index
    %90 = memref.load %arg1[%c7] : memref<8xi32, #tpu.memory_space<smem>>
    %91 = arith.index_cast %90 : i32 to index
    %c0_59 = arith.constant 0 : index
    %92 = vector.load %arg5[%91, %c0_59] : memref<8x128xf32, #tpu.memory_space<vmem>>, vector<1x128xf32>
    %93 = tpu.concatenate %71, %74, %77, %80, %83, %86, %89, %92 in 0 : vector<1x128xf32>, vector<1x128xf32>, vector<1x128xf32>, vector<1x128xf32>, vector<1x128xf32>, vector<1x128xf32>, vector<1x128xf32>, vector<1x128xf32> -> vector<8x128xf32>
    %c0_60 = arith.constant 0 : index
    %c384 = arith.constant 384 : index
    %94 = vector.load %arg24[%c0_60, %c384] : memref<16x512xf32, #tpu.memory_space<vmem>>, vector<8x128xf32>
    tpu.vector_store %arg24[%c0_60, %c384], %93 {strides = array<i32>} : memref<16x512xf32, #tpu.memory_space<vmem>>, vector<8x128xf32>,
    %c8_61 = arith.constant 8 : index
    %c384_62 = arith.constant 384 : index
    %95 = vector.load %arg24[%c8_61, %c384_62] : memref<16x512xf32, #tpu.memory_space<vmem>>, vector<8x128xf32>
    tpu.vector_store %arg24[%c8_61, %c384_62], %93 {strides = array<i32>} : memref<16x512xf32, #tpu.memory_space<vmem>>, vector<8x128xf32>,
    %c0_63 = arith.constant 0 : index
    %c0_64 = arith.constant 0 : index
    %96 = vector.load %arg24[%c0_63, %c0_64] : memref<16x512xf32, #tpu.memory_space<vmem>>, vector<16x512xf32>
    %97 = arith.truncf %96 : vector<16x512xf32> to vector<16x512xbf16>
    %c0_65 = arith.constant 0 : index
    %c0_66 = arith.constant 0 : index
    %98 = vector.load %arg16[%c0_65, %c0_66] : memref<512x256xbf16, #tpu.memory_space<vmem>>, vector<512x256xbf16>
    %cst_67 = arith.constant dense<0.000000e+00> : vector<16x256xf32>
    %99 = tpu.matmul %97, %98, %cst_67 {dimension_numbers = #tpu.dot_dimension_numbers<[1], [0], [0], [1], [0, 0, 1, 1], [], []>} : vector<16x512xbf16>, vector<512x256xbf16>, vector<16x256xf32> -> vector<16x256xf32>
    %c0_68 = arith.constant 0 : index
    %c0_69 = arith.constant 0 : index
    %100 = vector.load %arg17[%c0_68, %c0_69] : memref<1x256xf32, #tpu.memory_space<vmem>>, vector<1x256xf32>
    %101 = vector.broadcast %100 : vector<1x256xf32> to vector<16x256xf32>
    %102 = arith.addf %99, %101 : vector<16x256xf32>
    %cst_70 = arith.constant 0.000000e+00 : f32
    %103 = vector.broadcast %cst_70 : f32 to vector<16x256xf32>
    %104 = arith.maximumf %102, %103 : vector<16x256xf32>
    %105 = arith.truncf %104 : vector<16x256xf32> to vector<16x256xbf16>
    %c0_71 = arith.constant 0 : index
    %c0_72 = arith.constant 0 : index
    %106 = vector.load %arg18[%c0_71, %c0_72] : memref<256x512xbf16, #tpu.memory_space<vmem>>, vector<256x512xbf16>
    %cst_73 = arith.constant dense<0.000000e+00> : vector<16x512xf32>
    %107 = tpu.matmul %105, %106, %cst_73 {dimension_numbers = #tpu.dot_dimension_numbers<[1], [0], [0], [1], [0, 0, 1, 1], [], []>} : vector<16x256xbf16>, vector<256x512xbf16>, vector<16x512xf32> -> vector<16x512xf32>
    %c0_74 = arith.constant 0 : index
    %c0_75 = arith.constant 0 : index
    %108 = vector.load %arg19[%c0_74, %c0_75] : memref<1x512xf32, #tpu.memory_space<vmem>>, vector<1x512xf32>
    %109 = vector.broadcast %108 : vector<1x512xf32> to vector<16x512xf32>
    %110 = arith.addf %107, %109 : vector<16x512xf32>
    %111 = arith.addf %110, %96 : vector<16x512xf32>
    %c0_76 = arith.constant 0 : index
    %c0_77 = arith.constant 0 : index
    %112 = vector.load %arg20[%c0_76, %c0_77] : memref<1x512xf32, #tpu.memory_space<vmem>>, vector<1x512xf32>
    %c0_78 = arith.constant 0 : index
    %c0_79 = arith.constant 0 : index
    %113 = vector.load %arg21[%c0_78, %c0_79] : memref<1x512xf32, #tpu.memory_space<vmem>>, vector<1x512xf32>
    %cst_80 = arith.constant dense<0.000000e+00> : vector<16xf32>
    %114 = vector.multi_reduction <add>, %111, %cst_80 [1] : vector<16x512xf32> to vector<16xf32>
    %115 = vector.shape_cast %114 : vector<16xf32> to vector<16x1xf32>
    %cst_81 = arith.constant 5.120000e+02 : f32
    %116 = vector.broadcast %cst_81 : f32 to vector<16x1xf32>
    %117 = arith.divf %115, %116 : vector<16x1xf32>
    %118 = vector.broadcast %117 : vector<16x1xf32> to vector<16x512xf32>
    %119 = arith.subf %111, %118 : vector<16x512xf32>
    %120 = arith.mulf %119, %119 : vector<16x512xf32>
    %cst_82 = arith.constant dense<0.000000e+00> : vector<16xf32>
    %121 = vector.multi_reduction <add>, %120, %cst_82 [1] : vector<16x512xf32> to vector<16xf32>
    %122 = vector.shape_cast %121 : vector<16xf32> to vector<16x1xf32>
    %cst_83 = arith.constant 5.120000e+02 : f32
    %123 = vector.broadcast %cst_83 : f32 to vector<16x1xf32>
    %124 = arith.divf %122, %123 : vector<16x1xf32>
    %125 = vector.broadcast %117 : vector<16x1xf32> to vector<16x512xf32>
    %126 = arith.subf %111, %125 : vector<16x512xf32>
    %cst_84 = arith.constant 9.99999997E-7 : f32
    %127 = vector.broadcast %cst_84 : f32 to vector<16x1xf32>
    %128 = arith.addf %124, %127 : vector<16x1xf32>
    %129 = math.rsqrt %128 : vector<16x1xf32>
    %130 = vector.broadcast %129 : vector<16x1xf32> to vector<16x512xf32>
    %131 = arith.mulf %126, %130 : vector<16x512xf32>
    %132 = vector.broadcast %112 : vector<1x512xf32> to vector<16x512xf32>
    %133 = arith.mulf %131, %132 : vector<16x512xf32>
    %134 = vector.broadcast %113 : vector<1x512xf32> to vector<16x512xf32>
    %135 = arith.addf %133, %134 : vector<16x512xf32>
    %c0_85 = arith.constant 0 : index
    %c0_86 = arith.constant 0 : index
    %136 = vector.load %arg23[%c0_85, %c0_86] : memref<16x512xf32, #tpu.memory_space<vmem>>, vector<16x512xf32>
    tpu.vector_store %arg23[%c0_85, %c0_86], %135 {strides = array<i32>} : memref<16x512xf32, #tpu.memory_space<vmem>>, vector<16x512xf32>,
    return
  }
  func.func @transform_0(%arg0: i32, %arg1: memref<8xi32, #tpu.memory_space<smem>>) -> (i32, i32, i32) {
    %c0_i32 = arith.constant 0 : i32
    %c0_i32_0 = arith.constant 0 : i32
    %c0_i32_1 = arith.constant 0 : i32
    %c0_i32_2 = arith.constant 0 : i32
    return %c0_i32, %c0_i32_0, %c0_i32_1 : i32, i32, i32
  }
  func.func @transform_1(%arg0: i32, %arg1: memref<8xi32, #tpu.memory_space<smem>>) -> (i32, i32, i32) {
    %c0_i32 = arith.constant 0 : i32
    %c0_i32_0 = arith.constant 0 : i32
    %c0_i32_1 = arith.constant 0 : i32
    %c0_i32_2 = arith.constant 0 : i32
    return %c0_i32, %c0_i32_0, %c0_i32_1 : i32, i32, i32
  }
  func.func @transform_2(%arg0: i32, %arg1: memref<8xi32, #tpu.memory_space<smem>>) -> (i32, i32, i32) {
    %c0_i32 = arith.constant 0 : i32
    %c0_i32_0 = arith.constant 0 : i32
    %c0_i32_1 = arith.constant 0 : i32
    %c0_i32_2 = arith.constant 0 : i32
    return %c0_i32, %c0_i32_0, %c0_i32_1 : i32, i32, i32
  }
  func.func @transform_3(%arg0: i32, %arg1: memref<8xi32, #tpu.memory_space<smem>>) -> (i32, i32) {
    %c0_i32 = arith.constant 0 : i32
    %c0_i32_0 = arith.constant 0 : i32
    %c0_i32_1 = arith.constant 0 : i32
    return %c0_i32, %c0_i32_0 : i32, i32
  }
  func.func @transform_4(%arg0: i32, %arg1: memref<8xi32, #tpu.memory_space<smem>>) -> (i32, i32) {
    %c0_i32 = arith.constant 0 : i32
    %c0_i32_0 = arith.constant 0 : i32
    %c0_i32_1 = arith.constant 0 : i32
    return %c0_i32, %c0_i32_0 : i32, i32
  }
  func.func @transform_5(%arg0: i32, %arg1: memref<8xi32, #tpu.memory_space<smem>>) -> (i32, i32) {
    %c0_i32 = arith.constant 0 : i32
    %c0_i32_0 = arith.constant 0 : i32
    %c0_i32_1 = arith.constant 0 : i32
    return %c0_i32, %c0_i32_0 : i32, i32
  }
  func.func @transform_6(%arg0: i32, %arg1: memref<8xi32, #tpu.memory_space<smem>>) -> (i32, i32) {
    %c0_i32 = arith.constant 0 : i32
    %c0_i32_0 = arith.constant 0 : i32
    %c0_i32_1 = arith.constant 0 : i32
    return %c0_i32, %c0_i32_0 : i32, i32
  }
  func.func @transform_7(%arg0: i32, %arg1: memref<8xi32, #tpu.memory_space<smem>>) -> (i32, i32) {
    %c0_i32 = arith.constant 0 : i32
    %c0_i32_0 = arith.constant 0 : i32
    %c0_i32_1 = arith.constant 0 : i32
    return %c0_i32, %c0_i32_0 : i32, i32
  }
  func.func @transform_8(%arg0: i32, %arg1: memref<8xi32, #tpu.memory_space<smem>>) -> (i32, i32) {
    %c0_i32 = arith.constant 0 : i32
    %c0_i32_0 = arith.constant 0 : i32
    %c0_i32_1 = arith.constant 0 : i32
    return %c0_i32, %c0_i32_0 : i32, i32
  }
  func.func @transform_9(%arg0: i32, %arg1: memref<8xi32, #tpu.memory_space<smem>>) -> (i32, i32) {
    %c0_i32 = arith.constant 0 : i32
    %c0_i32_0 = arith.constant 0 : i32
    %c0_i32_1 = arith.constant 0 : i32
    return %c0_i32, %c0_i32_0 : i32, i32
  }
  func.func @transform_10(%arg0: i32, %arg1: memref<8xi32, #tpu.memory_space<smem>>) -> (i32, i32) {
    %c0_i32 = arith.constant 0 : i32
    %c0_i32_0 = arith.constant 0 : i32
    %c0_i32_1 = arith.constant 0 : i32
    return %c0_i32, %c0_i32_0 : i32, i32
  }
  func.func @transform_11(%arg0: i32, %arg1: memref<8xi32, #tpu.memory_space<smem>>) -> (i32, i32) {
    %c0_i32 = arith.constant 0 : i32
    %c0_i32_0 = arith.constant 0 : i32
    %c0_i32_1 = arith.constant 0 : i32
    return %c0_i32, %c0_i32_0 : i32, i32
  }
  func.func @transform_12(%arg0: i32, %arg1: memref<8xi32, #tpu.memory_space<smem>>) -> (i32, i32) {
    %c0_i32 = arith.constant 0 : i32
    %c0_i32_0 = arith.constant 0 : i32
    %c0_i32_1 = arith.constant 0 : i32
    return %c0_i32, %c0_i32_0 : i32, i32
  }
  func.func @transform_13(%arg0: i32, %arg1: memref<8xi32, #tpu.memory_space<smem>>) -> (i32, i32) {
    %c0_i32 = arith.constant 0 : i32
    %c0_i32_0 = arith.constant 0 : i32
    %c0_i32_1 = arith.constant 0 : i32
    return %c0_i32, %c0_i32_0 : i32, i32
  }
  func.func @transform_14(%arg0: i32, %arg1: memref<8xi32, #tpu.memory_space<smem>>) -> (i32, i32) {
    %c0_i32 = arith.constant 0 : i32
    %c0_i32_0 = arith.constant 0 : i32
    %c0_i32_1 = arith.constant 0 : i32
    return %c0_i32, %c0_i32_0 : i32, i32
  }
  func.func @transform_15(%arg0: i32, %arg1: memref<8xi32, #tpu.memory_space<smem>>) -> (i32, i32) {
    %c0_i32 = arith.constant 0 : i32
    %c0_i32_0 = arith.constant 0 : i32
    %c0_i32_1 = arith.constant 0 : i32
    return %c0_i32, %c0_i32_0 : i32, i32
  }
  func.func @transform_16(%arg0: i32, %arg1: memref<8xi32, #tpu.memory_space<smem>>) -> (i32, i32) {
    %c0_i32 = arith.constant 0 : i32
    %c0_i32_0 = arith.constant 0 : i32
    %c0_i32_1 = arith.constant 0 : i32
    return %c0_i32, %c0_i32_0 : i32, i32
  }
  func.func @transform_17(%arg0: i32, %arg1: memref<8xi32, #tpu.memory_space<smem>>) -> (i32, i32) {
    %c0_i32 = arith.constant 0 : i32
    %c0_i32_0 = arith.constant 0 : i32
    %c0_i32_1 = arith.constant 0 : i32
    return %c0_i32, %c0_i32_0 : i32, i32
  }
  func.func @transform_18(%arg0: i32, %arg1: memref<8xi32, #tpu.memory_space<smem>>) -> (i32, i32) {
    %c0_i32 = arith.constant 0 : i32
    %c0_i32_0 = arith.constant 0 : i32
    %c0_i32_1 = arith.constant 0 : i32
    return %c0_i32, %c0_i32_0 : i32, i32
  }
  func.func @transform_19(%arg0: i32, %arg1: memref<8xi32, #tpu.memory_space<smem>>) -> (i32, i32) {
    %c0_i32 = arith.constant 0 : i32
    %c0_i32_0 = arith.constant 0 : i32
    %c0_i32_1 = arith.constant 0 : i32
    return %c0_i32, %c0_i32_0 : i32, i32
  }
  func.func @transform_20(%arg0: i32, %arg1: memref<8xi32, #tpu.memory_space<smem>>) -> (i32, i32) {
    %c0_i32 = arith.constant 0 : i32
    %c0_i32_0 = arith.constant 0 : i32
    %c0_i32_1 = arith.constant 0 : i32
    return %c0_i32, %c0_i32_0 : i32, i32
  }
  func.func @transform_21(%arg0: i32, %arg1: memref<8xi32, #tpu.memory_space<smem>>) -> (i32, i32) {
    %c0_i32 = arith.constant 0 : i32
    %c0_i32_0 = arith.constant 0 : i32
    %c0_i32_1 = arith.constant 0 : i32
    return %c0_i32, %c0_i32_0 : i32, i32
  }
}

</mosaic_0001>

<llo_original>
// kernel: decoder_forward.1
$region0: #{decoder_forward.1}
  #allocation0 [shape = 'u32[]', space=smem, size = 0x4, offset = 0x4, fixed_abs, tag = 'smem constant byte address 0x4 - core index']
  #allocation1 [shape = 'u32[72,128]{1,0:T(1,128)}', space=vmem, size = 0x9000, scoped, tag = 'internal scratch']
  #allocation2 [shape = 'f32[16,512]{1,0:T(8,128)}', space=vmem, size = 0x8000, scoped, tag = 'scratch operand']
  #allocation3 [shape = 's32[1]{0}', space=sflag, size = 0x4, scoped, tag = 'scoped memory for decoder_forward.1']
  #allocation4 [shape = 'u8[512]{0}', space=smem, size = 0x200, scoped, tag = 'prefetched SMEM operand 0']
  %s0 = inlined_call_operand.hbm [shape: s32[8], index: 0, kind: input, shape index: {}]
  %s1 = inlined_call_operand.vmem [shape: f32[8,6,512], index: 1, kind: input, shape index: {}]
  %s2 = inlined_call_operand.vmem [shape: f32[8,10,512], index: 2, kind: input, shape index: {}]
  %s3 = inlined_call_operand.hbm [shape: f32[8,8,512], index: 3, kind: input, shape index: {}]
  %s4 = inlined_call_operand.hbm [shape: f32[8,128], index: 4, kind: input, shape index: {}]
  %s5 = inlined_call_operand.vmem [shape: bf16[512,192], index: 5, kind: input, shape index: {}]
  %s6 = inlined_call_operand.hbm [shape: bf16[512,384], index: 6, kind: input, shape index: {}]
  %s7 = inlined_call_operand.hbm [shape: bf16[1536,256], index: 7, kind: input, shape index: {}]
  %s8 = inlined_call_operand.hbm [shape: f32[1,256], index: 8, kind: input, shape index: {}]
  %s9 = inlined_call_operand.hbm [shape: bf16[256,1536], index: 9, kind: input, shape index: {}]
  %s10 = inlined_call_operand.hbm [shape: f32[1,1536], index: 10, kind: input, shape index: {}]
  %s11 = inlined_call_operand.hbm [shape: f32[1,1536], index: 11, kind: input, shape index: {}]
  %s12 = inlined_call_operand.hbm [shape: f32[1,1536], index: 12, kind: input, shape index: {}]
  %s13 = inlined_call_operand.hbm [shape: bf16[1536,512], index: 13, kind: input, shape index: {}]
  %s14 = inlined_call_operand.hbm [shape: f32[1,512], index: 14, kind: input, shape index: {}]
  %s15 = inlined_call_operand.hbm [shape: bf16[512,256], index: 15, kind: input, shape index: {}]
  %s16 = inlined_call_operand.hbm [shape: f32[1,256], index: 16, kind: input, shape index: {}]
  %s17 = inlined_call_operand.hbm [shape: bf16[256,512], index: 17, kind: input, shape index: {}]
  %s18 = inlined_call_operand.hbm [shape: f32[1,512], index: 18, kind: input, shape index: {}]
  %s19 = inlined_call_operand.hbm [shape: f32[1,512], index: 19, kind: input, shape index: {}]
  %s20 = inlined_call_operand.hbm [shape: f32[1,512], index: 20, kind: input, shape index: {}]
  %s21 = inlined_call_operand.hbm [shape: f32[8,512], index: 21, kind: output, shape index: {0}]
  %s22 = inlined_call_operand.vmem [shape: f32[16,512], index: 22, kind: output, shape index: {1}]
  %23 = xla_tuple %s21, %s22
  %s24 = sld [smem:[#allocation0]]
  $region166: #{decoder_forward.1} parent=0
    _
  %s26 = ssub.s32 1, %s24
  %s27 = scalar_select 0, %s26, %s24
  %s29 = sshll.u32 %s0, 4
  %s30 = int_to_ptr.hbm [resolvable:$true] %s29
  %32 = dma.hbm_to_smem %s30, 16, [#allocation4], [#allocation3]
  %34 = dma.done [#allocation3], 16
  %35 = sfence
  $region1: #{decoder_forward.1} parent=0
    #allocation5 [shape = 'u8[131072]{0}', space=vmem, size = 0x20000, scoped, tag = 'input window, operand 3, single buffered']
    #allocation6 [shape = 's32[1]{0}', space=sflag, size = 0x4, scoped, tag = 'scoped memory for decoder_forward.1']
    #allocation7 [shape = 's32[1]{0}', space=sflag, size = 0x4, scoped, tag = 'scoped memory for decoder_forward.1']
    #allocation8 [shape = 'u8[4096]{0}', space=vmem, size = 0x1000, scoped, tag = 'input window, operand 4, single buffered']
    #allocation9 [shape = 's32[1]{0}', space=sflag, size = 0x4, scoped, tag = 'scoped memory for decoder_forward.1']
    #allocation10 [shape = 'u8[393216]{0}', space=vmem, size = 0x60000, scoped, tag = 'input window, operand 6, single buffered']
    #allocation11 [shape = 'u8[786432]{0}', space=vmem, size = 0xc0000, scoped, tag = 'input window, operand 7, single buffered']
    #allocation12 [shape = 's32[1]{0}', space=sflag, size = 0x4, scoped, tag = 'scoped memory for decoder_forward.1']
    #allocation13 [shape = 'u8[1024]{0}', space=vmem, size = 0x400, scoped, tag = 'input window, operand 8, single buffered']
    #allocation14 [shape = 'u8[786432]{0}', space=vmem, size = 0xc0000, scoped, tag = 'input window, operand 9, single buffered']
    #allocation15 [shape = 's32[1]{0}', space=sflag, size = 0x4, scoped, tag = 'scoped memory for decoder_forward.1']
    #allocation16 [shape = 'u8[6144]{0}', space=vmem, size = 0x1800, scoped, tag = 'input window, operand 10, single buffered']
    #allocation17 [shape = 'u8[6144]{0}', space=vmem, size = 0x1800, scoped, tag = 'input window, operand 11, single buffered']
    #allocation18 [shape = 's32[1]{0}', space=sflag, size = 0x4, scoped, tag = 'scoped memory for decoder_forward.1']
    #allocation19 [shape = 'u8[6144]{0}', space=vmem, size = 0x1800, scoped, tag = 'input window, operand 12, single buffered']
    #allocation20 [shape = 'u8[1572864]{0}', space=vmem, size = 0x180000, scoped, tag = 'input window, operand 13, single buffered']
    #allocation21 [shape = 's32[1]{0}', space=sflag, size = 0x4, scoped, tag = 'scoped memory for decoder_forward.1']
    #allocation22 [shape = 'u8[2048]{0}', space=vmem, size = 0x800, scoped, tag = 'input window, operand 14, single buffered']
    #allocation23 [shape = 'u8[262144]{0}', space=vmem, size = 0x40000, scoped, tag = 'input window, operand 15, single buffered']
    #allocation24 [shape = 's32[1]{0}', space=sflag, size = 0x4, scoped, tag = 'scoped memory for decoder_forward.1']
    #allocation25 [shape = 'u8[1024]{0}', space=vmem, size = 0x400, scoped, tag = 'input window, operand 16, single buffered']
    #allocation26 [shape = 'u8[262144]{0}', space=vmem, size = 0x40000, scoped, tag = 'input window, operand 17, single buffered']
    #allocation27 [shape = 's32[1]{0}', space=sflag, size = 0x4, scoped, tag = 'scoped memory for decoder_forward.1']
    #allocation28 [shape = 'u8[2048]{0}', space=vmem, size = 0x800, scoped, tag = 'input window, operand 18, single buffered']
    #allocation29 [shape = 'u8[2048]{0}', space=vmem, size = 0x800, scoped, tag = 'input window, operand 19, single buffered']
    #allocation30 [shape = 's32[1]{0}', space=sflag, size = 0x4, scoped, tag = 'scoped memory for decoder_forward.1']
    #allocation31 [shape = 'u8[2048]{0}', space=vmem, size = 0x800, scoped, tag = 'input window, operand 20, single buffered']
    #allocation32 [shape = 'u8[16384]{0}', space=vmem, size = 0x4000, scoped, tag = 'output window, operand 0, single buffered']
    %36 = vsyncpa [#allocation6], 0
    %37 = vsyncpa [#allocation9], 0
    %38 = vsyncpa [#allocation12], 0
    %39 = vsyncpa [#allocation15], 0
    %40 = vsyncpa [#allocation18], 0
    %41 = vsyncpa [#allocation21], 0
    %42 = vsyncpa [#allocation24], 0
    %43 = vsyncpa [#allocation27], 0
    %44 = vsyncpa [#allocation30], 0
    %45 = vsyncpa [#allocation7], 0
    // Predicated region
    $region2: #{decoder_forward.1} parent=1 // pred_check
      _
    $region3: #{decoder_forward.1} parent=1 // pred_check_branch
      %47 = sbr.rel (0) target = $region5
    $region4: #{decoder_forward.1} parent=1 // pred_region
      _
    $region5: #{decoder_forward.1} parent=1 // pred_fallthru
      _
    // Predicated region
    $region6: #{decoder_forward.1} parent=1 // pred_check
      _
    $region7: #{decoder_forward.1} parent=1 // pred_check_branch
      %49 = sbr.rel (0) target = $region9
    $region8: #{decoder_forward.1} parent=1 // pred_region
      _
    $region9: #{decoder_forward.1} parent=1 // pred_fallthru
      _
    // Predicated region
    $region10: #{decoder_forward.1} parent=1 // pred_check
      _
    $region11: #{decoder_forward.1} parent=1 // pred_check_branch
      %51 = sbr.rel (0) target = $region13
    $region12: #{decoder_forward.1} parent=1 // pred_region
      %53 = vsyncadd [#allocation6], 0
      %s54 = sshll.u32 %s3, 4
      %s55 = int_to_ptr.hbm [resolvable:$true] %s54
      %s56 = sshll.u32 [#allocation5], 4
      %s57 = int_to_ptr.vmem [resolvable:$true] %s56
      %62 = dma.hbm_to_vmem [thread:$0]  %s55, 4096, %s57, [#allocation6], 512, 512, 32
    $region13: #{decoder_forward.1} parent=1 // pred_fallthru
      _
    // Predicated region
    $region14: #{decoder_forward.1} parent=1 // pred_check
      _
    $region15: #{decoder_forward.1} parent=1 // pred_check_branch
      %64 = sbr.rel (0) target = $region17
    $region16: #{decoder_forward.1} parent=1 // pred_region
      %66 = vsyncadd [#allocation9], 0
      %s68 = sshll.u32 %s4, 4
      %s69 = int_to_ptr.hbm [resolvable:$true] %s68
      %s70 = sshll.u32 [#allocation8], 4
      %s71 = int_to_ptr.vmem [resolvable:$true] %s70
      %73 = dma.hbm_to_vmem [thread:$0]  %s69, 128, %s71, [#allocation9]
    $region17: #{decoder_forward.1} parent=1 // pred_fallthru
      _
    // Predicated region
    $region18: #{decoder_forward.1} parent=1 // pred_check
      _
    $region19: #{decoder_forward.1} parent=1 // pred_check_branch
      %75 = sbr.rel (0) target = $region21
    $region20: #{decoder_forward.1} parent=1 // pred_region
      _
    $region21: #{decoder_forward.1} parent=1 // pred_fallthru
      _
    // Predicated region
    $region22: #{decoder_forward.1} parent=1 // pred_check
      _
    $region23: #{decoder_forward.1} parent=1 // pred_check_branch
      %77 = sbr.rel (0) target = $region25
    $region24: #{decoder_forward.1} parent=1 // pred_region
      %79 = vsyncadd [#allocation9], 0
      %s80 = sshll.u32 %s6, 4
      %s81 = int_to_ptr.hbm [resolvable:$true] %s80
      %s82 = sshll.u32 [#allocation10], 4
      %s83 = int_to_ptr.vmem [resolvable:$true] %s82
      %88 = dma.hbm_to_vmem [thread:$0]  %s81, 12288, %s83, [#allocation9], 192, 192, 12
    $region25: #{decoder_forward.1} parent=1 // pred_fallthru
      _
    // Predicated region
    $region26: #{decoder_forward.1} parent=1 // pred_check
      _
    $region27: #{decoder_forward.1} parent=1 // pred_check_branch
      %90 = sbr.rel (0) target = $region29
    $region28: #{decoder_forward.1} parent=1 // pred_region
      %92 = vsyncadd [#allocation12], 0
      %s93 = sshll.u32 %s7, 4
      %s94 = int_to_ptr.hbm [resolvable:$true] %s93
      %s95 = sshll.u32 [#allocation11], 4
      %s96 = int_to_ptr.vmem [resolvable:$true] %s95
      %101 = dma.hbm_to_vmem [thread:$0]  %s94, 24576, %s96, [#allocation12], 128, 128, 8
    $region29: #{decoder_forward.1} parent=1 // pred_fallthru
      _
    // Predicated region
    $region30: #{decoder_forward.1} parent=1 // pred_check
      _
    $region31: #{decoder_forward.1} parent=1 // pred_check_branch
      %103 = sbr.rel (0) target = $region33
    $region32: #{decoder_forward.1} parent=1 // pred_region
      %105 = vsyncadd [#allocation12], 0
      %s107 = sshll.u32 %s8, 4
      %s108 = int_to_ptr.hbm [resolvable:$true] %s107
      %s109 = sshll.u32 [#allocation13], 4
      %s110 = int_to_ptr.vmem [resolvable:$true] %s109
      %112 = dma.hbm_to_vmem [thread:$0]  %s108, 32, %s110, [#allocation12]
    $region33: #{decoder_forward.1} parent=1 // pred_fallthru
      _
    // Predicated region
    $region34: #{decoder_forward.1} parent=1 // pred_check
      _
    $region35: #{decoder_forward.1} parent=1 // pred_check_branch
      %114 = sbr.rel (0) target = $region37
    $region36: #{decoder_forward.1} parent=1 // pred_region
      %116 = vsyncadd [#allocation15], 0
      %s117 = sshll.u32 %s9, 4
      %s118 = int_to_ptr.hbm [resolvable:$true] %s117
      %s119 = sshll.u32 [#allocation14], 4
      %s120 = int_to_ptr.vmem [resolvable:$true] %s119
      %125 = dma.hbm_to_vmem [thread:$0]  %s118, 24576, %s120, [#allocation15], 768, 768, 48
    $region37: #{decoder_forward.1} parent=1 // pred_fallthru
      _
    // Predicated region
    $region38: #{decoder_forward.1} parent=1 // pred_check
      _
    $region39: #{decoder_forward.1} parent=1 // pred_check_branch
      %127 = sbr.rel (0) target = $region41
    $region40: #{decoder_forward.1} parent=1 // pred_region
      %129 = vsyncadd [#allocation15], 0
      %s131 = sshll.u32 %s10, 4
      %s132 = int_to_ptr.hbm [resolvable:$true] %s131
      %s133 = sshll.u32 [#allocation16], 4
      %s134 = int_to_ptr.vmem [resolvable:$true] %s133
      %136 = dma.hbm_to_vmem [thread:$0]  %s132, 192, %s134, [#allocation15]
    $region41: #{decoder_forward.1} parent=1 // pred_fallthru
      _
    // Predicated region
    $region42: #{decoder_forward.1} parent=1 // pred_check
      _
    $region43: #{decoder_forward.1} parent=1 // pred_check_branch
      %138 = sbr.rel (0) target = $region45
    $region44: #{decoder_forward.1} parent=1 // pred_region
      %140 = vsyncadd [#allocation18], 0
      %s142 = sshll.u32 %s11, 4
      %s143 = int_to_ptr.hbm [resolvable:$true] %s142
      %s144 = sshll.u32 [#allocation17], 4
      %s145 = int_to_ptr.vmem [resolvable:$true] %s144
      %147 = dma.hbm_to_vmem [thread:$0]  %s143, 192, %s145, [#allocation18]
    $region45: #{decoder_forward.1} parent=1 // pred_fallthru
      _
    // Predicated region
    $region46: #{decoder_forward.1} parent=1 // pred_check
      _
    $region47: #{decoder_forward.1} parent=1 // pred_check_branch
      %149 = sbr.rel (0) target = $region49
    $region48: #{decoder_forward.1} parent=1 // pred_region
      %151 = vsyncadd [#allocation18], 0
      %s153 = sshll.u32 %s12, 4
      %s154 = int_to_ptr.hbm [resolvable:$true] %s153
      %s155 = sshll.u32 [#allocation19], 4
      %s156 = int_to_ptr.vmem [resolvable:$true] %s155
      %158 = dma.hbm_to_vmem [thread:$0]  %s154, 192, %s156, [#allocation18]
    $region49: #{decoder_forward.1} parent=1 // pred_fallthru
      _
    // Predicated region
    $region50: #{decoder_forward.1} parent=1 // pred_check
      _
    $region51: #{decoder_forward.1} parent=1 // pred_check_branch
      %160 = sbr.rel (0) target = $region53
    $region52: #{decoder_forward.1} parent=1 // pred_region
      %162 = vsyncadd [#allocation21], 0
      %s163 = sshll.u32 %s13, 4
      %s164 = int_to_ptr.hbm [resolvable:$true] %s163
      %s165 = sshll.u32 [#allocation20], 4
      %s166 = int_to_ptr.vmem [resolvable:$true] %s165
      %171 = dma.hbm_to_vmem [thread:$0]  %s164, 49152, %s166, [#allocation21], 256, 256, 16
    $region53: #{decoder_forward.1} parent=1 // pred_fallthru
      _
    // Predicated region
    $region54: #{decoder_forward.1} parent=1 // pred_check
      _
    $region55: #{decoder_forward.1} parent=1 // pred_check_branch
      %173 = sbr.rel (0) target = $region57
    $region56: #{decoder_forward.1} parent=1 // pred_region
      %175 = vsyncadd [#allocation21], 0
      %s177 = sshll.u32 %s14, 4
      %s178 = int_to_ptr.hbm [resolvable:$true] %s177
      %s179 = sshll.u32 [#allocation22], 4
      %s180 = int_to_ptr.vmem [resolvable:$true] %s179
      %182 = dma.hbm_to_vmem [thread:$0]  %s178, 64, %s180, [#allocation21]
    $region57: #{decoder_forward.1} parent=1 // pred_fallthru
      _
    // Predicated region
    $region58: #{decoder_forward.1} parent=1 // pred_check
      _
    $region59: #{decoder_forward.1} parent=1 // pred_check_branch
      %184 = sbr.rel (0) target = $region61
    $region60: #{decoder_forward.1} parent=1 // pred_region
      %186 = vsyncadd [#allocation24], 0
      %s187 = sshll.u32 %s15, 4
      %s188 = int_to_ptr.hbm [resolvable:$true] %s187
      %s189 = sshll.u32 [#allocation23], 4
      %s190 = int_to_ptr.vmem [resolvable:$true] %s189
      %195 = dma.hbm_to_vmem [thread:$0]  %s188, 8192, %s190, [#allocation24], 128, 128, 8
    $region61: #{decoder_forward.1} parent=1 // pred_fallthru
      _
    // Predicated region
    $region62: #{decoder_forward.1} parent=1 // pred_check
      _
    $region63: #{decoder_forward.1} parent=1 // pred_check_branch
      %197 = sbr.rel (0) target = $region65
    $region64: #{decoder_forward.1} parent=1 // pred_region
      %199 = vsyncadd [#allocation24], 0
      %s201 = sshll.u32 %s16, 4
      %s202 = int_to_ptr.hbm [resolvable:$true] %s201
      %s203 = sshll.u32 [#allocation25], 4
      %s204 = int_to_ptr.vmem [resolvable:$true] %s203
      %206 = dma.hbm_to_vmem [thread:$0]  %s202, 32, %s204, [#allocation24]
    $region65: #{decoder_forward.1} parent=1 // pred_fallthru
      _
    // Predicated region
    $region66: #{decoder_forward.1} parent=1 // pred_check
      _
    $region67: #{decoder_forward.1} parent=1 // pred_check_branch
      %208 = sbr.rel (0) target = $region69
    $region68: #{decoder_forward.1} parent=1 // pred_region
      %210 = vsyncadd [#allocation27], 0
      %s211 = sshll.u32 %s17, 4
      %s212 = int_to_ptr.hbm [resolvable:$true] %s211
      %s213 = sshll.u32 [#allocation26], 4
      %s214 = int_to_ptr.vmem [resolvable:$true] %s213
      %219 = dma.hbm_to_vmem [thread:$0]  %s212, 8192, %s214, [#allocation27], 256, 256, 16
    $region69: #{decoder_forward.1} parent=1 // pred_fallthru
      _
    // Predicated region
    $region70: #{decoder_forward.1} parent=1 // pred_check
      _
    $region71: #{decoder_forward.1} parent=1 // pred_check_branch
      %221 = sbr.rel (0) target = $region73
    $region72: #{decoder_forward.1} parent=1 // pred_region
      %223 = vsyncadd [#allocation27], 0
      %s225 = sshll.u32 %s18, 4
      %s226 = int_to_ptr.hbm [resolvable:$true] %s225
      %s227 = sshll.u32 [#allocation28], 4
      %s228 = int_to_ptr.vmem [resolvable:$true] %s227
      %230 = dma.hbm_to_vmem [thread:$0]  %s226, 64, %s228, [#allocation27]
    $region73: #{decoder_forward.1} parent=1 // pred_fallthru
      _
    // Predicated region
    $region74: #{decoder_forward.1} parent=1 // pred_check
      _
    $region75: #{decoder_forward.1} parent=1 // pred_check_branch
      %232 = sbr.rel (0) target = $region77
    $region76: #{decoder_forward.1} parent=1 // pred_region
      %234 = vsyncadd [#allocation30], 0
      %s236 = sshll.u32 %s19, 4
      %s237 = int_to_ptr.hbm [resolvable:$true] %s236
      %s238 = sshll.u32 [#allocation29], 4
      %s239 = int_to_ptr.vmem [resolvable:$true] %s238
      %241 = dma.hbm_to_vmem [thread:$0]  %s237, 64, %s239, [#allocation30]
    $region77: #{decoder_forward.1} parent=1 // pred_fallthru
      _
    // Predicated region
    $region78: #{decoder_forward.1} parent=1 // pred_check
      _
    $region79: #{decoder_forward.1} parent=1 // pred_check_branch
      %243 = sbr.rel (0) target = $region81
    $region80: #{decoder_forward.1} parent=1 // pred_region
      %245 = vsyncadd [#allocation30], 0
      %s247 = sshll.u32 %s20, 4
      %s248 = int_to_ptr.hbm [resolvable:$true] %s247
      %s249 = sshll.u32 [#allocation31], 4
      %s250 = int_to_ptr.vmem [resolvable:$true] %s249
      %252 = dma.hbm_to_vmem [thread:$0]  %s248, 64, %s250, [#allocation30]
    $region81: #{decoder_forward.1} parent=1 // pred_fallthru
      _
    // Predicated region
    $region82: #{decoder_forward.1} parent=1 // pred_check
      _
    $region83: #{decoder_forward.1} parent=1 // pred_check_branch
      %254 = sbr.rel (0) target = $region85
    $region84: #{decoder_forward.1} parent=1 // pred_region
      %256 = dma.done [#allocation6], 4096
    $region85: #{decoder_forward.1} parent=1 // pred_fallthru
      _
    // Predicated region
    $region86: #{decoder_forward.1} parent=1 // pred_check
      _
    $region87: #{decoder_forward.1} parent=1 // pred_check_branch
      %258 = sbr.rel (0) target = $region89
    $region88: #{decoder_forward.1} parent=1 // pred_region
      %260 = dma.done [#allocation9], 128
    $region89: #{decoder_forward.1} parent=1 // pred_fallthru
      _
    // Predicated region
    $region90: #{decoder_forward.1} parent=1 // pred_check
      _
    $region91: #{decoder_forward.1} parent=1 // pred_check_branch
      %262 = sbr.rel (0) target = $region93
    $region92: #{decoder_forward.1} parent=1 // pred_region
      %264 = dma.done [#allocation9], 12288
    $region93: #{decoder_forward.1} parent=1 // pred_fallthru
      _
    // Predicated region
    $region94: #{decoder_forward.1} parent=1 // pred_check
      _
    $region95: #{decoder_forward.1} parent=1 // pred_check_branch
      %266 = sbr.rel (0) target = $region97
    $region96: #{decoder_forward.1} parent=1 // pred_region
      %268 = dma.done [#allocation12], 24576
    $region97: #{decoder_forward.1} parent=1 // pred_fallthru
      _
    // Predicated region
    $region98: #{decoder_forward.1} parent=1 // pred_check
      _
    $region99: #{decoder_forward.1} parent=1 // pred_check_branch
      %270 = sbr.rel (0) target = $region101
    $region100: #{decoder_forward.1} parent=1 // pred_region
      %272 = dma.done [#allocation12], 32
    $region101: #{decoder_forward.1} parent=1 // pred_fallthru
      _
    // Predicated region
    $region102: #{decoder_forward.1} parent=1 // pred_check
      _
    $region103: #{decoder_forward.1} parent=1 // pred_check_branch
      %274 = sbr.rel (0) target = $region105
    $region104: #{decoder_forward.1} parent=1 // pred_region
      %276 = dma.done [#allocation15], 24576
    $region105: #{decoder_forward.1} parent=1 // pred_fallthru
      _
    // Predicated region
    $region106: #{decoder_forward.1} parent=1 // pred_check
      _
    $region107: #{decoder_forward.1} parent=1 // pred_check_branch
      %278 = sbr.rel (0) target = $region109
    $region108: #{decoder_forward.1} parent=1 // pred_region
      %280 = dma.done [#allocation15], 192
    $region109: #{decoder_forward.1} parent=1 // pred_fallthru
      _
    // Predicated region
    $region110: #{decoder_forward.1} parent=1 // pred_check
      _
    $region111: #{decoder_forward.1} parent=1 // pred_check_branch
      %282 = sbr.rel (0) target = $region113
    $region112: #{decoder_forward.1} parent=1 // pred_region
      %284 = dma.done [#allocation18], 192
    $region113: #{decoder_forward.1} parent=1 // pred_fallthru
      _
    // Predicated region
    $region114: #{decoder_forward.1} parent=1 // pred_check
      _
    $region115: #{decoder_forward.1} parent=1 // pred_check_branch
      %286 = sbr.rel (0) target = $region117
    $region116: #{decoder_forward.1} parent=1 // pred_region
      %288 = dma.done [#allocation18], 192
    $region117: #{decoder_forward.1} parent=1 // pred_fallthru
      _
    // Predicated region
    $region118: #{decoder_forward.1} parent=1 // pred_check
      _
    $region119: #{decoder_forward.1} parent=1 // pred_check_branch
      %290 = sbr.rel (0) target = $region121
    $region120: #{decoder_forward.1} parent=1 // pred_region
      %292 = dma.done [#allocation21], 49152
    $region121: #{decoder_forward.1} parent=1 // pred_fallthru
      _
    // Predicated region
    $region122: #{decoder_forward.1} parent=1 // pred_check
      _
    $region123: #{decoder_forward.1} parent=1 // pred_check_branch
      %294 = sbr.rel (0) target = $region125
    $region124: #{decoder_forward.1} parent=1 // pred_region
      %296 = dma.done [#allocation21], 64
    $region125: #{decoder_forward.1} parent=1 // pred_fallthru
      _
    // Predicated region
    $region126: #{decoder_forward.1} parent=1 // pred_check
      _
    $region127: #{decoder_forward.1} parent=1 // pred_check_branch
      %298 = sbr.rel (0) target = $region129
    $region128: #{decoder_forward.1} parent=1 // pred_region
      %300 = dma.done [#allocation24], 8192
    $region129: #{decoder_forward.1} parent=1 // pred_fallthru
      _
    // Predicated region
    $region130: #{decoder_forward.1} parent=1 // pred_check
      _
    $region131: #{decoder_forward.1} parent=1 // pred_check_branch
      %302 = sbr.rel (0) target = $region133
    $region132: #{decoder_forward.1} parent=1 // pred_region
      %304 = dma.done [#allocation24], 32
    $region133: #{decoder_forward.1} parent=1 // pred_fallthru
      _
    // Predicated region
    $region134: #{decoder_forward.1} parent=1 // pred_check
      _
    $region135: #{decoder_forward.1} parent=1 // pred_check_branch
      %306 = sbr.rel (0) target = $region137
    $region136: #{decoder_forward.1} parent=1 // pred_region
      %308 = dma.done [#allocation27], 8192
    $region137: #{decoder_forward.1} parent=1 // pred_fallthru
      _
    // Predicated region
    $region138: #{decoder_forward.1} parent=1 // pred_check
      _
    $region139: #{decoder_forward.1} parent=1 // pred_check_branch
      %310 = sbr.rel (0) target = $region141
    $region140: #{decoder_forward.1} parent=1 // pred_region
      %312 = dma.done [#allocation27], 64
    $region141: #{decoder_forward.1} parent=1 // pred_fallthru
      _
    // Predicated region
    $region142: #{decoder_forward.1} parent=1 // pred_check
      _
    $region143: #{decoder_forward.1} parent=1 // pred_check_branch
      %314 = sbr.rel (0) target = $region145
    $region144: #{decoder_forward.1} parent=1 // pred_region
      %316 = dma.done [#allocation30], 64
    $region145: #{decoder_forward.1} parent=1 // pred_fallthru
      _
    // Predicated region
    $region146: #{decoder_forward.1} parent=1 // pred_check
      _
    $region147: #{decoder_forward.1} parent=1 // pred_check_branch
      %318 = sbr.rel (0) target = $region149
    $region148: #{decoder_forward.1} parent=1 // pred_region
      %320 = dma.done [#allocation30], 64
    $region149: #{decoder_forward.1} parent=1 // pred_fallthru
      _
    %v321 = vld [vmem:[%s1] sm:$0x3f]
    %v322 = vld [vmem:[%s1 + $0x8] sm:$0x3f]
    %v323 = vld [vmem:[%s1 + $0x10] sm:$0x3f]
    %v324 = vld [vmem:[%s1 + $0x18] sm:$0x3f]
    %v325 = vld [vmem:[%s1 + $0x20] sm:$0x3f]
    %v326 = vld [vmem:[%s1 + $0x28] sm:$0x3f]
    %v327 = vld [vmem:[%s1 + $0x30] sm:$0x3f]
    %v328 = vld [vmem:[%s1 + $0x38] sm:$0x3f]
    %v329 = vld [vmem:[%s1 + $0x40] sm:$0x3f]
    %v330 = vld [vmem:[%s1 + $0x48] sm:$0x3f]
    %v331 = vld [vmem:[%s1 + $0x50] sm:$0x3f]
    %v332 = vld [vmem:[%s1 + $0x58] sm:$0x3f]
    %v333 = vld [vmem:[%s1 + $0x60] sm:$0x3f]
    %v334 = vld [vmem:[%s1 + $0x68] sm:$0x3f]
    %v335 = vld [vmem:[%s1 + $0x70] sm:$0x3f]
    %v336 = vld [vmem:[%s1 + $0x78] sm:$0x3f]
    %v337 = vld [vmem:[%s1 + $0x80] sm:$0x3f]
    %v338 = vld [vmem:[%s1 + $0x88] sm:$0x3f]
    %v339 = vld [vmem:[%s1 + $0x90] sm:$0x3f]
    %v340 = vld [vmem:[%s1 + $0x98] sm:$0x3f]
    %v341 = vld [vmem:[%s1 + $0xa0] sm:$0x3f]
    %v342 = vld [vmem:[%s1 + $0xa8] sm:$0x3f]
    %v343 = vld [vmem:[%s1 + $0xb0] sm:$0x3f]
    %v344 = vld [vmem:[%s1 + $0xb8] sm:$0x3f]
    %v345 = vld [vmem:[%s1 + $0xc0] sm:$0x3f]
    %v346 = vld [vmem:[%s1 + $0xc8] sm:$0x3f]
    %v347 = vld [vmem:[%s1 + $0xd0] sm:$0x3f]
    %v348 = vld [vmem:[%s1 + $0xd8] sm:$0x3f]
    %v349 = vld [vmem:[%s1 + $0xe0] sm:$0x3f]
    %v350 = vld [vmem:[%s1 + $0xe8] sm:$0x3f]
    %v351 = vld [vmem:[%s1 + $0xf0] sm:$0x3f]
    %v352 = vld [vmem:[%s1 + $0xf8] sm:$0x3f]
    %vm353 = vcmask 1045504
    %v354 = vsel %vm353, %v321, 0.0
    %v355 = vrot.slane %v354, 4
    %v356 = vadd.f32 %v354, %v355
    %v357 = vrot.slane %v356, 2
    %v358 = vadd.f32 %v356, %v357
    %v359 = vrot.slane %v358, 1
    %v360 = vadd.f32 %v358, %v359
    %v361 = vsel %vm353, %v322, 0.0
    %v362 = vrot.slane %v361, 4
    %v363 = vadd.f32 %v361, %v362
    %v364 = vrot.slane %v363, 2
    %v365 = vadd.f32 %v363, %v364
    %v366 = vrot.slane %v365, 1
    %v367 = vadd.f32 %v365, %v366
    %v368 = vsel %vm353, %v323, 0.0
    %v369 = vrot.slane %v368, 4
    %v370 = vadd.f32 %v368, %v369
    %v371 = vrot.slane %v370, 2
    %v372 = vadd.f32 %v370, %v371
    %v373 = vrot.slane %v372, 1
    %v374 = vadd.f32 %v372, %v373
    %v375 = vsel %vm353, %v324, 0.0
    %v376 = vrot.slane %v375, 4
    %v377 = vadd.f32 %v375, %v376
    %v378 = vrot.slane %v377, 2
    %v379 = vadd.f32 %v377, %v378
    %v380 = vrot.slane %v379, 1
    %v381 = vadd.f32 %v379, %v380
    %v382 = vsel %vm353, %v325, 0.0
    %v383 = vrot.slane %v382, 4
    %v384 = vadd.f32 %v382, %v383
    %v385 = vrot.slane %v384, 2
    %v386 = vadd.f32 %v384, %v385
    %v387 = vrot.slane %v386, 1
    %v388 = vadd.f32 %v386, %v387
    %v389 = vsel %vm353, %v326, 0.0
    %v390 = vrot.slane %v389, 4
    %v391 = vadd.f32 %v389, %v390
    %v392 = vrot.slane %v391, 2
    %v393 = vadd.f32 %v391, %v392
    %v394 = vrot.slane %v393, 1
    %v395 = vadd.f32 %v393, %v394
    %v396 = vsel %vm353, %v327, 0.0
    %v397 = vrot.slane %v396, 4
    %v398 = vadd.f32 %v396, %v397
    %v399 = vrot.slane %v398, 2
    %v400 = vadd.f32 %v398, %v399
    %v401 = vrot.slane %v400, 1
    %v402 = vadd.f32 %v400, %v401
    %v403 = vsel %vm353, %v328, 0.0
    %v404 = vrot.slane %v403, 4
    %v405 = vadd.f32 %v403, %v404
    %v406 = vrot.slane %v405, 2
    %v407 = vadd.f32 %v405, %v406
    %v408 = vrot.slane %v407, 1
    %v409 = vadd.f32 %v407, %v408
    %v410 = vsel %vm353, %v329, 0.0
    %v411 = vrot.slane %v410, 4
    %v412 = vadd.f32 %v410, %v411
    %v413 = vrot.slane %v412, 2
    %v414 = vadd.f32 %v412, %v413
    %v415 = vrot.slane %v414, 1
    %v416 = vadd.f32 %v414, %v415
    %v417 = vsel %vm353, %v330, 0.0
    %v418 = vrot.slane %v417, 4
    %v419 = vadd.f32 %v417, %v418
    %v420 = vrot.slane %v419, 2
    %v421 = vadd.f32 %v419, %v420
    %v422 = vrot.slane %v421, 1
    %v423 = vadd.f32 %v421, %v422
    %v424 = vsel %vm353, %v331, 0.0
    %v425 = vrot.slane %v424, 4
    %v426 = vadd.f32 %v424, %v425
    %v427 = vrot.slane %v426, 2
    %v428 = vadd.f32 %v426, %v427
    %v429 = vrot.slane %v428, 1
    %v430 = vadd.f32 %v428, %v429
    %v431 = vsel %vm353, %v332, 0.0
    %v432 = vrot.slane %v431, 4
    %v433 = vadd.f32 %v431, %v432
    %v434 = vrot.slane %v433, 2
    %v435 = vadd.f32 %v433, %v434
    %v436 = vrot.slane %v435, 1
    %v437 = vadd.f32 %v435, %v436
    %v438 = vsel %vm353, %v333, 0.0
    %v439 = vrot.slane %v438, 4
    %v440 = vadd.f32 %v438, %v439
    %v441 = vrot.slane %v440, 2
    %v442 = vadd.f32 %v440, %v441
    %v443 = vrot.slane %v442, 1
    %v444 = vadd.f32 %v442, %v443
    %v445 = vsel %vm353, %v334, 0.0
    %v446 = vrot.slane %v445, 4
    %v447 = vadd.f32 %v445, %v446
    %v448 = vrot.slane %v447, 2
    %v449 = vadd.f32 %v447, %v448
    %v450 = vrot.slane %v449, 1
    %v451 = vadd.f32 %v449, %v450
    %v452 = vsel %vm353, %v335, 0.0
    %v453 = vrot.slane %v452, 4
    %v454 = vadd.f32 %v452, %v453
    %v455 = vrot.slane %v454, 2
    %v456 = vadd.f32 %v454, %v455
    %v457 = vrot.slane %v456, 1
    %v458 = vadd.f32 %v456, %v457
    %v459 = vsel %vm353, %v336, 0.0
    %v460 = vrot.slane %v459, 4
    %v461 = vadd.f32 %v459, %v460
    %v462 = vrot.slane %v461, 2
    %v463 = vadd.f32 %v461, %v462
    %v464 = vrot.slane %v463, 1
    %v465 = vadd.f32 %v463, %v464
    %v466 = vsel %vm353, %v337, 0.0
    %v467 = vrot.slane %v466, 4
    %v468 = vadd.f32 %v466, %v467
    %v469 = vrot.slane %v468, 2
    %v470 = vadd.f32 %v468, %v469
    %v471 = vrot.slane %v470, 1
    %v472 = vadd.f32 %v470, %v471
    %v473 = vsel %vm353, %v338, 0.0
    %v474 = vrot.slane %v473, 4
    %v475 = vadd.f32 %v473, %v474
    %v476 = vrot.slane %v475, 2
    %v477 = vadd.f32 %v475, %v476
    %v478 = vrot.slane %v477, 1
    %v479 = vadd.f32 %v477, %v478
    %v480 = vsel %vm353, %v339, 0.0
    %v481 = vrot.slane %v480, 4
    %v482 = vadd.f32 %v480, %v481
    %v483 = vrot.slane %v482, 2
    %v484 = vadd.f32 %v482, %v483
    %v485 = vrot.slane %v484, 1
    %v486 = vadd.f32 %v484, %v485
    %v487 = vsel %vm353, %v340, 0.0
    %v488 = vrot.slane %v487, 4
    %v489 = vadd.f32 %v487, %v488
    %v490 = vrot.slane %v489, 2
    %v491 = vadd.f32 %v489, %v490
    %v492 = vrot.slane %v491, 1
    %v493 = vadd.f32 %v491, %v492
    %v494 = vsel %vm353, %v341, 0.0
    %v495 = vrot.slane %v494, 4
    %v496 = vadd.f32 %v494, %v495
    %v497 = vrot.slane %v496, 2
    %v498 = vadd.f32 %v496, %v497
    %v499 = vrot.slane %v498, 1
    %v500 = vadd.f32 %v498, %v499
    %v501 = vsel %vm353, %v342, 0.0
    %v502 = vrot.slane %v501, 4
    %v503 = vadd.f32 %v501, %v502
    %v504 = vrot.slane %v503, 2
    %v505 = vadd.f32 %v503, %v504
    %v506 = vrot.slane %v505, 1
    %v507 = vadd.f32 %v505, %v506
    %v508 = vsel %vm353, %v343, 0.0
    %v509 = vrot.slane %v508, 4
    %v510 = vadd.f32 %v508, %v509
    %v511 = vrot.slane %v510, 2
    %v512 = vadd.f32 %v510, %v511
    %v513 = vrot.slane %v512, 1
    %v514 = vadd.f32 %v512, %v513
    %v515 = vsel %vm353, %v344, 0.0
    %v516 = vrot.slane %v515, 4
    %v517 = vadd.f32 %v515, %v516
    %v518 = vrot.slane %v517, 2
    %v519 = vadd.f32 %v517, %v518
    %v520 = vrot.slane %v519, 1
    %v521 = vadd.f32 %v519, %v520
    %v522 = vsel %vm353, %v345, 0.0
    %v523 = vrot.slane %v522, 4
    %v524 = vadd.f32 %v522, %v523
    %v525 = vrot.slane %v524, 2
    %v526 = vadd.f32 %v524, %v525
    %v527 = vrot.slane %v526, 1
    %v528 = vadd.f32 %v526, %v527
    %v529 = vsel %vm353, %v346, 0.0
    %v530 = vrot.slane %v529, 4
    %v531 = vadd.f32 %v529, %v530
    %v532 = vrot.slane %v531, 2
    %v533 = vadd.f32 %v531, %v532
    %v534 = vrot.slane %v533, 1
    %v535 = vadd.f32 %v533, %v534
    %v536 = vsel %vm353, %v347, 0.0
    %v537 = vrot.slane %v536, 4
    %v538 = vadd.f32 %v536, %v537
    %v539 = vrot.slane %v538, 2
    %v540 = vadd.f32 %v538, %v539
    %v541 = vrot.slane %v540, 1
    %v542 = vadd.f32 %v540, %v541
    %v543 = vsel %vm353, %v348, 0.0
    %v544 = vrot.slane %v543, 4
    %v545 = vadd.f32 %v543, %v544
    %v546 = vrot.slane %v545, 2
    %v547 = vadd.f32 %v545, %v546
    %v548 = vrot.slane %v547, 1
    %v549 = vadd.f32 %v547, %v548
    %v550 = vsel %vm353, %v349, 0.0
    %v551 = vrot.slane %v550, 4
    %v552 = vadd.f32 %v550, %v551
    %v553 = vrot.slane %v552, 2
    %v554 = vadd.f32 %v552, %v553
    %v555 = vrot.slane %v554, 1
    %v556 = vadd.f32 %v554, %v555
    %v557 = vsel %vm353, %v350, 0.0
    %v558 = vrot.slane %v557, 4
    %v559 = vadd.f32 %v557, %v558
    %v560 = vrot.slane %v559, 2
    %v561 = vadd.f32 %v559, %v560
    %v562 = vrot.slane %v561, 1
    %v563 = vadd.f32 %v561, %v562
    %v564 = vsel %vm353, %v351, 0.0
    %v565 = vrot.slane %v564, 4
    %v566 = vadd.f32 %v564, %v565
    %v567 = vrot.slane %v566, 2
    %v568 = vadd.f32 %v566, %v567
    %v569 = vrot.slane %v568, 1
    %v570 = vadd.f32 %v568, %v569
    %v571 = vsel %vm353, %v352, 0.0
    %v572 = vrot.slane %v571, 4
    %v573 = vadd.f32 %v571, %v572
    %v574 = vrot.slane %v573, 2
    %v575 = vadd.f32 %v573, %v574
    %v576 = vrot.slane %v575, 1
    %v577 = vadd.f32 %v575, %v576
    %v578 = vrcp.pop 6.0
    %v579 = vmul.f32 6.0, %v578
    %v580 = vsub.f32 1.0, %v579
    %v581 = vmul.f32 %v578, %v580
    %v582 = vadd.f32 %v578, %v581
    %vm583 = vweird.f32 %v578
    %v584 = vsel %vm583, %v578, %v582
    %v585 = vmul.f32 %v360, %v584
    %v586 = vmul.f32 %v367, %v584
    %v587 = vmul.f32 %v374, %v584
    %v588 = vmul.f32 %v381, %v584
    %v589 = vmul.f32 %v388, %v584
    %v590 = vmul.f32 %v395, %v584
    %v591 = vmul.f32 %v402, %v584
    %v592 = vmul.f32 %v409, %v584
    %v593 = vmul.f32 %v416, %v584
    %v594 = vmul.f32 %v423, %v584
    %v595 = vmul.f32 %v430, %v584
    %v596 = vmul.f32 %v437, %v584
    %v597 = vmul.f32 %v444, %v584
    %v598 = vmul.f32 %v451, %v584
    %v599 = vmul.f32 %v458, %v584
    %v600 = vmul.f32 %v465, %v584
    %v601 = vmul.f32 %v472, %v584
    %v602 = vmul.f32 %v479, %v584
    %v603 = vmul.f32 %v486, %v584
    %v604 = vmul.f32 %v493, %v584
    %v605 = vmul.f32 %v500, %v584
    %v606 = vmul.f32 %v507, %v584
    %v607 = vmul.f32 %v514, %v584
    %v608 = vmul.f32 %v521, %v584
    %v609 = vmul.f32 %v528, %v584
    %v610 = vmul.f32 %v535, %v584
    %v611 = vmul.f32 %v542, %v584
    %v612 = vmul.f32 %v549, %v584
    %v613 = vmul.f32 %v556, %v584
    %v614 = vmul.f32 %v563, %v584
    %v615 = vmul.f32 %v570, %v584
    %v616 = vmul.f32 %v577, %v584
    %v617 = vld [vmem:[%s2] sm:$0xff]
    %v618 = vld [vmem:[%s2 + $0x8] sm:$0xff]
    %v619 = vld [vmem:[%s2 + $0x10] sm:$0xff]
    %v620 = vld [vmem:[%s2 + $0x18] sm:$0xff]
    %v621 = vld [vmem:[%s2 + $0x20] sm:$0x3]
    %v622 = vld [vmem:[%s2 + $0x28] sm:$0x3]
    %v623 = vld [vmem:[%s2 + $0x30] sm:$0x3]
    %v624 = vld [vmem:[%s2 + $0x38] sm:$0x3]
    %v625 = vld [vmem:[%s2 + $0x40] sm:$0xff]
    %v626 = vld [vmem:[%s2 + $0x48] sm:$0xff]
    %v627 = vld [vmem:[%s2 + $0x50] sm:$0xff]
    %v628 = vld [vmem:[%s2 + $0x58] sm:$0xff]
    %v629 = vld [vmem:[%s2 + $0x60] sm:$0x3]
    %v630 = vld [vmem:[%s2 + $0x68] sm:$0x3]
    %v631 = vld [vmem:[%s2 + $0x70] sm:$0x3]
    %v632 = vld [vmem:[%s2 + $0x78] sm:$0x3]
    %v633 = vld [vmem:[%s2 + $0x80] sm:$0xff]
    %v634 = vld [vmem:[%s2 + $0x88] sm:$0xff]
    %v635 = vld [vmem:[%s2 + $0x90] sm:$0xff]
    %v636 = vld [vmem:[%s2 + $0x98] sm:$0xff]
    %v637 = vld [vmem:[%s2 + $0xa0] sm:$0x3]
    %v638 = vld [vmem:[%s2 + $0xa8] sm:$0x3]
    %v639 = vld [vmem:[%s2 + $0xb0] sm:$0x3]
    %v640 = vld [vmem:[%s2 + $0xb8] sm:$0x3]
    %v641 = vld [vmem:[%s2 + $0xc0] sm:$0xff]
    %v642 = vld [vmem:[%s2 + $0xc8] sm:$0xff]
    %v643 = vld [vmem:[%s2 + $0xd0] sm:$0xff]
    %v644 = vld [vmem:[%s2 + $0xd8] sm:$0xff]
    %v645 = vld [vmem:[%s2 + $0xe0] sm:$0x3]
    %v646 = vld [vmem:[%s2 + $0xe8] sm:$0x3]
    %v647 = vld [vmem:[%s2 + $0xf0] sm:$0x3]
    %v648 = vld [vmem:[%s2 + $0xf8] sm:$0x3]
    %v649 = vld [vmem:[%s2 + $0x100] sm:$0xff]
    %v650 = vld [vmem:[%s2 + $0x108] sm:$0xff]
    %v651 = vld [vmem:[%s2 + $0x110] sm:$0xff]
    %v652 = vld [vmem:[%s2 + $0x118] sm:$0xff]
    %v653 = vld [vmem:[%s2 + $0x120] sm:$0x3]
    %v654 = vld [vmem:[%s2 + $0x128] sm:$0x3]
    %v655 = vld [vmem:[%s2 + $0x130] sm:$0x3]
    %v656 = vld [vmem:[%s2 + $0x138] sm:$0x3]
    %v657 = vld [vmem:[%s2 + $0x140] sm:$0xff]
    %v658 = vld [vmem:[%s2 + $0x148] sm:$0xff]
    %v659 = vld [vmem:[%s2 + $0x150] sm:$0xff]
    %v660 = vld [vmem:[%s2 + $0x158] sm:$0xff]
    %v661 = vld [vmem:[%s2 + $0x160] sm:$0x3]
    %v662 = vld [vmem:[%s2 + $0x168] sm:$0x3]
    %v663 = vld [vmem:[%s2 + $0x170] sm:$0x3]
    %v664 = vld [vmem:[%s2 + $0x178] sm:$0x3]
    %v665 = vld [vmem:[%s2 + $0x180] sm:$0xff]
    %v666 = vld [vmem:[%s2 + $0x188] sm:$0xff]
    %v667 = vld [vmem:[%s2 + $0x190] sm:$0xff]
    %v668 = vld [vmem:[%s2 + $0x198] sm:$0xff]
    %v669 = vld [vmem:[%s2 + $0x1a0] sm:$0x3]
    %v670 = vld [vmem:[%s2 + $0x1a8] sm:$0x3]
    %v671 = vld [vmem:[%s2 + $0x1b0] sm:$0x3]
    %v672 = vld [vmem:[%s2 + $0x1b8] sm:$0x3]
    %v673 = vld [vmem:[%s2 + $0x1c0] sm:$0xff]
    %v674 = vld [vmem:[%s2 + $0x1c8] sm:$0xff]
    %v675 = vld [vmem:[%s2 + $0x1d0] sm:$0xff]
    %v676 = vld [vmem:[%s2 + $0x1d8] sm:$0xff]
    %v677 = vld [vmem:[%s2 + $0x1e0] sm:$0x3]
    %v678 = vld [vmem:[%s2 + $0x1e8] sm:$0x3]
    %v679 = vld [vmem:[%s2 + $0x1f0] sm:$0x3]
    %v680 = vld [vmem:[%s2 + $0x1f8] sm:$0x3]
    %vm681 = vcmask 1041408
    %v682 = vsel %vm681, %v621, 0.0
    %v683 = vadd.f32 %v617, %v682
    %v684 = vrot.slane %v683, 4
    %v685 = vadd.f32 %v683, %v684
    %v686 = vrot.slane %v685, 2
    %v687 = vadd.f32 %v685, %v686
    %v688 = vrot.slane %v687, 1
    %v689 = vadd.f32 %v687, %v688
    %v690 = vsel %vm681, %v622, 0.0
    %v691 = vadd.f32 %v618, %v690
    %v692 = vrot.slane %v691, 4
    %v693 = vadd.f32 %v691, %v692
    %v694 = vrot.slane %v693, 2
    %v695 = vadd.f32 %v693, %v694
    %v696 = vrot.slane %v695, 1
    %v697 = vadd.f32 %v695, %v696
    %v698 = vsel %vm681, %v623, 0.0
    %v699 = vadd.f32 %v619, %v698
    %v700 = vrot.slane %v699, 4
    %v701 = vadd.f32 %v699, %v700
    %v702 = vrot.slane %v701, 2
    %v703 = vadd.f32 %v701, %v702
    %v704 = vrot.slane %v703, 1
    %v705 = vadd.f32 %v703, %v704
    %v706 = vsel %vm681, %v624, 0.0
    %v707 = vadd.f32 %v620, %v706
    %v708 = vrot.slane %v707, 4
    %v709 = vadd.f32 %v707, %v708
    %v710 = vrot.slane %v709, 2
    %v711 = vadd.f32 %v709, %v710
    %v712 = vrot.slane %v711, 1
    %v713 = vadd.f32 %v711, %v712
    %v714 = vsel %vm681, %v629, 0.0
    %v715 = vadd.f32 %v625, %v714
    %v716 = vrot.slane %v715, 4
    %v717 = vadd.f32 %v715, %v716
    %v718 = vrot.slane %v717, 2
    %v719 = vadd.f32 %v717, %v718
    %v720 = vrot.slane %v719, 1
    %v721 = vadd.f32 %v719, %v720
    %v722 = vsel %vm681, %v630, 0.0
    %v723 = vadd.f32 %v626, %v722
    %v724 = vrot.slane %v723, 4
    %v725 = vadd.f32 %v723, %v724
    %v726 = vrot.slane %v725, 2
    %v727 = vadd.f32 %v725, %v726
    %v728 = vrot.slane %v727, 1
    %v729 = vadd.f32 %v727, %v728
    %v730 = vsel %vm681, %v631, 0.0
    %v731 = vadd.f32 %v627, %v730
    %v732 = vrot.slane %v731, 4
    %v733 = vadd.f32 %v731, %v732
    %v734 = vrot.slane %v733, 2
    %v735 = vadd.f32 %v733, %v734
    %v736 = vrot.slane %v735, 1
    %v737 = vadd.f32 %v735, %v736
    %v738 = vsel %vm681, %v632, 0.0
    %v739 = vadd.f32 %v628, %v738
    %v740 = vrot.slane %v739, 4
    %v741 = vadd.f32 %v739, %v740
    %v742 = vrot.slane %v741, 2
    %v743 = vadd.f32 %v741, %v742
    %v744 = vrot.slane %v743, 1
    %v745 = vadd.f32 %v743, %v744
    %v746 = vsel %vm681, %v637, 0.0
    %v747 = vadd.f32 %v633, %v746
    %v748 = vrot.slane %v747, 4
    %v749 = vadd.f32 %v747, %v748
    %v750 = vrot.slane %v749, 2
    %v751 = vadd.f32 %v749, %v750
    %v752 = vrot.slane %v751, 1
    %v753 = vadd.f32 %v751, %v752
    %v754 = vsel %vm681, %v638, 0.0
    %v755 = vadd.f32 %v634, %v754
    %v756 = vrot.slane %v755, 4
    %v757 = vadd.f32 %v755, %v756
    %v758 = vrot.slane %v757, 2
    %v759 = vadd.f32 %v757, %v758
    %v760 = vrot.slane %v759, 1
    %v761 = vadd.f32 %v759, %v760
    %v762 = vsel %vm681, %v639, 0.0
    %v763 = vadd.f32 %v635, %v762
    %v764 = vrot.slane %v763, 4
    %v765 = vadd.f32 %v763, %v764
    %v766 = vrot.slane %v765, 2
    %v767 = vadd.f32 %v765, %v766
    %v768 = vrot.slane %v767, 1
    %v769 = vadd.f32 %v767, %v768
    %v770 = vsel %vm681, %v640, 0.0
    %v771 = vadd.f32 %v636, %v770
    %v772 = vrot.slane %v771, 4
    %v773 = vadd.f32 %v771, %v772
    %v774 = vrot.slane %v773, 2
    %v775 = vadd.f32 %v773, %v774
    %v776 = vrot.slane %v775, 1
    %v777 = vadd.f32 %v775, %v776
    %v778 = vsel %vm681, %v645, 0.0
    %v779 = vadd.f32 %v641, %v778
    %v780 = vrot.slane %v779, 4
    %v781 = vadd.f32 %v779, %v780
    %v782 = vrot.slane %v781, 2
    %v783 = vadd.f32 %v781, %v782
    %v784 = vrot.slane %v783, 1
    %v785 = vadd.f32 %v783, %v784
    %v786 = vsel %vm681, %v646, 0.0
    %v787 = vadd.f32 %v642, %v786
    %v788 = vrot.slane %v787, 4
    %v789 = vadd.f32 %v787, %v788
    %v790 = vrot.slane %v789, 2
    %v791 = vadd.f32 %v789, %v790
    %v792 = vrot.slane %v791, 1
    %v793 = vadd.f32 %v791, %v792
    %v794 = vsel %vm681, %v647, 0.0
    %v795 = vadd.f32 %v643, %v794
    %v796 = vrot.slane %v795, 4
    %v797 = vadd.f32 %v795, %v796
    %v798 = vrot.slane %v797, 2
    %v799 = vadd.f32 %v797, %v798
    %v800 = vrot.slane %v799, 1
    %v801 = vadd.f32 %v799, %v800
    %v802 = vsel %vm681, %v648, 0.0
    %v803 = vadd.f32 %v644, %v802
    %v804 = vrot.slane %v803, 4
    %v805 = vadd.f32 %v803, %v804
    %v806 = vrot.slane %v805, 2
    %v807 = vadd.f32 %v805, %v806
    %v808 = vrot.slane %v807, 1
    %v809 = vadd.f32 %v807, %v808
    %v810 = vsel %vm681, %v653, 0.0
    %v811 = vadd.f32 %v649, %v810
    %v812 = vrot.slane %v811, 4
    %v813 = vadd.f32 %v811, %v812
    %v814 = vrot.slane %v813, 2
    %v815 = vadd.f32 %v813, %v814
    %v816 = vrot.slane %v815, 1
    %v817 = vadd.f32 %v815, %v816
    %v818 = vsel %vm681, %v654, 0.0
    %v819 = vadd.f32 %v650, %v818
    %v820 = vrot.slane %v819, 4
    %v821 = vadd.f32 %v819, %v820
    %v822 = vrot.slane %v821, 2
    %v823 = vadd.f32 %v821, %v822
    %v824 = vrot.slane %v823, 1
    %v825 = vadd.f32 %v823, %v824
    %v826 = vsel %vm681, %v655, 0.0
    %v827 = vadd.f32 %v651, %v826
    %v828 = vrot.slane %v827, 4
    %v829 = vadd.f32 %v827, %v828
    %v830 = vrot.slane %v829, 2
    %v831 = vadd.f32 %v829, %v830
    %v832 = vrot.slane %v831, 1
    %v833 = vadd.f32 %v831, %v832
    %v834 = vsel %vm681, %v656, 0.0
    %v835 = vadd.f32 %v652, %v834
    %v836 = vrot.slane %v835, 4
    %v837 = vadd.f32 %v835, %v836
    %v838 = vrot.slane %v837, 2
    %v839 = vadd.f32 %v837, %v838
    %v840 = vrot.slane %v839, 1
    %v841 = vadd.f32 %v839, %v840
    %v842 = vsel %vm681, %v661, 0.0
    %v843 = vadd.f32 %v657, %v842
    %v844 = vrot.slane %v843, 4
    %v845 = vadd.f32 %v843, %v844
    %v846 = vrot.slane %v845, 2
    %v847 = vadd.f32 %v845, %v846
    %v848 = vrot.slane %v847, 1
    %v849 = vadd.f32 %v847, %v848
    %v850 = vsel %vm681, %v662, 0.0
    %v851 = vadd.f32 %v658, %v850
    %v852 = vrot.slane %v851, 4
    %v853 = vadd.f32 %v851, %v852
    %v854 = vrot.slane %v853, 2
    %v855 = vadd.f32 %v853, %v854
    %v856 = vrot.slane %v855, 1
    %v857 = vadd.f32 %v855, %v856
    %v858 = vsel %vm681, %v663, 0.0
    %v859 = vadd.f32 %v659, %v858
    %v860 = vrot.slane %v859, 4
    %v861 = vadd.f32 %v859, %v860
    %v862 = vrot.slane %v861, 2
    %v863 = vadd.f32 %v861, %v862
    %v864 = vrot.slane %v863, 1
    %v865 = vadd.f32 %v863, %v864
    %v866 = vsel %vm681, %v664, 0.0
    %v867 = vadd.f32 %v660, %v866
    %v868 = vrot.slane %v867, 4
    %v869 = vadd.f32 %v867, %v868
    %v870 = vrot.slane %v869, 2
    %v871 = vadd.f32 %v869, %v870
    %v872 = vrot.slane %v871, 1
    %v873 = vadd.f32 %v871, %v872
    %v874 = vsel %vm681, %v669, 0.0
    %v875 = vadd.f32 %v665, %v874
    %v876 = vrot.slane %v875, 4
    %v877 = vadd.f32 %v875, %v876
    %v878 = vrot.slane %v877, 2
    %v879 = vadd.f32 %v877, %v878
    %v880 = vrot.slane %v879, 1
    %v881 = vadd.f32 %v879, %v880
    %v882 = vsel %vm681, %v670, 0.0
    %v883 = vadd.f32 %v666, %v882
    %v884 = vrot.slane %v883, 4
    %v885 = vadd.f32 %v883, %v884
    %v886 = vrot.slane %v885, 2
    %v887 = vadd.f32 %v885, %v886
    %v888 = vrot.slane %v887, 1
    %v889 = vadd.f32 %v887, %v888
    %v890 = vsel %vm681, %v671, 0.0
    %v891 = vadd.f32 %v667, %v890
    %v892 = vrot.slane %v891, 4
    %v893 = vadd.f32 %v891, %v892
    %v894 = vrot.slane %v893, 2
    %v895 = vadd.f32 %v893, %v894
    %v896 = vrot.slane %v895, 1
    %v897 = vadd.f32 %v895, %v896
    %v898 = vsel %vm681, %v672, 0.0
    %v899 = vadd.f32 %v668, %v898
    %v900 = vrot.slane %v899, 4
    %v901 = vadd.f32 %v899, %v900
    %v902 = vrot.slane %v901, 2
    %v903 = vadd.f32 %v901, %v902
    %v904 = vrot.slane %v903, 1
    %v905 = vadd.f32 %v903, %v904
    %v906 = vsel %vm681, %v677, 0.0
    %v907 = vadd.f32 %v673, %v906
    %v908 = vrot.slane %v907, 4
    %v909 = vadd.f32 %v907, %v908
    %v910 = vrot.slane %v909, 2
    %v911 = vadd.f32 %v909, %v910
    %v912 = vrot.slane %v911, 1
    %v913 = vadd.f32 %v911, %v912
    %v914 = vsel %vm681, %v678, 0.0
    %v915 = vadd.f32 %v674, %v914
    %v916 = vrot.slane %v915, 4
    %v917 = vadd.f32 %v915, %v916
    %v918 = vrot.slane %v917, 2
    %v919 = vadd.f32 %v917, %v918
    %v920 = vrot.slane %v919, 1
    %v921 = vadd.f32 %v919, %v920
    %v922 = vsel %vm681, %v679, 0.0
    %v923 = vadd.f32 %v675, %v922
    %v924 = vrot.slane %v923, 4
    %v925 = vadd.f32 %v923, %v924
    %v926 = vrot.slane %v925, 2
    %v927 = vadd.f32 %v925, %v926
    %v928 = vrot.slane %v927, 1
    %v929 = vadd.f32 %v927, %v928
    %v930 = vsel %vm681, %v680, 0.0
    %v931 = vadd.f32 %v676, %v930
    %v932 = vrot.slane %v931, 4
    %v933 = vadd.f32 %v931, %v932
    %v934 = vrot.slane %v933, 2
    %v935 = vadd.f32 %v933, %v934
    %v936 = vrot.slane %v935, 1
    %v937 = vadd.f32 %v935, %v936
    %v938 = vrcp.pop 10.0
    %v939 = vmul.f32 10.0, %v938
    %v940 = vsub.f32 1.0, %v939
    %v941 = vmul.f32 %v938, %v940
    %v942 = vadd.f32 %v938, %v941
    %vm943 = vweird.f32 %v938
    %v944 = vsel %vm943, %v938, %v942
    %v945 = vmul.f32 %v689, %v944
    %v946 = vmul.f32 %v697, %v944
    %v947 = vmul.f32 %v705, %v944
    %v948 = vmul.f32 %v713, %v944
    %v949 = vmul.f32 %v721, %v944
    %v950 = vmul.f32 %v729, %v944
    %v951 = vmul.f32 %v737, %v944
    %v952 = vmul.f32 %v745, %v944
    %v953 = vmul.f32 %v753, %v944
    %v954 = vmul.f32 %v761, %v944
    %v955 = vmul.f32 %v769, %v944
    %v956 = vmul.f32 %v777, %v944
    %v957 = vmul.f32 %v785, %v944
    %v958 = vmul.f32 %v793, %v944
    %v959 = vmul.f32 %v801, %v944
    %v960 = vmul.f32 %v809, %v944
    %v961 = vmul.f32 %v817, %v944
    %v962 = vmul.f32 %v825, %v944
    %v963 = vmul.f32 %v833, %v944
    %v964 = vmul.f32 %v841, %v944
    %v965 = vmul.f32 %v849, %v944
    %v966 = vmul.f32 %v857, %v944
    %v967 = vmul.f32 %v865, %v944
    %v968 = vmul.f32 %v873, %v944
    %v969 = vmul.f32 %v881, %v944
    %v970 = vmul.f32 %v889, %v944
    %v971 = vmul.f32 %v897, %v944
    %v972 = vmul.f32 %v905, %v944
    %v973 = vmul.f32 %v913, %v944
    %v974 = vmul.f32 %v921, %v944
    %v975 = vmul.f32 %v929, %v944
    %v976 = vmul.f32 %v937, %v944
    %v977 = vld [vmem:[#allocation5] sm:$0xff]
    %v978 = vld [vmem:[#allocation5 + $0x8] sm:$0xff]
    %v979 = vld [vmem:[#allocation5 + $0x10] sm:$0xff]
    %v980 = vld [vmem:[#allocation5 + $0x18] sm:$0xff]
    %v981 = vld [vmem:[#allocation5 + $0x20] sm:$0xff]
    %v982 = vld [vmem:[#allocation5 + $0x28] sm:$0xff]
    %v983 = vld [vmem:[#allocation5 + $0x30] sm:$0xff]
    %v984 = vld [vmem:[#allocation5 + $0x38] sm:$0xff]
    %v985 = vld [vmem:[#allocation5 + $0x40] sm:$0xff]
    %v986 = vld [vmem:[#allocation5 + $0x48] sm:$0xff]
    %v987 = vld [vmem:[#allocation5 + $0x50] sm:$0xff]
    %v988 = vld [vmem:[#allocation5 + $0x58] sm:$0xff]
    %v989 = vld [vmem:[#allocation5 + $0x60] sm:$0xff]
    %v990 = vld [vmem:[#allocation5 + $0x68] sm:$0xff]
    %v991 = vld [vmem:[#allocation5 + $0x70] sm:$0xff]
    %v992 = vld [vmem:[#allocation5 + $0x78] sm:$0xff]
    %v993 = vld [vmem:[#allocation5 + $0x80] sm:$0xff]
    %v994 = vld [vmem:[#allocation5 + $0x88] sm:$0xff]
    %v995 = vld [vmem:[#allocation5 + $0x90] sm:$0xff]
    %v996 = vld [vmem:[#allocation5 + $0x98] sm:$0xff]
    %v997 = vld [vmem:[#allocation5 + $0xa0] sm:$0xff]
    %v998 = vld [vmem:[#allocation5 + $0xa8] sm:$0xff]
    %v999 = vld [vmem:[#allocation5 + $0xb0] sm:$0xff]
    %v1000 = vld [vmem:[#allocation5 + $0xb8] sm:$0xff]
    %v1001 = vld [vmem:[#allocation5 + $0xc0] sm:$0xff]
    %v1002 = vld [vmem:[#allocation5 + $0xc8] sm:$0xff]
    %v1003 = vld [vmem:[#allocation5 + $0xd0] sm:$0xff]
    %v1004 = vld [vmem:[#allocation5 + $0xd8] sm:$0xff]
    %v1005 = vld [vmem:[#allocation5 + $0xe0] sm:$0xff]
    %v1006 = vld [vmem:[#allocation5 + $0xe8] sm:$0xff]
    %v1007 = vld [vmem:[#allocation5 + $0xf0] sm:$0xff]
    %v1008 = vld [vmem:[#allocation5 + $0xf8] sm:$0xff]
    %v1009 = vrot.slane %v977, 4
    %v1010 = vadd.f32 %v977, %v1009
    %v1011 = vrot.slane %v1010, 2
    %v1012 = vadd.f32 %v1010, %v1011
    %v1013 = vrot.slane %v1012, 1
    %v1014 = vadd.f32 %v1012, %v1013
    %v1015 = vrot.slane %v978, 4
    %v1016 = vadd.f32 %v978, %v1015
    %v1017 = vrot.slane %v1016, 2
    %v1018 = vadd.f32 %v1016, %v1017
    %v1019 = vrot.slane %v1018, 1
    %v1020 = vadd.f32 %v1018, %v1019
    %v1021 = vrot.slane %v979, 4
    %v1022 = vadd.f32 %v979, %v1021
    %v1023 = vrot.slane %v1022, 2
    %v1024 = vadd.f32 %v1022, %v1023
    %v1025 = vrot.slane %v1024, 1
    %v1026 = vadd.f32 %v1024, %v1025
    %v1027 = vrot.slane %v980, 4
    %v1028 = vadd.f32 %v980, %v1027
    %v1029 = vrot.slane %v1028, 2
    %v1030 = vadd.f32 %v1028, %v1029
    %v1031 = vrot.slane %v1030, 1
    %v1032 = vadd.f32 %v1030, %v1031
    %v1033 = vrot.slane %v981, 4
    %v1034 = vadd.f32 %v981, %v1033
    %v1035 = vrot.slane %v1034, 2
    %v1036 = vadd.f32 %v1034, %v1035
    %v1037 = vrot.slane %v1036, 1
    %v1038 = vadd.f32 %v1036, %v1037
    %v1039 = vrot.slane %v982, 4
    %v1040 = vadd.f32 %v982, %v1039
    %v1041 = vrot.slane %v1040, 2
    %v1042 = vadd.f32 %v1040, %v1041
    %v1043 = vrot.slane %v1042, 1
    %v1044 = vadd.f32 %v1042, %v1043
    %v1045 = vrot.slane %v983, 4
    %v1046 = vadd.f32 %v983, %v1045
    %v1047 = vrot.slane %v1046, 2
    %v1048 = vadd.f32 %v1046, %v1047
    %v1049 = vrot.slane %v1048, 1
    %v1050 = vadd.f32 %v1048, %v1049
    %v1051 = vrot.slane %v984, 4
    %v1052 = vadd.f32 %v984, %v1051
    %v1053 = vrot.slane %v1052, 2
    %v1054 = vadd.f32 %v1052, %v1053
    %v1055 = vrot.slane %v1054, 1
    %v1056 = vadd.f32 %v1054, %v1055
    %v1057 = vrot.slane %v985, 4
    %v1058 = vadd.f32 %v985, %v1057
    %v1059 = vrot.slane %v1058, 2
    %v1060 = vadd.f32 %v1058, %v1059
    %v1061 = vrot.slane %v1060, 1
    %v1062 = vadd.f32 %v1060, %v1061
    %v1063 = vrot.slane %v986, 4
    %v1064 = vadd.f32 %v986, %v1063
    %v1065 = vrot.slane %v1064, 2
    %v1066 = vadd.f32 %v1064, %v1065
    %v1067 = vrot.slane %v1066, 1
    %v1068 = vadd.f32 %v1066, %v1067
    %v1069 = vrot.slane %v987, 4
    %v1070 = vadd.f32 %v987, %v1069
    %v1071 = vrot.slane %v1070, 2
    %v1072 = vadd.f32 %v1070, %v1071
    %v1073 = vrot.slane %v1072, 1
    %v1074 = vadd.f32 %v1072, %v1073
    %v1075 = vrot.slane %v988, 4
    %v1076 = vadd.f32 %v988, %v1075
    %v1077 = vrot.slane %v1076, 2
    %v1078 = vadd.f32 %v1076, %v1077
    %v1079 = vrot.slane %v1078, 1
    %v1080 = vadd.f32 %v1078, %v1079
    %v1081 = vrot.slane %v989, 4
    %v1082 = vadd.f32 %v989, %v1081
    %v1083 = vrot.slane %v1082, 2
    %v1084 = vadd.f32 %v1082, %v1083
    %v1085 = vrot.slane %v1084, 1
    %v1086 = vadd.f32 %v1084, %v1085
    %v1087 = vrot.slane %v990, 4
    %v1088 = vadd.f32 %v990, %v1087
    %v1089 = vrot.slane %v1088, 2
    %v1090 = vadd.f32 %v1088, %v1089
    %v1091 = vrot.slane %v1090, 1
    %v1092 = vadd.f32 %v1090, %v1091
    %v1093 = vrot.slane %v991, 4
    %v1094 = vadd.f32 %v991, %v1093
    %v1095 = vrot.slane %v1094, 2
    %v1096 = vadd.f32 %v1094, %v1095
    %v1097 = vrot.slane %v1096, 1
    %v1098 = vadd.f32 %v1096, %v1097
    %v1099 = vrot.slane %v992, 4
    %v1100 = vadd.f32 %v992, %v1099
    %v1101 = vrot.slane %v1100, 2
    %v1102 = vadd.f32 %v1100, %v1101
    %v1103 = vrot.slane %v1102, 1
    %v1104 = vadd.f32 %v1102, %v1103
    %v1105 = vrot.slane %v993, 4
    %v1106 = vadd.f32 %v993, %v1105
    %v1107 = vrot.slane %v1106, 2
    %v1108 = vadd.f32 %v1106, %v1107
    %v1109 = vrot.slane %v1108, 1
    %v1110 = vadd.f32 %v1108, %v1109
    %v1111 = vrot.slane %v994, 4
    %v1112 = vadd.f32 %v994, %v1111
    %v1113 = vrot.slane %v1112, 2
    %v1114 = vadd.f32 %v1112, %v1113
    %v1115 = vrot.slane %v1114, 1
    %v1116 = vadd.f32 %v1114, %v1115
    %v1117 = vrot.slane %v995, 4
    %v1118 = vadd.f32 %v995, %v1117
    %v1119 = vrot.slane %v1118, 2
    %v1120 = vadd.f32 %v1118, %v1119
    %v1121 = vrot.slane %v1120, 1
    %v1122 = vadd.f32 %v1120, %v1121
    %v1123 = vrot.slane %v996, 4
    %v1124 = vadd.f32 %v996, %v1123
    %v1125 = vrot.slane %v1124, 2
    %v1126 = vadd.f32 %v1124, %v1125
    %v1127 = vrot.slane %v1126, 1
    %v1128 = vadd.f32 %v1126, %v1127
    %v1129 = vrot.slane %v997, 4
    %v1130 = vadd.f32 %v997, %v1129
    %v1131 = vrot.slane %v1130, 2
    %v1132 = vadd.f32 %v1130, %v1131
    %v1133 = vrot.slane %v1132, 1
    %v1134 = vadd.f32 %v1132, %v1133
    %v1135 = vrot.slane %v998, 4
    %v1136 = vadd.f32 %v998, %v1135
    %v1137 = vrot.slane %v1136, 2
    %v1138 = vadd.f32 %v1136, %v1137
    %v1139 = vrot.slane %v1138, 1
    %v1140 = vadd.f32 %v1138, %v1139
    %v1141 = vrot.slane %v999, 4
    %v1142 = vadd.f32 %v999, %v1141
    %v1143 = vrot.slane %v1142, 2
    %v1144 = vadd.f32 %v1142, %v1143
    %v1145 = vrot.slane %v1144, 1
    %v1146 = vadd.f32 %v1144, %v1145
    %v1147 = vrot.slane %v1000, 4
    %v1148 = vadd.f32 %v1000, %v1147
    %v1149 = vrot.slane %v1148, 2
    %v1150 = vadd.f32 %v1148, %v1149
    %v1151 = vrot.slane %v1150, 1
    %v1152 = vadd.f32 %v1150, %v1151
    %v1153 = vrot.slane %v1001, 4
    %v1154 = vadd.f32 %v1001, %v1153
    %v1155 = vrot.slane %v1154, 2
    %v1156 = vadd.f32 %v1154, %v1155
    %v1157 = vrot.slane %v1156, 1
    %v1158 = vadd.f32 %v1156, %v1157
    %v1159 = vrot.slane %v1002, 4
    %v1160 = vadd.f32 %v1002, %v1159
    %v1161 = vrot.slane %v1160, 2
    %v1162 = vadd.f32 %v1160, %v1161
    %v1163 = vrot.slane %v1162, 1
    %v1164 = vadd.f32 %v1162, %v1163
    %v1165 = vrot.slane %v1003, 4
    %v1166 = vadd.f32 %v1003, %v1165
    %v1167 = vrot.slane %v1166, 2
    %v1168 = vadd.f32 %v1166, %v1167
    %v1169 = vrot.slane %v1168, 1
    %v1170 = vadd.f32 %v1168, %v1169
    %v1171 = vrot.slane %v1004, 4
    %v1172 = vadd.f32 %v1004, %v1171
    %v1173 = vrot.slane %v1172, 2
    %v1174 = vadd.f32 %v1172, %v1173
    %v1175 = vrot.slane %v1174, 1
    %v1176 = vadd.f32 %v1174, %v1175
    %v1177 = vrot.slane %v1005, 4
    %v1178 = vadd.f32 %v1005, %v1177
    %v1179 = vrot.slane %v1178, 2
    %v1180 = vadd.f32 %v1178, %v1179
    %v1181 = vrot.slane %v1180, 1
    %v1182 = vadd.f32 %v1180, %v1181
    %v1183 = vrot.slane %v1006, 4
    %v1184 = vadd.f32 %v1006, %v1183
    %v1185 = vrot.slane %v1184, 2
    %v1186 = vadd.f32 %v1184, %v1185
    %v1187 = vrot.slane %v1186, 1
    %v1188 = vadd.f32 %v1186, %v1187
    %v1189 = vrot.slane %v1007, 4
    %v1190 = vadd.f32 %v1007, %v1189
    %v1191 = vrot.slane %v1190, 2
    %v1192 = vadd.f32 %v1190, %v1191
    %v1193 = vrot.slane %v1192, 1
    %v1194 = vadd.f32 %v1192, %v1193
    %v1195 = vrot.slane %v1008, 4
    %v1196 = vadd.f32 %v1008, %v1195
    %v1197 = vrot.slane %v1196, 2
    %v1198 = vadd.f32 %v1196, %v1197
    %v1199 = vrot.slane %v1198, 1
    %v1200 = vadd.f32 %v1198, %v1199
    %v1201 = vrcp.pop 8.0
    %v1202 = vmul.f32 8.0, %v1201
    %v1203 = vsub.f32 1.0, %v1202
    %v1204 = vmul.f32 %v1201, %v1203
    %v1205 = vadd.f32 %v1201, %v1204
    %vm1206 = vweird.f32 %v1201
    %v1207 = vsel %vm1206, %v1201, %v1205
    %v1208 = vmul.f32 %v1014, %v1207
    %v1209 = vmul.f32 %v1020, %v1207
    %v1210 = vmul.f32 %v1026, %v1207
    %v1211 = vmul.f32 %v1032, %v1207
    %v1212 = vmul.f32 %v1038, %v1207
    %v1213 = vmul.f32 %v1044, %v1207
    %v1214 = vmul.f32 %v1050, %v1207
    %v1215 = vmul.f32 %v1056, %v1207
    %v1216 = vmul.f32 %v1062, %v1207
    %v1217 = vmul.f32 %v1068, %v1207
    %v1218 = vmul.f32 %v1074, %v1207
    %v1219 = vmul.f32 %v1080, %v1207
    %v1220 = vmul.f32 %v1086, %v1207
    %v1221 = vmul.f32 %v1092, %v1207
    %v1222 = vmul.f32 %v1098, %v1207
    %v1223 = vmul.f32 %v1104, %v1207
    %v1224 = vmul.f32 %v1110, %v1207
    %v1225 = vmul.f32 %v1116, %v1207
    %v1226 = vmul.f32 %v1122, %v1207
    %v1227 = vmul.f32 %v1128, %v1207
    %v1228 = vmul.f32 %v1134, %v1207
    %v1229 = vmul.f32 %v1140, %v1207
    %v1230 = vmul.f32 %v1146, %v1207
    %v1231 = vmul.f32 %v1152, %v1207
    %v1232 = vmul.f32 %v1158, %v1207
    %v1233 = vmul.f32 %v1164, %v1207
    %v1234 = vmul.f32 %v1170, %v1207
    %v1235 = vmul.f32 %v1176, %v1207
    %v1236 = vmul.f32 %v1182, %v1207
    %v1237 = vmul.f32 %v1188, %v1207
    %v1238 = vmul.f32 %v1194, %v1207
    %v1239 = vmul.f32 %v1200, %v1207
    %vm1272 = vcmask 1041409
    %v1273 = vsel %vm1272, %v1212, %v1208
    %vm1274 = vcmask 1042434
    %v1275 = vsel %vm1274, %v1216, %v1273
    %vm1276 = vcmask 1043459
    %v1277 = vsel %vm1276, %v1220, %v1275
    %vm1278 = vcmask 1044484
    %v1279 = vsel %vm1278, %v1224, %v1277
    %vm1280 = vcmask 1045509
    %v1281 = vsel %vm1280, %v1228, %v1279
    %vm1282 = vcmask 1046534
    %v1283 = vsel %vm1282, %v1232, %v1281
    %vm1284 = vcmask 1047559
    %v1285 = vsel %vm1284, %v1236, %v1283
    %v1286 = vsel %vm1272, %v1213, %v1209
    %v1287 = vsel %vm1274, %v1217, %v1286
    %v1288 = vsel %vm1276, %v1221, %v1287
    %v1289 = vsel %vm1278, %v1225, %v1288
    %v1290 = vsel %vm1280, %v1229, %v1289
    %v1291 = vsel %vm1282, %v1233, %v1290
    %v1292 = vsel %vm1284, %v1237, %v1291
    %v1293 = vsel %vm1272, %v1214, %v1210
    %v1294 = vsel %vm1274, %v1218, %v1293
    %v1295 = vsel %vm1276, %v1222, %v1294
    %v1296 = vsel %vm1278, %v1226, %v1295
    %v1297 = vsel %vm1280, %v1230, %v1296
    %v1298 = vsel %vm1282, %v1234, %v1297
    %v1299 = vsel %vm1284, %v1238, %v1298
    %v1300 = vsel %vm1272, %v1215, %v1211
    %v1301 = vsel %vm1274, %v1219, %v1300
    %v1302 = vsel %vm1276, %v1223, %v1301
    %v1303 = vsel %vm1278, %v1227, %v1302
    %v1304 = vsel %vm1280, %v1231, %v1303
    %v1305 = vsel %vm1282, %v1235, %v1304
    %v1306 = vsel %vm1284, %v1239, %v1305
    %v1343 = vsel %vm1272, %v589, %v585
    %v1344 = vsel %vm1274, %v593, %v1343
    %v1345 = vsel %vm1276, %v597, %v1344
    %v1346 = vsel %vm1278, %v601, %v1345
    %v1347 = vsel %vm1280, %v605, %v1346
    %v1348 = vsel %vm1282, %v609, %v1347
    %v1349 = vsel %vm1284, %v613, %v1348
    %v1350 = vsel %vm1272, %v590, %v586
    %v1351 = vsel %vm1274, %v594, %v1350
    %v1352 = vsel %vm1276, %v598, %v1351
    %v1353 = vsel %vm1278, %v602, %v1352
    %v1354 = vsel %vm1280, %v606, %v1353
    %v1355 = vsel %vm1282, %v610, %v1354
    %v1356 = vsel %vm1284, %v614, %v1355
    %v1357 = vsel %vm1272, %v591, %v587
    %v1358 = vsel %vm1274, %v595, %v1357
    %v1359 = vsel %vm1276, %v599, %v1358
    %v1360 = vsel %vm1278, %v603, %v1359
    %v1361 = vsel %vm1280, %v607, %v1360
    %v1362 = vsel %vm1282, %v611, %v1361
    %v1363 = vsel %vm1284, %v615, %v1362
    %v1364 = vsel %vm1272, %v592, %v588
    %v1365 = vsel %vm1274, %v596, %v1364
    %v1366 = vsel %vm1276, %v600, %v1365
    %v1367 = vsel %vm1278, %v604, %v1366
    %v1368 = vsel %vm1280, %v608, %v1367
    %v1369 = vsel %vm1282, %v612, %v1368
    %v1370 = vsel %vm1284, %v616, %v1369
    %v1407 = vsel %vm1272, %v949, %v945
    %v1408 = vsel %vm1274, %v953, %v1407
    %v1409 = vsel %vm1276, %v957, %v1408
    %v1410 = vsel %vm1278, %v961, %v1409
    %v1411 = vsel %vm1280, %v965, %v1410
    %v1412 = vsel %vm1282, %v969, %v1411
    %v1413 = vsel %vm1284, %v973, %v1412
    %v1414 = vsel %vm1272, %v950, %v946
    %v1415 = vsel %vm1274, %v954, %v1414
    %v1416 = vsel %vm1276, %v958, %v1415
    %v1417 = vsel %vm1278, %v962, %v1416
    %v1418 = vsel %vm1280, %v966, %v1417
    %v1419 = vsel %vm1282, %v970, %v1418
    %v1420 = vsel %vm1284, %v974, %v1419
    %v1421 = vsel %vm1272, %v951, %v947
    %v1422 = vsel %vm1274, %v955, %v1421
    %v1423 = vsel %vm1276, %v959, %v1422
    %v1424 = vsel %vm1278, %v963, %v1423
    %v1425 = vsel %vm1280, %v967, %v1424
    %v1426 = vsel %vm1282, %v971, %v1425
    %v1427 = vsel %vm1284, %v975, %v1426
    %v1428 = vsel %vm1272, %v952, %v948
    %v1429 = vsel %vm1274, %v956, %v1428
    %v1430 = vsel %vm1276, %v960, %v1429
    %v1431 = vsel %vm1278, %v964, %v1430
    %v1432 = vsel %vm1280, %v968, %v1431
    %v1433 = vsel %vm1282, %v972, %v1432
    %v1434 = vsel %vm1284, %v976, %v1433
    %v1439 = vpack.c.bf16 %v1285, %v1285
    %v1440 = vpack.c.bf16 %v1292, %v1292
    %v1441 = vpack.c.bf16 %v1299, %v1299
    %v1442 = vpack.c.bf16 %v1306, %v1306
    %v1443 = vpack.c.bf16 %v1349, %v1349
    %v1444 = vpack.c.bf16 %v1356, %v1356
    %v1445 = vpack.c.bf16 %v1363, %v1363
    %v1446 = vpack.c.bf16 %v1370, %v1370
    %v1447 = vpack.c.bf16 %v1413, %v1413
    %v1448 = vpack.c.bf16 %v1420, %v1420
    %v1449 = vpack.c.bf16 %v1427, %v1427
    %v1450 = vpack.c.bf16 %v1434, %v1434
    %v1451 = vld [vmem:[#allocation11] sm:$0xff]
    %v1452 = vld [vmem:[#allocation11 + $0x8] sm:$0xff]
    %v1453 = vld [vmem:[#allocation11 + $0x10] sm:$0xff]
    %v1454 = vld [vmem:[#allocation11 + $0x18] sm:$0xff]
    %v1455 = vld [vmem:[#allocation11 + $0x20] sm:$0xff]
    %v1456 = vld [vmem:[#allocation11 + $0x28] sm:$0xff]
    %v1457 = vld [vmem:[#allocation11 + $0x30] sm:$0xff]
    %v1458 = vld [vmem:[#allocation11 + $0x38] sm:$0xff]
    %v1459 = vld [vmem:[#allocation11 + $0x40] sm:$0xff]
    %v1460 = vld [vmem:[#allocation11 + $0x48] sm:$0xff]
    %v1461 = vld [vmem:[#allocation11 + $0x50] sm:$0xff]
    %v1462 = vld [vmem:[#allocation11 + $0x58] sm:$0xff]
    %v1463 = vld [vmem:[#allocation11 + $0x60] sm:$0xff]
    %v1464 = vld [vmem:[#allocation11 + $0x68] sm:$0xff]
    %v1465 = vld [vmem:[#allocation11 + $0x70] sm:$0xff]
    %v1466 = vld [vmem:[#allocation11 + $0x78] sm:$0xff]
    %v1467 = vld [vmem:[#allocation11 + $0x80] sm:$0xff]
    %v1468 = vld [vmem:[#allocation11 + $0x88] sm:$0xff]
    %v1469 = vld [vmem:[#allocation11 + $0x90] sm:$0xff]
    %v1470 = vld [vmem:[#allocation11 + $0x98] sm:$0xff]
    %v1471 = vld [vmem:[#allocation11 + $0xa0] sm:$0xff]
    %v1472 = vld [vmem:[#allocation11 + $0xa8] sm:$0xff]
    %v1473 = vld [vmem:[#allocation11 + $0xb0] sm:$0xff]
    %v1474 = vld [vmem:[#allocation11 + $0xb8] sm:$0xff]
    %v1475 = vld [vmem:[#allocation11 + $0xc0] sm:$0xff]
    %v1476 = vld [vmem:[#allocation11 + $0xc8] sm:$0xff]
    %v1477 = vld [vmem:[#allocation11 + $0xd0] sm:$0xff]
    %v1478 = vld [vmem:[#allocation11 + $0xd8] sm:$0xff]
    %v1479 = vld [vmem:[#allocation11 + $0xe0] sm:$0xff]
    %v1480 = vld [vmem:[#allocation11 + $0xe8] sm:$0xff]
    %v1481 = vld [vmem:[#allocation11 + $0xf0] sm:$0xff]
    %v1482 = vld [vmem:[#allocation11 + $0xf8] sm:$0xff]
    %v1483 = vld [vmem:[#allocation11 + $0x100] sm:$0xff]
    %v1484 = vld [vmem:[#allocation11 + $0x108] sm:$0xff]
    %v1485 = vld [vmem:[#allocation11 + $0x110] sm:$0xff]
    %v1486 = vld [vmem:[#allocation11 + $0x118] sm:$0xff]
    %v1487 = vld [vmem:[#allocation11 + $0x120] sm:$0xff]
    %v1488 = vld [vmem:[#allocation11 + $0x128] sm:$0xff]
    %v1489 = vld [vmem:[#allocation11 + $0x130] sm:$0xff]
    %v1490 = vld [vmem:[#allocation11 + $0x138] sm:$0xff]
    %v1491 = vld [vmem:[#allocation11 + $0x140] sm:$0xff]
    %v1492 = vld [vmem:[#allocation11 + $0x148] sm:$0xff]
    %v1493 = vld [vmem:[#allocation11 + $0x150] sm:$0xff]
    %v1494 = vld [vmem:[#allocation11 + $0x158] sm:$0xff]
    %v1495 = vld [vmem:[#allocation11 + $0x160] sm:$0xff]
    %v1496 = vld [vmem:[#allocation11 + $0x168] sm:$0xff]
    %v1497 = vld [vmem:[#allocation11 + $0x170] sm:$0xff]
    %v1498 = vld [vmem:[#allocation11 + $0x178] sm:$0xff]
    %v1499 = vld [vmem:[#allocation11 + $0x180] sm:$0xff]
    %v1500 = vld [vmem:[#allocation11 + $0x188] sm:$0xff]
    %v1501 = vld [vmem:[#allocation11 + $0x190] sm:$0xff]
    %v1502 = vld [vmem:[#allocation11 + $0x198] sm:$0xff]
    %v1503 = vld [vmem:[#allocation11 + $0x1a0] sm:$0xff]
    %v1504 = vld [vmem:[#allocation11 + $0x1a8] sm:$0xff]
    %v1505 = vld [vmem:[#allocation11 + $0x1b0] sm:$0xff]
    %v1506 = vld [vmem:[#allocation11 + $0x1b8] sm:$0xff]
    %v1507 = vld [vmem:[#allocation11 + $0x1c0] sm:$0xff]
    %v1508 = vld [vmem:[#allocation11 + $0x1c8] sm:$0xff]
    %v1509 = vld [vmem:[#allocation11 + $0x1d0] sm:$0xff]
    %v1510 = vld [vmem:[#allocation11 + $0x1d8] sm:$0xff]
    %v1511 = vld [vmem:[#allocation11 + $0x1e0] sm:$0xff]
    %v1512 = vld [vmem:[#allocation11 + $0x1e8] sm:$0xff]
    %v1513 = vld [vmem:[#allocation11 + $0x1f0] sm:$0xff]
    %v1514 = vld [vmem:[#allocation11 + $0x1f8] sm:$0xff]
    %v1515 = vld [vmem:[#allocation11 + $0x200] sm:$0xff]
    %v1516 = vld [vmem:[#allocation11 + $0x208] sm:$0xff]
    %v1517 = vld [vmem:[#allocation11 + $0x210] sm:$0xff]
    %v1518 = vld [vmem:[#allocation11 + $0x218] sm:$0xff]
    %v1519 = vld [vmem:[#allocation11 + $0x220] sm:$0xff]
    %v1520 = vld [vmem:[#allocation11 + $0x228] sm:$0xff]
    %v1521 = vld [vmem:[#allocation11 + $0x230] sm:$0xff]
    %v1522 = vld [vmem:[#allocation11 + $0x238] sm:$0xff]
    %v1523 = vld [vmem:[#allocation11 + $0x240] sm:$0xff]
    %v1524 = vld [vmem:[#allocation11 + $0x248] sm:$0xff]
    %v1525 = vld [vmem:[#allocation11 + $0x250] sm:$0xff]
    %v1526 = vld [vmem:[#allocation11 + $0x258] sm:$0xff]
    %v1527 = vld [vmem:[#allocation11 + $0x260] sm:$0xff]
    %v1528 = vld [vmem:[#allocation11 + $0x268] sm:$0xff]
    %v1529 = vld [vmem:[#allocation11 + $0x270] sm:$0xff]
    %v1530 = vld [vmem:[#allocation11 + $0x278] sm:$0xff]
    %v1531 = vld [vmem:[#allocation11 + $0x280] sm:$0xff]
    %v1532 = vld [vmem:[#allocation11 + $0x288] sm:$0xff]
    %v1533 = vld [vmem:[#allocation11 + $0x290] sm:$0xff]
    %v1534 = vld [vmem:[#allocation11 + $0x298] sm:$0xff]
    %v1535 = vld [vmem:[#allocation11 + $0x2a0] sm:$0xff]
    %v1536 = vld [vmem:[#allocation11 + $0x2a8] sm:$0xff]
    %v1537 = vld [vmem:[#allocation11 + $0x2b0] sm:$0xff]
    %v1538 = vld [vmem:[#allocation11 + $0x2b8] sm:$0xff]
    %v1539 = vld [vmem:[#allocation11 + $0x2c0] sm:$0xff]
    %v1540 = vld [vmem:[#allocation11 + $0x2c8] sm:$0xff]
    %v1541 = vld [vmem:[#allocation11 + $0x2d0] sm:$0xff]
    %v1542 = vld [vmem:[#allocation11 + $0x2d8] sm:$0xff]
    %v1543 = vld [vmem:[#allocation11 + $0x2e0] sm:$0xff]
    %v1544 = vld [vmem:[#allocation11 + $0x2e8] sm:$0xff]
    %v1545 = vld [vmem:[#allocation11 + $0x2f0] sm:$0xff]
    %v1546 = vld [vmem:[#allocation11 + $0x2f8] sm:$0xff]
    %v1547 = vld [vmem:[#allocation11 + $0x300] sm:$0xff]
    %v1548 = vld [vmem:[#allocation11 + $0x308] sm:$0xff]
    %v1549 = vld [vmem:[#allocation11 + $0x310] sm:$0xff]
    %v1550 = vld [vmem:[#allocation11 + $0x318] sm:$0xff]
    %v1551 = vld [vmem:[#allocation11 + $0x320] sm:$0xff]
    %v1552 = vld [vmem:[#allocation11 + $0x328] sm:$0xff]
    %v1553 = vld [vmem:[#allocation11 + $0x330] sm:$0xff]
    %v1554 = vld [vmem:[#allocation11 + $0x338] sm:$0xff]
    %v1555 = vld [vmem:[#allocation11 + $0x340] sm:$0xff]
    %v1556 = vld [vmem:[#allocation11 + $0x348] sm:$0xff]
    %v1557 = vld [vmem:[#allocation11 + $0x350] sm:$0xff]
    %v1558 = vld [vmem:[#allocation11 + $0x358] sm:$0xff]
    %v1559 = vld [vmem:[#allocation11 + $0x360] sm:$0xff]
    %v1560 = vld [vmem:[#allocation11 + $0x368] sm:$0xff]
    %v1561 = vld [vmem:[#allocation11 + $0x370] sm:$0xff]
    %v1562 = vld [vmem:[#allocation11 + $0x378] sm:$0xff]
    %v1563 = vld [vmem:[#allocation11 + $0x380] sm:$0xff]
    %v1564 = vld [vmem:[#allocation11 + $0x388] sm:$0xff]
    %v1565 = vld [vmem:[#allocation11 + $0x390] sm:$0xff]
    %v1566 = vld [vmem:[#allocation11 + $0x398] sm:$0xff]
    %v1567 = vld [vmem:[#allocation11 + $0x3a0] sm:$0xff]
    %v1568 = vld [vmem:[#allocation11 + $0x3a8] sm:$0xff]
    %v1569 = vld [vmem:[#allocation11 + $0x3b0] sm:$0xff]
    %v1570 = vld [vmem:[#allocation11 + $0x3b8] sm:$0xff]
    %v1571 = vld [vmem:[#allocation11 + $0x3c0] sm:$0xff]
    %v1572 = vld [vmem:[#allocation11 + $0x3c8] sm:$0xff]
    %v1573 = vld [vmem:[#allocation11 + $0x3d0] sm:$0xff]
    %v1574 = vld [vmem:[#allocation11 + $0x3d8] sm:$0xff]
    %v1575 = vld [vmem:[#allocation11 + $0x3e0] sm:$0xff]
    %v1576 = vld [vmem:[#allocation11 + $0x3e8] sm:$0xff]
    %v1577 = vld [vmem:[#allocation11 + $0x3f0] sm:$0xff]
    %v1578 = vld [vmem:[#allocation11 + $0x3f8] sm:$0xff]
    %v1579 = vld [vmem:[#allocation11 + $0x400] sm:$0xff]
    %v1580 = vld [vmem:[#allocation11 + $0x408] sm:$0xff]
    %v1581 = vld [vmem:[#allocation11 + $0x410] sm:$0xff]
    %v1582 = vld [vmem:[#allocation11 + $0x418] sm:$0xff]
    %v1583 = vld [vmem:[#allocation11 + $0x420] sm:$0xff]
    %v1584 = vld [vmem:[#allocation11 + $0x428] sm:$0xff]
    %v1585 = vld [vmem:[#allocation11 + $0x430] sm:$0xff]
    %v1586 = vld [vmem:[#allocation11 + $0x438] sm:$0xff]
    %v1587 = vld [vmem:[#allocation11 + $0x440] sm:$0xff]
    %v1588 = vld [vmem:[#allocation11 + $0x448] sm:$0xff]
    %v1589 = vld [vmem:[#allocation11 + $0x450] sm:$0xff]
    %v1590 = vld [vmem:[#allocation11 + $0x458] sm:$0xff]
    %v1591 = vld [vmem:[#allocation11 + $0x460] sm:$0xff]
    %v1592 = vld [vmem:[#allocation11 + $0x468] sm:$0xff]
    %v1593 = vld [vmem:[#allocation11 + $0x470] sm:$0xff]
    %v1594 = vld [vmem:[#allocation11 + $0x478] sm:$0xff]
    %v1595 = vld [vmem:[#allocation11 + $0x480] sm:$0xff]
    %v1596 = vld [vmem:[#allocation11 + $0x488] sm:$0xff]
    %v1597 = vld [vmem:[#allocation11 + $0x490] sm:$0xff]
    %v1598 = vld [vmem:[#allocation11 + $0x498] sm:$0xff]
    %v1599 = vld [vmem:[#allocation11 + $0x4a0] sm:$0xff]
    %v1600 = vld [vmem:[#allocation11 + $0x4a8] sm:$0xff]
    %v1601 = vld [vmem:[#allocation11 + $0x4b0] sm:$0xff]
    %v1602 = vld [vmem:[#allocation11 + $0x4b8] sm:$0xff]
    %v1603 = vld [vmem:[#allocation11 + $0x4c0] sm:$0xff]
    %v1604 = vld [vmem:[#allocation11 + $0x4c8] sm:$0xff]
    %v1605 = vld [vmem:[#allocation11 + $0x4d0] sm:$0xff]
    %v1606 = vld [vmem:[#allocation11 + $0x4d8] sm:$0xff]
    %v1607 = vld [vmem:[#allocation11 + $0x4e0] sm:$0xff]
    %v1608 = vld [vmem:[#allocation11 + $0x4e8] sm:$0xff]
    %v1609 = vld [vmem:[#allocation11 + $0x4f0] sm:$0xff]
    %v1610 = vld [vmem:[#allocation11 + $0x4f8] sm:$0xff]
    %v1611 = vld [vmem:[#allocation11 + $0x500] sm:$0xff]
    %v1612 = vld [vmem:[#allocation11 + $0x508] sm:$0xff]
    %v1613 = vld [vmem:[#allocation11 + $0x510] sm:$0xff]
    %v1614 = vld [vmem:[#allocation11 + $0x518] sm:$0xff]
    %v1615 = vld [vmem:[#allocation11 + $0x520] sm:$0xff]
    %v1616 = vld [vmem:[#allocation11 + $0x528] sm:$0xff]
    %v1617 = vld [vmem:[#allocation11 + $0x530] sm:$0xff]
    %v1618 = vld [vmem:[#allocation11 + $0x538] sm:$0xff]
    %v1619 = vld [vmem:[#allocation11 + $0x540] sm:$0xff]
    %v1620 = vld [vmem:[#allocation11 + $0x548] sm:$0xff]
    %v1621 = vld [vmem:[#allocation11 + $0x550] sm:$0xff]
    %v1622 = vld [vmem:[#allocation11 + $0x558] sm:$0xff]
    %v1623 = vld [vmem:[#allocation11 + $0x560] sm:$0xff]
    %v1624 = vld [vmem:[#allocation11 + $0x568] sm:$0xff]
    %v1625 = vld [vmem:[#allocation11 + $0x570] sm:$0xff]
    %v1626 = vld [vmem:[#allocation11 + $0x578] sm:$0xff]
    %v1627 = vld [vmem:[#allocation11 + $0x580] sm:$0xff]
    %v1628 = vld [vmem:[#allocation11 + $0x588] sm:$0xff]
    %v1629 = vld [vmem:[#allocation11 + $0x590] sm:$0xff]
    %v1630 = vld [vmem:[#allocation11 + $0x598] sm:$0xff]
    %v1631 = vld [vmem:[#allocation11 + $0x5a0] sm:$0xff]
    %v1632 = vld [vmem:[#allocation11 + $0x5a8] sm:$0xff]
    %v1633 = vld [vmem:[#allocation11 + $0x5b0] sm:$0xff]
    %v1634 = vld [vmem:[#allocation11 + $0x5b8] sm:$0xff]
    %v1635 = vld [vmem:[#allocation11 + $0x5c0] sm:$0xff]
    %v1636 = vld [vmem:[#allocation11 + $0x5c8] sm:$0xff]
    %v1637 = vld [vmem:[#allocation11 + $0x5d0] sm:$0xff]
    %v1638 = vld [vmem:[#allocation11 + $0x5d8] sm:$0xff]
    %v1639 = vld [vmem:[#allocation11 + $0x5e0] sm:$0xff]
    %v1640 = vld [vmem:[#allocation11 + $0x5e8] sm:$0xff]
    %v1641 = vld [vmem:[#allocation11 + $0x5f0] sm:$0xff]
    %v1642 = vld [vmem:[#allocation11 + $0x5f8] sm:$0xff]
    %v1643 = vld [vmem:[#allocation13] sm:$0x3]
    %v1645 = vperm.slane %v1643, 0
    %v1646 = vperm.slane %v1643, 1
    %v1841 = vunpack.c.l.b16 %v1451
    %v1842 = vunpack.c.h.b16 %v1451
    %v1843 = vunpack.c.l.b16 %v1452
    %v1844 = vunpack.c.h.b16 %v1452
    %v1845 = vunpack.c.l.b16 %v1453
    %v1846 = vunpack.c.h.b16 %v1453
    %v1847 = vunpack.c.l.b16 %v1454
    %v1848 = vunpack.c.h.b16 %v1454
    %v1849 = vunpack.c.l.b16 %v1455
    %v1850 = vunpack.c.h.b16 %v1455
    %v1851 = vunpack.c.l.b16 %v1456
    %v1852 = vunpack.c.h.b16 %v1456
    %v1853 = vunpack.c.l.b16 %v1457
    %v1854 = vunpack.c.h.b16 %v1457
    %v1855 = vunpack.c.l.b16 %v1458
    %v1856 = vunpack.c.h.b16 %v1458
    %v1857 = vunpack.c.l.b16 %v1459
    %v1858 = vunpack.c.h.b16 %v1459
    %v1859 = vunpack.c.l.b16 %v1460
    %v1860 = vunpack.c.h.b16 %v1460
    %v1861 = vunpack.c.l.b16 %v1461
    %v1862 = vunpack.c.h.b16 %v1461
    %v1863 = vunpack.c.l.b16 %v1462
    %v1864 = vunpack.c.h.b16 %v1462
    %v1865 = vunpack.c.l.b16 %v1463
    %v1866 = vunpack.c.h.b16 %v1463
    %v1867 = vunpack.c.l.b16 %v1464
    %v1868 = vunpack.c.h.b16 %v1464
    %v1869 = vunpack.c.l.b16 %v1465
    %v1870 = vunpack.c.h.b16 %v1465
    %v1871 = vunpack.c.l.b16 %v1466
    %v1872 = vunpack.c.h.b16 %v1466
    %v1873 = vunpack.c.l.b16 %v1467
    %v1874 = vunpack.c.h.b16 %v1467
    %v1875 = vunpack.c.l.b16 %v1468
    %v1876 = vunpack.c.h.b16 %v1468
    %v1877 = vunpack.c.l.b16 %v1469
    %v1878 = vunpack.c.h.b16 %v1469
    %v1879 = vunpack.c.l.b16 %v1470
    %v1880 = vunpack.c.h.b16 %v1470
    %v1881 = vunpack.c.l.b16 %v1471
    %v1882 = vunpack.c.h.b16 %v1471
    %v1883 = vunpack.c.l.b16 %v1472
    %v1884 = vunpack.c.h.b16 %v1472
    %v1885 = vunpack.c.l.b16 %v1473
    %v1886 = vunpack.c.h.b16 %v1473
    %v1887 = vunpack.c.l.b16 %v1474
    %v1888 = vunpack.c.h.b16 %v1474
    %v1889 = vunpack.c.l.b16 %v1475
    %v1890 = vunpack.c.h.b16 %v1475
    %v1891 = vunpack.c.l.b16 %v1476
    %v1892 = vunpack.c.h.b16 %v1476
    %v1893 = vunpack.c.l.b16 %v1477
    %v1894 = vunpack.c.h.b16 %v1477
    %v1895 = vunpack.c.l.b16 %v1478
    %v1896 = vunpack.c.h.b16 %v1478
    %v1897 = vunpack.c.l.b16 %v1479
    %v1898 = vunpack.c.h.b16 %v1479
    %v1899 = vunpack.c.l.b16 %v1480
    %v1900 = vunpack.c.h.b16 %v1480
    %v1901 = vunpack.c.l.b16 %v1481
    %v1902 = vunpack.c.h.b16 %v1481
    %v1903 = vunpack.c.l.b16 %v1482
    %v1904 = vunpack.c.h.b16 %v1482
    %v1905 = vunpack.c.l.b16 %v1483
    %v1906 = vunpack.c.h.b16 %v1483
    %v1907 = vunpack.c.l.b16 %v1484
    %v1908 = vunpack.c.h.b16 %v1484
    %v1909 = vunpack.c.l.b16 %v1485
    %v1910 = vunpack.c.h.b16 %v1485
    %v1911 = vunpack.c.l.b16 %v1486
    %v1912 = vunpack.c.h.b16 %v1486
    %v1913 = vunpack.c.l.b16 %v1487
    %v1914 = vunpack.c.h.b16 %v1487
    %v1915 = vunpack.c.l.b16 %v1488
    %v1916 = vunpack.c.h.b16 %v1488
    %v1917 = vunpack.c.l.b16 %v1489
    %v1918 = vunpack.c.h.b16 %v1489
    %v1919 = vunpack.c.l.b16 %v1490
    %v1920 = vunpack.c.h.b16 %v1490
    %v1921 = vunpack.c.l.b16 %v1491
    %v1922 = vunpack.c.h.b16 %v1491
    %v1923 = vunpack.c.l.b16 %v1492
    %v1924 = vunpack.c.h.b16 %v1492
    %v1925 = vunpack.c.l.b16 %v1493
    %v1926 = vunpack.c.h.b16 %v1493
    %v1927 = vunpack.c.l.b16 %v1494
    %v1928 = vunpack.c.h.b16 %v1494
    %v1929 = vunpack.c.l.b16 %v1495
    %v1930 = vunpack.c.h.b16 %v1495
    %v1931 = vunpack.c.l.b16 %v1496
    %v1932 = vunpack.c.h.b16 %v1496
    %v1933 = vunpack.c.l.b16 %v1497
    %v1934 = vunpack.c.h.b16 %v1497
    %v1935 = vunpack.c.l.b16 %v1498
    %v1936 = vunpack.c.h.b16 %v1498
    %v1937 = vunpack.c.l.b16 %v1499
    %v1938 = vunpack.c.h.b16 %v1499
    %v1939 = vunpack.c.l.b16 %v1500
    %v1940 = vunpack.c.h.b16 %v1500
    %v1941 = vunpack.c.l.b16 %v1501
    %v1942 = vunpack.c.h.b16 %v1501
    %v1943 = vunpack.c.l.b16 %v1502
    %v1944 = vunpack.c.h.b16 %v1502
    %v1945 = vunpack.c.l.b16 %v1503
    %v1946 = vunpack.c.h.b16 %v1503
    %v1947 = vunpack.c.l.b16 %v1504
    %v1948 = vunpack.c.h.b16 %v1504
    %v1949 = vunpack.c.l.b16 %v1505
    %v1950 = vunpack.c.h.b16 %v1505
    %v1951 = vunpack.c.l.b16 %v1506
    %v1952 = vunpack.c.h.b16 %v1506
    %v1953 = vunpack.c.l.b16 %v1507
    %v1954 = vunpack.c.h.b16 %v1507
    %v1955 = vunpack.c.l.b16 %v1508
    %v1956 = vunpack.c.h.b16 %v1508
    %v1957 = vunpack.c.l.b16 %v1509
    %v1958 = vunpack.c.h.b16 %v1509
    %v1959 = vunpack.c.l.b16 %v1510
    %v1960 = vunpack.c.h.b16 %v1510
    %v1961 = vunpack.c.l.b16 %v1511
    %v1962 = vunpack.c.h.b16 %v1511
    %v1963 = vunpack.c.l.b16 %v1512
    %v1964 = vunpack.c.h.b16 %v1512
    %v1965 = vunpack.c.l.b16 %v1513
    %v1966 = vunpack.c.h.b16 %v1513
    %v1967 = vunpack.c.l.b16 %v1514
    %v1968 = vunpack.c.h.b16 %v1514
    %v1969 = vunpack.c.l.b16 %v1515
    %v1970 = vunpack.c.h.b16 %v1515
    %v1971 = vunpack.c.l.b16 %v1516
    %v1972 = vunpack.c.h.b16 %v1516
    %v1973 = vunpack.c.l.b16 %v1517
    %v1974 = vunpack.c.h.b16 %v1517
    %v1975 = vunpack.c.l.b16 %v1518
    %v1976 = vunpack.c.h.b16 %v1518
    %v1977 = vunpack.c.l.b16 %v1519
    %v1978 = vunpack.c.h.b16 %v1519
    %v1979 = vunpack.c.l.b16 %v1520
    %v1980 = vunpack.c.h.b16 %v1520
    %v1981 = vunpack.c.l.b16 %v1521
    %v1982 = vunpack.c.h.b16 %v1521
    %v1983 = vunpack.c.l.b16 %v1522
    %v1984 = vunpack.c.h.b16 %v1522
    %v1985 = vunpack.c.l.b16 %v1523
    %v1986 = vunpack.c.h.b16 %v1523
    %v1987 = vunpack.c.l.b16 %v1524
    %v1988 = vunpack.c.h.b16 %v1524
    %v1989 = vunpack.c.l.b16 %v1525
    %v1990 = vunpack.c.h.b16 %v1525
    %v1991 = vunpack.c.l.b16 %v1526
    %v1992 = vunpack.c.h.b16 %v1526
    %v1993 = vunpack.c.l.b16 %v1527
    %v1994 = vunpack.c.h.b16 %v1527
    %v1995 = vunpack.c.l.b16 %v1528
    %v1996 = vunpack.c.h.b16 %v1528
    %v1997 = vunpack.c.l.b16 %v1529
    %v1998 = vunpack.c.h.b16 %v1529
    %v1999 = vunpack.c.l.b16 %v1530
    %v2000 = vunpack.c.h.b16 %v1530
    %v2001 = vunpack.c.l.b16 %v1531
    %v2002 = vunpack.c.h.b16 %v1531
    %v2003 = vunpack.c.l.b16 %v1532
    %v2004 = vunpack.c.h.b16 %v1532
    %v2005 = vunpack.c.l.b16 %v1533
    %v2006 = vunpack.c.h.b16 %v1533
    %v2007 = vunpack.c.l.b16 %v1534
    %v2008 = vunpack.c.h.b16 %v1534
    %v2009 = vunpack.c.l.b16 %v1535
    %v2010 = vunpack.c.h.b16 %v1535
    %v2011 = vunpack.c.l.b16 %v1536
    %v2012 = vunpack.c.h.b16 %v1536
    %v2013 = vunpack.c.l.b16 %v1537
    %v2014 = vunpack.c.h.b16 %v1537
    %v2015 = vunpack.c.l.b16 %v1538
    %v2016 = vunpack.c.h.b16 %v1538
    %v2017 = vunpack.c.l.b16 %v1539
    %v2018 = vunpack.c.h.b16 %v1539
    %v2019 = vunpack.c.l.b16 %v1540
    %v2020 = vunpack.c.h.b16 %v1540
    %v2021 = vunpack.c.l.b16 %v1541
    %v2022 = vunpack.c.h.b16 %v1541
    %v2023 = vunpack.c.l.b16 %v1542
    %v2024 = vunpack.c.h.b16 %v1542
    %v2025 = vunpack.c.l.b16 %v1543
    %v2026 = vunpack.c.h.b16 %v1543
    %v2027 = vunpack.c.l.b16 %v1544
    %v2028 = vunpack.c.h.b16 %v1544
    %v2029 = vunpack.c.l.b16 %v1545
    %v2030 = vunpack.c.h.b16 %v1545
    %v2031 = vunpack.c.l.b16 %v1546
    %v2032 = vunpack.c.h.b16 %v1546
    %v2033 = vunpack.c.l.b16 %v1547
    %v2034 = vunpack.c.h.b16 %v1547
    %v2035 = vunpack.c.l.b16 %v1548
    %v2036 = vunpack.c.h.b16 %v1548
    %v2037 = vunpack.c.l.b16 %v1549
    %v2038 = vunpack.c.h.b16 %v1549
    %v2039 = vunpack.c.l.b16 %v1550
    %v2040 = vunpack.c.h.b16 %v1550
    %v2041 = vunpack.c.l.b16 %v1551
    %v2042 = vunpack.c.h.b16 %v1551
    %v2043 = vunpack.c.l.b16 %v1552
    %v2044 = vunpack.c.h.b16 %v1552
    %v2045 = vunpack.c.l.b16 %v1553
    %v2046 = vunpack.c.h.b16 %v1553
    %v2047 = vunpack.c.l.b16 %v1554
    %v2048 = vunpack.c.h.b16 %v1554
    %v2049 = vunpack.c.l.b16 %v1555
    %v2050 = vunpack.c.h.b16 %v1555
    %v2051 = vunpack.c.l.b16 %v1556
    %v2052 = vunpack.c.h.b16 %v1556
    %v2053 = vunpack.c.l.b16 %v1557
    %v2054 = vunpack.c.h.b16 %v1557
    %v2055 = vunpack.c.l.b16 %v1558
    %v2056 = vunpack.c.h.b16 %v1558
    %v2057 = vunpack.c.l.b16 %v1559
    %v2058 = vunpack.c.h.b16 %v1559
    %v2059 = vunpack.c.l.b16 %v1560
    %v2060 = vunpack.c.h.b16 %v1560
    %v2061 = vunpack.c.l.b16 %v1561
    %v2062 = vunpack.c.h.b16 %v1561
    %v2063 = vunpack.c.l.b16 %v1562
    %v2064 = vunpack.c.h.b16 %v1562
    %v2065 = vunpack.c.l.b16 %v1563
    %v2066 = vunpack.c.h.b16 %v1563
    %v2067 = vunpack.c.l.b16 %v1564
    %v2068 = vunpack.c.h.b16 %v1564
    %v2069 = vunpack.c.l.b16 %v1565
    %v2070 = vunpack.c.h.b16 %v1565
    %v2071 = vunpack.c.l.b16 %v1566
    %v2072 = vunpack.c.h.b16 %v1566
    %v2073 = vunpack.c.l.b16 %v1567
    %v2074 = vunpack.c.h.b16 %v1567
    %v2075 = vunpack.c.l.b16 %v1568
    %v2076 = vunpack.c.h.b16 %v1568
    %v2077 = vunpack.c.l.b16 %v1569
    %v2078 = vunpack.c.h.b16 %v1569
    %v2079 = vunpack.c.l.b16 %v1570
    %v2080 = vunpack.c.h.b16 %v1570
    %v2081 = vunpack.c.l.b16 %v1571
    %v2082 = vunpack.c.h.b16 %v1571
    %v2083 = vunpack.c.l.b16 %v1572
    %v2084 = vunpack.c.h.b16 %v1572
    %v2085 = vunpack.c.l.b16 %v1573
    %v2086 = vunpack.c.h.b16 %v1573
    %v2087 = vunpack.c.l.b16 %v1574
    %v2088 = vunpack.c.h.b16 %v1574
    %v2089 = vunpack.c.l.b16 %v1575
    %v2090 = vunpack.c.h.b16 %v1575
    %v2091 = vunpack.c.l.b16 %v1576
    %v2092 = vunpack.c.h.b16 %v1576
    %v2093 = vunpack.c.l.b16 %v1577
    %v2094 = vunpack.c.h.b16 %v1577
    %v2095 = vunpack.c.l.b16 %v1578
    %v2096 = vunpack.c.h.b16 %v1578
    %v2097 = vunpack.c.l.b16 %v1579
    %v2098 = vunpack.c.h.b16 %v1579
    %v2099 = vunpack.c.l.b16 %v1580
    %v2100 = vunpack.c.h.b16 %v1580
    %v2101 = vunpack.c.l.b16 %v1581
    %v2102 = vunpack.c.h.b16 %v1581
    %v2103 = vunpack.c.l.b16 %v1582
    %v2104 = vunpack.c.h.b16 %v1582
    %v2105 = vunpack.c.l.b16 %v1583
    %v2106 = vunpack.c.h.b16 %v1583
    %v2107 = vunpack.c.l.b16 %v1584
    %v2108 = vunpack.c.h.b16 %v1584
    %v2109 = vunpack.c.l.b16 %v1585
    %v2110 = vunpack.c.h.b16 %v1585
    %v2111 = vunpack.c.l.b16 %v1586
    %v2112 = vunpack.c.h.b16 %v1586
    %v2113 = vunpack.c.l.b16 %v1587
    %v2114 = vunpack.c.h.b16 %v1587
    %v2115 = vunpack.c.l.b16 %v1588
    %v2116 = vunpack.c.h.b16 %v1588
    %v2117 = vunpack.c.l.b16 %v1589
    %v2118 = vunpack.c.h.b16 %v1589
    %v2119 = vunpack.c.l.b16 %v1590
    %v2120 = vunpack.c.h.b16 %v1590
    %v2121 = vunpack.c.l.b16 %v1591
    %v2122 = vunpack.c.h.b16 %v1591
    %v2123 = vunpack.c.l.b16 %v1592
    %v2124 = vunpack.c.h.b16 %v1592
    %v2125 = vunpack.c.l.b16 %v1593
    %v2126 = vunpack.c.h.b16 %v1593
    %v2127 = vunpack.c.l.b16 %v1594
    %v2128 = vunpack.c.h.b16 %v1594
    %v2129 = vunpack.c.l.b16 %v1595
    %v2130 = vunpack.c.h.b16 %v1595
    %v2131 = vunpack.c.l.b16 %v1596
    %v2132 = vunpack.c.h.b16 %v1596
    %v2133 = vunpack.c.l.b16 %v1597
    %v2134 = vunpack.c.h.b16 %v1597
    %v2135 = vunpack.c.l.b16 %v1598
    %v2136 = vunpack.c.h.b16 %v1598
    %v2137 = vunpack.c.l.b16 %v1599
    %v2138 = vunpack.c.h.b16 %v1599
    %v2139 = vunpack.c.l.b16 %v1600
    %v2140 = vunpack.c.h.b16 %v1600
    %v2141 = vunpack.c.l.b16 %v1601
    %v2142 = vunpack.c.h.b16 %v1601
    %v2143 = vunpack.c.l.b16 %v1602
    %v2144 = vunpack.c.h.b16 %v1602
    %v2145 = vunpack.c.l.b16 %v1603
    %v2146 = vunpack.c.h.b16 %v1603
    %v2147 = vunpack.c.l.b16 %v1604
    %v2148 = vunpack.c.h.b16 %v1604
    %v2149 = vunpack.c.l.b16 %v1605
    %v2150 = vunpack.c.h.b16 %v1605
    %v2151 = vunpack.c.l.b16 %v1606
    %v2152 = vunpack.c.h.b16 %v1606
    %v2153 = vunpack.c.l.b16 %v1607
    %v2154 = vunpack.c.h.b16 %v1607
    %v2155 = vunpack.c.l.b16 %v1608
    %v2156 = vunpack.c.h.b16 %v1608
    %v2157 = vunpack.c.l.b16 %v1609
    %v2158 = vunpack.c.h.b16 %v1609
    %v2159 = vunpack.c.l.b16 %v1610
    %v2160 = vunpack.c.h.b16 %v1610
    %v2161 = vunpack.c.l.b16 %v1611
    %v2162 = vunpack.c.h.b16 %v1611
    %v2163 = vunpack.c.l.b16 %v1612
    %v2164 = vunpack.c.h.b16 %v1612
    %v2165 = vunpack.c.l.b16 %v1613
    %v2166 = vunpack.c.h.b16 %v1613
    %v2167 = vunpack.c.l.b16 %v1614
    %v2168 = vunpack.c.h.b16 %v1614
    %v2169 = vunpack.c.l.b16 %v1615
    %v2170 = vunpack.c.h.b16 %v1615
    %v2171 = vunpack.c.l.b16 %v1616
    %v2172 = vunpack.c.h.b16 %v1616
    %v2173 = vunpack.c.l.b16 %v1617
    %v2174 = vunpack.c.h.b16 %v1617
    %v2175 = vunpack.c.l.b16 %v1618
    %v2176 = vunpack.c.h.b16 %v1618
    %v2177 = vunpack.c.l.b16 %v1619
    %v2178 = vunpack.c.h.b16 %v1619
    %v2179 = vunpack.c.l.b16 %v1620
    %v2180 = vunpack.c.h.b16 %v1620
    %v2181 = vunpack.c.l.b16 %v1621
    %v2182 = vunpack.c.h.b16 %v1621
    %v2183 = vunpack.c.l.b16 %v1622
    %v2184 = vunpack.c.h.b16 %v1622
    %v2185 = vunpack.c.l.b16 %v1623
    %v2186 = vunpack.c.h.b16 %v1623
    %v2187 = vunpack.c.l.b16 %v1624
    %v2188 = vunpack.c.h.b16 %v1624
    %v2189 = vunpack.c.l.b16 %v1625
    %v2190 = vunpack.c.h.b16 %v1625
    %v2191 = vunpack.c.l.b16 %v1626
    %v2192 = vunpack.c.h.b16 %v1626
    %v2193 = vunpack.c.l.b16 %v1627
    %v2194 = vunpack.c.h.b16 %v1627
    %v2195 = vunpack.c.l.b16 %v1628
    %v2196 = vunpack.c.h.b16 %v1628
    %v2197 = vunpack.c.l.b16 %v1629
    %v2198 = vunpack.c.h.b16 %v1629
    %v2199 = vunpack.c.l.b16 %v1630
    %v2200 = vunpack.c.h.b16 %v1630
    %v2201 = vunpack.c.l.b16 %v1631
    %v2202 = vunpack.c.h.b16 %v1631
    %v2203 = vunpack.c.l.b16 %v1632
    %v2204 = vunpack.c.h.b16 %v1632
    %v2205 = vunpack.c.l.b16 %v1633
    %v2206 = vunpack.c.h.b16 %v1633
    %v2207 = vunpack.c.l.b16 %v1634
    %v2208 = vunpack.c.h.b16 %v1634
    %v2209 = vunpack.c.l.b16 %v1635
    %v2210 = vunpack.c.h.b16 %v1635
    %v2211 = vunpack.c.l.b16 %v1636
    %v2212 = vunpack.c.h.b16 %v1636
    %v2213 = vunpack.c.l.b16 %v1637
    %v2214 = vunpack.c.h.b16 %v1637
    %v2215 = vunpack.c.l.b16 %v1638
    %v2216 = vunpack.c.h.b16 %v1638
    %v2217 = vunpack.c.l.b16 %v1639
    %v2218 = vunpack.c.h.b16 %v1639
    %v2219 = vunpack.c.l.b16 %v1640
    %v2220 = vunpack.c.h.b16 %v1640
    %v2221 = vunpack.c.l.b16 %v1641
    %v2222 = vunpack.c.h.b16 %v1641
    %v2223 = vunpack.c.l.b16 %v1642
    %v2224 = vunpack.c.h.b16 %v1642
    %v2225 = vpack.c.b16 %v1843, %v1841
    %v2226 = vpack.c.b16 %v1844, %v1842
    %v2227 = vpack.c.b16 %v1847, %v1845
    %v2228 = vpack.c.b16 %v1848, %v1846
    %v2229 = vpack.c.b16 %v1851, %v1849
    %v2230 = vpack.c.b16 %v1852, %v1850
    %v2231 = vpack.c.b16 %v1855, %v1853
    %v2232 = vpack.c.b16 %v1856, %v1854
    %v2233 = vpack.c.b16 %v1859, %v1857
    %v2234 = vpack.c.b16 %v1860, %v1858
    %v2235 = vpack.c.b16 %v1863, %v1861
    %v2236 = vpack.c.b16 %v1864, %v1862
    %v2237 = vpack.c.b16 %v1867, %v1865
    %v2238 = vpack.c.b16 %v1868, %v1866
    %v2239 = vpack.c.b16 %v1871, %v1869
    %v2240 = vpack.c.b16 %v1872, %v1870
    %v2241 = vpack.c.b16 %v1875, %v1873
    %v2242 = vpack.c.b16 %v1876, %v1874
    %v2243 = vpack.c.b16 %v1879, %v1877
    %v2244 = vpack.c.b16 %v1880, %v1878
    %v2245 = vpack.c.b16 %v1883, %v1881
    %v2246 = vpack.c.b16 %v1884, %v1882
    %v2247 = vpack.c.b16 %v1887, %v1885
    %v2248 = vpack.c.b16 %v1888, %v1886
    %v2249 = vpack.c.b16 %v1891, %v1889
    %v2250 = vpack.c.b16 %v1892, %v1890
    %v2251 = vpack.c.b16 %v1895, %v1893
    %v2252 = vpack.c.b16 %v1896, %v1894
    %v2253 = vpack.c.b16 %v1899, %v1897
    %v2254 = vpack.c.b16 %v1900, %v1898
    %v2255 = vpack.c.b16 %v1903, %v1901
    %v2256 = vpack.c.b16 %v1904, %v1902
    %v2257 = vpack.c.b16 %v1907, %v1905
    %v2258 = vpack.c.b16 %v1908, %v1906
    %v2259 = vpack.c.b16 %v1911, %v1909
    %v2260 = vpack.c.b16 %v1912, %v1910
    %v2261 = vpack.c.b16 %v1915, %v1913
    %v2262 = vpack.c.b16 %v1916, %v1914
    %v2263 = vpack.c.b16 %v1919, %v1917
    %v2264 = vpack.c.b16 %v1920, %v1918
    %v2265 = vpack.c.b16 %v1923, %v1921
    %v2266 = vpack.c.b16 %v1924, %v1922
    %v2267 = vpack.c.b16 %v1927, %v1925
    %v2268 = vpack.c.b16 %v1928, %v1926
    %v2269 = vpack.c.b16 %v1931, %v1929
    %v2270 = vpack.c.b16 %v1932, %v1930
    %v2271 = vpack.c.b16 %v1935, %v1933
    %v2272 = vpack.c.b16 %v1936, %v1934
    %v2273 = vpack.c.b16 %v1939, %v1937
    %v2274 = vpack.c.b16 %v1940, %v1938
    %v2275 = vpack.c.b16 %v1943, %v1941
    %v2276 = vpack.c.b16 %v1944, %v1942
    %v2277 = vpack.c.b16 %v1947, %v1945
    %v2278 = vpack.c.b16 %v1948, %v1946
    %v2279 = vpack.c.b16 %v1951, %v1949
    %v2280 = vpack.c.b16 %v1952, %v1950
    %v2281 = vpack.c.b16 %v1955, %v1953
    %v2282 = vpack.c.b16 %v1956, %v1954
    %v2283 = vpack.c.b16 %v1959, %v1957
    %v2284 = vpack.c.b16 %v1960, %v1958
    %v2285 = vpack.c.b16 %v1963, %v1961
    %v2286 = vpack.c.b16 %v1964, %v1962
    %v2287 = vpack.c.b16 %v1967, %v1965
    %v2288 = vpack.c.b16 %v1968, %v1966
    %v2289 = vpack.c.b16 %v1971, %v1969
    %v2290 = vpack.c.b16 %v1972, %v1970
    %v2291 = vpack.c.b16 %v1975, %v1973
    %v2292 = vpack.c.b16 %v1976, %v1974
    %v2293 = vpack.c.b16 %v1979, %v1977
    %v2294 = vpack.c.b16 %v1980, %v1978
    %v2295 = vpack.c.b16 %v1983, %v1981
    %v2296 = vpack.c.b16 %v1984, %v1982
    %v2297 = vpack.c.b16 %v1987, %v1985
    %v2298 = vpack.c.b16 %v1988, %v1986
    %v2299 = vpack.c.b16 %v1991, %v1989
    %v2300 = vpack.c.b16 %v1992, %v1990
    %v2301 = vpack.c.b16 %v1995, %v1993
    %v2302 = vpack.c.b16 %v1996, %v1994
    %v2303 = vpack.c.b16 %v1999, %v1997
    %v2304 = vpack.c.b16 %v2000, %v1998
    %v2305 = vpack.c.b16 %v2003, %v2001
    %v2306 = vpack.c.b16 %v2004, %v2002
    %v2307 = vpack.c.b16 %v2007, %v2005
    %v2308 = vpack.c.b16 %v2008, %v2006
    %v2309 = vpack.c.b16 %v2011, %v2009
    %v2310 = vpack.c.b16 %v2012, %v2010
    %v2311 = vpack.c.b16 %v2015, %v2013
    %v2312 = vpack.c.b16 %v2016, %v2014
    %v2313 = vpack.c.b16 %v2019, %v2017
    %v2314 = vpack.c.b16 %v2020, %v2018
    %v2315 = vpack.c.b16 %v2023, %v2021
    %v2316 = vpack.c.b16 %v2024, %v2022
    %v2317 = vpack.c.b16 %v2027, %v2025
    %v2318 = vpack.c.b16 %v2028, %v2026
    %v2319 = vpack.c.b16 %v2031, %v2029
    %v2320 = vpack.c.b16 %v2032, %v2030
    %v2321 = vpack.c.b16 %v2035, %v2033
    %v2322 = vpack.c.b16 %v2036, %v2034
    %v2323 = vpack.c.b16 %v2039, %v2037
    %v2324 = vpack.c.b16 %v2040, %v2038
    %v2325 = vpack.c.b16 %v2043, %v2041
    %v2326 = vpack.c.b16 %v2044, %v2042
    %v2327 = vpack.c.b16 %v2047, %v2045
    %v2328 = vpack.c.b16 %v2048, %v2046
    %v2329 = vpack.c.b16 %v2051, %v2049
    %v2330 = vpack.c.b16 %v2052, %v2050
    %v2331 = vpack.c.b16 %v2055, %v2053
    %v2332 = vpack.c.b16 %v2056, %v2054
    %v2333 = vpack.c.b16 %v2059, %v2057
    %v2334 = vpack.c.b16 %v2060, %v2058
    %v2335 = vpack.c.b16 %v2063, %v2061
    %v2336 = vpack.c.b16 %v2064, %v2062
    %v2337 = vpack.c.b16 %v2067, %v2065
    %v2338 = vpack.c.b16 %v2068, %v2066
    %v2339 = vpack.c.b16 %v2071, %v2069
    %v2340 = vpack.c.b16 %v2072, %v2070
    %v2341 = vpack.c.b16 %v2075, %v2073
    %v2342 = vpack.c.b16 %v2076, %v2074
    %v2343 = vpack.c.b16 %v2079, %v2077
    %v2344 = vpack.c.b16 %v2080, %v2078
    %v2345 = vpack.c.b16 %v2083, %v2081
    %v2346 = vpack.c.b16 %v2084, %v2082
    %v2347 = vpack.c.b16 %v2087, %v2085
    %v2348 = vpack.c.b16 %v2088, %v2086
    %v2349 = vpack.c.b16 %v2091, %v2089
    %v2350 = vpack.c.b16 %v2092, %v2090
    %v2351 = vpack.c.b16 %v2095, %v2093
    %v2352 = vpack.c.b16 %v2096, %v2094
    %v2353 = vpack.c.b16 %v2099, %v2097
    %v2354 = vpack.c.b16 %v2100, %v2098
    %v2355 = vpack.c.b16 %v2103, %v2101
    %v2356 = vpack.c.b16 %v2104, %v2102
    %v2357 = vpack.c.b16 %v2107, %v2105
    %v2358 = vpack.c.b16 %v2108, %v2106
    %v2359 = vpack.c.b16 %v2111, %v2109
    %v2360 = vpack.c.b16 %v2112, %v2110
    %v2361 = vpack.c.b16 %v2115, %v2113
    %v2362 = vpack.c.b16 %v2116, %v2114
    %v2363 = vpack.c.b16 %v2119, %v2117
    %v2364 = vpack.c.b16 %v2120, %v2118
    %v2365 = vpack.c.b16 %v2123, %v2121
    %v2366 = vpack.c.b16 %v2124, %v2122
    %v2367 = vpack.c.b16 %v2127, %v2125
    %v2368 = vpack.c.b16 %v2128, %v2126
    %v2369 = vpack.c.b16 %v2131, %v2129
    %v2370 = vpack.c.b16 %v2132, %v2130
    %v2371 = vpack.c.b16 %v2135, %v2133
    %v2372 = vpack.c.b16 %v2136, %v2134
    %v2373 = vpack.c.b16 %v2139, %v2137
    %v2374 = vpack.c.b16 %v2140, %v2138
    %v2375 = vpack.c.b16 %v2143, %v2141
    %v2376 = vpack.c.b16 %v2144, %v2142
    %v2377 = vpack.c.b16 %v2147, %v2145
    %v2378 = vpack.c.b16 %v2148, %v2146
    %v2379 = vpack.c.b16 %v2151, %v2149
    %v2380 = vpack.c.b16 %v2152, %v2150
    %v2381 = vpack.c.b16 %v2155, %v2153
    %v2382 = vpack.c.b16 %v2156, %v2154
    %v2383 = vpack.c.b16 %v2159, %v2157
    %v2384 = vpack.c.b16 %v2160, %v2158
    %v2385 = vpack.c.b16 %v2163, %v2161
    %v2386 = vpack.c.b16 %v2164, %v2162
    %v2387 = vpack.c.b16 %v2167, %v2165
    %v2388 = vpack.c.b16 %v2168, %v2166
    %v2389 = vpack.c.b16 %v2171, %v2169
    %v2390 = vpack.c.b16 %v2172, %v2170
    %v2391 = vpack.c.b16 %v2175, %v2173
    %v2392 = vpack.c.b16 %v2176, %v2174
    %v2393 = vpack.c.b16 %v2179, %v2177
    %v2394 = vpack.c.b16 %v2180, %v2178
    %v2395 = vpack.c.b16 %v2183, %v2181
    %v2396 = vpack.c.b16 %v2184, %v2182
    %v2397 = vpack.c.b16 %v2187, %v2185
    %v2398 = vpack.c.b16 %v2188, %v2186
    %v2399 = vpack.c.b16 %v2191, %v2189
    %v2400 = vpack.c.b16 %v2192, %v2190
    %v2401 = vpack.c.b16 %v2195, %v2193
    %v2402 = vpack.c.b16 %v2196, %v2194
    %v2403 = vpack.c.b16 %v2199, %v2197
    %v2404 = vpack.c.b16 %v2200, %v2198
    %v2405 = vpack.c.b16 %v2203, %v2201
    %v2406 = vpack.c.b16 %v2204, %v2202
    %v2407 = vpack.c.b16 %v2207, %v2205
    %v2408 = vpack.c.b16 %v2208, %v2206
    %v2409 = vpack.c.b16 %v2211, %v2209
    %v2410 = vpack.c.b16 %v2212, %v2210
    %v2411 = vpack.c.b16 %v2215, %v2213
    %v2412 = vpack.c.b16 %v2216, %v2214
    %v2413 = vpack.c.b16 %v2219, %v2217
    %v2414 = vpack.c.b16 %v2220, %v2218
    %v2415 = vpack.c.b16 %v2223, %v2221
    %v2416 = vpack.c.b16 %v2224, %v2222
    %2609 = vmatpush.bf16.msra.mxu0 %v2239
    %2610 = vmatpush.bf16.msra.mxu0 %v2237
    %2611 = vmatpush.bf16.msra.mxu0 %v2235
    %2612 = vmatpush.bf16.msra.mxu0 %v2233
    %2613 = vmatpush.bf16.msra.mxu0 %v2231
    %2614 = vmatpush.bf16.msra.mxu0 %v2229
    %2615 = vmatpush.bf16.msra.mxu0 %v2227
    %2616 = vmatpush.bf16.msra.mxu0 %v2225
    %2617 = vmatmul.bf16.gmra.mxu0 %v1439
    %v2618 = vpop.f32.mrf.mxu0
    %v2619 = vadd.f32 %v1645, %v2618
    %v2620 = vpop.f32.mrf.mxu0
    %2621 = vdwg.mxu0
    %2622 = vmatpush.bf16.msra.mxu0 %v2255
    %2623 = vmatpush.bf16.msra.mxu0 %v2253
    %2624 = vmatpush.bf16.msra.mxu0 %v2251
    %2625 = vmatpush.bf16.msra.mxu0 %v2249
    %2626 = vmatpush.bf16.msra.mxu0 %v2247
    %2627 = vmatpush.bf16.msra.mxu0 %v2245
    %2628 = vmatpush.bf16.msra.mxu0 %v2243
    %2629 = vmatpush.bf16.msra.mxu0 %v2241
    %2630 = vmatmul.bf16.gmra.mxu0 %v1440
    %v2631 = vpop.f32.mrf.mxu0
    %v2632 = vadd.f32 %v2619, %v2631
    %v2633 = vpop.f32.mrf.mxu0
    %2634 = vdwg.mxu0
    %2635 = vmatpush.bf16.msra.mxu0 %v2271
    %2636 = vmatpush.bf16.msra.mxu0 %v2269
    %2637 = vmatpush.bf16.msra.mxu0 %v2267
    %2638 = vmatpush.bf16.msra.mxu0 %v2265
    %2639 = vmatpush.bf16.msra.mxu0 %v2263
    %2640 = vmatpush.bf16.msra.mxu0 %v2261
    %2641 = vmatpush.bf16.msra.mxu0 %v2259
    %2642 = vmatpush.bf16.msra.mxu0 %v2257
    %2643 = vmatmul.bf16.gmra.mxu0 %v1441
    %v2644 = vpop.f32.mrf.mxu0
    %v2645 = vadd.f32 %v2632, %v2644
    %v2646 = vpop.f32.mrf.mxu0
    %2647 = vdwg.mxu0
    %2648 = vmatpush.bf16.msra.mxu0 %v2287
    %2649 = vmatpush.bf16.msra.mxu0 %v2285
    %2650 = vmatpush.bf16.msra.mxu0 %v2283
    %2651 = vmatpush.bf16.msra.mxu0 %v2281
    %2652 = vmatpush.bf16.msra.mxu0 %v2279
    %2653 = vmatpush.bf16.msra.mxu0 %v2277
    %2654 = vmatpush.bf16.msra.mxu0 %v2275
    %2655 = vmatpush.bf16.msra.mxu0 %v2273
    %2656 = vmatmul.bf16.gmra.mxu0 %v1442
    %v2657 = vpop.f32.mrf.mxu0
    %v2658 = vadd.f32 %v2645, %v2657
    %v2659 = vpop.f32.mrf.mxu0
    %2660 = vdwg.mxu0
    %2661 = vmatpush.bf16.msra.mxu0 %v2303
    %2662 = vmatpush.bf16.msra.mxu0 %v2301
    %2663 = vmatpush.bf16.msra.mxu0 %v2299
    %2664 = vmatpush.bf16.msra.mxu0 %v2297
    %2665 = vmatpush.bf16.msra.mxu0 %v2295
    %2666 = vmatpush.bf16.msra.mxu0 %v2293
    %2667 = vmatpush.bf16.msra.mxu0 %v2291
    %2668 = vmatpush.bf16.msra.mxu0 %v2289
    %2669 = vmatmul.bf16.gmra.mxu0 %v1443
    %v2670 = vpop.f32.mrf.mxu0
    %v2671 = vadd.f32 %v2658, %v2670
    %v2672 = vpop.f32.mrf.mxu0
    %2673 = vdwg.mxu0
    %2674 = vmatpush.bf16.msra.mxu0 %v2319
    %2675 = vmatpush.bf16.msra.mxu0 %v2317
    %2676 = vmatpush.bf16.msra.mxu0 %v2315
    %2677 = vmatpush.bf16.msra.mxu0 %v2313
    %2678 = vmatpush.bf16.msra.mxu0 %v2311
    %2679 = vmatpush.bf16.msra.mxu0 %v2309
    %2680 = vmatpush.bf16.msra.mxu0 %v2307
    %2681 = vmatpush.bf16.msra.mxu0 %v2305
    %2682 = vmatmul.bf16.gmra.mxu0 %v1444
    %v2683 = vpop.f32.mrf.mxu0
    %v2684 = vadd.f32 %v2671, %v2683
    %v2685 = vpop.f32.mrf.mxu0
    %2686 = vdwg.mxu0
    %2687 = vmatpush.bf16.msra.mxu0 %v2335
    %2688 = vmatpush.bf16.msra.mxu0 %v2333
    %2689 = vmatpush.bf16.msra.mxu0 %v2331
    %2690 = vmatpush.bf16.msra.mxu0 %v2329
    %2691 = vmatpush.bf16.msra.mxu0 %v2327
    %2692 = vmatpush.bf16.msra.mxu0 %v2325
    %2693 = vmatpush.bf16.msra.mxu0 %v2323
    %2694 = vmatpush.bf16.msra.mxu0 %v2321
    %2695 = vmatmul.bf16.gmra.mxu0 %v1445
    %v2696 = vpop.f32.mrf.mxu0
    %v2697 = vadd.f32 %v2684, %v2696
    %v2698 = vpop.f32.mrf.mxu0
    %2699 = vdwg.mxu0
    %2700 = vmatpush.bf16.msra.mxu0 %v2351
    %2701 = vmatpush.bf16.msra.mxu0 %v2349
    %2702 = vmatpush.bf16.msra.mxu0 %v2347
    %2703 = vmatpush.bf16.msra.mxu0 %v2345
    %2704 = vmatpush.bf16.msra.mxu0 %v2343
    %2705 = vmatpush.bf16.msra.mxu0 %v2341
    %2706 = vmatpush.bf16.msra.mxu0 %v2339
    %2707 = vmatpush.bf16.msra.mxu0 %v2337
    %2708 = vmatmul.bf16.gmra.mxu0 %v1446
    %v2709 = vpop.f32.mrf.mxu0
    %v2710 = vadd.f32 %v2697, %v2709
    %v2711 = vpop.f32.mrf.mxu0
    %2712 = vdwg.mxu0
    %2713 = vmatpush.bf16.msra.mxu0 %v2367
    %2714 = vmatpush.bf16.msra.mxu0 %v2365
    %2715 = vmatpush.bf16.msra.mxu0 %v2363
    %2716 = vmatpush.bf16.msra.mxu0 %v2361
    %2717 = vmatpush.bf16.msra.mxu0 %v2359
    %2718 = vmatpush.bf16.msra.mxu0 %v2357
    %2719 = vmatpush.bf16.msra.mxu0 %v2355
    %2720 = vmatpush.bf16.msra.mxu0 %v2353
    %2721 = vmatmul.bf16.gmra.mxu0 %v1447
    %v2722 = vpop.f32.mrf.mxu0
    %v2723 = vadd.f32 %v2710, %v2722
    %v2724 = vpop.f32.mrf.mxu0
    %2725 = vdwg.mxu0
    %2726 = vmatpush.bf16.msra.mxu0 %v2383
    %2727 = vmatpush.bf16.msra.mxu0 %v2381
    %2728 = vmatpush.bf16.msra.mxu0 %v2379
    %2729 = vmatpush.bf16.msra.mxu0 %v2377
    %2730 = vmatpush.bf16.msra.mxu0 %v2375
    %2731 = vmatpush.bf16.msra.mxu0 %v2373
    %2732 = vmatpush.bf16.msra.mxu0 %v2371
    %2733 = vmatpush.bf16.msra.mxu0 %v2369
    %2734 = vmatmul.bf16.gmra.mxu0 %v1448
    %v2735 = vpop.f32.mrf.mxu0
    %v2736 = vadd.f32 %v2723, %v2735
    %v2737 = vpop.f32.mrf.mxu0
    %2738 = vdwg.mxu0
    %2739 = vmatpush.bf16.msra.mxu0 %v2399
    %2740 = vmatpush.bf16.msra.mxu0 %v2397
    %2741 = vmatpush.bf16.msra.mxu0 %v2395
    %2742 = vmatpush.bf16.msra.mxu0 %v2393
    %2743 = vmatpush.bf16.msra.mxu0 %v2391
    %2744 = vmatpush.bf16.msra.mxu0 %v2389
    %2745 = vmatpush.bf16.msra.mxu0 %v2387
    %2746 = vmatpush.bf16.msra.mxu0 %v2385
    %2747 = vmatmul.bf16.gmra.mxu0 %v1449
    %v2748 = vpop.f32.mrf.mxu0
    %v2749 = vadd.f32 %v2736, %v2748
    %v2750 = vpop.f32.mrf.mxu0
    %2751 = vdwg.mxu0
    %2752 = vmatpush.bf16.msra.mxu0 %v2415
    %2753 = vmatpush.bf16.msra.mxu0 %v2413
    %2754 = vmatpush.bf16.msra.mxu0 %v2411
    %2755 = vmatpush.bf16.msra.mxu0 %v2409
    %2756 = vmatpush.bf16.msra.mxu0 %v2407
    %2757 = vmatpush.bf16.msra.mxu0 %v2405
    %2758 = vmatpush.bf16.msra.mxu0 %v2403
    %2759 = vmatpush.bf16.msra.mxu0 %v2401
    %2760 = vmatmul.bf16.gmra.mxu0 %v1450
    %v2761 = vpop.f32.mrf.mxu0
    %v2762 = vadd.f32 %v2749, %v2761
    %v2763 = vpop.f32.mrf.mxu0
    %2764 = vdwg.mxu0
    %2765 = vmatpush.bf16.msra.mxu0 %v2240
    %2766 = vmatpush.bf16.msra.mxu0 %v2238
    %2767 = vmatpush.bf16.msra.mxu0 %v2236
    %2768 = vmatpush.bf16.msra.mxu0 %v2234
    %2769 = vmatpush.bf16.msra.mxu0 %v2232
    %2770 = vmatpush.bf16.msra.mxu0 %v2230
    %2771 = vmatpush.bf16.msra.mxu0 %v2228
    %2772 = vmatpush.bf16.msra.mxu0 %v2226
    %2773 = vmatmul.bf16.gmra.mxu0 %v1439
    %v2774 = vpop.f32.mrf.mxu0
    %v2775 = vadd.f32 %v1646, %v2774
    %v2776 = vpop.f32.mrf.mxu0
    %2777 = vdwg.mxu0
    %2778 = vmatpush.bf16.msra.mxu0 %v2256
    %2779 = vmatpush.bf16.msra.mxu0 %v2254
    %2780 = vmatpush.bf16.msra.mxu0 %v2252
    %2781 = vmatpush.bf16.msra.mxu0 %v2250
    %2782 = vmatpush.bf16.msra.mxu0 %v2248
    %2783 = vmatpush.bf16.msra.mxu0 %v2246
    %2784 = vmatpush.bf16.msra.mxu0 %v2244
    %2785 = vmatpush.bf16.msra.mxu0 %v2242
    %2786 = vmatmul.bf16.gmra.mxu0 %v1440
    %v2787 = vpop.f32.mrf.mxu0
    %v2788 = vadd.f32 %v2775, %v2787
    %v2789 = vpop.f32.mrf.mxu0
    %2790 = vdwg.mxu0
    %2791 = vmatpush.bf16.msra.mxu0 %v2272
    %2792 = vmatpush.bf16.msra.mxu0 %v2270
    %2793 = vmatpush.bf16.msra.mxu0 %v2268
    %2794 = vmatpush.bf16.msra.mxu0 %v2266
    %2795 = vmatpush.bf16.msra.mxu0 %v2264
    %2796 = vmatpush.bf16.msra.mxu0 %v2262
    %2797 = vmatpush.bf16.msra.mxu0 %v2260
    %2798 = vmatpush.bf16.msra.mxu0 %v2258
    %2799 = vmatmul.bf16.gmra.mxu0 %v1441
    %v2800 = vpop.f32.mrf.mxu0
    %v2801 = vadd.f32 %v2788, %v2800
    %v2802 = vpop.f32.mrf.mxu0
    %2803 = vdwg.mxu0
    %2804 = vmatpush.bf16.msra.mxu0 %v2288
    %2805 = vmatpush.bf16.msra.mxu0 %v2286
    %2806 = vmatpush.bf16.msra.mxu0 %v2284
    %2807 = vmatpush.bf16.msra.mxu0 %v2282
    %2808 = vmatpush.bf16.msra.mxu0 %v2280
    %2809 = vmatpush.bf16.msra.mxu0 %v2278
    %2810 = vmatpush.bf16.msra.mxu0 %v2276
    %2811 = vmatpush.bf16.msra.mxu0 %v2274
    %2812 = vmatmul.bf16.gmra.mxu0 %v1442
    %v2813 = vpop.f32.mrf.mxu0
    %v2814 = vadd.f32 %v2801, %v2813
    %v2815 = vpop.f32.mrf.mxu0
    %2816 = vdwg.mxu0
    %2817 = vmatpush.bf16.msra.mxu0 %v2304
    %2818 = vmatpush.bf16.msra.mxu0 %v2302
    %2819 = vmatpush.bf16.msra.mxu0 %v2300
    %2820 = vmatpush.bf16.msra.mxu0 %v2298
    %2821 = vmatpush.bf16.msra.mxu0 %v2296
    %2822 = vmatpush.bf16.msra.mxu0 %v2294
    %2823 = vmatpush.bf16.msra.mxu0 %v2292
    %2824 = vmatpush.bf16.msra.mxu0 %v2290
    %2825 = vmatmul.bf16.gmra.mxu0 %v1443
    %v2826 = vpop.f32.mrf.mxu0
    %v2827 = vadd.f32 %v2814, %v2826
    %v2828 = vpop.f32.mrf.mxu0
    %2829 = vdwg.mxu0
    %2830 = vmatpush.bf16.msra.mxu0 %v2320
    %2831 = vmatpush.bf16.msra.mxu0 %v2318
    %2832 = vmatpush.bf16.msra.mxu0 %v2316
    %2833 = vmatpush.bf16.msra.mxu0 %v2314
    %2834 = vmatpush.bf16.msra.mxu0 %v2312
    %2835 = vmatpush.bf16.msra.mxu0 %v2310
    %2836 = vmatpush.bf16.msra.mxu0 %v2308
    %2837 = vmatpush.bf16.msra.mxu0 %v2306
    %2838 = vmatmul.bf16.gmra.mxu0 %v1444
    %v2839 = vpop.f32.mrf.mxu0
    %v2840 = vadd.f32 %v2827, %v2839
    %v2841 = vpop.f32.mrf.mxu0
    %2842 = vdwg.mxu0
    %2843 = vmatpush.bf16.msra.mxu0 %v2336
    %2844 = vmatpush.bf16.msra.mxu0 %v2334
    %2845 = vmatpush.bf16.msra.mxu0 %v2332
    %2846 = vmatpush.bf16.msra.mxu0 %v2330
    %2847 = vmatpush.bf16.msra.mxu0 %v2328
    %2848 = vmatpush.bf16.msra.mxu0 %v2326
    %2849 = vmatpush.bf16.msra.mxu0 %v2324
    %2850 = vmatpush.bf16.msra.mxu0 %v2322
    %2851 = vmatmul.bf16.gmra.mxu0 %v1445
    %v2852 = vpop.f32.mrf.mxu0
    %v2853 = vadd.f32 %v2840, %v2852
    %v2854 = vpop.f32.mrf.mxu0
    %2855 = vdwg.mxu0
    %2856 = vmatpush.bf16.msra.mxu0 %v2352
    %2857 = vmatpush.bf16.msra.mxu0 %v2350
    %2858 = vmatpush.bf16.msra.mxu0 %v2348
    %2859 = vmatpush.bf16.msra.mxu0 %v2346
    %2860 = vmatpush.bf16.msra.mxu0 %v2344
    %2861 = vmatpush.bf16.msra.mxu0 %v2342
    %2862 = vmatpush.bf16.msra.mxu0 %v2340
    %2863 = vmatpush.bf16.msra.mxu0 %v2338
    %2864 = vmatmul.bf16.gmra.mxu0 %v1446
    %v2865 = vpop.f32.mrf.mxu0
    %v2866 = vadd.f32 %v2853, %v2865
    %v2867 = vpop.f32.mrf.mxu0
    %2868 = vdwg.mxu0
    %2869 = vmatpush.bf16.msra.mxu0 %v2368
    %2870 = vmatpush.bf16.msra.mxu0 %v2366
    %2871 = vmatpush.bf16.msra.mxu0 %v2364
    %2872 = vmatpush.bf16.msra.mxu0 %v2362
    %2873 = vmatpush.bf16.msra.mxu0 %v2360
    %2874 = vmatpush.bf16.msra.mxu0 %v2358
    %2875 = vmatpush.bf16.msra.mxu0 %v2356
    %2876 = vmatpush.bf16.msra.mxu0 %v2354
    %2877 = vmatmul.bf16.gmra.mxu0 %v1447
    %v2878 = vpop.f32.mrf.mxu0
    %v2879 = vadd.f32 %v2866, %v2878
    %v2880 = vpop.f32.mrf.mxu0
    %2881 = vdwg.mxu0
    %2882 = vmatpush.bf16.msra.mxu0 %v2384
    %2883 = vmatpush.bf16.msra.mxu0 %v2382
    %2884 = vmatpush.bf16.msra.mxu0 %v2380
    %2885 = vmatpush.bf16.msra.mxu0 %v2378
    %2886 = vmatpush.bf16.msra.mxu0 %v2376
    %2887 = vmatpush.bf16.msra.mxu0 %v2374
    %2888 = vmatpush.bf16.msra.mxu0 %v2372
    %2889 = vmatpush.bf16.msra.mxu0 %v2370
    %2890 = vmatmul.bf16.gmra.mxu0 %v1448
    %v2891 = vpop.f32.mrf.mxu0
    %v2892 = vadd.f32 %v2879, %v2891
    %v2893 = vpop.f32.mrf.mxu0
    %2894 = vdwg.mxu0
    %2895 = vmatpush.bf16.msra.mxu0 %v2400
    %2896 = vmatpush.bf16.msra.mxu0 %v2398
    %2897 = vmatpush.bf16.msra.mxu0 %v2396
    %2898 = vmatpush.bf16.msra.mxu0 %v2394
    %2899 = vmatpush.bf16.msra.mxu0 %v2392
    %2900 = vmatpush.bf16.msra.mxu0 %v2390
    %2901 = vmatpush.bf16.msra.mxu0 %v2388
    %2902 = vmatpush.bf16.msra.mxu0 %v2386
    %2903 = vmatmul.bf16.gmra.mxu0 %v1449
    %v2904 = vpop.f32.mrf.mxu0
    %v2905 = vadd.f32 %v2892, %v2904
    %v2906 = vpop.f32.mrf.mxu0
    %2907 = vdwg.mxu0
    %2908 = vmatpush.bf16.msra.mxu0 %v2416
    %2909 = vmatpush.bf16.msra.mxu0 %v2414
    %2910 = vmatpush.bf16.msra.mxu0 %v2412
    %2911 = vmatpush.bf16.msra.mxu0 %v2410
    %2912 = vmatpush.bf16.msra.mxu0 %v2408
    %2913 = vmatpush.bf16.msra.mxu0 %v2406
    %2914 = vmatpush.bf16.msra.mxu0 %v2404
    %2915 = vmatpush.bf16.msra.mxu0 %v2402
    %2916 = vmatmul.bf16.gmra.mxu0 %v1450
    %v2917 = vpop.f32.mrf.mxu0
    %v2918 = vadd.f32 %v2905, %v2917
    %v2919 = vpop.f32.mrf.mxu0
    %2920 = vdwg.mxu0
    %v2921 = vmax.f32 %v2762, 0.0
    %v2922 = vmax.f32 %v2918, 0.0
    %v2923 = vpack.c.bf16 %v2921, %v2921
    %v2924 = vpack.c.bf16 %v2922, %v2922
    %v2925 = vld [vmem:[#allocation14] sm:$0xff]
    %v2926 = vld [vmem:[#allocation14 + $0x8] sm:$0xff]
    %v2927 = vld [vmem:[#allocation14 + $0x10] sm:$0xff]
    %v2928 = vld [vmem:[#allocation14 + $0x18] sm:$0xff]
    %v2929 = vld [vmem:[#allocation14 + $0x20] sm:$0xff]
    %v2930 = vld [vmem:[#allocation14 + $0x28] sm:$0xff]
    %v2931 = vld [vmem:[#allocation14 + $0x30] sm:$0xff]
    %v2932 = vld [vmem:[#allocation14 + $0x38] sm:$0xff]
    %v2933 = vld [vmem:[#allocation14 + $0x40] sm:$0xff]
    %v2934 = vld [vmem:[#allocation14 + $0x48] sm:$0xff]
    %v2935 = vld [vmem:[#allocation14 + $0x50] sm:$0xff]
    %v2936 = vld [vmem:[#allocation14 + $0x58] sm:$0xff]
    %v2937 = vld [vmem:[#allocation14 + $0x60] sm:$0xff]
    %v2938 = vld [vmem:[#allocation14 + $0x68] sm:$0xff]
    %v2939 = vld [vmem:[#allocation14 + $0x70] sm:$0xff]
    %v2940 = vld [vmem:[#allocation14 + $0x78] sm:$0xff]
    %v2941 = vld [vmem:[#allocation14 + $0x80] sm:$0xff]
    %v2942 = vld [vmem:[#allocation14 + $0x88] sm:$0xff]
    %v2943 = vld [vmem:[#allocation14 + $0x90] sm:$0xff]
    %v2944 = vld [vmem:[#allocation14 + $0x98] sm:$0xff]
    %v2945 = vld [vmem:[#allocation14 + $0xa0] sm:$0xff]
    %v2946 = vld [vmem:[#allocation14 + $0xa8] sm:$0xff]
    %v2947 = vld [vmem:[#allocation14 + $0xb0] sm:$0xff]
    %v2948 = vld [vmem:[#allocation14 + $0xb8] sm:$0xff]
    %v2949 = vld [vmem:[#allocation14 + $0xc0] sm:$0xff]
    %v2950 = vld [vmem:[#allocation14 + $0xc8] sm:$0xff]
    %v2951 = vld [vmem:[#allocation14 + $0xd0] sm:$0xff]
    %v2952 = vld [vmem:[#allocation14 + $0xd8] sm:$0xff]
    %v2953 = vld [vmem:[#allocation14 + $0xe0] sm:$0xff]
    %v2954 = vld [vmem:[#allocation14 + $0xe8] sm:$0xff]
    %v2955 = vld [vmem:[#allocation14 + $0xf0] sm:$0xff]
    %v2956 = vld [vmem:[#allocation14 + $0xf8] sm:$0xff]
    %v2957 = vld [vmem:[#allocation14 + $0x100] sm:$0xff]
    %v2958 = vld [vmem:[#allocation14 + $0x108] sm:$0xff]
    %v2959 = vld [vmem:[#allocation14 + $0x110] sm:$0xff]
    %v2960 = vld [vmem:[#allocation14 + $0x118] sm:$0xff]
    %v2961 = vld [vmem:[#allocation14 + $0x120] sm:$0xff]
    %v2962 = vld [vmem:[#allocation14 + $0x128] sm:$0xff]
    %v2963 = vld [vmem:[#allocation14 + $0x130] sm:$0xff]
    %v2964 = vld [vmem:[#allocation14 + $0x138] sm:$0xff]
    %v2965 = vld [vmem:[#allocation14 + $0x140] sm:$0xff]
    %v2966 = vld [vmem:[#allocation14 + $0x148] sm:$0xff]
    %v2967 = vld [vmem:[#allocation14 + $0x150] sm:$0xff]
    %v2968 = vld [vmem:[#allocation14 + $0x158] sm:$0xff]
    %v2969 = vld [vmem:[#allocation14 + $0x160] sm:$0xff]
    %v2970 = vld [vmem:[#allocation14 + $0x168] sm:$0xff]
    %v2971 = vld [vmem:[#allocation14 + $0x170] sm:$0xff]
    %v2972 = vld [vmem:[#allocation14 + $0x178] sm:$0xff]
    %v2973 = vld [vmem:[#allocation14 + $0x180] sm:$0xff]
    %v2974 = vld [vmem:[#allocation14 + $0x188] sm:$0xff]
    %v2975 = vld [vmem:[#allocation14 + $0x190] sm:$0xff]
    %v2976 = vld [vmem:[#allocation14 + $0x198] sm:$0xff]
    %v2977 = vld [vmem:[#allocation14 + $0x1a0] sm:$0xff]
    %v2978 = vld [vmem:[#allocation14 + $0x1a8] sm:$0xff]
    %v2979 = vld [vmem:[#allocation14 + $0x1b0] sm:$0xff]
    %v2980 = vld [vmem:[#allocation14 + $0x1b8] sm:$0xff]
    %v2981 = vld [vmem:[#allocation14 + $0x1c0] sm:$0xff]
    %v2982 = vld [vmem:[#allocation14 + $0x1c8] sm:$0xff]
    %v2983 = vld [vmem:[#allocation14 + $0x1d0] sm:$0xff]
    %v2984 = vld [vmem:[#allocation14 + $0x1d8] sm:$0xff]
    %v2985 = vld [vmem:[#allocation14 + $0x1e0] sm:$0xff]
    %v2986 = vld [vmem:[#allocation14 + $0x1e8] sm:$0xff]
    %v2987 = vld [vmem:[#allocation14 + $0x1f0] sm:$0xff]
    %v2988 = vld [vmem:[#allocation14 + $0x1f8] sm:$0xff]
    %v2989 = vld [vmem:[#allocation14 + $0x200] sm:$0xff]
    %v2990 = vld [vmem:[#allocation14 + $0x208] sm:$0xff]
    %v2991 = vld [vmem:[#allocation14 + $0x210] sm:$0xff]
    %v2992 = vld [vmem:[#allocation14 + $0x218] sm:$0xff]
    %v2993 = vld [vmem:[#allocation14 + $0x220] sm:$0xff]
    %v2994 = vld [vmem:[#allocation14 + $0x228] sm:$0xff]
    %v2995 = vld [vmem:[#allocation14 + $0x230] sm:$0xff]
    %v2996 = vld [vmem:[#allocation14 + $0x238] sm:$0xff]
    %v2997 = vld [vmem:[#allocation14 + $0x240] sm:$0xff]
    %v2998 = vld [vmem:[#allocation14 + $0x248] sm:$0xff]
    %v2999 = vld [vmem:[#allocation14 + $0x250] sm:$0xff]
    %v3000 = vld [vmem:[#allocation14 + $0x258] sm:$0xff]
    %v3001 = vld [vmem:[#allocation14 + $0x260] sm:$0xff]
    %v3002 = vld [vmem:[#allocation14 + $0x268] sm:$0xff]
    %v3003 = vld [vmem:[#allocation14 + $0x270] sm:$0xff]
    %v3004 = vld [vmem:[#allocation14 + $0x278] sm:$0xff]
    %v3005 = vld [vmem:[#allocation14 + $0x280] sm:$0xff]
    %v3006 = vld [vmem:[#allocation14 + $0x288] sm:$0xff]
    %v3007 = vld [vmem:[#allocation14 + $0x290] sm:$0xff]
    %v3008 = vld [vmem:[#allocation14 + $0x298] sm:$0xff]
    %v3009 = vld [vmem:[#allocation14 + $0x2a0] sm:$0xff]
    %v3010 = vld [vmem:[#allocation14 + $0x2a8] sm:$0xff]
    %v3011 = vld [vmem:[#allocation14 + $0x2b0] sm:$0xff]
    %v3012 = vld [vmem:[#allocation14 + $0x2b8] sm:$0xff]
    %v3013 = vld [vmem:[#allocation14 + $0x2c0] sm:$0xff]
    %v3014 = vld [vmem:[#allocation14 + $0x2c8] sm:$0xff]
    %v3015 = vld [vmem:[#allocation14 + $0x2d0] sm:$0xff]
    %v3016 = vld [vmem:[#allocation14 + $0x2d8] sm:$0xff]
    %v3017 = vld [vmem:[#allocation14 + $0x2e0] sm:$0xff]
    %v3018 = vld [vmem:[#allocation14 + $0x2e8] sm:$0xff]
    %v3019 = vld [vmem:[#allocation14 + $0x2f0] sm:$0xff]
    %v3020 = vld [vmem:[#allocation14 + $0x2f8] sm:$0xff]
    %v3021 = vld [vmem:[#allocation14 + $0x300] sm:$0xff]
    %v3022 = vld [vmem:[#allocation14 + $0x308] sm:$0xff]
    %v3023 = vld [vmem:[#allocation14 + $0x310] sm:$0xff]
    %v3024 = vld [vmem:[#allocation14 + $0x318] sm:$0xff]
    %v3025 = vld [vmem:[#allocation14 + $0x320] sm:$0xff]
    %v3026 = vld [vmem:[#allocation14 + $0x328] sm:$0xff]
    %v3027 = vld [vmem:[#allocation14 + $0x330] sm:$0xff]
    %v3028 = vld [vmem:[#allocation14 + $0x338] sm:$0xff]
    %v3029 = vld [vmem:[#allocation14 + $0x340] sm:$0xff]
    %v3030 = vld [vmem:[#allocation14 + $0x348] sm:$0xff]
    %v3031 = vld [vmem:[#allocation14 + $0x350] sm:$0xff]
    %v3032 = vld [vmem:[#allocation14 + $0x358] sm:$0xff]
    %v3033 = vld [vmem:[#allocation14 + $0x360] sm:$0xff]
    %v3034 = vld [vmem:[#allocation14 + $0x368] sm:$0xff]
    %v3035 = vld [vmem:[#allocation14 + $0x370] sm:$0xff]
    %v3036 = vld [vmem:[#allocation14 + $0x378] sm:$0xff]
    %v3037 = vld [vmem:[#allocation14 + $0x380] sm:$0xff]
    %v3038 = vld [vmem:[#allocation14 + $0x388] sm:$0xff]
    %v3039 = vld [vmem:[#allocation14 + $0x390] sm:$0xff]
    %v3040 = vld [vmem:[#allocation14 + $0x398] sm:$0xff]
    %v3041 = vld [vmem:[#allocation14 + $0x3a0] sm:$0xff]
    %v3042 = vld [vmem:[#allocation14 + $0x3a8] sm:$0xff]
    %v3043 = vld [vmem:[#allocation14 + $0x3b0] sm:$0xff]
    %v3044 = vld [vmem:[#allocation14 + $0x3b8] sm:$0xff]
    %v3045 = vld [vmem:[#allocation14 + $0x3c0] sm:$0xff]
    %v3046 = vld [vmem:[#allocation14 + $0x3c8] sm:$0xff]
    %v3047 = vld [vmem:[#allocation14 + $0x3d0] sm:$0xff]
    %v3048 = vld [vmem:[#allocation14 + $0x3d8] sm:$0xff]
    %v3049 = vld [vmem:[#allocation14 + $0x3e0] sm:$0xff]
    %v3050 = vld [vmem:[#allocation14 + $0x3e8] sm:$0xff]
    %v3051 = vld [vmem:[#allocation14 + $0x3f0] sm:$0xff]
    %v3052 = vld [vmem:[#allocation14 + $0x3f8] sm:$0xff]
    %v3053 = vld [vmem:[#allocation14 + $0x400] sm:$0xff]
    %v3054 = vld [vmem:[#allocation14 + $0x408] sm:$0xff]
    %v3055 = vld [vmem:[#allocation14 + $0x410] sm:$0xff]
    %v3056 = vld [vmem:[#allocation14 + $0x418] sm:$0xff]
    %v3057 = vld [vmem:[#allocation14 + $0x420] sm:$0xff]
    %v3058 = vld [vmem:[#allocation14 + $0x428] sm:$0xff]
    %v3059 = vld [vmem:[#allocation14 + $0x430] sm:$0xff]
    %v3060 = vld [vmem:[#allocation14 + $0x438] sm:$0xff]
    %v3061 = vld [vmem:[#allocation14 + $0x440] sm:$0xff]
    %v3062 = vld [vmem:[#allocation14 + $0x448] sm:$0xff]
    %v3063 = vld [vmem:[#allocation14 + $0x450] sm:$0xff]
    %v3064 = vld [vmem:[#allocation14 + $0x458] sm:$0xff]
    %v3065 = vld [vmem:[#allocation14 + $0x460] sm:$0xff]
    %v3066 = vld [vmem:[#allocation14 + $0x468] sm:$0xff]
    %v3067 = vld [vmem:[#allocation14 + $0x470] sm:$0xff]
    %v3068 = vld [vmem:[#allocation14 + $0x478] sm:$0xff]
    %v3069 = vld [vmem:[#allocation14 + $0x480] sm:$0xff]
    %v3070 = vld [vmem:[#allocation14 + $0x488] sm:$0xff]
    %v3071 = vld [vmem:[#allocation14 + $0x490] sm:$0xff]
    %v3072 = vld [vmem:[#allocation14 + $0x498] sm:$0xff]
    %v3073 = vld [vmem:[#allocation14 + $0x4a0] sm:$0xff]
    %v3074 = vld [vmem:[#allocation14 + $0x4a8] sm:$0xff]
    %v3075 = vld [vmem:[#allocation14 + $0x4b0] sm:$0xff]
    %v3076 = vld [vmem:[#allocation14 + $0x4b8] sm:$0xff]
    %v3077 = vld [vmem:[#allocation14 + $0x4c0] sm:$0xff]
    %v3078 = vld [vmem:[#allocation14 + $0x4c8] sm:$0xff]
    %v3079 = vld [vmem:[#allocation14 + $0x4d0] sm:$0xff]
    %v3080 = vld [vmem:[#allocation14 + $0x4d8] sm:$0xff]
    %v3081 = vld [vmem:[#allocation14 + $0x4e0] sm:$0xff]
    %v3082 = vld [vmem:[#allocation14 + $0x4e8] sm:$0xff]
    %v3083 = vld [vmem:[#allocation14 + $0x4f0] sm:$0xff]
    %v3084 = vld [vmem:[#allocation14 + $0x4f8] sm:$0xff]
    %v3085 = vld [vmem:[#allocation14 + $0x500] sm:$0xff]
    %v3086 = vld [vmem:[#allocation14 + $0x508] sm:$0xff]
    %v3087 = vld [vmem:[#allocation14 + $0x510] sm:$0xff]
    %v3088 = vld [vmem:[#allocation14 + $0x518] sm:$0xff]
    %v3089 = vld [vmem:[#allocation14 + $0x520] sm:$0xff]
    %v3090 = vld [vmem:[#allocation14 + $0x528] sm:$0xff]
    %v3091 = vld [vmem:[#allocation14 + $0x530] sm:$0xff]
    %v3092 = vld [vmem:[#allocation14 + $0x538] sm:$0xff]
    %v3093 = vld [vmem:[#allocation14 + $0x540] sm:$0xff]
    %v3094 = vld [vmem:[#allocation14 + $0x548] sm:$0xff]
    %v3095 = vld [vmem:[#allocation14 + $0x550] sm:$0xff]
    %v3096 = vld [vmem:[#allocation14 + $0x558] sm:$0xff]
    %v3097 = vld [vmem:[#allocation14 + $0x560] sm:$0xff]
    %v3098 = vld [vmem:[#allocation14 + $0x568] sm:$0xff]
    %v3099 = vld [vmem:[#allocation14 + $0x570] sm:$0xff]
    %v3100 = vld [vmem:[#allocation14 + $0x578] sm:$0xff]
    %v3101 = vld [vmem:[#allocation14 + $0x580] sm:$0xff]
    %v3102 = vld [vmem:[#allocation14 + $0x588] sm:$0xff]
    %v3103 = vld [vmem:[#allocation14 + $0x590] sm:$0xff]
    %v3104 = vld [vmem:[#allocation14 + $0x598] sm:$0xff]
    %v3105 = vld [vmem:[#allocation14 + $0x5a0] sm:$0xff]
    %v3106 = vld [vmem:[#allocation14 + $0x5a8] sm:$0xff]
    %v3107 = vld [vmem:[#allocation14 + $0x5b0] sm:$0xff]
    %v3108 = vld [vmem:[#allocation14 + $0x5b8] sm:$0xff]
    %v3109 = vld [vmem:[#allocation14 + $0x5c0] sm:$0xff]
    %v3110 = vld [vmem:[#allocation14 + $0x5c8] sm:$0xff]
    %v3111 = vld [vmem:[#allocation14 + $0x5d0] sm:$0xff]
    %v3112 = vld [vmem:[#allocation14 + $0x5d8] sm:$0xff]
    %v3113 = vld [vmem:[#allocation14 + $0x5e0] sm:$0xff]
    %v3114 = vld [vmem:[#allocation14 + $0x5e8] sm:$0xff]
    %v3115 = vld [vmem:[#allocation14 + $0x5f0] sm:$0xff]
    %v3116 = vld [vmem:[#allocation14 + $0x5f8] sm:$0xff]
    %v3117 = vld [vmem:[#allocation16] sm:$0xff]
    %v3118 = vld [vmem:[#allocation16 + $0x8] sm:$0xf]
    %v3121 = vperm.slane %v3117, 0
    %v3122 = vperm.slane %v3117, 1
    %v3123 = vperm.slane %v3117, 2
    %v3124 = vperm.slane %v3117, 3
    %v3125 = vperm.slane %v3117, 4
    %v3126 = vperm.slane %v3117, 5
    %v3127 = vperm.slane %v3117, 6
    %v3128 = vperm.slane %v3117, 7
    %v3129 = vperm.slane %v3118, 0
    %v3130 = vperm.slane %v3118, 1
    %v3131 = vperm.slane %v3118, 2
    %v3132 = vperm.slane %v3118, 3
    %v3337 = vunpack.c.l.b16 %v2925
    %v3338 = vunpack.c.h.b16 %v2925
    %v3339 = vunpack.c.l.b16 %v2926
    %v3340 = vunpack.c.h.b16 %v2926
    %v3341 = vunpack.c.l.b16 %v2927
    %v3342 = vunpack.c.h.b16 %v2927
    %v3343 = vunpack.c.l.b16 %v2928
    %v3344 = vunpack.c.h.b16 %v2928
    %v3345 = vunpack.c.l.b16 %v2929
    %v3346 = vunpack.c.h.b16 %v2929
    %v3347 = vunpack.c.l.b16 %v2930
    %v3348 = vunpack.c.h.b16 %v2930
    %v3349 = vunpack.c.l.b16 %v2931
    %v3350 = vunpack.c.h.b16 %v2931
    %v3351 = vunpack.c.l.b16 %v2932
    %v3352 = vunpack.c.h.b16 %v2932
    %v3353 = vunpack.c.l.b16 %v2933
    %v3354 = vunpack.c.h.b16 %v2933
    %v3355 = vunpack.c.l.b16 %v2934
    %v3356 = vunpack.c.h.b16 %v2934
    %v3357 = vunpack.c.l.b16 %v2935
    %v3358 = vunpack.c.h.b16 %v2935
    %v3359 = vunpack.c.l.b16 %v2936
    %v3360 = vunpack.c.h.b16 %v2936
    %v3361 = vunpack.c.l.b16 %v2937
    %v3362 = vunpack.c.h.b16 %v2937
    %v3363 = vunpack.c.l.b16 %v2938
    %v3364 = vunpack.c.h.b16 %v2938
    %v3365 = vunpack.c.l.b16 %v2939
    %v3366 = vunpack.c.h.b16 %v2939
    %v3367 = vunpack.c.l.b16 %v2940
    %v3368 = vunpack.c.h.b16 %v2940
    %v3369 = vunpack.c.l.b16 %v2941
    %v3370 = vunpack.c.h.b16 %v2941
    %v3371 = vunpack.c.l.b16 %v2942
    %v3372 = vunpack.c.h.b16 %v2942
    %v3373 = vunpack.c.l.b16 %v2943
    %v3374 = vunpack.c.h.b16 %v2943
    %v3375 = vunpack.c.l.b16 %v2944
    %v3376 = vunpack.c.h.b16 %v2944
    %v3377 = vunpack.c.l.b16 %v2945
    %v3378 = vunpack.c.h.b16 %v2945
    %v3379 = vunpack.c.l.b16 %v2946
    %v3380 = vunpack.c.h.b16 %v2946
    %v3381 = vunpack.c.l.b16 %v2947
    %v3382 = vunpack.c.h.b16 %v2947
    %v3383 = vunpack.c.l.b16 %v2948
    %v3384 = vunpack.c.h.b16 %v2948
    %v3385 = vunpack.c.l.b16 %v2949
    %v3386 = vunpack.c.h.b16 %v2949
    %v3387 = vunpack.c.l.b16 %v2950
    %v3388 = vunpack.c.h.b16 %v2950
    %v3389 = vunpack.c.l.b16 %v2951
    %v3390 = vunpack.c.h.b16 %v2951
    %v3391 = vunpack.c.l.b16 %v2952
    %v3392 = vunpack.c.h.b16 %v2952
    %v3393 = vunpack.c.l.b16 %v2953
    %v3394 = vunpack.c.h.b16 %v2953
    %v3395 = vunpack.c.l.b16 %v2954
    %v3396 = vunpack.c.h.b16 %v2954
    %v3397 = vunpack.c.l.b16 %v2955
    %v3398 = vunpack.c.h.b16 %v2955
    %v3399 = vunpack.c.l.b16 %v2956
    %v3400 = vunpack.c.h.b16 %v2956
    %v3401 = vunpack.c.l.b16 %v2957
    %v3402 = vunpack.c.h.b16 %v2957
    %v3403 = vunpack.c.l.b16 %v2958
    %v3404 = vunpack.c.h.b16 %v2958
    %v3405 = vunpack.c.l.b16 %v2959
    %v3406 = vunpack.c.h.b16 %v2959
    %v3407 = vunpack.c.l.b16 %v2960
    %v3408 = vunpack.c.h.b16 %v2960
    %v3409 = vunpack.c.l.b16 %v2961
    %v3410 = vunpack.c.h.b16 %v2961
    %v3411 = vunpack.c.l.b16 %v2962
    %v3412 = vunpack.c.h.b16 %v2962
    %v3413 = vunpack.c.l.b16 %v2963
    %v3414 = vunpack.c.h.b16 %v2963
    %v3415 = vunpack.c.l.b16 %v2964
    %v3416 = vunpack.c.h.b16 %v2964
    %v3417 = vunpack.c.l.b16 %v2965
    %v3418 = vunpack.c.h.b16 %v2965
    %v3419 = vunpack.c.l.b16 %v2966
    %v3420 = vunpack.c.h.b16 %v2966
    %v3421 = vunpack.c.l.b16 %v2967
    %v3422 = vunpack.c.h.b16 %v2967
    %v3423 = vunpack.c.l.b16 %v2968
    %v3424 = vunpack.c.h.b16 %v2968
    %v3425 = vunpack.c.l.b16 %v2969
    %v3426 = vunpack.c.h.b16 %v2969
    %v3427 = vunpack.c.l.b16 %v2970
    %v3428 = vunpack.c.h.b16 %v2970
    %v3429 = vunpack.c.l.b16 %v2971
    %v3430 = vunpack.c.h.b16 %v2971
    %v3431 = vunpack.c.l.b16 %v2972
    %v3432 = vunpack.c.h.b16 %v2972
    %v3433 = vunpack.c.l.b16 %v2973
    %v3434 = vunpack.c.h.b16 %v2973
    %v3435 = vunpack.c.l.b16 %v2974
    %v3436 = vunpack.c.h.b16 %v2974
    %v3437 = vunpack.c.l.b16 %v2975
    %v3438 = vunpack.c.h.b16 %v2975
    %v3439 = vunpack.c.l.b16 %v2976
    %v3440 = vunpack.c.h.b16 %v2976
    %v3441 = vunpack.c.l.b16 %v2977
    %v3442 = vunpack.c.h.b16 %v2977
    %v3443 = vunpack.c.l.b16 %v2978
    %v3444 = vunpack.c.h.b16 %v2978
    %v3445 = vunpack.c.l.b16 %v2979
    %v3446 = vunpack.c.h.b16 %v2979
    %v3447 = vunpack.c.l.b16 %v2980
    %v3448 = vunpack.c.h.b16 %v2980
    %v3449 = vunpack.c.l.b16 %v2981
    %v3450 = vunpack.c.h.b16 %v2981
    %v3451 = vunpack.c.l.b16 %v2982
    %v3452 = vunpack.c.h.b16 %v2982
    %v3453 = vunpack.c.l.b16 %v2983
    %v3454 = vunpack.c.h.b16 %v2983
    %v3455 = vunpack.c.l.b16 %v2984
    %v3456 = vunpack.c.h.b16 %v2984
    %v3457 = vunpack.c.l.b16 %v2985
    %v3458 = vunpack.c.h.b16 %v2985
    %v3459 = vunpack.c.l.b16 %v2986
    %v3460 = vunpack.c.h.b16 %v2986
    %v3461 = vunpack.c.l.b16 %v2987
    %v3462 = vunpack.c.h.b16 %v2987
    %v3463 = vunpack.c.l.b16 %v2988
    %v3464 = vunpack.c.h.b16 %v2988
    %v3465 = vunpack.c.l.b16 %v2989
    %v3466 = vunpack.c.h.b16 %v2989
    %v3467 = vunpack.c.l.b16 %v2990
    %v3468 = vunpack.c.h.b16 %v2990
    %v3469 = vunpack.c.l.b16 %v2991
    %v3470 = vunpack.c.h.b16 %v2991
    %v3471 = vunpack.c.l.b16 %v2992
    %v3472 = vunpack.c.h.b16 %v2992
    %v3473 = vunpack.c.l.b16 %v2993
    %v3474 = vunpack.c.h.b16 %v2993
    %v3475 = vunpack.c.l.b16 %v2994
    %v3476 = vunpack.c.h.b16 %v2994
    %v3477 = vunpack.c.l.b16 %v2995
    %v3478 = vunpack.c.h.b16 %v2995
    %v3479 = vunpack.c.l.b16 %v2996
    %v3480 = vunpack.c.h.b16 %v2996
    %v3481 = vunpack.c.l.b16 %v2997
    %v3482 = vunpack.c.h.b16 %v2997
    %v3483 = vunpack.c.l.b16 %v2998
    %v3484 = vunpack.c.h.b16 %v2998
    %v3485 = vunpack.c.l.b16 %v2999
    %v3486 = vunpack.c.h.b16 %v2999
    %v3487 = vunpack.c.l.b16 %v3000
    %v3488 = vunpack.c.h.b16 %v3000
    %v3489 = vunpack.c.l.b16 %v3001
    %v3490 = vunpack.c.h.b16 %v3001
    %v3491 = vunpack.c.l.b16 %v3002
    %v3492 = vunpack.c.h.b16 %v3002
    %v3493 = vunpack.c.l.b16 %v3003
    %v3494 = vunpack.c.h.b16 %v3003
    %v3495 = vunpack.c.l.b16 %v3004
    %v3496 = vunpack.c.h.b16 %v3004
    %v3497 = vunpack.c.l.b16 %v3005
    %v3498 = vunpack.c.h.b16 %v3005
    %v3499 = vunpack.c.l.b16 %v3006
    %v3500 = vunpack.c.h.b16 %v3006
    %v3501 = vunpack.c.l.b16 %v3007
    %v3502 = vunpack.c.h.b16 %v3007
    %v3503 = vunpack.c.l.b16 %v3008
    %v3504 = vunpack.c.h.b16 %v3008
    %v3505 = vunpack.c.l.b16 %v3009
    %v3506 = vunpack.c.h.b16 %v3009
    %v3507 = vunpack.c.l.b16 %v3010
    %v3508 = vunpack.c.h.b16 %v3010
    %v3509 = vunpack.c.l.b16 %v3011
    %v3510 = vunpack.c.h.b16 %v3011
    %v3511 = vunpack.c.l.b16 %v3012
    %v3512 = vunpack.c.h.b16 %v3012
    %v3513 = vunpack.c.l.b16 %v3013
    %v3514 = vunpack.c.h.b16 %v3013
    %v3515 = vunpack.c.l.b16 %v3014
    %v3516 = vunpack.c.h.b16 %v3014
    %v3517 = vunpack.c.l.b16 %v3015
    %v3518 = vunpack.c.h.b16 %v3015
    %v3519 = vunpack.c.l.b16 %v3016
    %v3520 = vunpack.c.h.b16 %v3016
    %v3521 = vunpack.c.l.b16 %v3017
    %v3522 = vunpack.c.h.b16 %v3017
    %v3523 = vunpack.c.l.b16 %v3018
    %v3524 = vunpack.c.h.b16 %v3018
    %v3525 = vunpack.c.l.b16 %v3019
    %v3526 = vunpack.c.h.b16 %v3019
    %v3527 = vunpack.c.l.b16 %v3020
    %v3528 = vunpack.c.h.b16 %v3020
    %v3529 = vunpack.c.l.b16 %v3021
    %v3530 = vunpack.c.h.b16 %v3021
    %v3531 = vunpack.c.l.b16 %v3022
    %v3532 = vunpack.c.h.b16 %v3022
    %v3533 = vunpack.c.l.b16 %v3023
    %v3534 = vunpack.c.h.b16 %v3023
    %v3535 = vunpack.c.l.b16 %v3024
    %v3536 = vunpack.c.h.b16 %v3024
    %v3537 = vunpack.c.l.b16 %v3025
    %v3538 = vunpack.c.h.b16 %v3025
    %v3539 = vunpack.c.l.b16 %v3026
    %v3540 = vunpack.c.h.b16 %v3026
    %v3541 = vunpack.c.l.b16 %v3027
    %v3542 = vunpack.c.h.b16 %v3027
    %v3543 = vunpack.c.l.b16 %v3028
    %v3544 = vunpack.c.h.b16 %v3028
    %v3545 = vunpack.c.l.b16 %v3029
    %v3546 = vunpack.c.h.b16 %v3029
    %v3547 = vunpack.c.l.b16 %v3030
    %v3548 = vunpack.c.h.b16 %v3030
    %v3549 = vunpack.c.l.b16 %v3031
    %v3550 = vunpack.c.h.b16 %v3031
    %v3551 = vunpack.c.l.b16 %v3032
    %v3552 = vunpack.c.h.b16 %v3032
    %v3553 = vunpack.c.l.b16 %v3033
    %v3554 = vunpack.c.h.b16 %v3033
    %v3555 = vunpack.c.l.b16 %v3034
    %v3556 = vunpack.c.h.b16 %v3034
    %v3557 = vunpack.c.l.b16 %v3035
    %v3558 = vunpack.c.h.b16 %v3035
    %v3559 = vunpack.c.l.b16 %v3036
    %v3560 = vunpack.c.h.b16 %v3036
    %v3561 = vunpack.c.l.b16 %v3037
    %v3562 = vunpack.c.h.b16 %v3037
    %v3563 = vunpack.c.l.b16 %v3038
    %v3564 = vunpack.c.h.b16 %v3038
    %v3565 = vunpack.c.l.b16 %v3039
    %v3566 = vunpack.c.h.b16 %v3039
    %v3567 = vunpack.c.l.b16 %v3040
    %v3568 = vunpack.c.h.b16 %v3040
    %v3569 = vunpack.c.l.b16 %v3041
    %v3570 = vunpack.c.h.b16 %v3041
    %v3571 = vunpack.c.l.b16 %v3042
    %v3572 = vunpack.c.h.b16 %v3042
    %v3573 = vunpack.c.l.b16 %v3043
    %v3574 = vunpack.c.h.b16 %v3043
    %v3575 = vunpack.c.l.b16 %v3044
    %v3576 = vunpack.c.h.b16 %v3044
    %v3577 = vunpack.c.l.b16 %v3045
    %v3578 = vunpack.c.h.b16 %v3045
    %v3579 = vunpack.c.l.b16 %v3046
    %v3580 = vunpack.c.h.b16 %v3046
    %v3581 = vunpack.c.l.b16 %v3047
    %v3582 = vunpack.c.h.b16 %v3047
    %v3583 = vunpack.c.l.b16 %v3048
    %v3584 = vunpack.c.h.b16 %v3048
    %v3585 = vunpack.c.l.b16 %v3049
    %v3586 = vunpack.c.h.b16 %v3049
    %v3587 = vunpack.c.l.b16 %v3050
    %v3588 = vunpack.c.h.b16 %v3050
    %v3589 = vunpack.c.l.b16 %v3051
    %v3590 = vunpack.c.h.b16 %v3051
    %v3591 = vunpack.c.l.b16 %v3052
    %v3592 = vunpack.c.h.b16 %v3052
    %v3593 = vunpack.c.l.b16 %v3053
    %v3594 = vunpack.c.h.b16 %v3053
    %v3595 = vunpack.c.l.b16 %v3054
    %v3596 = vunpack.c.h.b16 %v3054
    %v3597 = vunpack.c.l.b16 %v3055
    %v3598 = vunpack.c.h.b16 %v3055
    %v3599 = vunpack.c.l.b16 %v3056
    %v3600 = vunpack.c.h.b16 %v3056
    %v3601 = vunpack.c.l.b16 %v3057
    %v3602 = vunpack.c.h.b16 %v3057
    %v3603 = vunpack.c.l.b16 %v3058
    %v3604 = vunpack.c.h.b16 %v3058
    %v3605 = vunpack.c.l.b16 %v3059
    %v3606 = vunpack.c.h.b16 %v3059
    %v3607 = vunpack.c.l.b16 %v3060
    %v3608 = vunpack.c.h.b16 %v3060
    %v3609 = vunpack.c.l.b16 %v3061
    %v3610 = vunpack.c.h.b16 %v3061
    %v3611 = vunpack.c.l.b16 %v3062
    %v3612 = vunpack.c.h.b16 %v3062
    %v3613 = vunpack.c.l.b16 %v3063
    %v3614 = vunpack.c.h.b16 %v3063
    %v3615 = vunpack.c.l.b16 %v3064
    %v3616 = vunpack.c.h.b16 %v3064
    %v3617 = vunpack.c.l.b16 %v3065
    %v3618 = vunpack.c.h.b16 %v3065
    %v3619 = vunpack.c.l.b16 %v3066
    %v3620 = vunpack.c.h.b16 %v3066
    %v3621 = vunpack.c.l.b16 %v3067
    %v3622 = vunpack.c.h.b16 %v3067
    %v3623 = vunpack.c.l.b16 %v3068
    %v3624 = vunpack.c.h.b16 %v3068
    %v3625 = vunpack.c.l.b16 %v3069
    %v3626 = vunpack.c.h.b16 %v3069
    %v3627 = vunpack.c.l.b16 %v3070
    %v3628 = vunpack.c.h.b16 %v3070
    %v3629 = vunpack.c.l.b16 %v3071
    %v3630 = vunpack.c.h.b16 %v3071
    %v3631 = vunpack.c.l.b16 %v3072
    %v3632 = vunpack.c.h.b16 %v3072
    %v3633 = vunpack.c.l.b16 %v3073
    %v3634 = vunpack.c.h.b16 %v3073
    %v3635 = vunpack.c.l.b16 %v3074
    %v3636 = vunpack.c.h.b16 %v3074
    %v3637 = vunpack.c.l.b16 %v3075
    %v3638 = vunpack.c.h.b16 %v3075
    %v3639 = vunpack.c.l.b16 %v3076
    %v3640 = vunpack.c.h.b16 %v3076
    %v3641 = vunpack.c.l.b16 %v3077
    %v3642 = vunpack.c.h.b16 %v3077
    %v3643 = vunpack.c.l.b16 %v3078
    %v3644 = vunpack.c.h.b16 %v3078
    %v3645 = vunpack.c.l.b16 %v3079
    %v3646 = vunpack.c.h.b16 %v3079
    %v3647 = vunpack.c.l.b16 %v3080
    %v3648 = vunpack.c.h.b16 %v3080
    %v3649 = vunpack.c.l.b16 %v3081
    %v3650 = vunpack.c.h.b16 %v3081
    %v3651 = vunpack.c.l.b16 %v3082
    %v3652 = vunpack.c.h.b16 %v3082
    %v3653 = vunpack.c.l.b16 %v3083
    %v3654 = vunpack.c.h.b16 %v3083
    %v3655 = vunpack.c.l.b16 %v3084
    %v3656 = vunpack.c.h.b16 %v3084
    %v3657 = vunpack.c.l.b16 %v3085
    %v3658 = vunpack.c.h.b16 %v3085
    %v3659 = vunpack.c.l.b16 %v3086
    %v3660 = vunpack.c.h.b16 %v3086
    %v3661 = vunpack.c.l.b16 %v3087
    %v3662 = vunpack.c.h.b16 %v3087
    %v3663 = vunpack.c.l.b16 %v3088
    %v3664 = vunpack.c.h.b16 %v3088
    %v3665 = vunpack.c.l.b16 %v3089
    %v3666 = vunpack.c.h.b16 %v3089
    %v3667 = vunpack.c.l.b16 %v3090
    %v3668 = vunpack.c.h.b16 %v3090
    %v3669 = vunpack.c.l.b16 %v3091
    %v3670 = vunpack.c.h.b16 %v3091
    %v3671 = vunpack.c.l.b16 %v3092
    %v3672 = vunpack.c.h.b16 %v3092
    %v3673 = vunpack.c.l.b16 %v3093
    %v3674 = vunpack.c.h.b16 %v3093
    %v3675 = vunpack.c.l.b16 %v3094
    %v3676 = vunpack.c.h.b16 %v3094
    %v3677 = vunpack.c.l.b16 %v3095
    %v3678 = vunpack.c.h.b16 %v3095
    %v3679 = vunpack.c.l.b16 %v3096
    %v3680 = vunpack.c.h.b16 %v3096
    %v3681 = vunpack.c.l.b16 %v3097
    %v3682 = vunpack.c.h.b16 %v3097
    %v3683 = vunpack.c.l.b16 %v3098
    %v3684 = vunpack.c.h.b16 %v3098
    %v3685 = vunpack.c.l.b16 %v3099
    %v3686 = vunpack.c.h.b16 %v3099
    %v3687 = vunpack.c.l.b16 %v3100
    %v3688 = vunpack.c.h.b16 %v3100
    %v3689 = vunpack.c.l.b16 %v3101
    %v3690 = vunpack.c.h.b16 %v3101
    %v3691 = vunpack.c.l.b16 %v3102
    %v3692 = vunpack.c.h.b16 %v3102
    %v3693 = vunpack.c.l.b16 %v3103
    %v3694 = vunpack.c.h.b16 %v3103
    %v3695 = vunpack.c.l.b16 %v3104
    %v3696 = vunpack.c.h.b16 %v3104
    %v3697 = vunpack.c.l.b16 %v3105
    %v3698 = vunpack.c.h.b16 %v3105
    %v3699 = vunpack.c.l.b16 %v3106
    %v3700 = vunpack.c.h.b16 %v3106
    %v3701 = vunpack.c.l.b16 %v3107
    %v3702 = vunpack.c.h.b16 %v3107
    %v3703 = vunpack.c.l.b16 %v3108
    %v3704 = vunpack.c.h.b16 %v3108
    %v3705 = vunpack.c.l.b16 %v3109
    %v3706 = vunpack.c.h.b16 %v3109
    %v3707 = vunpack.c.l.b16 %v3110
    %v3708 = vunpack.c.h.b16 %v3110
    %v3709 = vunpack.c.l.b16 %v3111
    %v3710 = vunpack.c.h.b16 %v3111
    %v3711 = vunpack.c.l.b16 %v3112
    %v3712 = vunpack.c.h.b16 %v3112
    %v3713 = vunpack.c.l.b16 %v3113
    %v3714 = vunpack.c.h.b16 %v3113
    %v3715 = vunpack.c.l.b16 %v3114
    %v3716 = vunpack.c.h.b16 %v3114
    %v3717 = vunpack.c.l.b16 %v3115
    %v3718 = vunpack.c.h.b16 %v3115
    %v3719 = vunpack.c.l.b16 %v3116
    %v3720 = vunpack.c.h.b16 %v3116
    %v3721 = vpack.c.b16 %v3349, %v3337
    %v3722 = vpack.c.b16 %v3350, %v3338
    %v3723 = vpack.c.b16 %v3351, %v3339
    %v3724 = vpack.c.b16 %v3352, %v3340
    %v3725 = vpack.c.b16 %v3353, %v3341
    %v3726 = vpack.c.b16 %v3354, %v3342
    %v3727 = vpack.c.b16 %v3355, %v3343
    %v3728 = vpack.c.b16 %v3356, %v3344
    %v3729 = vpack.c.b16 %v3357, %v3345
    %v3730 = vpack.c.b16 %v3358, %v3346
    %v3731 = vpack.c.b16 %v3359, %v3347
    %v3732 = vpack.c.b16 %v3360, %v3348
    %v3733 = vpack.c.b16 %v3373, %v3361
    %v3734 = vpack.c.b16 %v3374, %v3362
    %v3735 = vpack.c.b16 %v3375, %v3363
    %v3736 = vpack.c.b16 %v3376, %v3364
    %v3737 = vpack.c.b16 %v3377, %v3365
    %v3738 = vpack.c.b16 %v3378, %v3366
    %v3739 = vpack.c.b16 %v3379, %v3367
    %v3740 = vpack.c.b16 %v3380, %v3368
    %v3741 = vpack.c.b16 %v3381, %v3369
    %v3742 = vpack.c.b16 %v3382, %v3370
    %v3743 = vpack.c.b16 %v3383, %v3371
    %v3744 = vpack.c.b16 %v3384, %v3372
    %v3745 = vpack.c.b16 %v3397, %v3385
    %v3746 = vpack.c.b16 %v3398, %v3386
    %v3747 = vpack.c.b16 %v3399, %v3387
    %v3748 = vpack.c.b16 %v3400, %v3388
    %v3749 = vpack.c.b16 %v3401, %v3389
    %v3750 = vpack.c.b16 %v3402, %v3390
    %v3751 = vpack.c.b16 %v3403, %v3391
    %v3752 = vpack.c.b16 %v3404, %v3392
    %v3753 = vpack.c.b16 %v3405, %v3393
    %v3754 = vpack.c.b16 %v3406, %v3394
    %v3755 = vpack.c.b16 %v3407, %v3395
    %v3756 = vpack.c.b16 %v3408, %v3396
    %v3757 = vpack.c.b16 %v3421, %v3409
    %v3758 = vpack.c.b16 %v3422, %v3410
    %v3759 = vpack.c.b16 %v3423, %v3411
    %v3760 = vpack.c.b16 %v3424, %v3412
    %v3761 = vpack.c.b16 %v3425, %v3413
    %v3762 = vpack.c.b16 %v3426, %v3414
    %v3763 = vpack.c.b16 %v3427, %v3415
    %v3764 = vpack.c.b16 %v3428, %v3416
    %v3765 = vpack.c.b16 %v3429, %v3417
    %v3766 = vpack.c.b16 %v3430, %v3418
    %v3767 = vpack.c.b16 %v3431, %v3419
    %v3768 = vpack.c.b16 %v3432, %v3420
    %v3769 = vpack.c.b16 %v3445, %v3433
    %v3770 = vpack.c.b16 %v3446, %v3434
    %v3771 = vpack.c.b16 %v3447, %v3435
    %v3772 = vpack.c.b16 %v3448, %v3436
    %v3773 = vpack.c.b16 %v3449, %v3437
    %v3774 = vpack.c.b16 %v3450, %v3438
    %v3775 = vpack.c.b16 %v3451, %v3439
    %v3776 = vpack.c.b16 %v3452, %v3440
    %v3777 = vpack.c.b16 %v3453, %v3441
    %v3778 = vpack.c.b16 %v3454, %v3442
    %v3779 = vpack.c.b16 %v3455, %v3443
    %v3780 = vpack.c.b16 %v3456, %v3444
    %v3781 = vpack.c.b16 %v3469, %v3457
    %v3782 = vpack.c.b16 %v3470, %v3458
    %v3783 = vpack.c.b16 %v3471, %v3459
    %v3784 = vpack.c.b16 %v3472, %v3460
    %v3785 = vpack.c.b16 %v3473, %v3461
    %v3786 = vpack.c.b16 %v3474, %v3462
    %v3787 = vpack.c.b16 %v3475, %v3463
    %v3788 = vpack.c.b16 %v3476, %v3464
    %v3789 = vpack.c.b16 %v3477, %v3465
    %v3790 = vpack.c.b16 %v3478, %v3466
    %v3791 = vpack.c.b16 %v3479, %v3467
    %v3792 = vpack.c.b16 %v3480, %v3468
    %v3793 = vpack.c.b16 %v3493, %v3481
    %v3794 = vpack.c.b16 %v3494, %v3482
    %v3795 = vpack.c.b16 %v3495, %v3483
    %v3796 = vpack.c.b16 %v3496, %v3484
    %v3797 = vpack.c.b16 %v3497, %v3485
    %v3798 = vpack.c.b16 %v3498, %v3486
    %v3799 = vpack.c.b16 %v3499, %v3487
    %v3800 = vpack.c.b16 %v3500, %v3488
    %v3801 = vpack.c.b16 %v3501, %v3489
    %v3802 = vpack.c.b16 %v3502, %v3490
    %v3803 = vpack.c.b16 %v3503, %v3491
    %v3804 = vpack.c.b16 %v3504, %v3492
    %v3805 = vpack.c.b16 %v3517, %v3505
    %v3806 = vpack.c.b16 %v3518, %v3506
    %v3807 = vpack.c.b16 %v3519, %v3507
    %v3808 = vpack.c.b16 %v3520, %v3508
    %v3809 = vpack.c.b16 %v3521, %v3509
    %v3810 = vpack.c.b16 %v3522, %v3510
    %v3811 = vpack.c.b16 %v3523, %v3511
    %v3812 = vpack.c.b16 %v3524, %v3512
    %v3813 = vpack.c.b16 %v3525, %v3513
    %v3814 = vpack.c.b16 %v3526, %v3514
    %v3815 = vpack.c.b16 %v3527, %v3515
    %v3816 = vpack.c.b16 %v3528, %v3516
    %v3817 = vpack.c.b16 %v3541, %v3529
    %v3818 = vpack.c.b16 %v3542, %v3530
    %v3819 = vpack.c.b16 %v3543, %v3531
    %v3820 = vpack.c.b16 %v3544, %v3532
    %v3821 = vpack.c.b16 %v3545, %v3533
    %v3822 = vpack.c.b16 %v3546, %v3534
    %v3823 = vpack.c.b16 %v3547, %v3535
    %v3824 = vpack.c.b16 %v3548, %v3536
    %v3825 = vpack.c.b16 %v3549, %v3537
    %v3826 = vpack.c.b16 %v3550, %v3538
    %v3827 = vpack.c.b16 %v3551, %v3539
    %v3828 = vpack.c.b16 %v3552, %v3540
    %v3829 = vpack.c.b16 %v3565, %v3553
    %v3830 = vpack.c.b16 %v3566, %v3554
    %v3831 = vpack.c.b16 %v3567, %v3555
    %v3832 = vpack.c.b16 %v3568, %v3556
    %v3833 = vpack.c.b16 %v3569, %v3557
    %v3834 = vpack.c.b16 %v3570, %v3558
    %v3835 = vpack.c.b16 %v3571, %v3559
    %v3836 = vpack.c.b16 %v3572, %v3560
    %v3837 = vpack.c.b16 %v3573, %v3561
    %v3838 = vpack.c.b16 %v3574, %v3562
    %v3839 = vpack.c.b16 %v3575, %v3563
    %v3840 = vpack.c.b16 %v3576, %v3564
    %v3841 = vpack.c.b16 %v3589, %v3577
    %v3842 = vpack.c.b16 %v3590, %v3578
    %v3843 = vpack.c.b16 %v3591, %v3579
    %v3844 = vpack.c.b16 %v3592, %v3580
    %v3845 = vpack.c.b16 %v3593, %v3581
    %v3846 = vpack.c.b16 %v3594, %v3582
    %v3847 = vpack.c.b16 %v3595, %v3583
    %v3848 = vpack.c.b16 %v3596, %v3584
    %v3849 = vpack.c.b16 %v3597, %v3585
    %v3850 = vpack.c.b16 %v3598, %v3586
    %v3851 = vpack.c.b16 %v3599, %v3587
    %v3852 = vpack.c.b16 %v3600, %v3588
    %v3853 = vpack.c.b16 %v3613, %v3601
    %v3854 = vpack.c.b16 %v3614, %v3602
    %v3855 = vpack.c.b16 %v3615, %v3603
    %v3856 = vpack.c.b16 %v3616, %v3604
    %v3857 = vpack.c.b16 %v3617, %v3605
    %v3858 = vpack.c.b16 %v3618, %v3606
    %v3859 = vpack.c.b16 %v3619, %v3607
    %v3860 = vpack.c.b16 %v3620, %v3608
    %v3861 = vpack.c.b16 %v3621, %v3609
    %v3862 = vpack.c.b16 %v3622, %v3610
    %v3863 = vpack.c.b16 %v3623, %v3611
    %v3864 = vpack.c.b16 %v3624, %v3612
    %v3865 = vpack.c.b16 %v3637, %v3625
    %v3866 = vpack.c.b16 %v3638, %v3626
    %v3867 = vpack.c.b16 %v3639, %v3627
    %v3868 = vpack.c.b16 %v3640, %v3628
    %v3869 = vpack.c.b16 %v3641, %v3629
    %v3870 = vpack.c.b16 %v3642, %v3630
    %v3871 = vpack.c.b16 %v3643, %v3631
    %v3872 = vpack.c.b16 %v3644, %v3632
    %v3873 = vpack.c.b16 %v3645, %v3633
    %v3874 = vpack.c.b16 %v3646, %v3634
    %v3875 = vpack.c.b16 %v3647, %v3635
    %v3876 = vpack.c.b16 %v3648, %v3636
    %v3877 = vpack.c.b16 %v3661, %v3649
    %v3878 = vpack.c.b16 %v3662, %v3650
    %v3879 = vpack.c.b16 %v3663, %v3651
    %v3880 = vpack.c.b16 %v3664, %v3652
    %v3881 = vpack.c.b16 %v3665, %v3653
    %v3882 = vpack.c.b16 %v3666, %v3654
    %v3883 = vpack.c.b16 %v3667, %v3655
    %v3884 = vpack.c.b16 %v3668, %v3656
    %v3885 = vpack.c.b16 %v3669, %v3657
    %v3886 = vpack.c.b16 %v3670, %v3658
    %v3887 = vpack.c.b16 %v3671, %v3659
    %v3888 = vpack.c.b16 %v3672, %v3660
    %v3889 = vpack.c.b16 %v3685, %v3673
    %v3890 = vpack.c.b16 %v3686, %v3674
    %v3891 = vpack.c.b16 %v3687, %v3675
    %v3892 = vpack.c.b16 %v3688, %v3676
    %v3893 = vpack.c.b16 %v3689, %v3677
    %v3894 = vpack.c.b16 %v3690, %v3678
    %v3895 = vpack.c.b16 %v3691, %v3679
    %v3896 = vpack.c.b16 %v3692, %v3680
    %v3897 = vpack.c.b16 %v3693, %v3681
    %v3898 = vpack.c.b16 %v3694, %v3682
    %v3899 = vpack.c.b16 %v3695, %v3683
    %v3900 = vpack.c.b16 %v3696, %v3684
    %v3901 = vpack.c.b16 %v3709, %v3697
    %v3902 = vpack.c.b16 %v3710, %v3698
    %v3903 = vpack.c.b16 %v3711, %v3699
    %v3904 = vpack.c.b16 %v3712, %v3700
    %v3905 = vpack.c.b16 %v3713, %v3701
    %v3906 = vpack.c.b16 %v3714, %v3702
    %v3907 = vpack.c.b16 %v3715, %v3703
    %v3908 = vpack.c.b16 %v3716, %v3704
    %v3909 = vpack.c.b16 %v3717, %v3705
    %v3910 = vpack.c.b16 %v3718, %v3706
    %v3911 = vpack.c.b16 %v3719, %v3707
    %v3912 = vpack.c.b16 %v3720, %v3708
    %4105 = vmatpush.bf16.msra.mxu0 %v3805
    %4106 = vmatpush.bf16.msra.mxu0 %v3793
    %4107 = vmatpush.bf16.msra.mxu0 %v3781
    %4108 = vmatpush.bf16.msra.mxu0 %v3769
    %4109 = vmatpush.bf16.msra.mxu0 %v3757
    %4110 = vmatpush.bf16.msra.mxu0 %v3745
    %4111 = vmatpush.bf16.msra.mxu0 %v3733
    %4112 = vmatpush.bf16.msra.mxu0 %v3721
    %4113 = vmatmul.bf16.gmra.mxu0 %v2923
    %v4114 = vpop.f32.mrf.mxu0
    %v4115 = vadd.f32 %v3121, %v4114
    %v4116 = vpop.f32.mrf.mxu0
    %4117 = vdwg.mxu0
    %4118 = vmatpush.bf16.msra.mxu0 %v3901
    %4119 = vmatpush.bf16.msra.mxu0 %v3889
    %4120 = vmatpush.bf16.msra.mxu0 %v3877
    %4121 = vmatpush.bf16.msra.mxu0 %v3865
    %4122 = vmatpush.bf16.msra.mxu0 %v3853
    %4123 = vmatpush.bf16.msra.mxu0 %v3841
    %4124 = vmatpush.bf16.msra.mxu0 %v3829
    %4125 = vmatpush.bf16.msra.mxu0 %v3817
    %4126 = vmatmul.bf16.gmra.mxu0 %v2924
    %v4127 = vpop.f32.mrf.mxu0
    %v4128 = vadd.f32 %v4115, %v4127
    %v4129 = vpop.f32.mrf.mxu0
    %4130 = vdwg.mxu0
    %4131 = vmatpush.bf16.msra.mxu0 %v3806
    %4132 = vmatpush.bf16.msra.mxu0 %v3794
    %4133 = vmatpush.bf16.msra.mxu0 %v3782
    %4134 = vmatpush.bf16.msra.mxu0 %v3770
    %4135 = vmatpush.bf16.msra.mxu0 %v3758
    %4136 = vmatpush.bf16.msra.mxu0 %v3746
    %4137 = vmatpush.bf16.msra.mxu0 %v3734
    %4138 = vmatpush.bf16.msra.mxu0 %v3722
    %4139 = vmatmul.bf16.gmra.mxu0 %v2923
    %v4140 = vpop.f32.mrf.mxu0
    %v4141 = vadd.f32 %v3122, %v4140
    %v4142 = vpop.f32.mrf.mxu0
    %4143 = vdwg.mxu0
    %4144 = vmatpush.bf16.msra.mxu0 %v3902
    %4145 = vmatpush.bf16.msra.mxu0 %v3890
    %4146 = vmatpush.bf16.msra.mxu0 %v3878
    %4147 = vmatpush.bf16.msra.mxu0 %v3866
    %4148 = vmatpush.bf16.msra.mxu0 %v3854
    %4149 = vmatpush.bf16.msra.mxu0 %v3842
    %4150 = vmatpush.bf16.msra.mxu0 %v3830
    %4151 = vmatpush.bf16.msra.mxu0 %v3818
    %4152 = vmatmul.bf16.gmra.mxu0 %v2924
    %v4153 = vpop.f32.mrf.mxu0
    %v4154 = vadd.f32 %v4141, %v4153
    %v4155 = vpop.f32.mrf.mxu0
    %4156 = vdwg.mxu0
    %4157 = vmatpush.bf16.msra.mxu0 %v3807
    %4158 = vmatpush.bf16.msra.mxu0 %v3795
    %4159 = vmatpush.bf16.msra.mxu0 %v3783
    %4160 = vmatpush.bf16.msra.mxu0 %v3771
    %4161 = vmatpush.bf16.msra.mxu0 %v3759
    %4162 = vmatpush.bf16.msra.mxu0 %v3747
    %4163 = vmatpush.bf16.msra.mxu0 %v3735
    %4164 = vmatpush.bf16.msra.mxu0 %v3723
    %4165 = vmatmul.bf16.gmra.mxu0 %v2923
    %v4166 = vpop.f32.mrf.mxu0
    %v4167 = vadd.f32 %v3123, %v4166
    %v4168 = vpop.f32.mrf.mxu0
    %4169 = vdwg.mxu0
    %4170 = vmatpush.bf16.msra.mxu0 %v3903
    %4171 = vmatpush.bf16.msra.mxu0 %v3891
    %4172 = vmatpush.bf16.msra.mxu0 %v3879
    %4173 = vmatpush.bf16.msra.mxu0 %v3867
    %4174 = vmatpush.bf16.msra.mxu0 %v3855
    %4175 = vmatpush.bf16.msra.mxu0 %v3843
    %4176 = vmatpush.bf16.msra.mxu0 %v3831
    %4177 = vmatpush.bf16.msra.mxu0 %v3819
    %4178 = vmatmul.bf16.gmra.mxu0 %v2924
    %v4179 = vpop.f32.mrf.mxu0
    %v4180 = vadd.f32 %v4167, %v4179
    %v4181 = vpop.f32.mrf.mxu0
    %4182 = vdwg.mxu0
    %4183 = vmatpush.bf16.msra.mxu0 %v3808
    %4184 = vmatpush.bf16.msra.mxu0 %v3796
    %4185 = vmatpush.bf16.msra.mxu0 %v3784
    %4186 = vmatpush.bf16.msra.mxu0 %v3772
    %4187 = vmatpush.bf16.msra.mxu0 %v3760
    %4188 = vmatpush.bf16.msra.mxu0 %v3748
    %4189 = vmatpush.bf16.msra.mxu0 %v3736
    %4190 = vmatpush.bf16.msra.mxu0 %v3724
    %4191 = vmatmul.bf16.gmra.mxu0 %v2923
    %v4192 = vpop.f32.mrf.mxu0
    %v4193 = vadd.f32 %v3124, %v4192
    %v4194 = vpop.f32.mrf.mxu0
    %4195 = vdwg.mxu0
    %4196 = vmatpush.bf16.msra.mxu0 %v3904
    %4197 = vmatpush.bf16.msra.mxu0 %v3892
    %4198 = vmatpush.bf16.msra.mxu0 %v3880
    %4199 = vmatpush.bf16.msra.mxu0 %v3868
    %4200 = vmatpush.bf16.msra.mxu0 %v3856
    %4201 = vmatpush.bf16.msra.mxu0 %v3844
    %4202 = vmatpush.bf16.msra.mxu0 %v3832
    %4203 = vmatpush.bf16.msra.mxu0 %v3820
    %4204 = vmatmul.bf16.gmra.mxu0 %v2924
    %v4205 = vpop.f32.mrf.mxu0
    %v4206 = vadd.f32 %v4193, %v4205
    %v4207 = vpop.f32.mrf.mxu0
    %4208 = vdwg.mxu0
    %4209 = vmatpush.bf16.msra.mxu0 %v3809
    %4210 = vmatpush.bf16.msra.mxu0 %v3797
    %4211 = vmatpush.bf16.msra.mxu0 %v3785
    %4212 = vmatpush.bf16.msra.mxu0 %v3773
    %4213 = vmatpush.bf16.msra.mxu0 %v3761
    %4214 = vmatpush.bf16.msra.mxu0 %v3749
    %4215 = vmatpush.bf16.msra.mxu0 %v3737
    %4216 = vmatpush.bf16.msra.mxu0 %v3725
    %4217 = vmatmul.bf16.gmra.mxu0 %v2923
    %v4218 = vpop.f32.mrf.mxu0
    %v4219 = vadd.f32 %v3125, %v4218
    %v4220 = vpop.f32.mrf.mxu0
    %4221 = vdwg.mxu0
    %4222 = vmatpush.bf16.msra.mxu0 %v3905
    %4223 = vmatpush.bf16.msra.mxu0 %v3893
    %4224 = vmatpush.bf16.msra.mxu0 %v3881
    %4225 = vmatpush.bf16.msra.mxu0 %v3869
    %4226 = vmatpush.bf16.msra.mxu0 %v3857
    %4227 = vmatpush.bf16.msra.mxu0 %v3845
    %4228 = vmatpush.bf16.msra.mxu0 %v3833
    %4229 = vmatpush.bf16.msra.mxu0 %v3821
    %4230 = vmatmul.bf16.gmra.mxu0 %v2924
    %v4231 = vpop.f32.mrf.mxu0
    %v4232 = vadd.f32 %v4219, %v4231
    %v4233 = vpop.f32.mrf.mxu0
    %4234 = vdwg.mxu0
    %4235 = vmatpush.bf16.msra.mxu0 %v3810
    %4236 = vmatpush.bf16.msra.mxu0 %v3798
    %4237 = vmatpush.bf16.msra.mxu0 %v3786
    %4238 = vmatpush.bf16.msra.mxu0 %v3774
    %4239 = vmatpush.bf16.msra.mxu0 %v3762
    %4240 = vmatpush.bf16.msra.mxu0 %v3750
    %4241 = vmatpush.bf16.msra.mxu0 %v3738
    %4242 = vmatpush.bf16.msra.mxu0 %v3726
    %4243 = vmatmul.bf16.gmra.mxu0 %v2923
    %v4244 = vpop.f32.mrf.mxu0
    %v4245 = vadd.f32 %v3126, %v4244
    %v4246 = vpop.f32.mrf.mxu0
    %4247 = vdwg.mxu0
    %4248 = vmatpush.bf16.msra.mxu0 %v3906
    %4249 = vmatpush.bf16.msra.mxu0 %v3894
    %4250 = vmatpush.bf16.msra.mxu0 %v3882
    %4251 = vmatpush.bf16.msra.mxu0 %v3870
    %4252 = vmatpush.bf16.msra.mxu0 %v3858
    %4253 = vmatpush.bf16.msra.mxu0 %v3846
    %4254 = vmatpush.bf16.msra.mxu0 %v3834
    %4255 = vmatpush.bf16.msra.mxu0 %v3822
    %4256 = vmatmul.bf16.gmra.mxu0 %v2924
    %v4257 = vpop.f32.mrf.mxu0
    %v4258 = vadd.f32 %v4245, %v4257
    %v4259 = vpop.f32.mrf.mxu0
    %4260 = vdwg.mxu0
    %4261 = vmatpush.bf16.msra.mxu0 %v3811
    %4262 = vmatpush.bf16.msra.mxu0 %v3799
    %4263 = vmatpush.bf16.msra.mxu0 %v3787
    %4264 = vmatpush.bf16.msra.mxu0 %v3775
    %4265 = vmatpush.bf16.msra.mxu0 %v3763
    %4266 = vmatpush.bf16.msra.mxu0 %v3751
    %4267 = vmatpush.bf16.msra.mxu0 %v3739
    %4268 = vmatpush.bf16.msra.mxu0 %v3727
    %4269 = vmatmul.bf16.gmra.mxu0 %v2923
    %v4270 = vpop.f32.mrf.mxu0
    %v4271 = vadd.f32 %v3127, %v4270
    %v4272 = vpop.f32.mrf.mxu0
    %4273 = vdwg.mxu0
    %4274 = vmatpush.bf16.msra.mxu0 %v3907
    %4275 = vmatpush.bf16.msra.mxu0 %v3895
    %4276 = vmatpush.bf16.msra.mxu0 %v3883
    %4277 = vmatpush.bf16.msra.mxu0 %v3871
    %4278 = vmatpush.bf16.msra.mxu0 %v3859
    %4279 = vmatpush.bf16.msra.mxu0 %v3847
    %4280 = vmatpush.bf16.msra.mxu0 %v3835
    %4281 = vmatpush.bf16.msra.mxu0 %v3823
    %4282 = vmatmul.bf16.gmra.mxu0 %v2924
    %v4283 = vpop.f32.mrf.mxu0
    %v4284 = vadd.f32 %v4271, %v4283
    %v4285 = vpop.f32.mrf.mxu0
    %4286 = vdwg.mxu0
    %4287 = vmatpush.bf16.msra.mxu0 %v3812
    %4288 = vmatpush.bf16.msra.mxu0 %v3800
    %4289 = vmatpush.bf16.msra.mxu0 %v3788
    %4290 = vmatpush.bf16.msra.mxu0 %v3776
    %4291 = vmatpush.bf16.msra.mxu0 %v3764
    %4292 = vmatpush.bf16.msra.mxu0 %v3752
    %4293 = vmatpush.bf16.msra.mxu0 %v3740
    %4294 = vmatpush.bf16.msra.mxu0 %v3728
    %4295 = vmatmul.bf16.gmra.mxu0 %v2923
    %v4296 = vpop.f32.mrf.mxu0
    %v4297 = vadd.f32 %v3128, %v4296
    %v4298 = vpop.f32.mrf.mxu0
    %4299 = vdwg.mxu0
    %4300 = vmatpush.bf16.msra.mxu0 %v3908
    %4301 = vmatpush.bf16.msra.mxu0 %v3896
    %4302 = vmatpush.bf16.msra.mxu0 %v3884
    %4303 = vmatpush.bf16.msra.mxu0 %v3872
    %4304 = vmatpush.bf16.msra.mxu0 %v3860
    %4305 = vmatpush.bf16.msra.mxu0 %v3848
    %4306 = vmatpush.bf16.msra.mxu0 %v3836
    %4307 = vmatpush.bf16.msra.mxu0 %v3824
    %4308 = vmatmul.bf16.gmra.mxu0 %v2924
    %v4309 = vpop.f32.mrf.mxu0
    %v4310 = vadd.f32 %v4297, %v4309
    %v4311 = vpop.f32.mrf.mxu0
    %4312 = vdwg.mxu0
    %4313 = vmatpush.bf16.msra.mxu0 %v3813
    %4314 = vmatpush.bf16.msra.mxu0 %v3801
    %4315 = vmatpush.bf16.msra.mxu0 %v3789
    %4316 = vmatpush.bf16.msra.mxu0 %v3777
    %4317 = vmatpush.bf16.msra.mxu0 %v3765
    %4318 = vmatpush.bf16.msra.mxu0 %v3753
    %4319 = vmatpush.bf16.msra.mxu0 %v3741
    %4320 = vmatpush.bf16.msra.mxu0 %v3729
    %4321 = vmatmul.bf16.gmra.mxu0 %v2923
    %v4322 = vpop.f32.mrf.mxu0
    %v4323 = vadd.f32 %v3129, %v4322
    %v4324 = vpop.f32.mrf.mxu0
    %4325 = vdwg.mxu0
    %4326 = vmatpush.bf16.msra.mxu0 %v3909
    %4327 = vmatpush.bf16.msra.mxu0 %v3897
    %4328 = vmatpush.bf16.msra.mxu0 %v3885
    %4329 = vmatpush.bf16.msra.mxu0 %v3873
    %4330 = vmatpush.bf16.msra.mxu0 %v3861
    %4331 = vmatpush.bf16.msra.mxu0 %v3849
    %4332 = vmatpush.bf16.msra.mxu0 %v3837
    %4333 = vmatpush.bf16.msra.mxu0 %v3825
    %4334 = vmatmul.bf16.gmra.mxu0 %v2924
    %v4335 = vpop.f32.mrf.mxu0
    %v4336 = vadd.f32 %v4323, %v4335
    %v4337 = vpop.f32.mrf.mxu0
    %4338 = vdwg.mxu0
    %4339 = vmatpush.bf16.msra.mxu0 %v3814
    %4340 = vmatpush.bf16.msra.mxu0 %v3802
    %4341 = vmatpush.bf16.msra.mxu0 %v3790
    %4342 = vmatpush.bf16.msra.mxu0 %v3778
    %4343 = vmatpush.bf16.msra.mxu0 %v3766
    %4344 = vmatpush.bf16.msra.mxu0 %v3754
    %4345 = vmatpush.bf16.msra.mxu0 %v3742
    %4346 = vmatpush.bf16.msra.mxu0 %v3730
    %4347 = vmatmul.bf16.gmra.mxu0 %v2923
    %v4348 = vpop.f32.mrf.mxu0
    %v4349 = vadd.f32 %v3130, %v4348
    %v4350 = vpop.f32.mrf.mxu0
    %4351 = vdwg.mxu0
    %4352 = vmatpush.bf16.msra.mxu0 %v3910
    %4353 = vmatpush.bf16.msra.mxu0 %v3898
    %4354 = vmatpush.bf16.msra.mxu0 %v3886
    %4355 = vmatpush.bf16.msra.mxu0 %v3874
    %4356 = vmatpush.bf16.msra.mxu0 %v3862
    %4357 = vmatpush.bf16.msra.mxu0 %v3850
    %4358 = vmatpush.bf16.msra.mxu0 %v3838
    %4359 = vmatpush.bf16.msra.mxu0 %v3826
    %4360 = vmatmul.bf16.gmra.mxu0 %v2924
    %v4361 = vpop.f32.mrf.mxu0
    %v4362 = vadd.f32 %v4349, %v4361
    %v4363 = vpop.f32.mrf.mxu0
    %4364 = vdwg.mxu0
    %4365 = vmatpush.bf16.msra.mxu0 %v3815
    %4366 = vmatpush.bf16.msra.mxu0 %v3803
    %4367 = vmatpush.bf16.msra.mxu0 %v3791
    %4368 = vmatpush.bf16.msra.mxu0 %v3779
    %4369 = vmatpush.bf16.msra.mxu0 %v3767
    %4370 = vmatpush.bf16.msra.mxu0 %v3755
    %4371 = vmatpush.bf16.msra.mxu0 %v3743
    %4372 = vmatpush.bf16.msra.mxu0 %v3731
    %4373 = vmatmul.bf16.gmra.mxu0 %v2923
    %v4374 = vpop.f32.mrf.mxu0
    %v4375 = vadd.f32 %v3131, %v4374
    %v4376 = vpop.f32.mrf.mxu0
    %4377 = vdwg.mxu0
    %4378 = vmatpush.bf16.msra.mxu0 %v3911
    %4379 = vmatpush.bf16.msra.mxu0 %v3899
    %4380 = vmatpush.bf16.msra.mxu0 %v3887
    %4381 = vmatpush.bf16.msra.mxu0 %v3875
    %4382 = vmatpush.bf16.msra.mxu0 %v3863
    %4383 = vmatpush.bf16.msra.mxu0 %v3851
    %4384 = vmatpush.bf16.msra.mxu0 %v3839
    %4385 = vmatpush.bf16.msra.mxu0 %v3827
    %4386 = vmatmul.bf16.gmra.mxu0 %v2924
    %v4387 = vpop.f32.mrf.mxu0
    %v4388 = vadd.f32 %v4375, %v4387
    %v4389 = vpop.f32.mrf.mxu0
    %4390 = vdwg.mxu0
    %4391 = vmatpush.bf16.msra.mxu0 %v3816
    %4392 = vmatpush.bf16.msra.mxu0 %v3804
    %4393 = vmatpush.bf16.msra.mxu0 %v3792
    %4394 = vmatpush.bf16.msra.mxu0 %v3780
    %4395 = vmatpush.bf16.msra.mxu0 %v3768
    %4396 = vmatpush.bf16.msra.mxu0 %v3756
    %4397 = vmatpush.bf16.msra.mxu0 %v3744
    %4398 = vmatpush.bf16.msra.mxu0 %v3732
    %4399 = vmatmul.bf16.gmra.mxu0 %v2923
    %v4400 = vpop.f32.mrf.mxu0
    %v4401 = vadd.f32 %v3132, %v4400
    %v4402 = vpop.f32.mrf.mxu0
    %4403 = vdwg.mxu0
    %4404 = vmatpush.bf16.msra.mxu0 %v3912
    %4405 = vmatpush.bf16.msra.mxu0 %v3900
    %4406 = vmatpush.bf16.msra.mxu0 %v3888
    %4407 = vmatpush.bf16.msra.mxu0 %v3876
    %4408 = vmatpush.bf16.msra.mxu0 %v3864
    %4409 = vmatpush.bf16.msra.mxu0 %v3852
    %4410 = vmatpush.bf16.msra.mxu0 %v3840
    %4411 = vmatpush.bf16.msra.mxu0 %v3828
    %4412 = vmatmul.bf16.gmra.mxu0 %v2924
    %v4413 = vpop.f32.mrf.mxu0
    %v4414 = vadd.f32 %v4401, %v4413
    %v4415 = vpop.f32.mrf.mxu0
    %4416 = vdwg.mxu0
    %v4417 = vadd.f32 %v4128, %v1285
    %v4418 = vadd.f32 %v4154, %v1292
    %v4419 = vadd.f32 %v4180, %v1299
    %v4420 = vadd.f32 %v4206, %v1306
    %v4421 = vadd.f32 %v4232, %v1349
    %v4422 = vadd.f32 %v4258, %v1356
    %v4423 = vadd.f32 %v4284, %v1363
    %v4424 = vadd.f32 %v4310, %v1370
    %v4425 = vadd.f32 %v4336, %v1413
    %v4426 = vadd.f32 %v4362, %v1420
    %v4427 = vadd.f32 %v4388, %v1427
    %v4428 = vadd.f32 %v4414, %v1434
    %v4429 = vld [vmem:[#allocation17] sm:$0xff]
    %v4430 = vld [vmem:[#allocation17 + $0x8] sm:$0xf]
    %v4431 = vld [vmem:[#allocation19] sm:$0xff]
    %v4432 = vld [vmem:[#allocation19 + $0x8] sm:$0xf]
    %v4433 = vadd.f32 %v4417, %v4418
    %v4434 = vadd.f32 %v4433, %v4419
    %v4435 = vadd.f32 %v4434, %v4420
    %v4436 = vadd.f32 %v4435, %v4421
    %v4437 = vadd.f32 %v4436, %v4422
    %v4438 = vadd.f32 %v4437, %v4423
    %v4439 = vadd.f32 %v4438, %v4424
    %v4440 = vadd.f32 %v4439, %v4425
    %v4441 = vadd.f32 %v4440, %v4426
    %v4442 = vadd.f32 %v4441, %v4427
    %v4443 = vadd.f32 %v4442, %v4428
    %4444 = vadd.xlane.f32.xlu0 %v4443
    %v4445 = vpop.xlane.xlu0 %4444
    %v4446 = vrcp.pop 1536.0
    %v4447 = vmul.f32 1536.0, %v4446
    %v4448 = vsub.f32 1.0, %v4447
    %v4449 = vmul.f32 %v4446, %v4448
    %v4450 = vadd.f32 %v4446, %v4449
    %vm4451 = vweird.f32 %v4446
    %v4452 = vsel %vm4451, %v4446, %v4450
    %v4453 = vmul.f32 %v4445, %v4452
    %v4454 = vsub.f32 %v4417, %v4453
    %v4455 = vsub.f32 %v4418, %v4453
    %v4456 = vsub.f32 %v4419, %v4453
    %v4457 = vsub.f32 %v4420, %v4453
    %v4458 = vsub.f32 %v4421, %v4453
    %v4459 = vsub.f32 %v4422, %v4453
    %v4460 = vsub.f32 %v4423, %v4453
    %v4461 = vsub.f32 %v4424, %v4453
    %v4462 = vsub.f32 %v4425, %v4453
    %v4463 = vsub.f32 %v4426, %v4453
    %v4464 = vsub.f32 %v4427, %v4453
    %v4465 = vsub.f32 %v4428, %v4453
    %v4466 = vmul.f32 %v4454, %v4454
    %v4467 = vmul.f32 %v4455, %v4455
    %v4468 = vmul.f32 %v4456, %v4456
    %v4469 = vmul.f32 %v4457, %v4457
    %v4470 = vmul.f32 %v4458, %v4458
    %v4471 = vmul.f32 %v4459, %v4459
    %v4472 = vmul.f32 %v4460, %v4460
    %v4473 = vmul.f32 %v4461, %v4461
    %v4474 = vmul.f32 %v4462, %v4462
    %v4475 = vmul.f32 %v4463, %v4463
    %v4476 = vmul.f32 %v4464, %v4464
    %v4477 = vmul.f32 %v4465, %v4465
    %v4478 = vadd.f32 %v4466, %v4467
    %v4479 = vadd.f32 %v4478, %v4468
    %v4480 = vadd.f32 %v4479, %v4469
    %v4481 = vadd.f32 %v4480, %v4470
    %v4482 = vadd.f32 %v4481, %v4471
    %v4483 = vadd.f32 %v4482, %v4472
    %v4484 = vadd.f32 %v4483, %v4473
    %v4485 = vadd.f32 %v4484, %v4474
    %v4486 = vadd.f32 %v4485, %v4475
    %v4487 = vadd.f32 %v4486, %v4476
    %v4488 = vadd.f32 %v4487, %v4477
    %4489 = vadd.xlane.f32.xlu0 %v4488
    %v4490 = vpop.xlane.xlu0 %4489
    %v4491 = vmul.f32 %v4490, %v4452
    %v4492 = vadd.f32 %v4491, 1e-06
    %v4493 = vrsqrt.pop %v4492
    %v4494 = vmul.f32 %v4493, %v4492
    %v4495 = vmul.f32 %v4494, %v4493
    %v4496 = vmul.f32 0.5, %v4495
    %v4497 = vsub.f32 1.5, %v4496
    %v4498 = vmul.f32 %v4493, %v4497
    %vm4499 = vweird.f32 %v4492
    %vm4500 = vweird.f32 %v4493
    %vm4501 = vmor %vm4499, %vm4500
    %v4502 = vsel %vm4501, %v4493, %v4498
    %v4503 = vmul.f32 %v4454, %v4502
    %v4504 = vmul.f32 %v4455, %v4502
    %v4505 = vmul.f32 %v4456, %v4502
    %v4506 = vmul.f32 %v4457, %v4502
    %v4507 = vmul.f32 %v4458, %v4502
    %v4508 = vmul.f32 %v4459, %v4502
    %v4509 = vmul.f32 %v4460, %v4502
    %v4510 = vmul.f32 %v4461, %v4502
    %v4511 = vmul.f32 %v4462, %v4502
    %v4512 = vmul.f32 %v4463, %v4502
    %v4513 = vmul.f32 %v4464, %v4502
    %v4514 = vmul.f32 %v4465, %v4502
    %v4517 = vperm.slane %v4429, 0
    %v4518 = vperm.slane %v4429, 1
    %v4519 = vperm.slane %v4429, 2
    %v4520 = vperm.slane %v4429, 3
    %v4521 = vperm.slane %v4429, 4
    %v4522 = vperm.slane %v4429, 5
    %v4523 = vperm.slane %v4429, 6
    %v4524 = vperm.slane %v4429, 7
    %v4525 = vperm.slane %v4430, 0
    %v4526 = vperm.slane %v4430, 1
    %v4527 = vperm.slane %v4430, 2
    %v4528 = vperm.slane %v4430, 3
    %v4541 = vmul.f32 %v4503, %v4517
    %v4542 = vmul.f32 %v4504, %v4518
    %v4543 = vmul.f32 %v4505, %v4519
    %v4544 = vmul.f32 %v4506, %v4520
    %v4545 = vmul.f32 %v4507, %v4521
    %v4546 = vmul.f32 %v4508, %v4522
    %v4547 = vmul.f32 %v4509, %v4523
    %v4548 = vmul.f32 %v4510, %v4524
    %v4549 = vmul.f32 %v4511, %v4525
    %v4550 = vmul.f32 %v4512, %v4526
    %v4551 = vmul.f32 %v4513, %v4527
    %v4552 = vmul.f32 %v4514, %v4528
    %v4555 = vperm.slane %v4431, 0
    %v4556 = vperm.slane %v4431, 1
    %v4557 = vperm.slane %v4431, 2
    %v4558 = vperm.slane %v4431, 3
    %v4559 = vperm.slane %v4431, 4
    %v4560 = vperm.slane %v4431, 5
    %v4561 = vperm.slane %v4431, 6
    %v4562 = vperm.slane %v4431, 7
    %v4563 = vperm.slane %v4432, 0
    %v4564 = vperm.slane %v4432, 1
    %v4565 = vperm.slane %v4432, 2
    %v4566 = vperm.slane %v4432, 3
    %v4579 = vadd.f32 %v4541, %v4555
    %v4580 = vadd.f32 %v4542, %v4556
    %v4581 = vadd.f32 %v4543, %v4557
    %v4582 = vadd.f32 %v4544, %v4558
    %v4583 = vadd.f32 %v4545, %v4559
    %v4584 = vadd.f32 %v4546, %v4560
    %v4585 = vadd.f32 %v4547, %v4561
    %v4586 = vadd.f32 %v4548, %v4562
    %v4587 = vadd.f32 %v4549, %v4563
    %v4588 = vadd.f32 %v4550, %v4564
    %v4589 = vadd.f32 %v4551, %v4565
    %v4590 = vadd.f32 %v4552, %v4566
    %v4591 = vpack.c.bf16 %v4579, %v4579
    %v4592 = vpack.c.bf16 %v4580, %v4580
    %v4593 = vpack.c.bf16 %v4581, %v4581
    %v4594 = vpack.c.bf16 %v4582, %v4582
    %v4595 = vpack.c.bf16 %v4583, %v4583
    %v4596 = vpack.c.bf16 %v4584, %v4584
    %v4597 = vpack.c.bf16 %v4585, %v4585
    %v4598 = vpack.c.bf16 %v4586, %v4586
    %v4599 = vpack.c.bf16 %v4587, %v4587
    %v4600 = vpack.c.bf16 %v4588, %v4588
    %v4601 = vpack.c.bf16 %v4589, %v4589
    %v4602 = vpack.c.bf16 %v4590, %v4590
    %v4603 = vld [vmem:[#allocation20] sm:$0xff]
    %v4604 = vld [vmem:[#allocation20 + $0x8] sm:$0xff]
    %v4605 = vld [vmem:[#allocation20 + $0x10] sm:$0xff]
    %v4606 = vld [vmem:[#allocation20 + $0x18] sm:$0xff]
    %v4607 = vld [vmem:[#allocation20 + $0x20] sm:$0xff]
    %v4608 = vld [vmem:[#allocation20 + $0x28] sm:$0xff]
    %v4609 = vld [vmem:[#allocation20 + $0x30] sm:$0xff]
    %v4610 = vld [vmem:[#allocation20 + $0x38] sm:$0xff]
    %v4611 = vld [vmem:[#allocation20 + $0x40] sm:$0xff]
    %v4612 = vld [vmem:[#allocation20 + $0x48] sm:$0xff]
    %v4613 = vld [vmem:[#allocation20 + $0x50] sm:$0xff]
    %v4614 = vld [vmem:[#allocation20 + $0x58] sm:$0xff]
    %v4615 = vld [vmem:[#allocation20 + $0x60] sm:$0xff]
    %v4616 = vld [vmem:[#allocation20 + $0x68] sm:$0xff]
    %v4617 = vld [vmem:[#allocation20 + $0x70] sm:$0xff]
    %v4618 = vld [vmem:[#allocation20 + $0x78] sm:$0xff]
    %v4619 = vld [vmem:[#allocation20 + $0x80] sm:$0xff]
    %v4620 = vld [vmem:[#allocation20 + $0x88] sm:$0xff]
    %v4621 = vld [vmem:[#allocation20 + $0x90] sm:$0xff]
    %v4622 = vld [vmem:[#allocation20 + $0x98] sm:$0xff]
    %v4623 = vld [vmem:[#allocation20 + $0xa0] sm:$0xff]
    %v4624 = vld [vmem:[#allocation20 + $0xa8] sm:$0xff]
    %v4625 = vld [vmem:[#allocation20 + $0xb0] sm:$0xff]
    %v4626 = vld [vmem:[#allocation20 + $0xb8] sm:$0xff]
    %v4627 = vld [vmem:[#allocation20 + $0xc0] sm:$0xff]
    %v4628 = vld [vmem:[#allocation20 + $0xc8] sm:$0xff]
    %v4629 = vld [vmem:[#allocation20 + $0xd0] sm:$0xff]
    %v4630 = vld [vmem:[#allocation20 + $0xd8] sm:$0xff]
    %v4631 = vld [vmem:[#allocation20 + $0xe0] sm:$0xff]
    %v4632 = vld [vmem:[#allocation20 + $0xe8] sm:$0xff]
    %v4633 = vld [vmem:[#allocation20 + $0xf0] sm:$0xff]
    %v4634 = vld [vmem:[#allocation20 + $0xf8] sm:$0xff]
    %v4635 = vld [vmem:[#allocation20 + $0x100] sm:$0xff]
    %v4636 = vld [vmem:[#allocation20 + $0x108] sm:$0xff]
    %v4637 = vld [vmem:[#allocation20 + $0x110] sm:$0xff]
    %v4638 = vld [vmem:[#allocation20 + $0x118] sm:$0xff]
    %v4639 = vld [vmem:[#allocation20 + $0x120] sm:$0xff]
    %v4640 = vld [vmem:[#allocation20 + $0x128] sm:$0xff]
    %v4641 = vld [vmem:[#allocation20 + $0x130] sm:$0xff]
    %v4642 = vld [vmem:[#allocation20 + $0x138] sm:$0xff]
    %v4643 = vld [vmem:[#allocation20 + $0x140] sm:$0xff]
    %v4644 = vld [vmem:[#allocation20 + $0x148] sm:$0xff]
    %v4645 = vld [vmem:[#allocation20 + $0x150] sm:$0xff]
    %v4646 = vld [vmem:[#allocation20 + $0x158] sm:$0xff]
    %v4647 = vld [vmem:[#allocation20 + $0x160] sm:$0xff]
    %v4648 = vld [vmem:[#allocation20 + $0x168] sm:$0xff]
    %v4649 = vld [vmem:[#allocation20 + $0x170] sm:$0xff]
    %v4650 = vld [vmem:[#allocation20 + $0x178] sm:$0xff]
    %v4651 = vld [vmem:[#allocation20 + $0x180] sm:$0xff]
    %v4652 = vld [vmem:[#allocation20 + $0x188] sm:$0xff]
    %v4653 = vld [vmem:[#allocation20 + $0x190] sm:$0xff]
    %v4654 = vld [vmem:[#allocation20 + $0x198] sm:$0xff]
    %v4655 = vld [vmem:[#allocation20 + $0x1a0] sm:$0xff]
    %v4656 = vld [vmem:[#allocation20 + $0x1a8] sm:$0xff]
    %v4657 = vld [vmem:[#allocation20 + $0x1b0] sm:$0xff]
    %v4658 = vld [vmem:[#allocation20 + $0x1b8] sm:$0xff]
    %v4659 = vld [vmem:[#allocation20 + $0x1c0] sm:$0xff]
    %v4660 = vld [vmem:[#allocation20 + $0x1c8] sm:$0xff]
    %v4661 = vld [vmem:[#allocation20 + $0x1d0] sm:$0xff]
    %v4662 = vld [vmem:[#allocation20 + $0x1d8] sm:$0xff]
    %v4663 = vld [vmem:[#allocation20 + $0x1e0] sm:$0xff]
    %v4664 = vld [vmem:[#allocation20 + $0x1e8] sm:$0xff]
    %v4665 = vld [vmem:[#allocation20 + $0x1f0] sm:$0xff]
    %v4666 = vld [vmem:[#allocation20 + $0x1f8] sm:$0xff]
    %v4667 = vld [vmem:[#allocation20 + $0x200] sm:$0xff]
    %v4668 = vld [vmem:[#allocation20 + $0x208] sm:$0xff]
    %v4669 = vld [vmem:[#allocation20 + $0x210] sm:$0xff]
    %v4670 = vld [vmem:[#allocation20 + $0x218] sm:$0xff]
    %v4671 = vld [vmem:[#allocation20 + $0x220] sm:$0xff]
    %v4672 = vld [vmem:[#allocation20 + $0x228] sm:$0xff]
    %v4673 = vld [vmem:[#allocation20 + $0x230] sm:$0xff]
    %v4674 = vld [vmem:[#allocation20 + $0x238] sm:$0xff]
    %v4675 = vld [vmem:[#allocation20 + $0x240] sm:$0xff]
    %v4676 = vld [vmem:[#allocation20 + $0x248] sm:$0xff]
    %v4677 = vld [vmem:[#allocation20 + $0x250] sm:$0xff]
    %v4678 = vld [vmem:[#allocation20 + $0x258] sm:$0xff]
    %v4679 = vld [vmem:[#allocation20 + $0x260] sm:$0xff]
    %v4680 = vld [vmem:[#allocation20 + $0x268] sm:$0xff]
    %v4681 = vld [vmem:[#allocation20 + $0x270] sm:$0xff]
    %v4682 = vld [vmem:[#allocation20 + $0x278] sm:$0xff]
    %v4683 = vld [vmem:[#allocation20 + $0x280] sm:$0xff]
    %v4684 = vld [vmem:[#allocation20 + $0x288] sm:$0xff]
    %v4685 = vld [vmem:[#allocation20 + $0x290] sm:$0xff]
    %v4686 = vld [vmem:[#allocation20 + $0x298] sm:$0xff]
    %v4687 = vld [vmem:[#allocation20 + $0x2a0] sm:$0xff]
    %v4688 = vld [vmem:[#allocation20 + $0x2a8] sm:$0xff]
    %v4689 = vld [vmem:[#allocation20 + $0x2b0] sm:$0xff]
    %v4690 = vld [vmem:[#allocation20 + $0x2b8] sm:$0xff]
    %v4691 = vld [vmem:[#allocation20 + $0x2c0] sm:$0xff]
    %v4692 = vld [vmem:[#allocation20 + $0x2c8] sm:$0xff]
    %v4693 = vld [vmem:[#allocation20 + $0x2d0] sm:$0xff]
    %v4694 = vld [vmem:[#allocation20 + $0x2d8] sm:$0xff]
    %v4695 = vld [vmem:[#allocation20 + $0x2e0] sm:$0xff]
    %v4696 = vld [vmem:[#allocation20 + $0x2e8] sm:$0xff]
    %v4697 = vld [vmem:[#allocation20 + $0x2f0] sm:$0xff]
    %v4698 = vld [vmem:[#allocation20 + $0x2f8] sm:$0xff]
    %v4699 = vld [vmem:[#allocation20 + $0x300] sm:$0xff]
    %v4700 = vld [vmem:[#allocation20 + $0x308] sm:$0xff]
    %v4701 = vld [vmem:[#allocation20 + $0x310] sm:$0xff]
    %v4702 = vld [vmem:[#allocation20 + $0x318] sm:$0xff]
    %v4703 = vld [vmem:[#allocation20 + $0x320] sm:$0xff]
    %v4704 = vld [vmem:[#allocation20 + $0x328] sm:$0xff]
    %v4705 = vld [vmem:[#allocation20 + $0x330] sm:$0xff]
    %v4706 = vld [vmem:[#allocation20 + $0x338] sm:$0xff]
    %v4707 = vld [vmem:[#allocation20 + $0x340] sm:$0xff]
    %v4708 = vld [vmem:[#allocation20 + $0x348] sm:$0xff]
    %v4709 = vld [vmem:[#allocation20 + $0x350] sm:$0xff]
    %v4710 = vld [vmem:[#allocation20 + $0x358] sm:$0xff]
    %v4711 = vld [vmem:[#allocation20 + $0x360] sm:$0xff]
    %v4712 = vld [vmem:[#allocation20 + $0x368] sm:$0xff]
    %v4713 = vld [vmem:[#allocation20 + $0x370] sm:$0xff]
    %v4714 = vld [vmem:[#allocation20 + $0x378] sm:$0xff]
    %v4715 = vld [vmem:[#allocation20 + $0x380] sm:$0xff]
    %v4716 = vld [vmem:[#allocation20 + $0x388] sm:$0xff]
    %v4717 = vld [vmem:[#allocation20 + $0x390] sm:$0xff]
    %v4718 = vld [vmem:[#allocation20 + $0x398] sm:$0xff]
    %v4719 = vld [vmem:[#allocation20 + $0x3a0] sm:$0xff]
    %v4720 = vld [vmem:[#allocation20 + $0x3a8] sm:$0xff]
    %v4721 = vld [vmem:[#allocation20 + $0x3b0] sm:$0xff]
    %v4722 = vld [vmem:[#allocation20 + $0x3b8] sm:$0xff]
    %v4723 = vld [vmem:[#allocation20 + $0x3c0] sm:$0xff]
    %v4724 = vld [vmem:[#allocation20 + $0x3c8] sm:$0xff]
    %v4725 = vld [vmem:[#allocation20 + $0x3d0] sm:$0xff]
    %v4726 = vld [vmem:[#allocation20 + $0x3d8] sm:$0xff]
    %v4727 = vld [vmem:[#allocation20 + $0x3e0] sm:$0xff]
    %v4728 = vld [vmem:[#allocation20 + $0x3e8] sm:$0xff]
    %v4729 = vld [vmem:[#allocation20 + $0x3f0] sm:$0xff]
    %v4730 = vld [vmem:[#allocation20 + $0x3f8] sm:$0xff]
    %v4731 = vld [vmem:[#allocation20 + $0x400] sm:$0xff]
    %v4732 = vld [vmem:[#allocation20 + $0x408] sm:$0xff]
    %v4733 = vld [vmem:[#allocation20 + $0x410] sm:$0xff]
    %v4734 = vld [vmem:[#allocation20 + $0x418] sm:$0xff]
    %v4735 = vld [vmem:[#allocation20 + $0x420] sm:$0xff]
    %v4736 = vld [vmem:[#allocation20 + $0x428] sm:$0xff]
    %v4737 = vld [vmem:[#allocation20 + $0x430] sm:$0xff]
    %v4738 = vld [vmem:[#allocation20 + $0x438] sm:$0xff]
    %v4739 = vld [vmem:[#allocation20 + $0x440] sm:$0xff]
    %v4740 = vld [vmem:[#allocation20 + $0x448] sm:$0xff]
    %v4741 = vld [vmem:[#allocation20 + $0x450] sm:$0xff]
    %v4742 = vld [vmem:[#allocation20 + $0x458] sm:$0xff]
    %v4743 = vld [vmem:[#allocation20 + $0x460] sm:$0xff]
    %v4744 = vld [vmem:[#allocation20 + $0x468] sm:$0xff]
    %v4745 = vld [vmem:[#allocation20 + $0x470] sm:$0xff]
    %v4746 = vld [vmem:[#allocation20 + $0x478] sm:$0xff]
    %v4747 = vld [vmem:[#allocation20 + $0x480] sm:$0xff]
    %v4748 = vld [vmem:[#allocation20 + $0x488] sm:$0xff]
    %v4749 = vld [vmem:[#allocation20 + $0x490] sm:$0xff]
    %v4750 = vld [vmem:[#allocation20 + $0x498] sm:$0xff]
    %v4751 = vld [vmem:[#allocation20 + $0x4a0] sm:$0xff]
    %v4752 = vld [vmem:[#allocation20 + $0x4a8] sm:$0xff]
    %v4753 = vld [vmem:[#allocation20 + $0x4b0] sm:$0xff]
    %v4754 = vld [vmem:[#allocation20 + $0x4b8] sm:$0xff]
    %v4755 = vld [vmem:[#allocation20 + $0x4c0] sm:$0xff]
    %v4756 = vld [vmem:[#allocation20 + $0x4c8] sm:$0xff]
    %v4757 = vld [vmem:[#allocation20 + $0x4d0] sm:$0xff]
    %v4758 = vld [vmem:[#allocation20 + $0x4d8] sm:$0xff]
    %v4759 = vld [vmem:[#allocation20 + $0x4e0] sm:$0xff]
    %v4760 = vld [vmem:[#allocation20 + $0x4e8] sm:$0xff]
    %v4761 = vld [vmem:[#allocation20 + $0x4f0] sm:$0xff]
    %v4762 = vld [vmem:[#allocation20 + $0x4f8] sm:$0xff]
    %v4763 = vld [vmem:[#allocation20 + $0x500] sm:$0xff]
    %v4764 = vld [vmem:[#allocation20 + $0x508] sm:$0xff]
    %v4765 = vld [vmem:[#allocation20 + $0x510] sm:$0xff]
    %v4766 = vld [vmem:[#allocation20 + $0x518] sm:$0xff]
    %v4767 = vld [vmem:[#allocation20 + $0x520] sm:$0xff]
    %v4768 = vld [vmem:[#allocation20 + $0x528] sm:$0xff]
    %v4769 = vld [vmem:[#allocation20 + $0x530] sm:$0xff]
    %v4770 = vld [vmem:[#allocation20 + $0x538] sm:$0xff]
    %v4771 = vld [vmem:[#allocation20 + $0x540] sm:$0xff]
    %v4772 = vld [vmem:[#allocation20 + $0x548] sm:$0xff]
    %v4773 = vld [vmem:[#allocation20 + $0x550] sm:$0xff]
    %v4774 = vld [vmem:[#allocation20 + $0x558] sm:$0xff]
    %v4775 = vld [vmem:[#allocation20 + $0x560] sm:$0xff]
    %v4776 = vld [vmem:[#allocation20 + $0x568] sm:$0xff]
    %v4777 = vld [vmem:[#allocation20 + $0x570] sm:$0xff]
    %v4778 = vld [vmem:[#allocation20 + $0x578] sm:$0xff]
    %v4779 = vld [vmem:[#allocation20 + $0x580] sm:$0xff]
    %v4780 = vld [vmem:[#allocation20 + $0x588] sm:$0xff]
    %v4781 = vld [vmem:[#allocation20 + $0x590] sm:$0xff]
    %v4782 = vld [vmem:[#allocation20 + $0x598] sm:$0xff]
    %v4783 = vld [vmem:[#allocation20 + $0x5a0] sm:$0xff]
    %v4784 = vld [vmem:[#allocation20 + $0x5a8] sm:$0xff]
    %v4785 = vld [vmem:[#allocation20 + $0x5b0] sm:$0xff]
    %v4786 = vld [vmem:[#allocation20 + $0x5b8] sm:$0xff]
    %v4787 = vld [vmem:[#allocation20 + $0x5c0] sm:$0xff]
    %v4788 = vld [vmem:[#allocation20 + $0x5c8] sm:$0xff]
    %v4789 = vld [vmem:[#allocation20 + $0x5d0] sm:$0xff]
    %v4790 = vld [vmem:[#allocation20 + $0x5d8] sm:$0xff]
    %v4791 = vld [vmem:[#allocation20 + $0x5e0] sm:$0xff]
    %v4792 = vld [vmem:[#allocation20 + $0x5e8] sm:$0xff]
    %v4793 = vld [vmem:[#allocation20 + $0x5f0] sm:$0xff]
    %v4794 = vld [vmem:[#allocation20 + $0x5f8] sm:$0xff]
    %v4795 = vld [vmem:[#allocation20 + $0x600] sm:$0xff]
    %v4796 = vld [vmem:[#allocation20 + $0x608] sm:$0xff]
    %v4797 = vld [vmem:[#allocation20 + $0x610] sm:$0xff]
    %v4798 = vld [vmem:[#allocation20 + $0x618] sm:$0xff]
    %v4799 = vld [vmem:[#allocation20 + $0x620] sm:$0xff]
    %v4800 = vld [vmem:[#allocation20 + $0x628] sm:$0xff]
    %v4801 = vld [vmem:[#allocation20 + $0x630] sm:$0xff]
    %v4802 = vld [vmem:[#allocation20 + $0x638] sm:$0xff]
    %v4803 = vld [vmem:[#allocation20 + $0x640] sm:$0xff]
    %v4804 = vld [vmem:[#allocation20 + $0x648] sm:$0xff]
    %v4805 = vld [vmem:[#allocation20 + $0x650] sm:$0xff]
    %v4806 = vld [vmem:[#allocation20 + $0x658] sm:$0xff]
    %v4807 = vld [vmem:[#allocation20 + $0x660] sm:$0xff]
    %v4808 = vld [vmem:[#allocation20 + $0x668] sm:$0xff]
    %v4809 = vld [vmem:[#allocation20 + $0x670] sm:$0xff]
    %v4810 = vld [vmem:[#allocation20 + $0x678] sm:$0xff]
    %v4811 = vld [vmem:[#allocation20 + $0x680] sm:$0xff]
    %v4812 = vld [vmem:[#allocation20 + $0x688] sm:$0xff]
    %v4813 = vld [vmem:[#allocation20 + $0x690] sm:$0xff]
    %v4814 = vld [vmem:[#allocation20 + $0x698] sm:$0xff]
    %v4815 = vld [vmem:[#allocation20 + $0x6a0] sm:$0xff]
    %v4816 = vld [vmem:[#allocation20 + $0x6a8] sm:$0xff]
    %v4817 = vld [vmem:[#allocation20 + $0x6b0] sm:$0xff]
    %v4818 = vld [vmem:[#allocation20 + $0x6b8] sm:$0xff]
    %v4819 = vld [vmem:[#allocation20 + $0x6c0] sm:$0xff]
    %v4820 = vld [vmem:[#allocation20 + $0x6c8] sm:$0xff]
    %v4821 = vld [vmem:[#allocation20 + $0x6d0] sm:$0xff]
    %v4822 = vld [vmem:[#allocation20 + $0x6d8] sm:$0xff]
    %v4823 = vld [vmem:[#allocation20 + $0x6e0] sm:$0xff]
    %v4824 = vld [vmem:[#allocation20 + $0x6e8] sm:$0xff]
    %v4825 = vld [vmem:[#allocation20 + $0x6f0] sm:$0xff]
    %v4826 = vld [vmem:[#allocation20 + $0x6f8] sm:$0xff]
    %v4827 = vld [vmem:[#allocation20 + $0x700] sm:$0xff]
    %v4828 = vld [vmem:[#allocation20 + $0x708] sm:$0xff]
    %v4829 = vld [vmem:[#allocation20 + $0x710] sm:$0xff]
    %v4830 = vld [vmem:[#allocation20 + $0x718] sm:$0xff]
    %v4831 = vld [vmem:[#allocation20 + $0x720] sm:$0xff]
    %v4832 = vld [vmem:[#allocation20 + $0x728] sm:$0xff]
    %v4833 = vld [vmem:[#allocation20 + $0x730] sm:$0xff]
    %v4834 = vld [vmem:[#allocation20 + $0x738] sm:$0xff]
    %v4835 = vld [vmem:[#allocation20 + $0x740] sm:$0xff]
    %v4836 = vld [vmem:[#allocation20 + $0x748] sm:$0xff]
    %v4837 = vld [vmem:[#allocation20 + $0x750] sm:$0xff]
    %v4838 = vld [vmem:[#allocation20 + $0x758] sm:$0xff]
    %v4839 = vld [vmem:[#allocation20 + $0x760] sm:$0xff]
    %v4840 = vld [vmem:[#allocation20 + $0x768] sm:$0xff]
    %v4841 = vld [vmem:[#allocation20 + $0x770] sm:$0xff]
    %v4842 = vld [vmem:[#allocation20 + $0x778] sm:$0xff]
    %v4843 = vld [vmem:[#allocation20 + $0x780] sm:$0xff]
    %v4844 = vld [vmem:[#allocation20 + $0x788] sm:$0xff]
    %v4845 = vld [vmem:[#allocation20 + $0x790] sm:$0xff]
    %v4846 = vld [vmem:[#allocation20 + $0x798] sm:$0xff]
    %v4847 = vld [vmem:[#allocation20 + $0x7a0] sm:$0xff]
    %v4848 = vld [vmem:[#allocation20 + $0x7a8] sm:$0xff]
    %v4849 = vld [vmem:[#allocation20 + $0x7b0] sm:$0xff]
    %v4850 = vld [vmem:[#allocation20 + $0x7b8] sm:$0xff]
    %v4851 = vld [vmem:[#allocation20 + $0x7c0] sm:$0xff]
    %v4852 = vld [vmem:[#allocation20 + $0x7c8] sm:$0xff]
    %v4853 = vld [vmem:[#allocation20 + $0x7d0] sm:$0xff]
    %v4854 = vld [vmem:[#allocation20 + $0x7d8] sm:$0xff]
    %v4855 = vld [vmem:[#allocation20 + $0x7e0] sm:$0xff]
    %v4856 = vld [vmem:[#allocation20 + $0x7e8] sm:$0xff]
    %v4857 = vld [vmem:[#allocation20 + $0x7f0] sm:$0xff]
    %v4858 = vld [vmem:[#allocation20 + $0x7f8] sm:$0xff]
    %v4859 = vld [vmem:[#allocation20 + $0x800] sm:$0xff]
    %v4860 = vld [vmem:[#allocation20 + $0x808] sm:$0xff]
    %v4861 = vld [vmem:[#allocation20 + $0x810] sm:$0xff]
    %v4862 = vld [vmem:[#allocation20 + $0x818] sm:$0xff]
    %v4863 = vld [vmem:[#allocation20 + $0x820] sm:$0xff]
    %v4864 = vld [vmem:[#allocation20 + $0x828] sm:$0xff]
    %v4865 = vld [vmem:[#allocation20 + $0x830] sm:$0xff]
    %v4866 = vld [vmem:[#allocation20 + $0x838] sm:$0xff]
    %v4867 = vld [vmem:[#allocation20 + $0x840] sm:$0xff]
    %v4868 = vld [vmem:[#allocation20 + $0x848] sm:$0xff]
    %v4869 = vld [vmem:[#allocation20 + $0x850] sm:$0xff]
    %v4870 = vld [vmem:[#allocation20 + $0x858] sm:$0xff]
    %v4871 = vld [vmem:[#allocation20 + $0x860] sm:$0xff]
    %v4872 = vld [vmem:[#allocation20 + $0x868] sm:$0xff]
    %v4873 = vld [vmem:[#allocation20 + $0x870] sm:$0xff]
    %v4874 = vld [vmem:[#allocation20 + $0x878] sm:$0xff]
    %v4875 = vld [vmem:[#allocation20 + $0x880] sm:$0xff]
    %v4876 = vld [vmem:[#allocation20 + $0x888] sm:$0xff]
    %v4877 = vld [vmem:[#allocation20 + $0x890] sm:$0xff]
    %v4878 = vld [vmem:[#allocation20 + $0x898] sm:$0xff]
    %v4879 = vld [vmem:[#allocation20 + $0x8a0] sm:$0xff]
    %v4880 = vld [vmem:[#allocation20 + $0x8a8] sm:$0xff]
    %v4881 = vld [vmem:[#allocation20 + $0x8b0] sm:$0xff]
    %v4882 = vld [vmem:[#allocation20 + $0x8b8] sm:$0xff]
    %v4883 = vld [vmem:[#allocation20 + $0x8c0] sm:$0xff]
    %v4884 = vld [vmem:[#allocation20 + $0x8c8] sm:$0xff]
    %v4885 = vld [vmem:[#allocation20 + $0x8d0] sm:$0xff]
    %v4886 = vld [vmem:[#allocation20 + $0x8d8] sm:$0xff]
    %v4887 = vld [vmem:[#allocation20 + $0x8e0] sm:$0xff]
    %v4888 = vld [vmem:[#allocation20 + $0x8e8] sm:$0xff]
    %v4889 = vld [vmem:[#allocation20 + $0x8f0] sm:$0xff]
    %v4890 = vld [vmem:[#allocation20 + $0x8f8] sm:$0xff]
    %v4891 = vld [vmem:[#allocation20 + $0x900] sm:$0xff]
    %v4892 = vld [vmem:[#allocation20 + $0x908] sm:$0xff]
    %v4893 = vld [vmem:[#allocation20 + $0x910] sm:$0xff]
    %v4894 = vld [vmem:[#allocation20 + $0x918] sm:$0xff]
    %v4895 = vld [vmem:[#allocation20 + $0x920] sm:$0xff]
    %v4896 = vld [vmem:[#allocation20 + $0x928] sm:$0xff]
    %v4897 = vld [vmem:[#allocation20 + $0x930] sm:$0xff]
    %v4898 = vld [vmem:[#allocation20 + $0x938] sm:$0xff]
    %v4899 = vld [vmem:[#allocation20 + $0x940] sm:$0xff]
    %v4900 = vld [vmem:[#allocation20 + $0x948] sm:$0xff]
    %v4901 = vld [vmem:[#allocation20 + $0x950] sm:$0xff]
    %v4902 = vld [vmem:[#allocation20 + $0x958] sm:$0xff]
    %v4903 = vld [vmem:[#allocation20 + $0x960] sm:$0xff]
    %v4904 = vld [vmem:[#allocation20 + $0x968] sm:$0xff]
    %v4905 = vld [vmem:[#allocation20 + $0x970] sm:$0xff]
    %v4906 = vld [vmem:[#allocation20 + $0x978] sm:$0xff]
    %v4907 = vld [vmem:[#allocation20 + $0x980] sm:$0xff]
    %v4908 = vld [vmem:[#allocation20 + $0x988] sm:$0xff]
    %v4909 = vld [vmem:[#allocation20 + $0x990] sm:$0xff]
    %v4910 = vld [vmem:[#allocation20 + $0x998] sm:$0xff]
    %v4911 = vld [vmem:[#allocation20 + $0x9a0] sm:$0xff]
    %v4912 = vld [vmem:[#allocation20 + $0x9a8] sm:$0xff]
    %v4913 = vld [vmem:[#allocation20 + $0x9b0] sm:$0xff]
    %v4914 = vld [vmem:[#allocation20 + $0x9b8] sm:$0xff]
    %v4915 = vld [vmem:[#allocation20 + $0x9c0] sm:$0xff]
    %v4916 = vld [vmem:[#allocation20 + $0x9c8] sm:$0xff]
    %v4917 = vld [vmem:[#allocation20 + $0x9d0] sm:$0xff]
    %v4918 = vld [vmem:[#allocation20 + $0x9d8] sm:$0xff]
    %v4919 = vld [vmem:[#allocation20 + $0x9e0] sm:$0xff]
    %v4920 = vld [vmem:[#allocation20 + $0x9e8] sm:$0xff]
    %v4921 = vld [vmem:[#allocation20 + $0x9f0] sm:$0xff]
    %v4922 = vld [vmem:[#allocation20 + $0x9f8] sm:$0xff]
    %v4923 = vld [vmem:[#allocation20 + $0xa00] sm:$0xff]
    %v4924 = vld [vmem:[#allocation20 + $0xa08] sm:$0xff]
    %v4925 = vld [vmem:[#allocation20 + $0xa10] sm:$0xff]
    %v4926 = vld [vmem:[#allocation20 + $0xa18] sm:$0xff]
    %v4927 = vld [vmem:[#allocation20 + $0xa20] sm:$0xff]
    %v4928 = vld [vmem:[#allocation20 + $0xa28] sm:$0xff]
    %v4929 = vld [vmem:[#allocation20 + $0xa30] sm:$0xff]
    %v4930 = vld [vmem:[#allocation20 + $0xa38] sm:$0xff]
    %v4931 = vld [vmem:[#allocation20 + $0xa40] sm:$0xff]
    %v4932 = vld [vmem:[#allocation20 + $0xa48] sm:$0xff]
    %v4933 = vld [vmem:[#allocation20 + $0xa50] sm:$0xff]
    %v4934 = vld [vmem:[#allocation20 + $0xa58] sm:$0xff]
    %v4935 = vld [vmem:[#allocation20 + $0xa60] sm:$0xff]
    %v4936 = vld [vmem:[#allocation20 + $0xa68] sm:$0xff]
    %v4937 = vld [vmem:[#allocation20 + $0xa70] sm:$0xff]
    %v4938 = vld [vmem:[#allocation20 + $0xa78] sm:$0xff]
    %v4939 = vld [vmem:[#allocation20 + $0xa80] sm:$0xff]
    %v4940 = vld [vmem:[#allocation20 + $0xa88] sm:$0xff]
    %v4941 = vld [vmem:[#allocation20 + $0xa90] sm:$0xff]
    %v4942 = vld [vmem:[#allocation20 + $0xa98] sm:$0xff]
    %v4943 = vld [vmem:[#allocation20 + $0xaa0] sm:$0xff]
    %v4944 = vld [vmem:[#allocation20 + $0xaa8] sm:$0xff]
    %v4945 = vld [vmem:[#allocation20 + $0xab0] sm:$0xff]
    %v4946 = vld [vmem:[#allocation20 + $0xab8] sm:$0xff]
    %v4947 = vld [vmem:[#allocation20 + $0xac0] sm:$0xff]
    %v4948 = vld [vmem:[#allocation20 + $0xac8] sm:$0xff]
    %v4949 = vld [vmem:[#allocation20 + $0xad0] sm:$0xff]
    %v4950 = vld [vmem:[#allocation20 + $0xad8] sm:$0xff]
    %v4951 = vld [vmem:[#allocation20 + $0xae0] sm:$0xff]
    %v4952 = vld [vmem:[#allocation20 + $0xae8] sm:$0xff]
    %v4953 = vld [vmem:[#allocation20 + $0xaf0] sm:$0xff]
    %v4954 = vld [vmem:[#allocation20 + $0xaf8] sm:$0xff]
    %v4955 = vld [vmem:[#allocation20 + $0xb00] sm:$0xff]
    %v4956 = vld [vmem:[#allocation20 + $0xb08] sm:$0xff]
    %v4957 = vld [vmem:[#allocation20 + $0xb10] sm:$0xff]
    %v4958 = vld [vmem:[#allocation20 + $0xb18] sm:$0xff]
    %v4959 = vld [vmem:[#allocation20 + $0xb20] sm:$0xff]
    %v4960 = vld [vmem:[#allocation20 + $0xb28] sm:$0xff]
    %v4961 = vld [vmem:[#allocation20 + $0xb30] sm:$0xff]
    %v4962 = vld [vmem:[#allocation20 + $0xb38] sm:$0xff]
    %v4963 = vld [vmem:[#allocation20 + $0xb40] sm:$0xff]
    %v4964 = vld [vmem:[#allocation20 + $0xb48] sm:$0xff]
    %v4965 = vld [vmem:[#allocation20 + $0xb50] sm:$0xff]
    %v4966 = vld [vmem:[#allocation20 + $0xb58] sm:$0xff]
    %v4967 = vld [vmem:[#allocation20 + $0xb60] sm:$0xff]
    %v4968 = vld [vmem:[#allocation20 + $0xb68] sm:$0xff]
    %v4969 = vld [vmem:[#allocation20 + $0xb70] sm:$0xff]
    %v4970 = vld [vmem:[#allocation20 + $0xb78] sm:$0xff]
    %v4971 = vld [vmem:[#allocation20 + $0xb80] sm:$0xff]
    %v4972 = vld [vmem:[#allocation20 + $0xb88] sm:$0xff]
    %v4973 = vld [vmem:[#allocation20 + $0xb90] sm:$0xff]
    %v4974 = vld [vmem:[#allocation20 + $0xb98] sm:$0xff]
    %v4975 = vld [vmem:[#allocation20 + $0xba0] sm:$0xff]
    %v4976 = vld [vmem:[#allocation20 + $0xba8] sm:$0xff]
    %v4977 = vld [vmem:[#allocation20 + $0xbb0] sm:$0xff]
    %v4978 = vld [vmem:[#allocation20 + $0xbb8] sm:$0xff]
    %v4979 = vld [vmem:[#allocation20 + $0xbc0] sm:$0xff]
    %v4980 = vld [vmem:[#allocation20 + $0xbc8] sm:$0xff]
    %v4981 = vld [vmem:[#allocation20 + $0xbd0] sm:$0xff]
    %v4982 = vld [vmem:[#allocation20 + $0xbd8] sm:$0xff]
    %v4983 = vld [vmem:[#allocation20 + $0xbe0] sm:$0xff]
    %v4984 = vld [vmem:[#allocation20 + $0xbe8] sm:$0xff]
    %v4985 = vld [vmem:[#allocation20 + $0xbf0] sm:$0xff]
    %v4986 = vld [vmem:[#allocation20 + $0xbf8] sm:$0xff]
    %v4987 = vld [vmem:[#allocation22] sm:$0xf]
    %v4989 = vperm.slane %v4987, 0
    %v4990 = vperm.slane %v4987, 1
    %v4991 = vperm.slane %v4987, 2
    %v4992 = vperm.slane %v4987, 3
    %v5381 = vunpack.c.l.b16 %v4603
    %v5382 = vunpack.c.h.b16 %v4603
    %v5383 = vunpack.c.l.b16 %v4604
    %v5384 = vunpack.c.h.b16 %v4604
    %v5385 = vunpack.c.l.b16 %v4605
    %v5386 = vunpack.c.h.b16 %v4605
    %v5387 = vunpack.c.l.b16 %v4606
    %v5388 = vunpack.c.h.b16 %v4606
    %v5389 = vunpack.c.l.b16 %v4607
    %v5390 = vunpack.c.h.b16 %v4607
    %v5391 = vunpack.c.l.b16 %v4608
    %v5392 = vunpack.c.h.b16 %v4608
    %v5393 = vunpack.c.l.b16 %v4609
    %v5394 = vunpack.c.h.b16 %v4609
    %v5395 = vunpack.c.l.b16 %v4610
    %v5396 = vunpack.c.h.b16 %v4610
    %v5397 = vunpack.c.l.b16 %v4611
    %v5398 = vunpack.c.h.b16 %v4611
    %v5399 = vunpack.c.l.b16 %v4612
    %v5400 = vunpack.c.h.b16 %v4612
    %v5401 = vunpack.c.l.b16 %v4613
    %v5402 = vunpack.c.h.b16 %v4613
    %v5403 = vunpack.c.l.b16 %v4614
    %v5404 = vunpack.c.h.b16 %v4614
    %v5405 = vunpack.c.l.b16 %v4615
    %v5406 = vunpack.c.h.b16 %v4615
    %v5407 = vunpack.c.l.b16 %v4616
    %v5408 = vunpack.c.h.b16 %v4616
    %v5409 = vunpack.c.l.b16 %v4617
    %v5410 = vunpack.c.h.b16 %v4617
    %v5411 = vunpack.c.l.b16 %v4618
    %v5412 = vunpack.c.h.b16 %v4618
    %v5413 = vunpack.c.l.b16 %v4619
    %v5414 = vunpack.c.h.b16 %v4619
    %v5415 = vunpack.c.l.b16 %v4620
    %v5416 = vunpack.c.h.b16 %v4620
    %v5417 = vunpack.c.l.b16 %v4621
    %v5418 = vunpack.c.h.b16 %v4621
    %v5419 = vunpack.c.l.b16 %v4622
    %v5420 = vunpack.c.h.b16 %v4622
    %v5421 = vunpack.c.l.b16 %v4623
    %v5422 = vunpack.c.h.b16 %v4623
    %v5423 = vunpack.c.l.b16 %v4624
    %v5424 = vunpack.c.h.b16 %v4624
    %v5425 = vunpack.c.l.b16 %v4625
    %v5426 = vunpack.c.h.b16 %v4625
    %v5427 = vunpack.c.l.b16 %v4626
    %v5428 = vunpack.c.h.b16 %v4626
    %v5429 = vunpack.c.l.b16 %v4627
    %v5430 = vunpack.c.h.b16 %v4627
    %v5431 = vunpack.c.l.b16 %v4628
    %v5432 = vunpack.c.h.b16 %v4628
    %v5433 = vunpack.c.l.b16 %v4629
    %v5434 = vunpack.c.h.b16 %v4629
    %v5435 = vunpack.c.l.b16 %v4630
    %v5436 = vunpack.c.h.b16 %v4630
    %v5437 = vunpack.c.l.b16 %v4631
    %v5438 = vunpack.c.h.b16 %v4631
    %v5439 = vunpack.c.l.b16 %v4632
    %v5440 = vunpack.c.h.b16 %v4632
    %v5441 = vunpack.c.l.b16 %v4633
    %v5442 = vunpack.c.h.b16 %v4633
    %v5443 = vunpack.c.l.b16 %v4634
    %v5444 = vunpack.c.h.b16 %v4634
    %v5445 = vunpack.c.l.b16 %v4635
    %v5446 = vunpack.c.h.b16 %v4635
    %v5447 = vunpack.c.l.b16 %v4636
    %v5448 = vunpack.c.h.b16 %v4636
    %v5449 = vunpack.c.l.b16 %v4637
    %v5450 = vunpack.c.h.b16 %v4637
    %v5451 = vunpack.c.l.b16 %v4638
    %v5452 = vunpack.c.h.b16 %v4638
    %v5453 = vunpack.c.l.b16 %v4639
    %v5454 = vunpack.c.h.b16 %v4639
    %v5455 = vunpack.c.l.b16 %v4640
    %v5456 = vunpack.c.h.b16 %v4640
    %v5457 = vunpack.c.l.b16 %v4641
    %v5458 = vunpack.c.h.b16 %v4641
    %v5459 = vunpack.c.l.b16 %v4642
    %v5460 = vunpack.c.h.b16 %v4642
    %v5461 = vunpack.c.l.b16 %v4643
    %v5462 = vunpack.c.h.b16 %v4643
    %v5463 = vunpack.c.l.b16 %v4644
    %v5464 = vunpack.c.h.b16 %v4644
    %v5465 = vunpack.c.l.b16 %v4645
    %v5466 = vunpack.c.h.b16 %v4645
    %v5467 = vunpack.c.l.b16 %v4646
    %v5468 = vunpack.c.h.b16 %v4646
    %v5469 = vunpack.c.l.b16 %v4647
    %v5470 = vunpack.c.h.b16 %v4647
    %v5471 = vunpack.c.l.b16 %v4648
    %v5472 = vunpack.c.h.b16 %v4648
    %v5473 = vunpack.c.l.b16 %v4649
    %v5474 = vunpack.c.h.b16 %v4649
    %v5475 = vunpack.c.l.b16 %v4650
    %v5476 = vunpack.c.h.b16 %v4650
    %v5477 = vunpack.c.l.b16 %v4651
    %v5478 = vunpack.c.h.b16 %v4651
    %v5479 = vunpack.c.l.b16 %v4652
    %v5480 = vunpack.c.h.b16 %v4652
    %v5481 = vunpack.c.l.b16 %v4653
    %v5482 = vunpack.c.h.b16 %v4653
    %v5483 = vunpack.c.l.b16 %v4654
    %v5484 = vunpack.c.h.b16 %v4654
    %v5485 = vunpack.c.l.b16 %v4655
    %v5486 = vunpack.c.h.b16 %v4655
    %v5487 = vunpack.c.l.b16 %v4656
    %v5488 = vunpack.c.h.b16 %v4656
    %v5489 = vunpack.c.l.b16 %v4657
    %v5490 = vunpack.c.h.b16 %v4657
    %v5491 = vunpack.c.l.b16 %v4658
    %v5492 = vunpack.c.h.b16 %v4658
    %v5493 = vunpack.c.l.b16 %v4659
    %v5494 = vunpack.c.h.b16 %v4659
    %v5495 = vunpack.c.l.b16 %v4660
    %v5496 = vunpack.c.h.b16 %v4660
    %v5497 = vunpack.c.l.b16 %v4661
    %v5498 = vunpack.c.h.b16 %v4661
    %v5499 = vunpack.c.l.b16 %v4662
    %v5500 = vunpack.c.h.b16 %v4662
    %v5501 = vunpack.c.l.b16 %v4663
    %v5502 = vunpack.c.h.b16 %v4663
    %v5503 = vunpack.c.l.b16 %v4664
    %v5504 = vunpack.c.h.b16 %v4664
    %v5505 = vunpack.c.l.b16 %v4665
    %v5506 = vunpack.c.h.b16 %v4665
    %v5507 = vunpack.c.l.b16 %v4666
    %v5508 = vunpack.c.h.b16 %v4666
    %v5509 = vunpack.c.l.b16 %v4667
    %v5510 = vunpack.c.h.b16 %v4667
    %v5511 = vunpack.c.l.b16 %v4668
    %v5512 = vunpack.c.h.b16 %v4668
    %v5513 = vunpack.c.l.b16 %v4669
    %v5514 = vunpack.c.h.b16 %v4669
    %v5515 = vunpack.c.l.b16 %v4670
    %v5516 = vunpack.c.h.b16 %v4670
    %v5517 = vunpack.c.l.b16 %v4671
    %v5518 = vunpack.c.h.b16 %v4671
    %v5519 = vunpack.c.l.b16 %v4672
    %v5520 = vunpack.c.h.b16 %v4672
    %v5521 = vunpack.c.l.b16 %v4673
    %v5522 = vunpack.c.h.b16 %v4673
    %v5523 = vunpack.c.l.b16 %v4674
    %v5524 = vunpack.c.h.b16 %v4674
    %v5525 = vunpack.c.l.b16 %v4675
    %v5526 = vunpack.c.h.b16 %v4675
    %v5527 = vunpack.c.l.b16 %v4676
    %v5528 = vunpack.c.h.b16 %v4676
    %v5529 = vunpack.c.l.b16 %v4677
    %v5530 = vunpack.c.h.b16 %v4677
    %v5531 = vunpack.c.l.b16 %v4678
    %v5532 = vunpack.c.h.b16 %v4678
    %v5533 = vunpack.c.l.b16 %v4679
    %v5534 = vunpack.c.h.b16 %v4679
    %v5535 = vunpack.c.l.b16 %v4680
    %v5536 = vunpack.c.h.b16 %v4680
    %v5537 = vunpack.c.l.b16 %v4681
    %v5538 = vunpack.c.h.b16 %v4681
    %v5539 = vunpack.c.l.b16 %v4682
    %v5540 = vunpack.c.h.b16 %v4682
    %v5541 = vunpack.c.l.b16 %v4683
    %v5542 = vunpack.c.h.b16 %v4683
    %v5543 = vunpack.c.l.b16 %v4684
    %v5544 = vunpack.c.h.b16 %v4684
    %v5545 = vunpack.c.l.b16 %v4685
    %v5546 = vunpack.c.h.b16 %v4685
    %v5547 = vunpack.c.l.b16 %v4686
    %v5548 = vunpack.c.h.b16 %v4686
    %v5549 = vunpack.c.l.b16 %v4687
    %v5550 = vunpack.c.h.b16 %v4687
    %v5551 = vunpack.c.l.b16 %v4688
    %v5552 = vunpack.c.h.b16 %v4688
    %v5553 = vunpack.c.l.b16 %v4689
    %v5554 = vunpack.c.h.b16 %v4689
    %v5555 = vunpack.c.l.b16 %v4690
    %v5556 = vunpack.c.h.b16 %v4690
    %v5557 = vunpack.c.l.b16 %v4691
    %v5558 = vunpack.c.h.b16 %v4691
    %v5559 = vunpack.c.l.b16 %v4692
    %v5560 = vunpack.c.h.b16 %v4692
    %v5561 = vunpack.c.l.b16 %v4693
    %v5562 = vunpack.c.h.b16 %v4693
    %v5563 = vunpack.c.l.b16 %v4694
    %v5564 = vunpack.c.h.b16 %v4694
    %v5565 = vunpack.c.l.b16 %v4695
    %v5566 = vunpack.c.h.b16 %v4695
    %v5567 = vunpack.c.l.b16 %v4696
    %v5568 = vunpack.c.h.b16 %v4696
    %v5569 = vunpack.c.l.b16 %v4697
    %v5570 = vunpack.c.h.b16 %v4697
    %v5571 = vunpack.c.l.b16 %v4698
    %v5572 = vunpack.c.h.b16 %v4698
    %v5573 = vunpack.c.l.b16 %v4699
    %v5574 = vunpack.c.h.b16 %v4699
    %v5575 = vunpack.c.l.b16 %v4700
    %v5576 = vunpack.c.h.b16 %v4700
    %v5577 = vunpack.c.l.b16 %v4701
    %v5578 = vunpack.c.h.b16 %v4701
    %v5579 = vunpack.c.l.b16 %v4702
    %v5580 = vunpack.c.h.b16 %v4702
    %v5581 = vunpack.c.l.b16 %v4703
    %v5582 = vunpack.c.h.b16 %v4703
    %v5583 = vunpack.c.l.b16 %v4704
    %v5584 = vunpack.c.h.b16 %v4704
    %v5585 = vunpack.c.l.b16 %v4705
    %v5586 = vunpack.c.h.b16 %v4705
    %v5587 = vunpack.c.l.b16 %v4706
    %v5588 = vunpack.c.h.b16 %v4706
    %v5589 = vunpack.c.l.b16 %v4707
    %v5590 = vunpack.c.h.b16 %v4707
    %v5591 = vunpack.c.l.b16 %v4708
    %v5592 = vunpack.c.h.b16 %v4708
    %v5593 = vunpack.c.l.b16 %v4709
    %v5594 = vunpack.c.h.b16 %v4709
    %v5595 = vunpack.c.l.b16 %v4710
    %v5596 = vunpack.c.h.b16 %v4710
    %v5597 = vunpack.c.l.b16 %v4711
    %v5598 = vunpack.c.h.b16 %v4711
    %v5599 = vunpack.c.l.b16 %v4712
    %v5600 = vunpack.c.h.b16 %v4712
    %v5601 = vunpack.c.l.b16 %v4713
    %v5602 = vunpack.c.h.b16 %v4713
    %v5603 = vunpack.c.l.b16 %v4714
    %v5604 = vunpack.c.h.b16 %v4714
    %v5605 = vunpack.c.l.b16 %v4715
    %v5606 = vunpack.c.h.b16 %v4715
    %v5607 = vunpack.c.l.b16 %v4716
    %v5608 = vunpack.c.h.b16 %v4716
    %v5609 = vunpack.c.l.b16 %v4717
    %v5610 = vunpack.c.h.b16 %v4717
    %v5611 = vunpack.c.l.b16 %v4718
    %v5612 = vunpack.c.h.b16 %v4718
    %v5613 = vunpack.c.l.b16 %v4719
    %v5614 = vunpack.c.h.b16 %v4719
    %v5615 = vunpack.c.l.b16 %v4720
    %v5616 = vunpack.c.h.b16 %v4720
    %v5617 = vunpack.c.l.b16 %v4721
    %v5618 = vunpack.c.h.b16 %v4721
    %v5619 = vunpack.c.l.b16 %v4722
    %v5620 = vunpack.c.h.b16 %v4722
    %v5621 = vunpack.c.l.b16 %v4723
    %v5622 = vunpack.c.h.b16 %v4723
    %v5623 = vunpack.c.l.b16 %v4724
    %v5624 = vunpack.c.h.b16 %v4724
    %v5625 = vunpack.c.l.b16 %v4725
    %v5626 = vunpack.c.h.b16 %v4725
    %v5627 = vunpack.c.l.b16 %v4726
    %v5628 = vunpack.c.h.b16 %v4726
    %v5629 = vunpack.c.l.b16 %v4727
    %v5630 = vunpack.c.h.b16 %v4727
    %v5631 = vunpack.c.l.b16 %v4728
    %v5632 = vunpack.c.h.b16 %v4728
    %v5633 = vunpack.c.l.b16 %v4729
    %v5634 = vunpack.c.h.b16 %v4729
    %v5635 = vunpack.c.l.b16 %v4730
    %v5636 = vunpack.c.h.b16 %v4730
    %v5637 = vunpack.c.l.b16 %v4731
    %v5638 = vunpack.c.h.b16 %v4731
    %v5639 = vunpack.c.l.b16 %v4732
    %v5640 = vunpack.c.h.b16 %v4732
    %v5641 = vunpack.c.l.b16 %v4733
    %v5642 = vunpack.c.h.b16 %v4733
    %v5643 = vunpack.c.l.b16 %v4734
    %v5644 = vunpack.c.h.b16 %v4734
    %v5645 = vunpack.c.l.b16 %v4735
    %v5646 = vunpack.c.h.b16 %v4735
    %v5647 = vunpack.c.l.b16 %v4736
    %v5648 = vunpack.c.h.b16 %v4736
    %v5649 = vunpack.c.l.b16 %v4737
    %v5650 = vunpack.c.h.b16 %v4737
    %v5651 = vunpack.c.l.b16 %v4738
    %v5652 = vunpack.c.h.b16 %v4738
    %v5653 = vunpack.c.l.b16 %v4739
    %v5654 = vunpack.c.h.b16 %v4739
    %v5655 = vunpack.c.l.b16 %v4740
    %v5656 = vunpack.c.h.b16 %v4740
    %v5657 = vunpack.c.l.b16 %v4741
    %v5658 = vunpack.c.h.b16 %v4741
    %v5659 = vunpack.c.l.b16 %v4742
    %v5660 = vunpack.c.h.b16 %v4742
    %v5661 = vunpack.c.l.b16 %v4743
    %v5662 = vunpack.c.h.b16 %v4743
    %v5663 = vunpack.c.l.b16 %v4744
    %v5664 = vunpack.c.h.b16 %v4744
    %v5665 = vunpack.c.l.b16 %v4745
    %v5666 = vunpack.c.h.b16 %v4745
    %v5667 = vunpack.c.l.b16 %v4746
    %v5668 = vunpack.c.h.b16 %v4746
    %v5669 = vunpack.c.l.b16 %v4747
    %v5670 = vunpack.c.h.b16 %v4747
    %v5671 = vunpack.c.l.b16 %v4748
    %v5672 = vunpack.c.h.b16 %v4748
    %v5673 = vunpack.c.l.b16 %v4749
    %v5674 = vunpack.c.h.b16 %v4749
    %v5675 = vunpack.c.l.b16 %v4750
    %v5676 = vunpack.c.h.b16 %v4750
    %v5677 = vunpack.c.l.b16 %v4751
    %v5678 = vunpack.c.h.b16 %v4751
    %v5679 = vunpack.c.l.b16 %v4752
    %v5680 = vunpack.c.h.b16 %v4752
    %v5681 = vunpack.c.l.b16 %v4753
    %v5682 = vunpack.c.h.b16 %v4753
    %v5683 = vunpack.c.l.b16 %v4754
    %v5684 = vunpack.c.h.b16 %v4754
    %v5685 = vunpack.c.l.b16 %v4755
    %v5686 = vunpack.c.h.b16 %v4755
    %v5687 = vunpack.c.l.b16 %v4756
    %v5688 = vunpack.c.h.b16 %v4756
    %v5689 = vunpack.c.l.b16 %v4757
    %v5690 = vunpack.c.h.b16 %v4757
    %v5691 = vunpack.c.l.b16 %v4758
    %v5692 = vunpack.c.h.b16 %v4758
    %v5693 = vunpack.c.l.b16 %v4759
    %v5694 = vunpack.c.h.b16 %v4759
    %v5695 = vunpack.c.l.b16 %v4760
    %v5696 = vunpack.c.h.b16 %v4760
    %v5697 = vunpack.c.l.b16 %v4761
    %v5698 = vunpack.c.h.b16 %v4761
    %v5699 = vunpack.c.l.b16 %v4762
    %v5700 = vunpack.c.h.b16 %v4762
    %v5701 = vunpack.c.l.b16 %v4763
    %v5702 = vunpack.c.h.b16 %v4763
    %v5703 = vunpack.c.l.b16 %v4764
    %v5704 = vunpack.c.h.b16 %v4764
    %v5705 = vunpack.c.l.b16 %v4765
    %v5706 = vunpack.c.h.b16 %v4765
    %v5707 = vunpack.c.l.b16 %v4766
    %v5708 = vunpack.c.h.b16 %v4766
    %v5709 = vunpack.c.l.b16 %v4767
    %v5710 = vunpack.c.h.b16 %v4767
    %v5711 = vunpack.c.l.b16 %v4768
    %v5712 = vunpack.c.h.b16 %v4768
    %v5713 = vunpack.c.l.b16 %v4769
    %v5714 = vunpack.c.h.b16 %v4769
    %v5715 = vunpack.c.l.b16 %v4770
    %v5716 = vunpack.c.h.b16 %v4770
    %v5717 = vunpack.c.l.b16 %v4771
    %v5718 = vunpack.c.h.b16 %v4771
    %v5719 = vunpack.c.l.b16 %v4772
    %v5720 = vunpack.c.h.b16 %v4772
    %v5721 = vunpack.c.l.b16 %v4773
    %v5722 = vunpack.c.h.b16 %v4773
    %v5723 = vunpack.c.l.b16 %v4774
    %v5724 = vunpack.c.h.b16 %v4774
    %v5725 = vunpack.c.l.b16 %v4775
    %v5726 = vunpack.c.h.b16 %v4775
    %v5727 = vunpack.c.l.b16 %v4776
    %v5728 = vunpack.c.h.b16 %v4776
    %v5729 = vunpack.c.l.b16 %v4777
    %v5730 = vunpack.c.h.b16 %v4777
    %v5731 = vunpack.c.l.b16 %v4778
    %v5732 = vunpack.c.h.b16 %v4778
    %v5733 = vunpack.c.l.b16 %v4779
    %v5734 = vunpack.c.h.b16 %v4779
    %v5735 = vunpack.c.l.b16 %v4780
    %v5736 = vunpack.c.h.b16 %v4780
    %v5737 = vunpack.c.l.b16 %v4781
    %v5738 = vunpack.c.h.b16 %v4781
    %v5739 = vunpack.c.l.b16 %v4782
    %v5740 = vunpack.c.h.b16 %v4782
    %v5741 = vunpack.c.l.b16 %v4783
    %v5742 = vunpack.c.h.b16 %v4783
    %v5743 = vunpack.c.l.b16 %v4784
    %v5744 = vunpack.c.h.b16 %v4784
    %v5745 = vunpack.c.l.b16 %v4785
    %v5746 = vunpack.c.h.b16 %v4785
    %v5747 = vunpack.c.l.b16 %v4786
    %v5748 = vunpack.c.h.b16 %v4786
    %v5749 = vunpack.c.l.b16 %v4787
    %v5750 = vunpack.c.h.b16 %v4787
    %v5751 = vunpack.c.l.b16 %v4788
    %v5752 = vunpack.c.h.b16 %v4788
    %v5753 = vunpack.c.l.b16 %v4789
    %v5754 = vunpack.c.h.b16 %v4789
    %v5755 = vunpack.c.l.b16 %v4790
    %v5756 = vunpack.c.h.b16 %v4790
    %v5757 = vunpack.c.l.b16 %v4791
    %v5758 = vunpack.c.h.b16 %v4791
    %v5759 = vunpack.c.l.b16 %v4792
    %v5760 = vunpack.c.h.b16 %v4792
    %v5761 = vunpack.c.l.b16 %v4793
    %v5762 = vunpack.c.h.b16 %v4793
    %v5763 = vunpack.c.l.b16 %v4794
    %v5764 = vunpack.c.h.b16 %v4794
    %v5765 = vunpack.c.l.b16 %v4795
    %v5766 = vunpack.c.h.b16 %v4795
    %v5767 = vunpack.c.l.b16 %v4796
    %v5768 = vunpack.c.h.b16 %v4796
    %v5769 = vunpack.c.l.b16 %v4797
    %v5770 = vunpack.c.h.b16 %v4797
    %v5771 = vunpack.c.l.b16 %v4798
    %v5772 = vunpack.c.h.b16 %v4798
    %v5773 = vunpack.c.l.b16 %v4799
    %v5774 = vunpack.c.h.b16 %v4799
    %v5775 = vunpack.c.l.b16 %v4800
    %v5776 = vunpack.c.h.b16 %v4800
    %v5777 = vunpack.c.l.b16 %v4801
    %v5778 = vunpack.c.h.b16 %v4801
    %v5779 = vunpack.c.l.b16 %v4802
    %v5780 = vunpack.c.h.b16 %v4802
    %v5781 = vunpack.c.l.b16 %v4803
    %v5782 = vunpack.c.h.b16 %v4803
    %v5783 = vunpack.c.l.b16 %v4804
    %v5784 = vunpack.c.h.b16 %v4804
    %v5785 = vunpack.c.l.b16 %v4805
    %v5786 = vunpack.c.h.b16 %v4805
    %v5787 = vunpack.c.l.b16 %v4806
    %v5788 = vunpack.c.h.b16 %v4806
    %v5789 = vunpack.c.l.b16 %v4807
    %v5790 = vunpack.c.h.b16 %v4807
    %v5791 = vunpack.c.l.b16 %v4808
    %v5792 = vunpack.c.h.b16 %v4808
    %v5793 = vunpack.c.l.b16 %v4809
    %v5794 = vunpack.c.h.b16 %v4809
    %v5795 = vunpack.c.l.b16 %v4810
    %v5796 = vunpack.c.h.b16 %v4810
    %v5797 = vunpack.c.l.b16 %v4811
    %v5798 = vunpack.c.h.b16 %v4811
    %v5799 = vunpack.c.l.b16 %v4812
    %v5800 = vunpack.c.h.b16 %v4812
    %v5801 = vunpack.c.l.b16 %v4813
    %v5802 = vunpack.c.h.b16 %v4813
    %v5803 = vunpack.c.l.b16 %v4814
    %v5804 = vunpack.c.h.b16 %v4814
    %v5805 = vunpack.c.l.b16 %v4815
    %v5806 = vunpack.c.h.b16 %v4815
    %v5807 = vunpack.c.l.b16 %v4816
    %v5808 = vunpack.c.h.b16 %v4816
    %v5809 = vunpack.c.l.b16 %v4817
    %v5810 = vunpack.c.h.b16 %v4817
    %v5811 = vunpack.c.l.b16 %v4818
    %v5812 = vunpack.c.h.b16 %v4818
    %v5813 = vunpack.c.l.b16 %v4819
    %v5814 = vunpack.c.h.b16 %v4819
    %v5815 = vunpack.c.l.b16 %v4820
    %v5816 = vunpack.c.h.b16 %v4820
    %v5817 = vunpack.c.l.b16 %v4821
    %v5818 = vunpack.c.h.b16 %v4821
    %v5819 = vunpack.c.l.b16 %v4822
    %v5820 = vunpack.c.h.b16 %v4822
    %v5821 = vunpack.c.l.b16 %v4823
    %v5822 = vunpack.c.h.b16 %v4823
    %v5823 = vunpack.c.l.b16 %v4824
    %v5824 = vunpack.c.h.b16 %v4824
    %v5825 = vunpack.c.l.b16 %v4825
    %v5826 = vunpack.c.h.b16 %v4825
    %v5827 = vunpack.c.l.b16 %v4826
    %v5828 = vunpack.c.h.b16 %v4826
    %v5829 = vunpack.c.l.b16 %v4827
    %v5830 = vunpack.c.h.b16 %v4827
    %v5831 = vunpack.c.l.b16 %v4828
    %v5832 = vunpack.c.h.b16 %v4828
    %v5833 = vunpack.c.l.b16 %v4829
    %v5834 = vunpack.c.h.b16 %v4829
    %v5835 = vunpack.c.l.b16 %v4830
    %v5836 = vunpack.c.h.b16 %v4830
    %v5837 = vunpack.c.l.b16 %v4831
    %v5838 = vunpack.c.h.b16 %v4831
    %v5839 = vunpack.c.l.b16 %v4832
    %v5840 = vunpack.c.h.b16 %v4832
    %v5841 = vunpack.c.l.b16 %v4833
    %v5842 = vunpack.c.h.b16 %v4833
    %v5843 = vunpack.c.l.b16 %v4834
    %v5844 = vunpack.c.h.b16 %v4834
    %v5845 = vunpack.c.l.b16 %v4835
    %v5846 = vunpack.c.h.b16 %v4835
    %v5847 = vunpack.c.l.b16 %v4836
    %v5848 = vunpack.c.h.b16 %v4836
    %v5849 = vunpack.c.l.b16 %v4837
    %v5850 = vunpack.c.h.b16 %v4837
    %v5851 = vunpack.c.l.b16 %v4838
    %v5852 = vunpack.c.h.b16 %v4838
    %v5853 = vunpack.c.l.b16 %v4839
    %v5854 = vunpack.c.h.b16 %v4839
    %v5855 = vunpack.c.l.b16 %v4840
    %v5856 = vunpack.c.h.b16 %v4840
    %v5857 = vunpack.c.l.b16 %v4841
    %v5858 = vunpack.c.h.b16 %v4841
    %v5859 = vunpack.c.l.b16 %v4842
    %v5860 = vunpack.c.h.b16 %v4842
    %v5861 = vunpack.c.l.b16 %v4843
    %v5862 = vunpack.c.h.b16 %v4843
    %v5863 = vunpack.c.l.b16 %v4844
    %v5864 = vunpack.c.h.b16 %v4844
    %v5865 = vunpack.c.l.b16 %v4845
    %v5866 = vunpack.c.h.b16 %v4845
    %v5867 = vunpack.c.l.b16 %v4846
    %v5868 = vunpack.c.h.b16 %v4846
    %v5869 = vunpack.c.l.b16 %v4847
    %v5870 = vunpack.c.h.b16 %v4847
    %v5871 = vunpack.c.l.b16 %v4848
    %v5872 = vunpack.c.h.b16 %v4848
    %v5873 = vunpack.c.l.b16 %v4849
    %v5874 = vunpack.c.h.b16 %v4849
    %v5875 = vunpack.c.l.b16 %v4850
    %v5876 = vunpack.c.h.b16 %v4850
    %v5877 = vunpack.c.l.b16 %v4851
    %v5878 = vunpack.c.h.b16 %v4851
    %v5879 = vunpack.c.l.b16 %v4852
    %v5880 = vunpack.c.h.b16 %v4852
    %v5881 = vunpack.c.l.b16 %v4853
    %v5882 = vunpack.c.h.b16 %v4853
    %v5883 = vunpack.c.l.b16 %v4854
    %v5884 = vunpack.c.h.b16 %v4854
    %v5885 = vunpack.c.l.b16 %v4855
    %v5886 = vunpack.c.h.b16 %v4855
    %v5887 = vunpack.c.l.b16 %v4856
    %v5888 = vunpack.c.h.b16 %v4856
    %v5889 = vunpack.c.l.b16 %v4857
    %v5890 = vunpack.c.h.b16 %v4857
    %v5891 = vunpack.c.l.b16 %v4858
    %v5892 = vunpack.c.h.b16 %v4858
    %v5893 = vunpack.c.l.b16 %v4859
    %v5894 = vunpack.c.h.b16 %v4859
    %v5895 = vunpack.c.l.b16 %v4860
    %v5896 = vunpack.c.h.b16 %v4860
    %v5897 = vunpack.c.l.b16 %v4861
    %v5898 = vunpack.c.h.b16 %v4861
    %v5899 = vunpack.c.l.b16 %v4862
    %v5900 = vunpack.c.h.b16 %v4862
    %v5901 = vunpack.c.l.b16 %v4863
    %v5902 = vunpack.c.h.b16 %v4863
    %v5903 = vunpack.c.l.b16 %v4864
    %v5904 = vunpack.c.h.b16 %v4864
    %v5905 = vunpack.c.l.b16 %v4865
    %v5906 = vunpack.c.h.b16 %v4865
    %v5907 = vunpack.c.l.b16 %v4866
    %v5908 = vunpack.c.h.b16 %v4866
    %v5909 = vunpack.c.l.b16 %v4867
    %v5910 = vunpack.c.h.b16 %v4867
    %v5911 = vunpack.c.l.b16 %v4868
    %v5912 = vunpack.c.h.b16 %v4868
    %v5913 = vunpack.c.l.b16 %v4869
    %v5914 = vunpack.c.h.b16 %v4869
    %v5915 = vunpack.c.l.b16 %v4870
    %v5916 = vunpack.c.h.b16 %v4870
    %v5917 = vunpack.c.l.b16 %v4871
    %v5918 = vunpack.c.h.b16 %v4871
    %v5919 = vunpack.c.l.b16 %v4872
    %v5920 = vunpack.c.h.b16 %v4872
    %v5921 = vunpack.c.l.b16 %v4873
    %v5922 = vunpack.c.h.b16 %v4873
    %v5923 = vunpack.c.l.b16 %v4874
    %v5924 = vunpack.c.h.b16 %v4874
    %v5925 = vunpack.c.l.b16 %v4875
    %v5926 = vunpack.c.h.b16 %v4875
    %v5927 = vunpack.c.l.b16 %v4876
    %v5928 = vunpack.c.h.b16 %v4876
    %v5929 = vunpack.c.l.b16 %v4877
    %v5930 = vunpack.c.h.b16 %v4877
    %v5931 = vunpack.c.l.b16 %v4878
    %v5932 = vunpack.c.h.b16 %v4878
    %v5933 = vunpack.c.l.b16 %v4879
    %v5934 = vunpack.c.h.b16 %v4879
    %v5935 = vunpack.c.l.b16 %v4880
    %v5936 = vunpack.c.h.b16 %v4880
    %v5937 = vunpack.c.l.b16 %v4881
    %v5938 = vunpack.c.h.b16 %v4881
    %v5939 = vunpack.c.l.b16 %v4882
    %v5940 = vunpack.c.h.b16 %v4882
    %v5941 = vunpack.c.l.b16 %v4883
    %v5942 = vunpack.c.h.b16 %v4883
    %v5943 = vunpack.c.l.b16 %v4884
    %v5944 = vunpack.c.h.b16 %v4884
    %v5945 = vunpack.c.l.b16 %v4885
    %v5946 = vunpack.c.h.b16 %v4885
    %v5947 = vunpack.c.l.b16 %v4886
    %v5948 = vunpack.c.h.b16 %v4886
    %v5949 = vunpack.c.l.b16 %v4887
    %v5950 = vunpack.c.h.b16 %v4887
    %v5951 = vunpack.c.l.b16 %v4888
    %v5952 = vunpack.c.h.b16 %v4888
    %v5953 = vunpack.c.l.b16 %v4889
    %v5954 = vunpack.c.h.b16 %v4889
    %v5955 = vunpack.c.l.b16 %v4890
    %v5956 = vunpack.c.h.b16 %v4890
    %v5957 = vunpack.c.l.b16 %v4891
    %v5958 = vunpack.c.h.b16 %v4891
    %v5959 = vunpack.c.l.b16 %v4892
    %v5960 = vunpack.c.h.b16 %v4892
    %v5961 = vunpack.c.l.b16 %v4893
    %v5962 = vunpack.c.h.b16 %v4893
    %v5963 = vunpack.c.l.b16 %v4894
    %v5964 = vunpack.c.h.b16 %v4894
    %v5965 = vunpack.c.l.b16 %v4895
    %v5966 = vunpack.c.h.b16 %v4895
    %v5967 = vunpack.c.l.b16 %v4896
    %v5968 = vunpack.c.h.b16 %v4896
    %v5969 = vunpack.c.l.b16 %v4897
    %v5970 = vunpack.c.h.b16 %v4897
    %v5971 = vunpack.c.l.b16 %v4898
    %v5972 = vunpack.c.h.b16 %v4898
    %v5973 = vunpack.c.l.b16 %v4899
    %v5974 = vunpack.c.h.b16 %v4899
    %v5975 = vunpack.c.l.b16 %v4900
    %v5976 = vunpack.c.h.b16 %v4900
    %v5977 = vunpack.c.l.b16 %v4901
    %v5978 = vunpack.c.h.b16 %v4901
    %v5979 = vunpack.c.l.b16 %v4902
    %v5980 = vunpack.c.h.b16 %v4902
    %v5981 = vunpack.c.l.b16 %v4903
    %v5982 = vunpack.c.h.b16 %v4903
    %v5983 = vunpack.c.l.b16 %v4904
    %v5984 = vunpack.c.h.b16 %v4904
    %v5985 = vunpack.c.l.b16 %v4905
    %v5986 = vunpack.c.h.b16 %v4905
    %v5987 = vunpack.c.l.b16 %v4906
    %v5988 = vunpack.c.h.b16 %v4906
    %v5989 = vunpack.c.l.b16 %v4907
    %v5990 = vunpack.c.h.b16 %v4907
    %v5991 = vunpack.c.l.b16 %v4908
    %v5992 = vunpack.c.h.b16 %v4908
    %v5993 = vunpack.c.l.b16 %v4909
    %v5994 = vunpack.c.h.b16 %v4909
    %v5995 = vunpack.c.l.b16 %v4910
    %v5996 = vunpack.c.h.b16 %v4910
    %v5997 = vunpack.c.l.b16 %v4911
    %v5998 = vunpack.c.h.b16 %v4911
    %v5999 = vunpack.c.l.b16 %v4912
    %v6000 = vunpack.c.h.b16 %v4912
    %v6001 = vunpack.c.l.b16 %v4913
    %v6002 = vunpack.c.h.b16 %v4913
    %v6003 = vunpack.c.l.b16 %v4914
    %v6004 = vunpack.c.h.b16 %v4914
    %v6005 = vunpack.c.l.b16 %v4915
    %v6006 = vunpack.c.h.b16 %v4915
    %v6007 = vunpack.c.l.b16 %v4916
    %v6008 = vunpack.c.h.b16 %v4916
    %v6009 = vunpack.c.l.b16 %v4917
    %v6010 = vunpack.c.h.b16 %v4917
    %v6011 = vunpack.c.l.b16 %v4918
    %v6012 = vunpack.c.h.b16 %v4918
    %v6013 = vunpack.c.l.b16 %v4919
    %v6014 = vunpack.c.h.b16 %v4919
    %v6015 = vunpack.c.l.b16 %v4920
    %v6016 = vunpack.c.h.b16 %v4920
    %v6017 = vunpack.c.l.b16 %v4921
    %v6018 = vunpack.c.h.b16 %v4921
    %v6019 = vunpack.c.l.b16 %v4922
    %v6020 = vunpack.c.h.b16 %v4922
    %v6021 = vunpack.c.l.b16 %v4923
    %v6022 = vunpack.c.h.b16 %v4923
    %v6023 = vunpack.c.l.b16 %v4924
    %v6024 = vunpack.c.h.b16 %v4924
    %v6025 = vunpack.c.l.b16 %v4925
    %v6026 = vunpack.c.h.b16 %v4925
    %v6027 = vunpack.c.l.b16 %v4926
    %v6028 = vunpack.c.h.b16 %v4926
    %v6029 = vunpack.c.l.b16 %v4927
    %v6030 = vunpack.c.h.b16 %v4927
    %v6031 = vunpack.c.l.b16 %v4928
    %v6032 = vunpack.c.h.b16 %v4928
    %v6033 = vunpack.c.l.b16 %v4929
    %v6034 = vunpack.c.h.b16 %v4929
    %v6035 = vunpack.c.l.b16 %v4930
    %v6036 = vunpack.c.h.b16 %v4930
    %v6037 = vunpack.c.l.b16 %v4931
    %v6038 = vunpack.c.h.b16 %v4931
    %v6039 = vunpack.c.l.b16 %v4932
    %v6040 = vunpack.c.h.b16 %v4932
    %v6041 = vunpack.c.l.b16 %v4933
    %v6042 = vunpack.c.h.b16 %v4933
    %v6043 = vunpack.c.l.b16 %v4934
    %v6044 = vunpack.c.h.b16 %v4934
    %v6045 = vunpack.c.l.b16 %v4935
    %v6046 = vunpack.c.h.b16 %v4935
    %v6047 = vunpack.c.l.b16 %v4936
    %v6048 = vunpack.c.h.b16 %v4936
    %v6049 = vunpack.c.l.b16 %v4937
    %v6050 = vunpack.c.h.b16 %v4937
    %v6051 = vunpack.c.l.b16 %v4938
    %v6052 = vunpack.c.h.b16 %v4938
    %v6053 = vunpack.c.l.b16 %v4939
    %v6054 = vunpack.c.h.b16 %v4939
    %v6055 = vunpack.c.l.b16 %v4940
    %v6056 = vunpack.c.h.b16 %v4940
    %v6057 = vunpack.c.l.b16 %v4941
    %v6058 = vunpack.c.h.b16 %v4941
    %v6059 = vunpack.c.l.b16 %v4942
    %v6060 = vunpack.c.h.b16 %v4942
    %v6061 = vunpack.c.l.b16 %v4943
    %v6062 = vunpack.c.h.b16 %v4943
    %v6063 = vunpack.c.l.b16 %v4944
    %v6064 = vunpack.c.h.b16 %v4944
    %v6065 = vunpack.c.l.b16 %v4945
    %v6066 = vunpack.c.h.b16 %v4945
    %v6067 = vunpack.c.l.b16 %v4946
    %v6068 = vunpack.c.h.b16 %v4946
    %v6069 = vunpack.c.l.b16 %v4947
    %v6070 = vunpack.c.h.b16 %v4947
    %v6071 = vunpack.c.l.b16 %v4948
    %v6072 = vunpack.c.h.b16 %v4948
    %v6073 = vunpack.c.l.b16 %v4949
    %v6074 = vunpack.c.h.b16 %v4949
    %v6075 = vunpack.c.l.b16 %v4950
    %v6076 = vunpack.c.h.b16 %v4950
    %v6077 = vunpack.c.l.b16 %v4951
    %v6078 = vunpack.c.h.b16 %v4951
    %v6079 = vunpack.c.l.b16 %v4952
    %v6080 = vunpack.c.h.b16 %v4952
    %v6081 = vunpack.c.l.b16 %v4953
    %v6082 = vunpack.c.h.b16 %v4953
    %v6083 = vunpack.c.l.b16 %v4954
    %v6084 = vunpack.c.h.b16 %v4954
    %v6085 = vunpack.c.l.b16 %v4955
    %v6086 = vunpack.c.h.b16 %v4955
    %v6087 = vunpack.c.l.b16 %v4956
    %v6088 = vunpack.c.h.b16 %v4956
    %v6089 = vunpack.c.l.b16 %v4957
    %v6090 = vunpack.c.h.b16 %v4957
    %v6091 = vunpack.c.l.b16 %v4958
    %v6092 = vunpack.c.h.b16 %v4958
    %v6093 = vunpack.c.l.b16 %v4959
    %v6094 = vunpack.c.h.b16 %v4959
    %v6095 = vunpack.c.l.b16 %v4960
    %v6096 = vunpack.c.h.b16 %v4960
    %v6097 = vunpack.c.l.b16 %v4961
    %v6098 = vunpack.c.h.b16 %v4961
    %v6099 = vunpack.c.l.b16 %v4962
    %v6100 = vunpack.c.h.b16 %v4962
    %v6101 = vunpack.c.l.b16 %v4963
    %v6102 = vunpack.c.h.b16 %v4963
    %v6103 = vunpack.c.l.b16 %v4964
    %v6104 = vunpack.c.h.b16 %v4964
    %v6105 = vunpack.c.l.b16 %v4965
    %v6106 = vunpack.c.h.b16 %v4965
    %v6107 = vunpack.c.l.b16 %v4966
    %v6108 = vunpack.c.h.b16 %v4966
    %v6109 = vunpack.c.l.b16 %v4967
    %v6110 = vunpack.c.h.b16 %v4967
    %v6111 = vunpack.c.l.b16 %v4968
    %v6112 = vunpack.c.h.b16 %v4968
    %v6113 = vunpack.c.l.b16 %v4969
    %v6114 = vunpack.c.h.b16 %v4969
    %v6115 = vunpack.c.l.b16 %v4970
    %v6116 = vunpack.c.h.b16 %v4970
    %v6117 = vunpack.c.l.b16 %v4971
    %v6118 = vunpack.c.h.b16 %v4971
    %v6119 = vunpack.c.l.b16 %v4972
    %v6120 = vunpack.c.h.b16 %v4972
    %v6121 = vunpack.c.l.b16 %v4973
    %v6122 = vunpack.c.h.b16 %v4973
    %v6123 = vunpack.c.l.b16 %v4974
    %v6124 = vunpack.c.h.b16 %v4974
    %v6125 = vunpack.c.l.b16 %v4975
    %v6126 = vunpack.c.h.b16 %v4975
    %v6127 = vunpack.c.l.b16 %v4976
    %v6128 = vunpack.c.h.b16 %v4976
    %v6129 = vunpack.c.l.b16 %v4977
    %v6130 = vunpack.c.h.b16 %v4977
    %v6131 = vunpack.c.l.b16 %v4978
    %v6132 = vunpack.c.h.b16 %v4978
    %v6133 = vunpack.c.l.b16 %v4979
    %v6134 = vunpack.c.h.b16 %v4979
    %v6135 = vunpack.c.l.b16 %v4980
    %v6136 = vunpack.c.h.b16 %v4980
    %v6137 = vunpack.c.l.b16 %v4981
    %v6138 = vunpack.c.h.b16 %v4981
    %v6139 = vunpack.c.l.b16 %v4982
    %v6140 = vunpack.c.h.b16 %v4982
    %v6141 = vunpack.c.l.b16 %v4983
    %v6142 = vunpack.c.h.b16 %v4983
    %v6143 = vunpack.c.l.b16 %v4984
    %v6144 = vunpack.c.h.b16 %v4984
    %v6145 = vunpack.c.l.b16 %v4985
    %v6146 = vunpack.c.h.b16 %v4985
    %v6147 = vunpack.c.l.b16 %v4986
    %v6148 = vunpack.c.h.b16 %v4986
    %v6149 = vpack.c.b16 %v5385, %v5381
    %v6150 = vpack.c.b16 %v5386, %v5382
    %v6151 = vpack.c.b16 %v5387, %v5383
    %v6152 = vpack.c.b16 %v5388, %v5384
    %v6153 = vpack.c.b16 %v5393, %v5389
    %v6154 = vpack.c.b16 %v5394, %v5390
    %v6155 = vpack.c.b16 %v5395, %v5391
    %v6156 = vpack.c.b16 %v5396, %v5392
    %v6157 = vpack.c.b16 %v5401, %v5397
    %v6158 = vpack.c.b16 %v5402, %v5398
    %v6159 = vpack.c.b16 %v5403, %v5399
    %v6160 = vpack.c.b16 %v5404, %v5400
    %v6161 = vpack.c.b16 %v5409, %v5405
    %v6162 = vpack.c.b16 %v5410, %v5406
    %v6163 = vpack.c.b16 %v5411, %v5407
    %v6164 = vpack.c.b16 %v5412, %v5408
    %v6165 = vpack.c.b16 %v5417, %v5413
    %v6166 = vpack.c.b16 %v5418, %v5414
    %v6167 = vpack.c.b16 %v5419, %v5415
    %v6168 = vpack.c.b16 %v5420, %v5416
    %v6169 = vpack.c.b16 %v5425, %v5421
    %v6170 = vpack.c.b16 %v5426, %v5422
    %v6171 = vpack.c.b16 %v5427, %v5423
    %v6172 = vpack.c.b16 %v5428, %v5424
    %v6173 = vpack.c.b16 %v5433, %v5429
    %v6174 = vpack.c.b16 %v5434, %v5430
    %v6175 = vpack.c.b16 %v5435, %v5431
    %v6176 = vpack.c.b16 %v5436, %v5432
    %v6177 = vpack.c.b16 %v5441, %v5437
    %v6178 = vpack.c.b16 %v5442, %v5438
    %v6179 = vpack.c.b16 %v5443, %v5439
    %v6180 = vpack.c.b16 %v5444, %v5440
    %v6181 = vpack.c.b16 %v5449, %v5445
    %v6182 = vpack.c.b16 %v5450, %v5446
    %v6183 = vpack.c.b16 %v5451, %v5447
    %v6184 = vpack.c.b16 %v5452, %v5448
    %v6185 = vpack.c.b16 %v5457, %v5453
    %v6186 = vpack.c.b16 %v5458, %v5454
    %v6187 = vpack.c.b16 %v5459, %v5455
    %v6188 = vpack.c.b16 %v5460, %v5456
    %v6189 = vpack.c.b16 %v5465, %v5461
    %v6190 = vpack.c.b16 %v5466, %v5462
    %v6191 = vpack.c.b16 %v5467, %v5463
    %v6192 = vpack.c.b16 %v5468, %v5464
    %v6193 = vpack.c.b16 %v5473, %v5469
    %v6194 = vpack.c.b16 %v5474, %v5470
    %v6195 = vpack.c.b16 %v5475, %v5471
    %v6196 = vpack.c.b16 %v5476, %v5472
    %v6197 = vpack.c.b16 %v5481, %v5477
    %v6198 = vpack.c.b16 %v5482, %v5478
    %v6199 = vpack.c.b16 %v5483, %v5479
    %v6200 = vpack.c.b16 %v5484, %v5480
    %v6201 = vpack.c.b16 %v5489, %v5485
    %v6202 = vpack.c.b16 %v5490, %v5486
    %v6203 = vpack.c.b16 %v5491, %v5487
    %v6204 = vpack.c.b16 %v5492, %v5488
    %v6205 = vpack.c.b16 %v5497, %v5493
    %v6206 = vpack.c.b16 %v5498, %v5494
    %v6207 = vpack.c.b16 %v5499, %v5495
    %v6208 = vpack.c.b16 %v5500, %v5496
    %v6209 = vpack.c.b16 %v5505, %v5501
    %v6210 = vpack.c.b16 %v5506, %v5502
    %v6211 = vpack.c.b16 %v5507, %v5503
    %v6212 = vpack.c.b16 %v5508, %v5504
    %v6213 = vpack.c.b16 %v5513, %v5509
    %v6214 = vpack.c.b16 %v5514, %v5510
    %v6215 = vpack.c.b16 %v5515, %v5511
    %v6216 = vpack.c.b16 %v5516, %v5512
    %v6217 = vpack.c.b16 %v5521, %v5517
    %v6218 = vpack.c.b16 %v5522, %v5518
    %v6219 = vpack.c.b16 %v5523, %v5519
    %v6220 = vpack.c.b16 %v5524, %v5520
    %v6221 = vpack.c.b16 %v5529, %v5525
    %v6222 = vpack.c.b16 %v5530, %v5526
    %v6223 = vpack.c.b16 %v5531, %v5527
    %v6224 = vpack.c.b16 %v5532, %v5528
    %v6225 = vpack.c.b16 %v5537, %v5533
    %v6226 = vpack.c.b16 %v5538, %v5534
    %v6227 = vpack.c.b16 %v5539, %v5535
    %v6228 = vpack.c.b16 %v5540, %v5536
    %v6229 = vpack.c.b16 %v5545, %v5541
    %v6230 = vpack.c.b16 %v5546, %v5542
    %v6231 = vpack.c.b16 %v5547, %v5543
    %v6232 = vpack.c.b16 %v5548, %v5544
    %v6233 = vpack.c.b16 %v5553, %v5549
    %v6234 = vpack.c.b16 %v5554, %v5550
    %v6235 = vpack.c.b16 %v5555, %v5551
    %v6236 = vpack.c.b16 %v5556, %v5552
    %v6237 = vpack.c.b16 %v5561, %v5557
    %v6238 = vpack.c.b16 %v5562, %v5558
    %v6239 = vpack.c.b16 %v5563, %v5559
    %v6240 = vpack.c.b16 %v5564, %v5560
    %v6241 = vpack.c.b16 %v5569, %v5565
    %v6242 = vpack.c.b16 %v5570, %v5566
    %v6243 = vpack.c.b16 %v5571, %v5567
    %v6244 = vpack.c.b16 %v5572, %v5568
    %v6245 = vpack.c.b16 %v5577, %v5573
    %v6246 = vpack.c.b16 %v5578, %v5574
    %v6247 = vpack.c.b16 %v5579, %v5575
    %v6248 = vpack.c.b16 %v5580, %v5576
    %v6249 = vpack.c.b16 %v5585, %v5581
    %v6250 = vpack.c.b16 %v5586, %v5582
    %v6251 = vpack.c.b16 %v5587, %v5583
    %v6252 = vpack.c.b16 %v5588, %v5584
    %v6253 = vpack.c.b16 %v5593, %v5589
    %v6254 = vpack.c.b16 %v5594, %v5590
    %v6255 = vpack.c.b16 %v5595, %v5591
    %v6256 = vpack.c.b16 %v5596, %v5592
    %v6257 = vpack.c.b16 %v5601, %v5597
    %v6258 = vpack.c.b16 %v5602, %v5598
    %v6259 = vpack.c.b16 %v5603, %v5599
    %v6260 = vpack.c.b16 %v5604, %v5600
    %v6261 = vpack.c.b16 %v5609, %v5605
    %v6262 = vpack.c.b16 %v5610, %v5606
    %v6263 = vpack.c.b16 %v5611, %v5607
    %v6264 = vpack.c.b16 %v5612, %v5608
    %v6265 = vpack.c.b16 %v5617, %v5613
    %v6266 = vpack.c.b16 %v5618, %v5614
    %v6267 = vpack.c.b16 %v5619, %v5615
    %v6268 = vpack.c.b16 %v5620, %v5616
    %v6269 = vpack.c.b16 %v5625, %v5621
    %v6270 = vpack.c.b16 %v5626, %v5622
    %v6271 = vpack.c.b16 %v5627, %v5623
    %v6272 = vpack.c.b16 %v5628, %v5624
    %v6273 = vpack.c.b16 %v5633, %v5629
    %v6274 = vpack.c.b16 %v5634, %v5630
    %v6275 = vpack.c.b16 %v5635, %v5631
    %v6276 = vpack.c.b16 %v5636, %v5632
    %v6277 = vpack.c.b16 %v5641, %v5637
    %v6278 = vpack.c.b16 %v5642, %v5638
    %v6279 = vpack.c.b16 %v5643, %v5639
    %v6280 = vpack.c.b16 %v5644, %v5640
    %v6281 = vpack.c.b16 %v5649, %v5645
    %v6282 = vpack.c.b16 %v5650, %v5646
    %v6283 = vpack.c.b16 %v5651, %v5647
    %v6284 = vpack.c.b16 %v5652, %v5648
    %v6285 = vpack.c.b16 %v5657, %v5653
    %v6286 = vpack.c.b16 %v5658, %v5654
    %v6287 = vpack.c.b16 %v5659, %v5655
    %v6288 = vpack.c.b16 %v5660, %v5656
    %v6289 = vpack.c.b16 %v5665, %v5661
    %v6290 = vpack.c.b16 %v5666, %v5662
    %v6291 = vpack.c.b16 %v5667, %v5663
    %v6292 = vpack.c.b16 %v5668, %v5664
    %v6293 = vpack.c.b16 %v5673, %v5669
    %v6294 = vpack.c.b16 %v5674, %v5670
    %v6295 = vpack.c.b16 %v5675, %v5671
    %v6296 = vpack.c.b16 %v5676, %v5672
    %v6297 = vpack.c.b16 %v5681, %v5677
    %v6298 = vpack.c.b16 %v5682, %v5678
    %v6299 = vpack.c.b16 %v5683, %v5679
    %v6300 = vpack.c.b16 %v5684, %v5680
    %v6301 = vpack.c.b16 %v5689, %v5685
    %v6302 = vpack.c.b16 %v5690, %v5686
    %v6303 = vpack.c.b16 %v5691, %v5687
    %v6304 = vpack.c.b16 %v5692, %v5688
    %v6305 = vpack.c.b16 %v5697, %v5693
    %v6306 = vpack.c.b16 %v5698, %v5694
    %v6307 = vpack.c.b16 %v5699, %v5695
    %v6308 = vpack.c.b16 %v5700, %v5696
    %v6309 = vpack.c.b16 %v5705, %v5701
    %v6310 = vpack.c.b16 %v5706, %v5702
    %v6311 = vpack.c.b16 %v5707, %v5703
    %v6312 = vpack.c.b16 %v5708, %v5704
    %v6313 = vpack.c.b16 %v5713, %v5709
    %v6314 = vpack.c.b16 %v5714, %v5710
    %v6315 = vpack.c.b16 %v5715, %v5711
    %v6316 = vpack.c.b16 %v5716, %v5712
    %v6317 = vpack.c.b16 %v5721, %v5717
    %v6318 = vpack.c.b16 %v5722, %v5718
    %v6319 = vpack.c.b16 %v5723, %v5719
    %v6320 = vpack.c.b16 %v5724, %v5720
    %v6321 = vpack.c.b16 %v5729, %v5725
    %v6322 = vpack.c.b16 %v5730, %v5726
    %v6323 = vpack.c.b16 %v5731, %v5727
    %v6324 = vpack.c.b16 %v5732, %v5728
    %v6325 = vpack.c.b16 %v5737, %v5733
    %v6326 = vpack.c.b16 %v5738, %v5734
    %v6327 = vpack.c.b16 %v5739, %v5735
    %v6328 = vpack.c.b16 %v5740, %v5736
    %v6329 = vpack.c.b16 %v5745, %v5741
    %v6330 = vpack.c.b16 %v5746, %v5742
    %v6331 = vpack.c.b16 %v5747, %v5743
    %v6332 = vpack.c.b16 %v5748, %v5744
    %v6333 = vpack.c.b16 %v5753, %v5749
    %v6334 = vpack.c.b16 %v5754, %v5750
    %v6335 = vpack.c.b16 %v5755, %v5751
    %v6336 = vpack.c.b16 %v5756, %v5752
    %v6337 = vpack.c.b16 %v5761, %v5757
    %v6338 = vpack.c.b16 %v5762, %v5758
    %v6339 = vpack.c.b16 %v5763, %v5759
    %v6340 = vpack.c.b16 %v5764, %v5760
    %v6341 = vpack.c.b16 %v5769, %v5765
    %v6342 = vpack.c.b16 %v5770, %v5766
    %v6343 = vpack.c.b16 %v5771, %v5767
    %v6344 = vpack.c.b16 %v5772, %v5768
    %v6345 = vpack.c.b16 %v5777, %v5773
    %v6346 = vpack.c.b16 %v5778, %v5774
    %v6347 = vpack.c.b16 %v5779, %v5775
    %v6348 = vpack.c.b16 %v5780, %v5776
    %v6349 = vpack.c.b16 %v5785, %v5781
    %v6350 = vpack.c.b16 %v5786, %v5782
    %v6351 = vpack.c.b16 %v5787, %v5783
    %v6352 = vpack.c.b16 %v5788, %v5784
    %v6353 = vpack.c.b16 %v5793, %v5789
    %v6354 = vpack.c.b16 %v5794, %v5790
    %v6355 = vpack.c.b16 %v5795, %v5791
    %v6356 = vpack.c.b16 %v5796, %v5792
    %v6357 = vpack.c.b16 %v5801, %v5797
    %v6358 = vpack.c.b16 %v5802, %v5798
    %v6359 = vpack.c.b16 %v5803, %v5799
    %v6360 = vpack.c.b16 %v5804, %v5800
    %v6361 = vpack.c.b16 %v5809, %v5805
    %v6362 = vpack.c.b16 %v5810, %v5806
    %v6363 = vpack.c.b16 %v5811, %v5807
    %v6364 = vpack.c.b16 %v5812, %v5808
    %v6365 = vpack.c.b16 %v5817, %v5813
    %v6366 = vpack.c.b16 %v5818, %v5814
    %v6367 = vpack.c.b16 %v5819, %v5815
    %v6368 = vpack.c.b16 %v5820, %v5816
    %v6369 = vpack.c.b16 %v5825, %v5821
    %v6370 = vpack.c.b16 %v5826, %v5822
    %v6371 = vpack.c.b16 %v5827, %v5823
    %v6372 = vpack.c.b16 %v5828, %v5824
    %v6373 = vpack.c.b16 %v5833, %v5829
    %v6374 = vpack.c.b16 %v5834, %v5830
    %v6375 = vpack.c.b16 %v5835, %v5831
    %v6376 = vpack.c.b16 %v5836, %v5832
    %v6377 = vpack.c.b16 %v5841, %v5837
    %v6378 = vpack.c.b16 %v5842, %v5838
    %v6379 = vpack.c.b16 %v5843, %v5839
    %v6380 = vpack.c.b16 %v5844, %v5840
    %v6381 = vpack.c.b16 %v5849, %v5845
    %v6382 = vpack.c.b16 %v5850, %v5846
    %v6383 = vpack.c.b16 %v5851, %v5847
    %v6384 = vpack.c.b16 %v5852, %v5848
    %v6385 = vpack.c.b16 %v5857, %v5853
    %v6386 = vpack.c.b16 %v5858, %v5854
    %v6387 = vpack.c.b16 %v5859, %v5855
    %v6388 = vpack.c.b16 %v5860, %v5856
    %v6389 = vpack.c.b16 %v5865, %v5861
    %v6390 = vpack.c.b16 %v5866, %v5862
    %v6391 = vpack.c.b16 %v5867, %v5863
    %v6392 = vpack.c.b16 %v5868, %v5864
    %v6393 = vpack.c.b16 %v5873, %v5869
    %v6394 = vpack.c.b16 %v5874, %v5870
    %v6395 = vpack.c.b16 %v5875, %v5871
    %v6396 = vpack.c.b16 %v5876, %v5872
    %v6397 = vpack.c.b16 %v5881, %v5877
    %v6398 = vpack.c.b16 %v5882, %v5878
    %v6399 = vpack.c.b16 %v5883, %v5879
    %v6400 = vpack.c.b16 %v5884, %v5880
    %v6401 = vpack.c.b16 %v5889, %v5885
    %v6402 = vpack.c.b16 %v5890, %v5886
    %v6403 = vpack.c.b16 %v5891, %v5887
    %v6404 = vpack.c.b16 %v5892, %v5888
    %v6405 = vpack.c.b16 %v5897, %v5893
    %v6406 = vpack.c.b16 %v5898, %v5894
    %v6407 = vpack.c.b16 %v5899, %v5895
    %v6408 = vpack.c.b16 %v5900, %v5896
    %v6409 = vpack.c.b16 %v5905, %v5901
    %v6410 = vpack.c.b16 %v5906, %v5902
    %v6411 = vpack.c.b16 %v5907, %v5903
    %v6412 = vpack.c.b16 %v5908, %v5904
    %v6413 = vpack.c.b16 %v5913, %v5909
    %v6414 = vpack.c.b16 %v5914, %v5910
    %v6415 = vpack.c.b16 %v5915, %v5911
    %v6416 = vpack.c.b16 %v5916, %v5912
    %v6417 = vpack.c.b16 %v5921, %v5917
    %v6418 = vpack.c.b16 %v5922, %v5918
    %v6419 = vpack.c.b16 %v5923, %v5919
    %v6420 = vpack.c.b16 %v5924, %v5920
    %v6421 = vpack.c.b16 %v5929, %v5925
    %v6422 = vpack.c.b16 %v5930, %v5926
    %v6423 = vpack.c.b16 %v5931, %v5927
    %v6424 = vpack.c.b16 %v5932, %v5928
    %v6425 = vpack.c.b16 %v5937, %v5933
    %v6426 = vpack.c.b16 %v5938, %v5934
    %v6427 = vpack.c.b16 %v5939, %v5935
    %v6428 = vpack.c.b16 %v5940, %v5936
    %v6429 = vpack.c.b16 %v5945, %v5941
    %v6430 = vpack.c.b16 %v5946, %v5942
    %v6431 = vpack.c.b16 %v5947, %v5943
    %v6432 = vpack.c.b16 %v5948, %v5944
    %v6433 = vpack.c.b16 %v5953, %v5949
    %v6434 = vpack.c.b16 %v5954, %v5950
    %v6435 = vpack.c.b16 %v5955, %v5951
    %v6436 = vpack.c.b16 %v5956, %v5952
    %v6437 = vpack.c.b16 %v5961, %v5957
    %v6438 = vpack.c.b16 %v5962, %v5958
    %v6439 = vpack.c.b16 %v5963, %v5959
    %v6440 = vpack.c.b16 %v5964, %v5960
    %v6441 = vpack.c.b16 %v5969, %v5965
    %v6442 = vpack.c.b16 %v5970, %v5966
    %v6443 = vpack.c.b16 %v5971, %v5967
    %v6444 = vpack.c.b16 %v5972, %v5968
    %v6445 = vpack.c.b16 %v5977, %v5973
    %v6446 = vpack.c.b16 %v5978, %v5974
    %v6447 = vpack.c.b16 %v5979, %v5975
    %v6448 = vpack.c.b16 %v5980, %v5976
    %v6449 = vpack.c.b16 %v5985, %v5981
    %v6450 = vpack.c.b16 %v5986, %v5982
    %v6451 = vpack.c.b16 %v5987, %v5983
    %v6452 = vpack.c.b16 %v5988, %v5984
    %v6453 = vpack.c.b16 %v5993, %v5989
    %v6454 = vpack.c.b16 %v5994, %v5990
    %v6455 = vpack.c.b16 %v5995, %v5991
    %v6456 = vpack.c.b16 %v5996, %v5992
    %v6457 = vpack.c.b16 %v6001, %v5997
    %v6458 = vpack.c.b16 %v6002, %v5998
    %v6459 = vpack.c.b16 %v6003, %v5999
    %v6460 = vpack.c.b16 %v6004, %v6000
    %v6461 = vpack.c.b16 %v6009, %v6005
    %v6462 = vpack.c.b16 %v6010, %v6006
    %v6463 = vpack.c.b16 %v6011, %v6007
    %v6464 = vpack.c.b16 %v6012, %v6008
    %v6465 = vpack.c.b16 %v6017, %v6013
    %v6466 = vpack.c.b16 %v6018, %v6014
    %v6467 = vpack.c.b16 %v6019, %v6015
    %v6468 = vpack.c.b16 %v6020, %v6016
    %v6469 = vpack.c.b16 %v6025, %v6021
    %v6470 = vpack.c.b16 %v6026, %v6022
    %v6471 = vpack.c.b16 %v6027, %v6023
    %v6472 = vpack.c.b16 %v6028, %v6024
    %v6473 = vpack.c.b16 %v6033, %v6029
    %v6474 = vpack.c.b16 %v6034, %v6030
    %v6475 = vpack.c.b16 %v6035, %v6031
    %v6476 = vpack.c.b16 %v6036, %v6032
    %v6477 = vpack.c.b16 %v6041, %v6037
    %v6478 = vpack.c.b16 %v6042, %v6038
    %v6479 = vpack.c.b16 %v6043, %v6039
    %v6480 = vpack.c.b16 %v6044, %v6040
    %v6481 = vpack.c.b16 %v6049, %v6045
    %v6482 = vpack.c.b16 %v6050, %v6046
    %v6483 = vpack.c.b16 %v6051, %v6047
    %v6484 = vpack.c.b16 %v6052, %v6048
    %v6485 = vpack.c.b16 %v6057, %v6053
    %v6486 = vpack.c.b16 %v6058, %v6054
    %v6487 = vpack.c.b16 %v6059, %v6055
    %v6488 = vpack.c.b16 %v6060, %v6056
    %v6489 = vpack.c.b16 %v6065, %v6061
    %v6490 = vpack.c.b16 %v6066, %v6062
    %v6491 = vpack.c.b16 %v6067, %v6063
    %v6492 = vpack.c.b16 %v6068, %v6064
    %v6493 = vpack.c.b16 %v6073, %v6069
    %v6494 = vpack.c.b16 %v6074, %v6070
    %v6495 = vpack.c.b16 %v6075, %v6071
    %v6496 = vpack.c.b16 %v6076, %v6072
    %v6497 = vpack.c.b16 %v6081, %v6077
    %v6498 = vpack.c.b16 %v6082, %v6078
    %v6499 = vpack.c.b16 %v6083, %v6079
    %v6500 = vpack.c.b16 %v6084, %v6080
    %v6501 = vpack.c.b16 %v6089, %v6085
    %v6502 = vpack.c.b16 %v6090, %v6086
    %v6503 = vpack.c.b16 %v6091, %v6087
    %v6504 = vpack.c.b16 %v6092, %v6088
    %v6505 = vpack.c.b16 %v6097, %v6093
    %v6506 = vpack.c.b16 %v6098, %v6094
    %v6507 = vpack.c.b16 %v6099, %v6095
    %v6508 = vpack.c.b16 %v6100, %v6096
    %v6509 = vpack.c.b16 %v6105, %v6101
    %v6510 = vpack.c.b16 %v6106, %v6102
    %v6511 = vpack.c.b16 %v6107, %v6103
    %v6512 = vpack.c.b16 %v6108, %v6104
    %v6513 = vpack.c.b16 %v6113, %v6109
    %v6514 = vpack.c.b16 %v6114, %v6110
    %v6515 = vpack.c.b16 %v6115, %v6111
    %v6516 = vpack.c.b16 %v6116, %v6112
    %v6517 = vpack.c.b16 %v6121, %v6117
    %v6518 = vpack.c.b16 %v6122, %v6118
    %v6519 = vpack.c.b16 %v6123, %v6119
    %v6520 = vpack.c.b16 %v6124, %v6120
    %v6521 = vpack.c.b16 %v6129, %v6125
    %v6522 = vpack.c.b16 %v6130, %v6126
    %v6523 = vpack.c.b16 %v6131, %v6127
    %v6524 = vpack.c.b16 %v6132, %v6128
    %v6525 = vpack.c.b16 %v6137, %v6133
    %v6526 = vpack.c.b16 %v6138, %v6134
    %v6527 = vpack.c.b16 %v6139, %v6135
    %v6528 = vpack.c.b16 %v6140, %v6136
    %v6529 = vpack.c.b16 %v6145, %v6141
    %v6530 = vpack.c.b16 %v6146, %v6142
    %v6531 = vpack.c.b16 %v6147, %v6143
    %v6532 = vpack.c.b16 %v6148, %v6144
    %6917 = vmatpush.bf16.msra.mxu0 %v6177
    %6918 = vmatpush.bf16.msra.mxu0 %v6173
    %6919 = vmatpush.bf16.msra.mxu0 %v6169
    %6920 = vmatpush.bf16.msra.mxu0 %v6165
    %6921 = vmatpush.bf16.msra.mxu0 %v6161
    %6922 = vmatpush.bf16.msra.mxu0 %v6157
    %6923 = vmatpush.bf16.msra.mxu0 %v6153
    %6924 = vmatpush.bf16.msra.mxu0 %v6149
    %6925 = vmatmul.bf16.gmra.mxu0 %v4591
    %v6926 = vpop.f32.mrf.mxu0
    %v6927 = vadd.f32 %v4989, %v6926
    %v6928 = vpop.f32.mrf.mxu0
    %6929 = vdwg.mxu0
    %6930 = vmatpush.bf16.msra.mxu0 %v6209
    %6931 = vmatpush.bf16.msra.mxu0 %v6205
    %6932 = vmatpush.bf16.msra.mxu0 %v6201
    %6933 = vmatpush.bf16.msra.mxu0 %v6197
    %6934 = vmatpush.bf16.msra.mxu0 %v6193
    %6935 = vmatpush.bf16.msra.mxu0 %v6189
    %6936 = vmatpush.bf16.msra.mxu0 %v6185
    %6937 = vmatpush.bf16.msra.mxu0 %v6181
    %6938 = vmatmul.bf16.gmra.mxu0 %v4592
    %v6939 = vpop.f32.mrf.mxu0
    %v6940 = vadd.f32 %v6927, %v6939
    %v6941 = vpop.f32.mrf.mxu0
    %6942 = vdwg.mxu0
    %6943 = vmatpush.bf16.msra.mxu0 %v6241
    %6944 = vmatpush.bf16.msra.mxu0 %v6237
    %6945 = vmatpush.bf16.msra.mxu0 %v6233
    %6946 = vmatpush.bf16.msra.mxu0 %v6229
    %6947 = vmatpush.bf16.msra.mxu0 %v6225
    %6948 = vmatpush.bf16.msra.mxu0 %v6221
    %6949 = vmatpush.bf16.msra.mxu0 %v6217
    %6950 = vmatpush.bf16.msra.mxu0 %v6213
    %6951 = vmatmul.bf16.gmra.mxu0 %v4593
    %v6952 = vpop.f32.mrf.mxu0
    %v6953 = vadd.f32 %v6940, %v6952
    %v6954 = vpop.f32.mrf.mxu0
    %6955 = vdwg.mxu0
    %6956 = vmatpush.bf16.msra.mxu0 %v6273
    %6957 = vmatpush.bf16.msra.mxu0 %v6269
    %6958 = vmatpush.bf16.msra.mxu0 %v6265
    %6959 = vmatpush.bf16.msra.mxu0 %v6261
    %6960 = vmatpush.bf16.msra.mxu0 %v6257
    %6961 = vmatpush.bf16.msra.mxu0 %v6253
    %6962 = vmatpush.bf16.msra.mxu0 %v6249
    %6963 = vmatpush.bf16.msra.mxu0 %v6245
    %6964 = vmatmul.bf16.gmra.mxu0 %v4594
    %v6965 = vpop.f32.mrf.mxu0
    %v6966 = vadd.f32 %v6953, %v6965
    %v6967 = vpop.f32.mrf.mxu0
    %6968 = vdwg.mxu0
    %6969 = vmatpush.bf16.msra.mxu0 %v6305
    %6970 = vmatpush.bf16.msra.mxu0 %v6301
    %6971 = vmatpush.bf16.msra.mxu0 %v6297
    %6972 = vmatpush.bf16.msra.mxu0 %v6293
    %6973 = vmatpush.bf16.msra.mxu0 %v6289
    %6974 = vmatpush.bf16.msra.mxu0 %v6285
    %6975 = vmatpush.bf16.msra.mxu0 %v6281
    %6976 = vmatpush.bf16.msra.mxu0 %v6277
    %6977 = vmatmul.bf16.gmra.mxu0 %v4595
    %v6978 = vpop.f32.mrf.mxu0
    %v6979 = vadd.f32 %v6966, %v6978
    %v6980 = vpop.f32.mrf.mxu0
    %6981 = vdwg.mxu0
    %6982 = vmatpush.bf16.msra.mxu0 %v6337
    %6983 = vmatpush.bf16.msra.mxu0 %v6333
    %6984 = vmatpush.bf16.msra.mxu0 %v6329
    %6985 = vmatpush.bf16.msra.mxu0 %v6325
    %6986 = vmatpush.bf16.msra.mxu0 %v6321
    %6987 = vmatpush.bf16.msra.mxu0 %v6317
    %6988 = vmatpush.bf16.msra.mxu0 %v6313
    %6989 = vmatpush.bf16.msra.mxu0 %v6309
    %6990 = vmatmul.bf16.gmra.mxu0 %v4596
    %v6991 = vpop.f32.mrf.mxu0
    %v6992 = vadd.f32 %v6979, %v6991
    %v6993 = vpop.f32.mrf.mxu0
    %6994 = vdwg.mxu0
    %6995 = vmatpush.bf16.msra.mxu0 %v6369
    %6996 = vmatpush.bf16.msra.mxu0 %v6365
    %6997 = vmatpush.bf16.msra.mxu0 %v6361
    %6998 = vmatpush.bf16.msra.mxu0 %v6357
    %6999 = vmatpush.bf16.msra.mxu0 %v6353
    %7000 = vmatpush.bf16.msra.mxu0 %v6349
    %7001 = vmatpush.bf16.msra.mxu0 %v6345
    %7002 = vmatpush.bf16.msra.mxu0 %v6341
    %7003 = vmatmul.bf16.gmra.mxu0 %v4597
    %v7004 = vpop.f32.mrf.mxu0
    %v7005 = vadd.f32 %v6992, %v7004
    %v7006 = vpop.f32.mrf.mxu0
    %7007 = vdwg.mxu0
    %7008 = vmatpush.bf16.msra.mxu0 %v6401
    %7009 = vmatpush.bf16.msra.mxu0 %v6397
    %7010 = vmatpush.bf16.msra.mxu0 %v6393
    %7011 = vmatpush.bf16.msra.mxu0 %v6389
    %7012 = vmatpush.bf16.msra.mxu0 %v6385
    %7013 = vmatpush.bf16.msra.mxu0 %v6381
    %7014 = vmatpush.bf16.msra.mxu0 %v6377
    %7015 = vmatpush.bf16.msra.mxu0 %v6373
    %7016 = vmatmul.bf16.gmra.mxu0 %v4598
    %v7017 = vpop.f32.mrf.mxu0
    %v7018 = vadd.f32 %v7005, %v7017
    %v7019 = vpop.f32.mrf.mxu0
    %7020 = vdwg.mxu0
    %7021 = vmatpush.bf16.msra.mxu0 %v6433
    %7022 = vmatpush.bf16.msra.mxu0 %v6429
    %7023 = vmatpush.bf16.msra.mxu0 %v6425
    %7024 = vmatpush.bf16.msra.mxu0 %v6421
    %7025 = vmatpush.bf16.msra.mxu0 %v6417
    %7026 = vmatpush.bf16.msra.mxu0 %v6413
    %7027 = vmatpush.bf16.msra.mxu0 %v6409
    %7028 = vmatpush.bf16.msra.mxu0 %v6405
    %7029 = vmatmul.bf16.gmra.mxu0 %v4599
    %v7030 = vpop.f32.mrf.mxu0
    %v7031 = vadd.f32 %v7018, %v7030
    %v7032 = vpop.f32.mrf.mxu0
    %7033 = vdwg.mxu0
    %7034 = vmatpush.bf16.msra.mxu0 %v6465
    %7035 = vmatpush.bf16.msra.mxu0 %v6461
    %7036 = vmatpush.bf16.msra.mxu0 %v6457
    %7037 = vmatpush.bf16.msra.mxu0 %v6453
    %7038 = vmatpush.bf16.msra.mxu0 %v6449
    %7039 = vmatpush.bf16.msra.mxu0 %v6445
    %7040 = vmatpush.bf16.msra.mxu0 %v6441
    %7041 = vmatpush.bf16.msra.mxu0 %v6437
    %7042 = vmatmul.bf16.gmra.mxu0 %v4600
    %v7043 = vpop.f32.mrf.mxu0
    %v7044 = vadd.f32 %v7031, %v7043
    %v7045 = vpop.f32.mrf.mxu0
    %7046 = vdwg.mxu0
    %7047 = vmatpush.bf16.msra.mxu0 %v6497
    %7048 = vmatpush.bf16.msra.mxu0 %v6493
    %7049 = vmatpush.bf16.msra.mxu0 %v6489
    %7050 = vmatpush.bf16.msra.mxu0 %v6485
    %7051 = vmatpush.bf16.msra.mxu0 %v6481
    %7052 = vmatpush.bf16.msra.mxu0 %v6477
    %7053 = vmatpush.bf16.msra.mxu0 %v6473
    %7054 = vmatpush.bf16.msra.mxu0 %v6469
    %7055 = vmatmul.bf16.gmra.mxu0 %v4601
    %v7056 = vpop.f32.mrf.mxu0
    %v7057 = vadd.f32 %v7044, %v7056
    %v7058 = vpop.f32.mrf.mxu0
    %7059 = vdwg.mxu0
    %7060 = vmatpush.bf16.msra.mxu0 %v6529
    %7061 = vmatpush.bf16.msra.mxu0 %v6525
    %7062 = vmatpush.bf16.msra.mxu0 %v6521
    %7063 = vmatpush.bf16.msra.mxu0 %v6517
    %7064 = vmatpush.bf16.msra.mxu0 %v6513
    %7065 = vmatpush.bf16.msra.mxu0 %v6509
    %7066 = vmatpush.bf16.msra.mxu0 %v6505
    %7067 = vmatpush.bf16.msra.mxu0 %v6501
    %7068 = vmatmul.bf16.gmra.mxu0 %v4602
    %v7069 = vpop.f32.mrf.mxu0
    %v7070 = vadd.f32 %v7057, %v7069
    %v7071 = vpop.f32.mrf.mxu0
    %7072 = vdwg.mxu0
    %7073 = vmatpush.bf16.msra.mxu0 %v6178
    %7074 = vmatpush.bf16.msra.mxu0 %v6174
    %7075 = vmatpush.bf16.msra.mxu0 %v6170
    %7076 = vmatpush.bf16.msra.mxu0 %v6166
    %7077 = vmatpush.bf16.msra.mxu0 %v6162
    %7078 = vmatpush.bf16.msra.mxu0 %v6158
    %7079 = vmatpush.bf16.msra.mxu0 %v6154
    %7080 = vmatpush.bf16.msra.mxu0 %v6150
    %7081 = vmatmul.bf16.gmra.mxu0 %v4591
    %v7082 = vpop.f32.mrf.mxu0
    %v7083 = vadd.f32 %v4990, %v7082
    %v7084 = vpop.f32.mrf.mxu0
    %7085 = vdwg.mxu0
    %7086 = vmatpush.bf16.msra.mxu0 %v6210
    %7087 = vmatpush.bf16.msra.mxu0 %v6206
    %7088 = vmatpush.bf16.msra.mxu0 %v6202
    %7089 = vmatpush.bf16.msra.mxu0 %v6198
    %7090 = vmatpush.bf16.msra.mxu0 %v6194
    %7091 = vmatpush.bf16.msra.mxu0 %v6190
    %7092 = vmatpush.bf16.msra.mxu0 %v6186
    %7093 = vmatpush.bf16.msra.mxu0 %v6182
    %7094 = vmatmul.bf16.gmra.mxu0 %v4592
    %v7095 = vpop.f32.mrf.mxu0
    %v7096 = vadd.f32 %v7083, %v7095
    %v7097 = vpop.f32.mrf.mxu0
    %7098 = vdwg.mxu0
    %7099 = vmatpush.bf16.msra.mxu0 %v6242
    %7100 = vmatpush.bf16.msra.mxu0 %v6238
    %7101 = vmatpush.bf16.msra.mxu0 %v6234
    %7102 = vmatpush.bf16.msra.mxu0 %v6230
    %7103 = vmatpush.bf16.msra.mxu0 %v6226
    %7104 = vmatpush.bf16.msra.mxu0 %v6222
    %7105 = vmatpush.bf16.msra.mxu0 %v6218
    %7106 = vmatpush.bf16.msra.mxu0 %v6214
    %7107 = vmatmul.bf16.gmra.mxu0 %v4593
    %v7108 = vpop.f32.mrf.mxu0
    %v7109 = vadd.f32 %v7096, %v7108
    %v7110 = vpop.f32.mrf.mxu0
    %7111 = vdwg.mxu0
    %7112 = vmatpush.bf16.msra.mxu0 %v6274
    %7113 = vmatpush.bf16.msra.mxu0 %v6270
    %7114 = vmatpush.bf16.msra.mxu0 %v6266
    %7115 = vmatpush.bf16.msra.mxu0 %v6262
    %7116 = vmatpush.bf16.msra.mxu0 %v6258
    %7117 = vmatpush.bf16.msra.mxu0 %v6254
    %7118 = vmatpush.bf16.msra.mxu0 %v6250
    %7119 = vmatpush.bf16.msra.mxu0 %v6246
    %7120 = vmatmul.bf16.gmra.mxu0 %v4594
    %v7121 = vpop.f32.mrf.mxu0
    %v7122 = vadd.f32 %v7109, %v7121
    %v7123 = vpop.f32.mrf.mxu0
    %7124 = vdwg.mxu0
    %7125 = vmatpush.bf16.msra.mxu0 %v6306
    %7126 = vmatpush.bf16.msra.mxu0 %v6302
    %7127 = vmatpush.bf16.msra.mxu0 %v6298
    %7128 = vmatpush.bf16.msra.mxu0 %v6294
    %7129 = vmatpush.bf16.msra.mxu0 %v6290
    %7130 = vmatpush.bf16.msra.mxu0 %v6286
    %7131 = vmatpush.bf16.msra.mxu0 %v6282
    %7132 = vmatpush.bf16.msra.mxu0 %v6278
    %7133 = vmatmul.bf16.gmra.mxu0 %v4595
    %v7134 = vpop.f32.mrf.mxu0
    %v7135 = vadd.f32 %v7122, %v7134
    %v7136 = vpop.f32.mrf.mxu0
    %7137 = vdwg.mxu0
    %7138 = vmatpush.bf16.msra.mxu0 %v6338
    %7139 = vmatpush.bf16.msra.mxu0 %v6334
    %7140 = vmatpush.bf16.msra.mxu0 %v6330
    %7141 = vmatpush.bf16.msra.mxu0 %v6326
    %7142 = vmatpush.bf16.msra.mxu0 %v6322
    %7143 = vmatpush.bf16.msra.mxu0 %v6318
    %7144 = vmatpush.bf16.msra.mxu0 %v6314
    %7145 = vmatpush.bf16.msra.mxu0 %v6310
    %7146 = vmatmul.bf16.gmra.mxu0 %v4596
    %v7147 = vpop.f32.mrf.mxu0
    %v7148 = vadd.f32 %v7135, %v7147
    %v7149 = vpop.f32.mrf.mxu0
    %7150 = vdwg.mxu0
    %7151 = vmatpush.bf16.msra.mxu0 %v6370
    %7152 = vmatpush.bf16.msra.mxu0 %v6366
    %7153 = vmatpush.bf16.msra.mxu0 %v6362
    %7154 = vmatpush.bf16.msra.mxu0 %v6358
    %7155 = vmatpush.bf16.msra.mxu0 %v6354
    %7156 = vmatpush.bf16.msra.mxu0 %v6350
    %7157 = vmatpush.bf16.msra.mxu0 %v6346
    %7158 = vmatpush.bf16.msra.mxu0 %v6342
    %7159 = vmatmul.bf16.gmra.mxu0 %v4597
    %v7160 = vpop.f32.mrf.mxu0
    %v7161 = vadd.f32 %v7148, %v7160
    %v7162 = vpop.f32.mrf.mxu0
    %7163 = vdwg.mxu0
    %7164 = vmatpush.bf16.msra.mxu0 %v6402
    %7165 = vmatpush.bf16.msra.mxu0 %v6398
    %7166 = vmatpush.bf16.msra.mxu0 %v6394
    %7167 = vmatpush.bf16.msra.mxu0 %v6390
    %7168 = vmatpush.bf16.msra.mxu0 %v6386
    %7169 = vmatpush.bf16.msra.mxu0 %v6382
    %7170 = vmatpush.bf16.msra.mxu0 %v6378
    %7171 = vmatpush.bf16.msra.mxu0 %v6374
    %7172 = vmatmul.bf16.gmra.mxu0 %v4598
    %v7173 = vpop.f32.mrf.mxu0
    %v7174 = vadd.f32 %v7161, %v7173
    %v7175 = vpop.f32.mrf.mxu0
    %7176 = vdwg.mxu0
    %7177 = vmatpush.bf16.msra.mxu0 %v6434
    %7178 = vmatpush.bf16.msra.mxu0 %v6430
    %7179 = vmatpush.bf16.msra.mxu0 %v6426
    %7180 = vmatpush.bf16.msra.mxu0 %v6422
    %7181 = vmatpush.bf16.msra.mxu0 %v6418
    %7182 = vmatpush.bf16.msra.mxu0 %v6414
    %7183 = vmatpush.bf16.msra.mxu0 %v6410
    %7184 = vmatpush.bf16.msra.mxu0 %v6406
    %7185 = vmatmul.bf16.gmra.mxu0 %v4599
    %v7186 = vpop.f32.mrf.mxu0
    %v7187 = vadd.f32 %v7174, %v7186
    %v7188 = vpop.f32.mrf.mxu0
    %7189 = vdwg.mxu0
    %7190 = vmatpush.bf16.msra.mxu0 %v6466
    %7191 = vmatpush.bf16.msra.mxu0 %v6462
    %7192 = vmatpush.bf16.msra.mxu0 %v6458
    %7193 = vmatpush.bf16.msra.mxu0 %v6454
    %7194 = vmatpush.bf16.msra.mxu0 %v6450
    %7195 = vmatpush.bf16.msra.mxu0 %v6446
    %7196 = vmatpush.bf16.msra.mxu0 %v6442
    %7197 = vmatpush.bf16.msra.mxu0 %v6438
    %7198 = vmatmul.bf16.gmra.mxu0 %v4600
    %v7199 = vpop.f32.mrf.mxu0
    %v7200 = vadd.f32 %v7187, %v7199
    %v7201 = vpop.f32.mrf.mxu0
    %7202 = vdwg.mxu0
    %7203 = vmatpush.bf16.msra.mxu0 %v6498
    %7204 = vmatpush.bf16.msra.mxu0 %v6494
    %7205 = vmatpush.bf16.msra.mxu0 %v6490
    %7206 = vmatpush.bf16.msra.mxu0 %v6486
    %7207 = vmatpush.bf16.msra.mxu0 %v6482
    %7208 = vmatpush.bf16.msra.mxu0 %v6478
    %7209 = vmatpush.bf16.msra.mxu0 %v6474
    %7210 = vmatpush.bf16.msra.mxu0 %v6470
    %7211 = vmatmul.bf16.gmra.mxu0 %v4601
    %v7212 = vpop.f32.mrf.mxu0
    %v7213 = vadd.f32 %v7200, %v7212
    %v7214 = vpop.f32.mrf.mxu0
    %7215 = vdwg.mxu0
    %7216 = vmatpush.bf16.msra.mxu0 %v6530
    %7217 = vmatpush.bf16.msra.mxu0 %v6526
    %7218 = vmatpush.bf16.msra.mxu0 %v6522
    %7219 = vmatpush.bf16.msra.mxu0 %v6518
    %7220 = vmatpush.bf16.msra.mxu0 %v6514
    %7221 = vmatpush.bf16.msra.mxu0 %v6510
    %7222 = vmatpush.bf16.msra.mxu0 %v6506
    %7223 = vmatpush.bf16.msra.mxu0 %v6502
    %7224 = vmatmul.bf16.gmra.mxu0 %v4602
    %v7225 = vpop.f32.mrf.mxu0
    %v7226 = vadd.f32 %v7213, %v7225
    %v7227 = vpop.f32.mrf.mxu0
    %7228 = vdwg.mxu0
    %7229 = vmatpush.bf16.msra.mxu0 %v6179
    %7230 = vmatpush.bf16.msra.mxu0 %v6175
    %7231 = vmatpush.bf16.msra.mxu0 %v6171
    %7232 = vmatpush.bf16.msra.mxu0 %v6167
    %7233 = vmatpush.bf16.msra.mxu0 %v6163
    %7234 = vmatpush.bf16.msra.mxu0 %v6159
    %7235 = vmatpush.bf16.msra.mxu0 %v6155
    %7236 = vmatpush.bf16.msra.mxu0 %v6151
    %7237 = vmatmul.bf16.gmra.mxu0 %v4591
    %v7238 = vpop.f32.mrf.mxu0
    %v7239 = vadd.f32 %v4991, %v7238
    %v7240 = vpop.f32.mrf.mxu0
    %7241 = vdwg.mxu0
    %7242 = vmatpush.bf16.msra.mxu0 %v6211
    %7243 = vmatpush.bf16.msra.mxu0 %v6207
    %7244 = vmatpush.bf16.msra.mxu0 %v6203
    %7245 = vmatpush.bf16.msra.mxu0 %v6199
    %7246 = vmatpush.bf16.msra.mxu0 %v6195
    %7247 = vmatpush.bf16.msra.mxu0 %v6191
    %7248 = vmatpush.bf16.msra.mxu0 %v6187
    %7249 = vmatpush.bf16.msra.mxu0 %v6183
    %7250 = vmatmul.bf16.gmra.mxu0 %v4592
    %v7251 = vpop.f32.mrf.mxu0
    %v7252 = vadd.f32 %v7239, %v7251
    %v7253 = vpop.f32.mrf.mxu0
    %7254 = vdwg.mxu0
    %7255 = vmatpush.bf16.msra.mxu0 %v6243
    %7256 = vmatpush.bf16.msra.mxu0 %v6239
    %7257 = vmatpush.bf16.msra.mxu0 %v6235
    %7258 = vmatpush.bf16.msra.mxu0 %v6231
    %7259 = vmatpush.bf16.msra.mxu0 %v6227
    %7260 = vmatpush.bf16.msra.mxu0 %v6223
    %7261 = vmatpush.bf16.msra.mxu0 %v6219
    %7262 = vmatpush.bf16.msra.mxu0 %v6215
    %7263 = vmatmul.bf16.gmra.mxu0 %v4593
    %v7264 = vpop.f32.mrf.mxu0
    %v7265 = vadd.f32 %v7252, %v7264
    %v7266 = vpop.f32.mrf.mxu0
    %7267 = vdwg.mxu0
    %7268 = vmatpush.bf16.msra.mxu0 %v6275
    %7269 = vmatpush.bf16.msra.mxu0 %v6271
    %7270 = vmatpush.bf16.msra.mxu0 %v6267
    %7271 = vmatpush.bf16.msra.mxu0 %v6263
    %7272 = vmatpush.bf16.msra.mxu0 %v6259
    %7273 = vmatpush.bf16.msra.mxu0 %v6255
    %7274 = vmatpush.bf16.msra.mxu0 %v6251
    %7275 = vmatpush.bf16.msra.mxu0 %v6247
    %7276 = vmatmul.bf16.gmra.mxu0 %v4594
    %v7277 = vpop.f32.mrf.mxu0
    %v7278 = vadd.f32 %v7265, %v7277
    %v7279 = vpop.f32.mrf.mxu0
    %7280 = vdwg.mxu0
    %7281 = vmatpush.bf16.msra.mxu0 %v6307
    %7282 = vmatpush.bf16.msra.mxu0 %v6303
    %7283 = vmatpush.bf16.msra.mxu0 %v6299
    %7284 = vmatpush.bf16.msra.mxu0 %v6295
    %7285 = vmatpush.bf16.msra.mxu0 %v6291
    %7286 = vmatpush.bf16.msra.mxu0 %v6287
    %7287 = vmatpush.bf16.msra.mxu0 %v6283
    %7288 = vmatpush.bf16.msra.mxu0 %v6279
    %7289 = vmatmul.bf16.gmra.mxu0 %v4595
    %v7290 = vpop.f32.mrf.mxu0
    %v7291 = vadd.f32 %v7278, %v7290
    %v7292 = vpop.f32.mrf.mxu0
    %7293 = vdwg.mxu0
    %7294 = vmatpush.bf16.msra.mxu0 %v6339
    %7295 = vmatpush.bf16.msra.mxu0 %v6335
    %7296 = vmatpush.bf16.msra.mxu0 %v6331
    %7297 = vmatpush.bf16.msra.mxu0 %v6327
    %7298 = vmatpush.bf16.msra.mxu0 %v6323
    %7299 = vmatpush.bf16.msra.mxu0 %v6319
    %7300 = vmatpush.bf16.msra.mxu0 %v6315
    %7301 = vmatpush.bf16.msra.mxu0 %v6311
    %7302 = vmatmul.bf16.gmra.mxu0 %v4596
    %v7303 = vpop.f32.mrf.mxu0
    %v7304 = vadd.f32 %v7291, %v7303
    %v7305 = vpop.f32.mrf.mxu0
    %7306 = vdwg.mxu0
    %7307 = vmatpush.bf16.msra.mxu0 %v6371
    %7308 = vmatpush.bf16.msra.mxu0 %v6367
    %7309 = vmatpush.bf16.msra.mxu0 %v6363
    %7310 = vmatpush.bf16.msra.mxu0 %v6359
    %7311 = vmatpush.bf16.msra.mxu0 %v6355
    %7312 = vmatpush.bf16.msra.mxu0 %v6351
    %7313 = vmatpush.bf16.msra.mxu0 %v6347
    %7314 = vmatpush.bf16.msra.mxu0 %v6343
    %7315 = vmatmul.bf16.gmra.mxu0 %v4597
    %v7316 = vpop.f32.mrf.mxu0
    %v7317 = vadd.f32 %v7304, %v7316
    %v7318 = vpop.f32.mrf.mxu0
    %7319 = vdwg.mxu0
    %7320 = vmatpush.bf16.msra.mxu0 %v6403
    %7321 = vmatpush.bf16.msra.mxu0 %v6399
    %7322 = vmatpush.bf16.msra.mxu0 %v6395
    %7323 = vmatpush.bf16.msra.mxu0 %v6391
    %7324 = vmatpush.bf16.msra.mxu0 %v6387
    %7325 = vmatpush.bf16.msra.mxu0 %v6383
    %7326 = vmatpush.bf16.msra.mxu0 %v6379
    %7327 = vmatpush.bf16.msra.mxu0 %v6375
    %7328 = vmatmul.bf16.gmra.mxu0 %v4598
    %v7329 = vpop.f32.mrf.mxu0
    %v7330 = vadd.f32 %v7317, %v7329
    %v7331 = vpop.f32.mrf.mxu0
    %7332 = vdwg.mxu0
    %7333 = vmatpush.bf16.msra.mxu0 %v6435
    %7334 = vmatpush.bf16.msra.mxu0 %v6431
    %7335 = vmatpush.bf16.msra.mxu0 %v6427
    %7336 = vmatpush.bf16.msra.mxu0 %v6423
    %7337 = vmatpush.bf16.msra.mxu0 %v6419
    %7338 = vmatpush.bf16.msra.mxu0 %v6415
    %7339 = vmatpush.bf16.msra.mxu0 %v6411
    %7340 = vmatpush.bf16.msra.mxu0 %v6407
    %7341 = vmatmul.bf16.gmra.mxu0 %v4599
    %v7342 = vpop.f32.mrf.mxu0
    %v7343 = vadd.f32 %v7330, %v7342
    %v7344 = vpop.f32.mrf.mxu0
    %7345 = vdwg.mxu0
    %7346 = vmatpush.bf16.msra.mxu0 %v6467
    %7347 = vmatpush.bf16.msra.mxu0 %v6463
    %7348 = vmatpush.bf16.msra.mxu0 %v6459
    %7349 = vmatpush.bf16.msra.mxu0 %v6455
    %7350 = vmatpush.bf16.msra.mxu0 %v6451
    %7351 = vmatpush.bf16.msra.mxu0 %v6447
    %7352 = vmatpush.bf16.msra.mxu0 %v6443
    %7353 = vmatpush.bf16.msra.mxu0 %v6439
    %7354 = vmatmul.bf16.gmra.mxu0 %v4600
    %v7355 = vpop.f32.mrf.mxu0
    %v7356 = vadd.f32 %v7343, %v7355
    %v7357 = vpop.f32.mrf.mxu0
    %7358 = vdwg.mxu0
    %7359 = vmatpush.bf16.msra.mxu0 %v6499
    %7360 = vmatpush.bf16.msra.mxu0 %v6495
    %7361 = vmatpush.bf16.msra.mxu0 %v6491
    %7362 = vmatpush.bf16.msra.mxu0 %v6487
    %7363 = vmatpush.bf16.msra.mxu0 %v6483
    %7364 = vmatpush.bf16.msra.mxu0 %v6479
    %7365 = vmatpush.bf16.msra.mxu0 %v6475
    %7366 = vmatpush.bf16.msra.mxu0 %v6471
    %7367 = vmatmul.bf16.gmra.mxu0 %v4601
    %v7368 = vpop.f32.mrf.mxu0
    %v7369 = vadd.f32 %v7356, %v7368
    %v7370 = vpop.f32.mrf.mxu0
    %7371 = vdwg.mxu0
    %7372 = vmatpush.bf16.msra.mxu0 %v6531
    %7373 = vmatpush.bf16.msra.mxu0 %v6527
    %7374 = vmatpush.bf16.msra.mxu0 %v6523
    %7375 = vmatpush.bf16.msra.mxu0 %v6519
    %7376 = vmatpush.bf16.msra.mxu0 %v6515
    %7377 = vmatpush.bf16.msra.mxu0 %v6511
    %7378 = vmatpush.bf16.msra.mxu0 %v6507
    %7379 = vmatpush.bf16.msra.mxu0 %v6503
    %7380 = vmatmul.bf16.gmra.mxu0 %v4602
    %v7381 = vpop.f32.mrf.mxu0
    %v7382 = vadd.f32 %v7369, %v7381
    %v7383 = vpop.f32.mrf.mxu0
    %7384 = vdwg.mxu0
    %7385 = vmatpush.bf16.msra.mxu0 %v6180
    %7386 = vmatpush.bf16.msra.mxu0 %v6176
    %7387 = vmatpush.bf16.msra.mxu0 %v6172
    %7388 = vmatpush.bf16.msra.mxu0 %v6168
    %7389 = vmatpush.bf16.msra.mxu0 %v6164
    %7390 = vmatpush.bf16.msra.mxu0 %v6160
    %7391 = vmatpush.bf16.msra.mxu0 %v6156
    %7392 = vmatpush.bf16.msra.mxu0 %v6152
    %7393 = vmatmul.bf16.gmra.mxu0 %v4591
    %v7394 = vpop.f32.mrf.mxu0
    %v7395 = vadd.f32 %v4992, %v7394
    %v7396 = vpop.f32.mrf.mxu0
    %7397 = vdwg.mxu0
    %7398 = vmatpush.bf16.msra.mxu0 %v6212
    %7399 = vmatpush.bf16.msra.mxu0 %v6208
    %7400 = vmatpush.bf16.msra.mxu0 %v6204
    %7401 = vmatpush.bf16.msra.mxu0 %v6200
    %7402 = vmatpush.bf16.msra.mxu0 %v6196
    %7403 = vmatpush.bf16.msra.mxu0 %v6192
    %7404 = vmatpush.bf16.msra.mxu0 %v6188
    %7405 = vmatpush.bf16.msra.mxu0 %v6184
    %7406 = vmatmul.bf16.gmra.mxu0 %v4592
    %v7407 = vpop.f32.mrf.mxu0
    %v7408 = vadd.f32 %v7395, %v7407
    %v7409 = vpop.f32.mrf.mxu0
    %7410 = vdwg.mxu0
    %7411 = vmatpush.bf16.msra.mxu0 %v6244
    %7412 = vmatpush.bf16.msra.mxu0 %v6240
    %7413 = vmatpush.bf16.msra.mxu0 %v6236
    %7414 = vmatpush.bf16.msra.mxu0 %v6232
    %7415 = vmatpush.bf16.msra.mxu0 %v6228
    %7416 = vmatpush.bf16.msra.mxu0 %v6224
    %7417 = vmatpush.bf16.msra.mxu0 %v6220
    %7418 = vmatpush.bf16.msra.mxu0 %v6216
    %7419 = vmatmul.bf16.gmra.mxu0 %v4593
    %v7420 = vpop.f32.mrf.mxu0
    %v7421 = vadd.f32 %v7408, %v7420
    %v7422 = vpop.f32.mrf.mxu0
    %7423 = vdwg.mxu0
    %7424 = vmatpush.bf16.msra.mxu0 %v6276
    %7425 = vmatpush.bf16.msra.mxu0 %v6272
    %7426 = vmatpush.bf16.msra.mxu0 %v6268
    %7427 = vmatpush.bf16.msra.mxu0 %v6264
    %7428 = vmatpush.bf16.msra.mxu0 %v6260
    %7429 = vmatpush.bf16.msra.mxu0 %v6256
    %7430 = vmatpush.bf16.msra.mxu0 %v6252
    %7431 = vmatpush.bf16.msra.mxu0 %v6248
    %7432 = vmatmul.bf16.gmra.mxu0 %v4594
    %v7433 = vpop.f32.mrf.mxu0
    %v7434 = vadd.f32 %v7421, %v7433
    %v7435 = vpop.f32.mrf.mxu0
    %7436 = vdwg.mxu0
    %7437 = vmatpush.bf16.msra.mxu0 %v6308
    %7438 = vmatpush.bf16.msra.mxu0 %v6304
    %7439 = vmatpush.bf16.msra.mxu0 %v6300
    %7440 = vmatpush.bf16.msra.mxu0 %v6296
    %7441 = vmatpush.bf16.msra.mxu0 %v6292
    %7442 = vmatpush.bf16.msra.mxu0 %v6288
    %7443 = vmatpush.bf16.msra.mxu0 %v6284
    %7444 = vmatpush.bf16.msra.mxu0 %v6280
    %7445 = vmatmul.bf16.gmra.mxu0 %v4595
    %v7446 = vpop.f32.mrf.mxu0
    %v7447 = vadd.f32 %v7434, %v7446
    %v7448 = vpop.f32.mrf.mxu0
    %7449 = vdwg.mxu0
    %7450 = vmatpush.bf16.msra.mxu0 %v6340
    %7451 = vmatpush.bf16.msra.mxu0 %v6336
    %7452 = vmatpush.bf16.msra.mxu0 %v6332
    %7453 = vmatpush.bf16.msra.mxu0 %v6328
    %7454 = vmatpush.bf16.msra.mxu0 %v6324
    %7455 = vmatpush.bf16.msra.mxu0 %v6320
    %7456 = vmatpush.bf16.msra.mxu0 %v6316
    %7457 = vmatpush.bf16.msra.mxu0 %v6312
    %7458 = vmatmul.bf16.gmra.mxu0 %v4596
    %v7459 = vpop.f32.mrf.mxu0
    %v7460 = vadd.f32 %v7447, %v7459
    %v7461 = vpop.f32.mrf.mxu0
    %7462 = vdwg.mxu0
    %7463 = vmatpush.bf16.msra.mxu0 %v6372
    %7464 = vmatpush.bf16.msra.mxu0 %v6368
    %7465 = vmatpush.bf16.msra.mxu0 %v6364
    %7466 = vmatpush.bf16.msra.mxu0 %v6360
    %7467 = vmatpush.bf16.msra.mxu0 %v6356
    %7468 = vmatpush.bf16.msra.mxu0 %v6352
    %7469 = vmatpush.bf16.msra.mxu0 %v6348
    %7470 = vmatpush.bf16.msra.mxu0 %v6344
    %7471 = vmatmul.bf16.gmra.mxu0 %v4597
    %v7472 = vpop.f32.mrf.mxu0
    %v7473 = vadd.f32 %v7460, %v7472
    %v7474 = vpop.f32.mrf.mxu0
    %7475 = vdwg.mxu0
    %7476 = vmatpush.bf16.msra.mxu0 %v6404
    %7477 = vmatpush.bf16.msra.mxu0 %v6400
    %7478 = vmatpush.bf16.msra.mxu0 %v6396
    %7479 = vmatpush.bf16.msra.mxu0 %v6392
    %7480 = vmatpush.bf16.msra.mxu0 %v6388
    %7481 = vmatpush.bf16.msra.mxu0 %v6384
    %7482 = vmatpush.bf16.msra.mxu0 %v6380
    %7483 = vmatpush.bf16.msra.mxu0 %v6376
    %7484 = vmatmul.bf16.gmra.mxu0 %v4598
    %v7485 = vpop.f32.mrf.mxu0
    %v7486 = vadd.f32 %v7473, %v7485
    %v7487 = vpop.f32.mrf.mxu0
    %7488 = vdwg.mxu0
    %7489 = vmatpush.bf16.msra.mxu0 %v6436
    %7490 = vmatpush.bf16.msra.mxu0 %v6432
    %7491 = vmatpush.bf16.msra.mxu0 %v6428
    %7492 = vmatpush.bf16.msra.mxu0 %v6424
    %7493 = vmatpush.bf16.msra.mxu0 %v6420
    %7494 = vmatpush.bf16.msra.mxu0 %v6416
    %7495 = vmatpush.bf16.msra.mxu0 %v6412
    %7496 = vmatpush.bf16.msra.mxu0 %v6408
    %7497 = vmatmul.bf16.gmra.mxu0 %v4599
    %v7498 = vpop.f32.mrf.mxu0
    %v7499 = vadd.f32 %v7486, %v7498
    %v7500 = vpop.f32.mrf.mxu0
    %7501 = vdwg.mxu0
    %7502 = vmatpush.bf16.msra.mxu0 %v6468
    %7503 = vmatpush.bf16.msra.mxu0 %v6464
    %7504 = vmatpush.bf16.msra.mxu0 %v6460
    %7505 = vmatpush.bf16.msra.mxu0 %v6456
    %7506 = vmatpush.bf16.msra.mxu0 %v6452
    %7507 = vmatpush.bf16.msra.mxu0 %v6448
    %7508 = vmatpush.bf16.msra.mxu0 %v6444
    %7509 = vmatpush.bf16.msra.mxu0 %v6440
    %7510 = vmatmul.bf16.gmra.mxu0 %v4600
    %v7511 = vpop.f32.mrf.mxu0
    %v7512 = vadd.f32 %v7499, %v7511
    %v7513 = vpop.f32.mrf.mxu0
    %7514 = vdwg.mxu0
    %7515 = vmatpush.bf16.msra.mxu0 %v6500
    %7516 = vmatpush.bf16.msra.mxu0 %v6496
    %7517 = vmatpush.bf16.msra.mxu0 %v6492
    %7518 = vmatpush.bf16.msra.mxu0 %v6488
    %7519 = vmatpush.bf16.msra.mxu0 %v6484
    %7520 = vmatpush.bf16.msra.mxu0 %v6480
    %7521 = vmatpush.bf16.msra.mxu0 %v6476
    %7522 = vmatpush.bf16.msra.mxu0 %v6472
    %7523 = vmatmul.bf16.gmra.mxu0 %v4601
    %v7524 = vpop.f32.mrf.mxu0
    %v7525 = vadd.f32 %v7512, %v7524
    %v7526 = vpop.f32.mrf.mxu0
    %7527 = vdwg.mxu0
    %7528 = vmatpush.bf16.msra.mxu0 %v6532
    %7529 = vmatpush.bf16.msra.mxu0 %v6528
    %7530 = vmatpush.bf16.msra.mxu0 %v6524
    %7531 = vmatpush.bf16.msra.mxu0 %v6520
    %7532 = vmatpush.bf16.msra.mxu0 %v6516
    %7533 = vmatpush.bf16.msra.mxu0 %v6512
    %7534 = vmatpush.bf16.msra.mxu0 %v6508
    %7535 = vmatpush.bf16.msra.mxu0 %v6504
    %7536 = vmatmul.bf16.gmra.mxu0 %v4602
    %v7537 = vpop.f32.mrf.mxu0
    %v7538 = vadd.f32 %v7525, %v7537
    %v7539 = vpop.f32.mrf.mxu0
    %7540 = vdwg.mxu0
    %7541 = vst [vmem:[#allocation32] sm:$0xff] %v7070
    %7542 = vst [vmem:[#allocation32 + $0x8] sm:$0xff] %v7226
    %7543 = vst [vmem:[#allocation32 + $0x10] sm:$0xff] %v7382
    %7544 = vst [vmem:[#allocation32 + $0x18] sm:$0xff] %v7538
    %v7545 = vpack.c.bf16 %v1413, %v1349
    %v7546 = vpack.c.bf16 %v1420, %v1356
    %v7547 = vpack.c.bf16 %v1427, %v1363
    %v7548 = vpack.c.bf16 %v1434, %v1370
    %v7549 = vld [vmem:[#allocation10] sm:$0xff]
    %v7550 = vld [vmem:[#allocation10 + $0x8] sm:$0xf]
    %v7551 = vld [vmem:[#allocation10 + $0xc] sm:$0xff]
    %v7552 = vld [vmem:[#allocation10 + $0x14] sm:$0xf]
    %v7553 = vld [vmem:[#allocation10 + $0x18] sm:$0xff]
    %v7554 = vld [vmem:[#allocation10 + $0x20] sm:$0xf]
    %v7555 = vld [vmem:[#allocation10 + $0x24] sm:$0xff]
    %v7556 = vld [vmem:[#allocation10 + $0x2c] sm:$0xf]
    %v7557 = vld [vmem:[#allocation10 + $0x30] sm:$0xff]
    %v7558 = vld [vmem:[#allocation10 + $0x38] sm:$0xf]
    %v7559 = vld [vmem:[#allocation10 + $0x3c] sm:$0xff]
    %v7560 = vld [vmem:[#allocation10 + $0x44] sm:$0xf]
    %v7561 = vld [vmem:[#allocation10 + $0x48] sm:$0xff]
    %v7562 = vld [vmem:[#allocation10 + $0x50] sm:$0xf]
    %v7563 = vld [vmem:[#allocation10 + $0x54] sm:$0xff]
    %v7564 = vld [vmem:[#allocation10 + $0x5c] sm:$0xf]
    %v7565 = vld [vmem:[#allocation10 + $0x60] sm:$0xff]
    %v7566 = vld [vmem:[#allocation10 + $0x68] sm:$0xf]
    %v7567 = vld [vmem:[#allocation10 + $0x6c] sm:$0xff]
    %v7568 = vld [vmem:[#allocation10 + $0x74] sm:$0xf]
    %v7569 = vld [vmem:[#allocation10 + $0x78] sm:$0xff]
    %v7570 = vld [vmem:[#allocation10 + $0x80] sm:$0xf]
    %v7571 = vld [vmem:[#allocation10 + $0x84] sm:$0xff]
    %v7572 = vld [vmem:[#allocation10 + $0x8c] sm:$0xf]
    %v7573 = vld [vmem:[#allocation10 + $0x90] sm:$0xff]
    %v7574 = vld [vmem:[#allocation10 + $0x98] sm:$0xf]
    %v7575 = vld [vmem:[#allocation10 + $0x9c] sm:$0xff]
    %v7576 = vld [vmem:[#allocation10 + $0xa4] sm:$0xf]
    %v7577 = vld [vmem:[#allocation10 + $0xa8] sm:$0xff]
    %v7578 = vld [vmem:[#allocation10 + $0xb0] sm:$0xf]
    %v7579 = vld [vmem:[#allocation10 + $0xb4] sm:$0xff]
    %v7580 = vld [vmem:[#allocation10 + $0xbc] sm:$0xf]
    %v7581 = vld [vmem:[#allocation10 + $0xc0] sm:$0xff]
    %v7582 = vld [vmem:[#allocation10 + $0xc8] sm:$0xf]
    %v7583 = vld [vmem:[#allocation10 + $0xcc] sm:$0xff]
    %v7584 = vld [vmem:[#allocation10 + $0xd4] sm:$0xf]
    %v7585 = vld [vmem:[#allocation10 + $0xd8] sm:$0xff]
    %v7586 = vld [vmem:[#allocation10 + $0xe0] sm:$0xf]
    %v7587 = vld [vmem:[#allocation10 + $0xe4] sm:$0xff]
    %v7588 = vld [vmem:[#allocation10 + $0xec] sm:$0xf]
    %v7589 = vld [vmem:[#allocation10 + $0xf0] sm:$0xff]
    %v7590 = vld [vmem:[#allocation10 + $0xf8] sm:$0xf]
    %v7591 = vld [vmem:[#allocation10 + $0xfc] sm:$0xff]
    %v7592 = vld [vmem:[#allocation10 + $0x104] sm:$0xf]
    %v7593 = vld [vmem:[#allocation10 + $0x108] sm:$0xff]
    %v7594 = vld [vmem:[#allocation10 + $0x110] sm:$0xf]
    %v7595 = vld [vmem:[#allocation10 + $0x114] sm:$0xff]
    %v7596 = vld [vmem:[#allocation10 + $0x11c] sm:$0xf]
    %v7597 = vld [vmem:[#allocation10 + $0x120] sm:$0xff]
    %v7598 = vld [vmem:[#allocation10 + $0x128] sm:$0xf]
    %v7599 = vld [vmem:[#allocation10 + $0x12c] sm:$0xff]
    %v7600 = vld [vmem:[#allocation10 + $0x134] sm:$0xf]
    %v7601 = vld [vmem:[#allocation10 + $0x138] sm:$0xff]
    %v7602 = vld [vmem:[#allocation10 + $0x140] sm:$0xf]
    %v7603 = vld [vmem:[#allocation10 + $0x144] sm:$0xff]
    %v7604 = vld [vmem:[#allocation10 + $0x14c] sm:$0xf]
    %v7605 = vld [vmem:[#allocation10 + $0x150] sm:$0xff]
    %v7606 = vld [vmem:[#allocation10 + $0x158] sm:$0xf]
    %v7607 = vld [vmem:[#allocation10 + $0x15c] sm:$0xff]
    %v7608 = vld [vmem:[#allocation10 + $0x164] sm:$0xf]
    %v7609 = vld [vmem:[#allocation10 + $0x168] sm:$0xff]
    %v7610 = vld [vmem:[#allocation10 + $0x170] sm:$0xf]
    %v7611 = vld [vmem:[#allocation10 + $0x174] sm:$0xff]
    %v7612 = vld [vmem:[#allocation10 + $0x17c] sm:$0xf]
    %v7613 = vld [vmem:[#allocation10 + $0x180] sm:$0xff]
    %v7614 = vld [vmem:[#allocation10 + $0x188] sm:$0xf]
    %v7615 = vld [vmem:[#allocation10 + $0x18c] sm:$0xff]
    %v7616 = vld [vmem:[#allocation10 + $0x194] sm:$0xf]
    %v7617 = vld [vmem:[#allocation10 + $0x198] sm:$0xff]
    %v7618 = vld [vmem:[#allocation10 + $0x1a0] sm:$0xf]
    %v7619 = vld [vmem:[#allocation10 + $0x1a4] sm:$0xff]
    %v7620 = vld [vmem:[#allocation10 + $0x1ac] sm:$0xf]
    %v7621 = vld [vmem:[#allocation10 + $0x1b0] sm:$0xff]
    %v7622 = vld [vmem:[#allocation10 + $0x1b8] sm:$0xf]
    %v7623 = vld [vmem:[#allocation10 + $0x1bc] sm:$0xff]
    %v7624 = vld [vmem:[#allocation10 + $0x1c4] sm:$0xf]
    %v7625 = vld [vmem:[#allocation10 + $0x1c8] sm:$0xff]
    %v7626 = vld [vmem:[#allocation10 + $0x1d0] sm:$0xf]
    %v7627 = vld [vmem:[#allocation10 + $0x1d4] sm:$0xff]
    %v7628 = vld [vmem:[#allocation10 + $0x1dc] sm:$0xf]
    %v7629 = vld [vmem:[#allocation10 + $0x1e0] sm:$0xff]
    %v7630 = vld [vmem:[#allocation10 + $0x1e8] sm:$0xf]
    %v7631 = vld [vmem:[#allocation10 + $0x1ec] sm:$0xff]
    %v7632 = vld [vmem:[#allocation10 + $0x1f4] sm:$0xf]
    %v7633 = vld [vmem:[#allocation10 + $0x1f8] sm:$0xff]
    %v7634 = vld [vmem:[#allocation10 + $0x200] sm:$0xf]
    %v7635 = vld [vmem:[#allocation10 + $0x204] sm:$0xff]
    %v7636 = vld [vmem:[#allocation10 + $0x20c] sm:$0xf]
    %v7637 = vld [vmem:[#allocation10 + $0x210] sm:$0xff]
    %v7638 = vld [vmem:[#allocation10 + $0x218] sm:$0xf]
    %v7639 = vld [vmem:[#allocation10 + $0x21c] sm:$0xff]
    %v7640 = vld [vmem:[#allocation10 + $0x224] sm:$0xf]
    %v7641 = vld [vmem:[#allocation10 + $0x228] sm:$0xff]
    %v7642 = vld [vmem:[#allocation10 + $0x230] sm:$0xf]
    %v7643 = vld [vmem:[#allocation10 + $0x234] sm:$0xff]
    %v7644 = vld [vmem:[#allocation10 + $0x23c] sm:$0xf]
    %v7645 = vld [vmem:[#allocation10 + $0x240] sm:$0xff]
    %v7646 = vld [vmem:[#allocation10 + $0x248] sm:$0xf]
    %v7647 = vld [vmem:[#allocation10 + $0x24c] sm:$0xff]
    %v7648 = vld [vmem:[#allocation10 + $0x254] sm:$0xf]
    %v7649 = vld [vmem:[#allocation10 + $0x258] sm:$0xff]
    %v7650 = vld [vmem:[#allocation10 + $0x260] sm:$0xf]
    %v7651 = vld [vmem:[#allocation10 + $0x264] sm:$0xff]
    %v7652 = vld [vmem:[#allocation10 + $0x26c] sm:$0xf]
    %v7653 = vld [vmem:[#allocation10 + $0x270] sm:$0xff]
    %v7654 = vld [vmem:[#allocation10 + $0x278] sm:$0xf]
    %v7655 = vld [vmem:[#allocation10 + $0x27c] sm:$0xff]
    %v7656 = vld [vmem:[#allocation10 + $0x284] sm:$0xf]
    %v7657 = vld [vmem:[#allocation10 + $0x288] sm:$0xff]
    %v7658 = vld [vmem:[#allocation10 + $0x290] sm:$0xf]
    %v7659 = vld [vmem:[#allocation10 + $0x294] sm:$0xff]
    %v7660 = vld [vmem:[#allocation10 + $0x29c] sm:$0xf]
    %v7661 = vld [vmem:[#allocation10 + $0x2a0] sm:$0xff]
    %v7662 = vld [vmem:[#allocation10 + $0x2a8] sm:$0xf]
    %v7663 = vld [vmem:[#allocation10 + $0x2ac] sm:$0xff]
    %v7664 = vld [vmem:[#allocation10 + $0x2b4] sm:$0xf]
    %v7665 = vld [vmem:[#allocation10 + $0x2b8] sm:$0xff]
    %v7666 = vld [vmem:[#allocation10 + $0x2c0] sm:$0xf]
    %v7667 = vld [vmem:[#allocation10 + $0x2c4] sm:$0xff]
    %v7668 = vld [vmem:[#allocation10 + $0x2cc] sm:$0xf]
    %v7669 = vld [vmem:[#allocation10 + $0x2d0] sm:$0xff]
    %v7670 = vld [vmem:[#allocation10 + $0x2d8] sm:$0xf]
    %v7671 = vld [vmem:[#allocation10 + $0x2dc] sm:$0xff]
    %v7672 = vld [vmem:[#allocation10 + $0x2e4] sm:$0xf]
    %v7673 = vld [vmem:[#allocation10 + $0x2e8] sm:$0xff]
    %v7674 = vld [vmem:[#allocation10 + $0x2f0] sm:$0xf]
    %v7675 = vld [vmem:[#allocation10 + $0x2f4] sm:$0xff]
    %v7676 = vld [vmem:[#allocation10 + $0x2fc] sm:$0xf]
    %v7805 = vunpack.c.l.b16 %v7549
    %v7806 = vunpack.c.h.b16 %v7549
    %v7807 = vunpack.c.l.b16 %v7550
    %v7808 = vunpack.c.l.b16 %v7551
    %v7809 = vunpack.c.h.b16 %v7551
    %v7810 = vunpack.c.l.b16 %v7552
    %v7811 = vunpack.c.l.b16 %v7553
    %v7812 = vunpack.c.h.b16 %v7553
    %v7813 = vunpack.c.l.b16 %v7554
    %v7814 = vunpack.c.l.b16 %v7555
    %v7815 = vunpack.c.h.b16 %v7555
    %v7816 = vunpack.c.l.b16 %v7556
    %v7817 = vunpack.c.l.b16 %v7557
    %v7818 = vunpack.c.h.b16 %v7557
    %v7819 = vunpack.c.l.b16 %v7558
    %v7820 = vunpack.c.l.b16 %v7559
    %v7821 = vunpack.c.h.b16 %v7559
    %v7822 = vunpack.c.l.b16 %v7560
    %v7823 = vunpack.c.l.b16 %v7561
    %v7824 = vunpack.c.h.b16 %v7561
    %v7825 = vunpack.c.l.b16 %v7562
    %v7826 = vunpack.c.l.b16 %v7563
    %v7827 = vunpack.c.h.b16 %v7563
    %v7828 = vunpack.c.l.b16 %v7564
    %v7829 = vunpack.c.l.b16 %v7565
    %v7830 = vunpack.c.h.b16 %v7565
    %v7831 = vunpack.c.l.b16 %v7566
    %v7832 = vunpack.c.l.b16 %v7567
    %v7833 = vunpack.c.h.b16 %v7567
    %v7834 = vunpack.c.l.b16 %v7568
    %v7835 = vunpack.c.l.b16 %v7569
    %v7836 = vunpack.c.h.b16 %v7569
    %v7837 = vunpack.c.l.b16 %v7570
    %v7838 = vunpack.c.l.b16 %v7571
    %v7839 = vunpack.c.h.b16 %v7571
    %v7840 = vunpack.c.l.b16 %v7572
    %v7841 = vunpack.c.l.b16 %v7573
    %v7842 = vunpack.c.h.b16 %v7573
    %v7843 = vunpack.c.l.b16 %v7574
    %v7844 = vunpack.c.l.b16 %v7575
    %v7845 = vunpack.c.h.b16 %v7575
    %v7846 = vunpack.c.l.b16 %v7576
    %v7847 = vunpack.c.l.b16 %v7577
    %v7848 = vunpack.c.h.b16 %v7577
    %v7849 = vunpack.c.l.b16 %v7578
    %v7850 = vunpack.c.l.b16 %v7579
    %v7851 = vunpack.c.h.b16 %v7579
    %v7852 = vunpack.c.l.b16 %v7580
    %v7853 = vunpack.c.l.b16 %v7581
    %v7854 = vunpack.c.h.b16 %v7581
    %v7855 = vunpack.c.l.b16 %v7582
    %v7856 = vunpack.c.l.b16 %v7583
    %v7857 = vunpack.c.h.b16 %v7583
    %v7858 = vunpack.c.l.b16 %v7584
    %v7859 = vunpack.c.l.b16 %v7585
    %v7860 = vunpack.c.h.b16 %v7585
    %v7861 = vunpack.c.l.b16 %v7586
    %v7862 = vunpack.c.l.b16 %v7587
    %v7863 = vunpack.c.h.b16 %v7587
    %v7864 = vunpack.c.l.b16 %v7588
    %v7865 = vunpack.c.l.b16 %v7589
    %v7866 = vunpack.c.h.b16 %v7589
    %v7867 = vunpack.c.l.b16 %v7590
    %v7868 = vunpack.c.l.b16 %v7591
    %v7869 = vunpack.c.h.b16 %v7591
    %v7870 = vunpack.c.l.b16 %v7592
    %v7871 = vunpack.c.l.b16 %v7593
    %v7872 = vunpack.c.h.b16 %v7593
    %v7873 = vunpack.c.l.b16 %v7594
    %v7874 = vunpack.c.l.b16 %v7595
    %v7875 = vunpack.c.h.b16 %v7595
    %v7876 = vunpack.c.l.b16 %v7596
    %v7877 = vunpack.c.l.b16 %v7597
    %v7878 = vunpack.c.h.b16 %v7597
    %v7879 = vunpack.c.l.b16 %v7598
    %v7880 = vunpack.c.l.b16 %v7599
    %v7881 = vunpack.c.h.b16 %v7599
    %v7882 = vunpack.c.l.b16 %v7600
    %v7883 = vunpack.c.l.b16 %v7601
    %v7884 = vunpack.c.h.b16 %v7601
    %v7885 = vunpack.c.l.b16 %v7602
    %v7886 = vunpack.c.l.b16 %v7603
    %v7887 = vunpack.c.h.b16 %v7603
    %v7888 = vunpack.c.l.b16 %v7604
    %v7889 = vunpack.c.l.b16 %v7605
    %v7890 = vunpack.c.h.b16 %v7605
    %v7891 = vunpack.c.l.b16 %v7606
    %v7892 = vunpack.c.l.b16 %v7607
    %v7893 = vunpack.c.h.b16 %v7607
    %v7894 = vunpack.c.l.b16 %v7608
    %v7895 = vunpack.c.l.b16 %v7609
    %v7896 = vunpack.c.h.b16 %v7609
    %v7897 = vunpack.c.l.b16 %v7610
    %v7898 = vunpack.c.l.b16 %v7611
    %v7899 = vunpack.c.h.b16 %v7611
    %v7900 = vunpack.c.l.b16 %v7612
    %v7901 = vunpack.c.l.b16 %v7613
    %v7902 = vunpack.c.h.b16 %v7613
    %v7903 = vunpack.c.l.b16 %v7614
    %v7904 = vunpack.c.l.b16 %v7615
    %v7905 = vunpack.c.h.b16 %v7615
    %v7906 = vunpack.c.l.b16 %v7616
    %v7907 = vunpack.c.l.b16 %v7617
    %v7908 = vunpack.c.h.b16 %v7617
    %v7909 = vunpack.c.l.b16 %v7618
    %v7910 = vunpack.c.l.b16 %v7619
    %v7911 = vunpack.c.h.b16 %v7619
    %v7912 = vunpack.c.l.b16 %v7620
    %v7913 = vunpack.c.l.b16 %v7621
    %v7914 = vunpack.c.h.b16 %v7621
    %v7915 = vunpack.c.l.b16 %v7622
    %v7916 = vunpack.c.l.b16 %v7623
    %v7917 = vunpack.c.h.b16 %v7623
    %v7918 = vunpack.c.l.b16 %v7624
    %v7919 = vunpack.c.l.b16 %v7625
    %v7920 = vunpack.c.h.b16 %v7625
    %v7921 = vunpack.c.l.b16 %v7626
    %v7922 = vunpack.c.l.b16 %v7627
    %v7923 = vunpack.c.h.b16 %v7627
    %v7924 = vunpack.c.l.b16 %v7628
    %v7925 = vunpack.c.l.b16 %v7629
    %v7926 = vunpack.c.h.b16 %v7629
    %v7927 = vunpack.c.l.b16 %v7630
    %v7928 = vunpack.c.l.b16 %v7631
    %v7929 = vunpack.c.h.b16 %v7631
    %v7930 = vunpack.c.l.b16 %v7632
    %v7931 = vunpack.c.l.b16 %v7633
    %v7932 = vunpack.c.h.b16 %v7633
    %v7933 = vunpack.c.l.b16 %v7634
    %v7934 = vunpack.c.l.b16 %v7635
    %v7935 = vunpack.c.h.b16 %v7635
    %v7936 = vunpack.c.l.b16 %v7636
    %v7937 = vunpack.c.l.b16 %v7637
    %v7938 = vunpack.c.h.b16 %v7637
    %v7939 = vunpack.c.l.b16 %v7638
    %v7940 = vunpack.c.l.b16 %v7639
    %v7941 = vunpack.c.h.b16 %v7639
    %v7942 = vunpack.c.l.b16 %v7640
    %v7943 = vunpack.c.l.b16 %v7641
    %v7944 = vunpack.c.h.b16 %v7641
    %v7945 = vunpack.c.l.b16 %v7642
    %v7946 = vunpack.c.l.b16 %v7643
    %v7947 = vunpack.c.h.b16 %v7643
    %v7948 = vunpack.c.l.b16 %v7644
    %v7949 = vunpack.c.l.b16 %v7645
    %v7950 = vunpack.c.h.b16 %v7645
    %v7951 = vunpack.c.l.b16 %v7646
    %v7952 = vunpack.c.l.b16 %v7647
    %v7953 = vunpack.c.h.b16 %v7647
    %v7954 = vunpack.c.l.b16 %v7648
    %v7955 = vunpack.c.l.b16 %v7649
    %v7956 = vunpack.c.h.b16 %v7649
    %v7957 = vunpack.c.l.b16 %v7650
    %v7958 = vunpack.c.l.b16 %v7651
    %v7959 = vunpack.c.h.b16 %v7651
    %v7960 = vunpack.c.l.b16 %v7652
    %v7961 = vunpack.c.l.b16 %v7653
    %v7962 = vunpack.c.h.b16 %v7653
    %v7963 = vunpack.c.l.b16 %v7654
    %v7964 = vunpack.c.l.b16 %v7655
    %v7965 = vunpack.c.h.b16 %v7655
    %v7966 = vunpack.c.l.b16 %v7656
    %v7967 = vunpack.c.l.b16 %v7657
    %v7968 = vunpack.c.h.b16 %v7657
    %v7969 = vunpack.c.l.b16 %v7658
    %v7970 = vunpack.c.l.b16 %v7659
    %v7971 = vunpack.c.h.b16 %v7659
    %v7972 = vunpack.c.l.b16 %v7660
    %v7973 = vunpack.c.l.b16 %v7661
    %v7974 = vunpack.c.h.b16 %v7661
    %v7975 = vunpack.c.l.b16 %v7662
    %v7976 = vunpack.c.l.b16 %v7663
    %v7977 = vunpack.c.h.b16 %v7663
    %v7978 = vunpack.c.l.b16 %v7664
    %v7979 = vunpack.c.l.b16 %v7665
    %v7980 = vunpack.c.h.b16 %v7665
    %v7981 = vunpack.c.l.b16 %v7666
    %v7982 = vunpack.c.l.b16 %v7667
    %v7983 = vunpack.c.h.b16 %v7667
    %v7984 = vunpack.c.l.b16 %v7668
    %v7985 = vunpack.c.l.b16 %v7669
    %v7986 = vunpack.c.h.b16 %v7669
    %v7987 = vunpack.c.l.b16 %v7670
    %v7988 = vunpack.c.l.b16 %v7671
    %v7989 = vunpack.c.h.b16 %v7671
    %v7990 = vunpack.c.l.b16 %v7672
    %v7991 = vunpack.c.l.b16 %v7673
    %v7992 = vunpack.c.h.b16 %v7673
    %v7993 = vunpack.c.l.b16 %v7674
    %v7994 = vunpack.c.l.b16 %v7675
    %v7995 = vunpack.c.h.b16 %v7675
    %v7996 = vunpack.c.l.b16 %v7676
    %v7997 = vpack.c.b16 %v7808, %v7805
    %v7998 = vpack.c.b16 %v7809, %v7806
    %v7999 = vpack.c.b16 %v7810, %v7807
    %v8000 = vpack.c.b16 %v7814, %v7811
    %v8001 = vpack.c.b16 %v7815, %v7812
    %v8002 = vpack.c.b16 %v7816, %v7813
    %v8003 = vpack.c.b16 %v7820, %v7817
    %v8004 = vpack.c.b16 %v7821, %v7818
    %v8005 = vpack.c.b16 %v7822, %v7819
    %v8006 = vpack.c.b16 %v7826, %v7823
    %v8007 = vpack.c.b16 %v7827, %v7824
    %v8008 = vpack.c.b16 %v7828, %v7825
    %v8009 = vpack.c.b16 %v7832, %v7829
    %v8010 = vpack.c.b16 %v7833, %v7830
    %v8011 = vpack.c.b16 %v7834, %v7831
    %v8012 = vpack.c.b16 %v7838, %v7835
    %v8013 = vpack.c.b16 %v7839, %v7836
    %v8014 = vpack.c.b16 %v7840, %v7837
    %v8015 = vpack.c.b16 %v7844, %v7841
    %v8016 = vpack.c.b16 %v7845, %v7842
    %v8017 = vpack.c.b16 %v7846, %v7843
    %v8018 = vpack.c.b16 %v7850, %v7847
    %v8019 = vpack.c.b16 %v7851, %v7848
    %v8020 = vpack.c.b16 %v7852, %v7849
    %v8021 = vpack.c.b16 %v7856, %v7853
    %v8022 = vpack.c.b16 %v7857, %v7854
    %v8023 = vpack.c.b16 %v7858, %v7855
    %v8024 = vpack.c.b16 %v7862, %v7859
    %v8025 = vpack.c.b16 %v7863, %v7860
    %v8026 = vpack.c.b16 %v7864, %v7861
    %v8027 = vpack.c.b16 %v7868, %v7865
    %v8028 = vpack.c.b16 %v7869, %v7866
    %v8029 = vpack.c.b16 %v7870, %v7867
    %v8030 = vpack.c.b16 %v7874, %v7871
    %v8031 = vpack.c.b16 %v7875, %v7872
    %v8032 = vpack.c.b16 %v7876, %v7873
    %v8033 = vpack.c.b16 %v7880, %v7877
    %v8034 = vpack.c.b16 %v7881, %v7878
    %v8035 = vpack.c.b16 %v7882, %v7879
    %v8036 = vpack.c.b16 %v7886, %v7883
    %v8037 = vpack.c.b16 %v7887, %v7884
    %v8038 = vpack.c.b16 %v7888, %v7885
    %v8039 = vpack.c.b16 %v7892, %v7889
    %v8040 = vpack.c.b16 %v7893, %v7890
    %v8041 = vpack.c.b16 %v7894, %v7891
    %v8042 = vpack.c.b16 %v7898, %v7895
    %v8043 = vpack.c.b16 %v7899, %v7896
    %v8044 = vpack.c.b16 %v7900, %v7897
    %v8045 = vpack.c.b16 %v7904, %v7901
    %v8046 = vpack.c.b16 %v7905, %v7902
    %v8047 = vpack.c.b16 %v7906, %v7903
    %v8048 = vpack.c.b16 %v7910, %v7907
    %v8049 = vpack.c.b16 %v7911, %v7908
    %v8050 = vpack.c.b16 %v7912, %v7909
    %v8051 = vpack.c.b16 %v7916, %v7913
    %v8052 = vpack.c.b16 %v7917, %v7914
    %v8053 = vpack.c.b16 %v7918, %v7915
    %v8054 = vpack.c.b16 %v7922, %v7919
    %v8055 = vpack.c.b16 %v7923, %v7920
    %v8056 = vpack.c.b16 %v7924, %v7921
    %v8057 = vpack.c.b16 %v7928, %v7925
    %v8058 = vpack.c.b16 %v7929, %v7926
    %v8059 = vpack.c.b16 %v7930, %v7927
    %v8060 = vpack.c.b16 %v7934, %v7931
    %v8061 = vpack.c.b16 %v7935, %v7932
    %v8062 = vpack.c.b16 %v7936, %v7933
    %v8063 = vpack.c.b16 %v7940, %v7937
    %v8064 = vpack.c.b16 %v7941, %v7938
    %v8065 = vpack.c.b16 %v7942, %v7939
    %v8066 = vpack.c.b16 %v7946, %v7943
    %v8067 = vpack.c.b16 %v7947, %v7944
    %v8068 = vpack.c.b16 %v7948, %v7945
    %v8069 = vpack.c.b16 %v7952, %v7949
    %v8070 = vpack.c.b16 %v7953, %v7950
    %v8071 = vpack.c.b16 %v7954, %v7951
    %v8072 = vpack.c.b16 %v7958, %v7955
    %v8073 = vpack.c.b16 %v7959, %v7956
    %v8074 = vpack.c.b16 %v7960, %v7957
    %v8075 = vpack.c.b16 %v7964, %v7961
    %v8076 = vpack.c.b16 %v7965, %v7962
    %v8077 = vpack.c.b16 %v7966, %v7963
    %v8078 = vpack.c.b16 %v7970, %v7967
    %v8079 = vpack.c.b16 %v7971, %v7968
    %v8080 = vpack.c.b16 %v7972, %v7969
    %v8081 = vpack.c.b16 %v7976, %v7973
    %v8082 = vpack.c.b16 %v7977, %v7974
    %v8083 = vpack.c.b16 %v7978, %v7975
    %v8084 = vpack.c.b16 %v7982, %v7979
    %v8085 = vpack.c.b16 %v7983, %v7980
    %v8086 = vpack.c.b16 %v7984, %v7981
    %v8087 = vpack.c.b16 %v7988, %v7985
    %v8088 = vpack.c.b16 %v7989, %v7986
    %v8089 = vpack.c.b16 %v7990, %v7987
    %v8090 = vpack.c.b16 %v7994, %v7991
    %v8091 = vpack.c.b16 %v7995, %v7992
    %v8092 = vpack.c.b16 %v7996, %v7993
    %8189 = vmatpush.bf16.msra.mxu0 %v8018
    %8190 = vmatpush.bf16.msra.mxu0 %v8015
    %8191 = vmatpush.bf16.msra.mxu0 %v8012
    %8192 = vmatpush.bf16.msra.mxu0 %v8009
    %8193 = vmatpush.bf16.msra.mxu0 %v8006
    %8194 = vmatpush.bf16.msra.mxu0 %v8003
    %8195 = vmatpush.bf16.msra.mxu0 %v8000
    %8196 = vmatpush.bf16.msra.mxu0 %v7997
    %8197 = vmatmul.bf16.gmra.mxu0 %v7545
    %v8198 = vpop.f32.mrf.mxu0
    %v8199 = vadd.f32 0.0, %v8198
    %v8200 = vpop.f32.mrf.mxu0
    %v8201 = vadd.f32 0.0, %v8200
    %8202 = vdwg.mxu0
    %8203 = vmatpush.bf16.msra.mxu0 %v8042
    %8204 = vmatpush.bf16.msra.mxu0 %v8039
    %8205 = vmatpush.bf16.msra.mxu0 %v8036
    %8206 = vmatpush.bf16.msra.mxu0 %v8033
    %8207 = vmatpush.bf16.msra.mxu0 %v8030
    %8208 = vmatpush.bf16.msra.mxu0 %v8027
    %8209 = vmatpush.bf16.msra.mxu0 %v8024
    %8210 = vmatpush.bf16.msra.mxu0 %v8021
    %8211 = vmatmul.bf16.gmra.mxu0 %v7546
    %v8212 = vpop.f32.mrf.mxu0
    %v8213 = vadd.f32 %v8199, %v8212
    %v8214 = vpop.f32.mrf.mxu0
    %v8215 = vadd.f32 %v8201, %v8214
    %8216 = vdwg.mxu0
    %8217 = vmatpush.bf16.msra.mxu0 %v8066
    %8218 = vmatpush.bf16.msra.mxu0 %v8063
    %8219 = vmatpush.bf16.msra.mxu0 %v8060
    %8220 = vmatpush.bf16.msra.mxu0 %v8057
    %8221 = vmatpush.bf16.msra.mxu0 %v8054
    %8222 = vmatpush.bf16.msra.mxu0 %v8051
    %8223 = vmatpush.bf16.msra.mxu0 %v8048
    %8224 = vmatpush.bf16.msra.mxu0 %v8045
    %8225 = vmatmul.bf16.gmra.mxu0 %v7547
    %v8226 = vpop.f32.mrf.mxu0
    %v8227 = vadd.f32 %v8213, %v8226
    %v8228 = vpop.f32.mrf.mxu0
    %v8229 = vadd.f32 %v8215, %v8228
    %8230 = vdwg.mxu0
    %8231 = vmatpush.bf16.msra.mxu0 %v8090
    %8232 = vmatpush.bf16.msra.mxu0 %v8087
    %8233 = vmatpush.bf16.msra.mxu0 %v8084
    %8234 = vmatpush.bf16.msra.mxu0 %v8081
    %8235 = vmatpush.bf16.msra.mxu0 %v8078
    %8236 = vmatpush.bf16.msra.mxu0 %v8075
    %8237 = vmatpush.bf16.msra.mxu0 %v8072
    %8238 = vmatpush.bf16.msra.mxu0 %v8069
    %8239 = vmatmul.bf16.gmra.mxu0 %v7548
    %v8240 = vpop.f32.mrf.mxu0
    %v8241 = vadd.f32 %v8227, %v8240
    %v8242 = vpop.f32.mrf.mxu0
    %v8243 = vadd.f32 %v8229, %v8242
    %8244 = vdwg.mxu0
    %8245 = vmatpush.bf16.msra.mxu0 %v8019
    %8246 = vmatpush.bf16.msra.mxu0 %v8016
    %8247 = vmatpush.bf16.msra.mxu0 %v8013
    %8248 = vmatpush.bf16.msra.mxu0 %v8010
    %8249 = vmatpush.bf16.msra.mxu0 %v8007
    %8250 = vmatpush.bf16.msra.mxu0 %v8004
    %8251 = vmatpush.bf16.msra.mxu0 %v8001
    %8252 = vmatpush.bf16.msra.mxu0 %v7998
    %8253 = vmatmul.bf16.gmra.mxu0 %v7545
    %v8254 = vpop.f32.mrf.mxu0
    %v8255 = vadd.f32 0.0, %v8254
    %v8256 = vpop.f32.mrf.mxu0
    %v8257 = vadd.f32 0.0, %v8256
    %8258 = vdwg.mxu0
    %8259 = vmatpush.bf16.msra.mxu0 %v8043
    %8260 = vmatpush.bf16.msra.mxu0 %v8040
    %8261 = vmatpush.bf16.msra.mxu0 %v8037
    %8262 = vmatpush.bf16.msra.mxu0 %v8034
    %8263 = vmatpush.bf16.msra.mxu0 %v8031
    %8264 = vmatpush.bf16.msra.mxu0 %v8028
    %8265 = vmatpush.bf16.msra.mxu0 %v8025
    %8266 = vmatpush.bf16.msra.mxu0 %v8022
    %8267 = vmatmul.bf16.gmra.mxu0 %v7546
    %v8268 = vpop.f32.mrf.mxu0
    %v8269 = vadd.f32 %v8255, %v8268
    %v8270 = vpop.f32.mrf.mxu0
    %v8271 = vadd.f32 %v8257, %v8270
    %8272 = vdwg.mxu0
    %8273 = vmatpush.bf16.msra.mxu0 %v8067
    %8274 = vmatpush.bf16.msra.mxu0 %v8064
    %8275 = vmatpush.bf16.msra.mxu0 %v8061
    %8276 = vmatpush.bf16.msra.mxu0 %v8058
    %8277 = vmatpush.bf16.msra.mxu0 %v8055
    %8278 = vmatpush.bf16.msra.mxu0 %v8052
    %8279 = vmatpush.bf16.msra.mxu0 %v8049
    %8280 = vmatpush.bf16.msra.mxu0 %v8046
    %8281 = vmatmul.bf16.gmra.mxu0 %v7547
    %v8282 = vpop.f32.mrf.mxu0
    %v8283 = vadd.f32 %v8269, %v8282
    %v8284 = vpop.f32.mrf.mxu0
    %v8285 = vadd.f32 %v8271, %v8284
    %8286 = vdwg.mxu0
    %8287 = vmatpush.bf16.msra.mxu0 %v8091
    %8288 = vmatpush.bf16.msra.mxu0 %v8088
    %8289 = vmatpush.bf16.msra.mxu0 %v8085
    %8290 = vmatpush.bf16.msra.mxu0 %v8082
    %8291 = vmatpush.bf16.msra.mxu0 %v8079
    %8292 = vmatpush.bf16.msra.mxu0 %v8076
    %8293 = vmatpush.bf16.msra.mxu0 %v8073
    %8294 = vmatpush.bf16.msra.mxu0 %v8070
    %8295 = vmatmul.bf16.gmra.mxu0 %v7548
    %v8296 = vpop.f32.mrf.mxu0
    %v8297 = vadd.f32 %v8283, %v8296
    %v8298 = vpop.f32.mrf.mxu0
    %v8299 = vadd.f32 %v8285, %v8298
    %8300 = vdwg.mxu0
    %8301 = vmatpush.bf16.msra.mxu0 %v8020
    %8302 = vmatpush.bf16.msra.mxu0 %v8017
    %8303 = vmatpush.bf16.msra.mxu0 %v8014
    %8304 = vmatpush.bf16.msra.mxu0 %v8011
    %8305 = vmatpush.bf16.msra.mxu0 %v8008
    %8306 = vmatpush.bf16.msra.mxu0 %v8005
    %8307 = vmatpush.bf16.msra.mxu0 %v8002
    %8308 = vmatpush.bf16.msra.mxu0 %v7999
    %8309 = vmatmul.bf16.gmra.mxu0 %v7545
    %v8310 = vpop.f32.mrf.mxu0
    %v8311 = vadd.f32 0.0, %v8310
    %v8312 = vpop.f32.mrf.mxu0
    %v8313 = vadd.f32 0.0, %v8312
    %8314 = vdwg.mxu0
    %8315 = vmatpush.bf16.msra.mxu0 %v8044
    %8316 = vmatpush.bf16.msra.mxu0 %v8041
    %8317 = vmatpush.bf16.msra.mxu0 %v8038
    %8318 = vmatpush.bf16.msra.mxu0 %v8035
    %8319 = vmatpush.bf16.msra.mxu0 %v8032
    %8320 = vmatpush.bf16.msra.mxu0 %v8029
    %8321 = vmatpush.bf16.msra.mxu0 %v8026
    %8322 = vmatpush.bf16.msra.mxu0 %v8023
    %8323 = vmatmul.bf16.gmra.mxu0 %v7546
    %v8324 = vpop.f32.mrf.mxu0
    %v8325 = vadd.f32 %v8311, %v8324
    %v8326 = vpop.f32.mrf.mxu0
    %v8327 = vadd.f32 %v8313, %v8326
    %8328 = vdwg.mxu0
    %8329 = vmatpush.bf16.msra.mxu0 %v8068
    %8330 = vmatpush.bf16.msra.mxu0 %v8065
    %8331 = vmatpush.bf16.msra.mxu0 %v8062
    %8332 = vmatpush.bf16.msra.mxu0 %v8059
    %8333 = vmatpush.bf16.msra.mxu0 %v8056
    %8334 = vmatpush.bf16.msra.mxu0 %v8053
    %8335 = vmatpush.bf16.msra.mxu0 %v8050
    %8336 = vmatpush.bf16.msra.mxu0 %v8047
    %8337 = vmatmul.bf16.gmra.mxu0 %v7547
    %v8338 = vpop.f32.mrf.mxu0
    %v8339 = vadd.f32 %v8325, %v8338
    %v8340 = vpop.f32.mrf.mxu0
    %v8341 = vadd.f32 %v8327, %v8340
    %8342 = vdwg.mxu0
    %8343 = vmatpush.bf16.msra.mxu0 %v8092
    %8344 = vmatpush.bf16.msra.mxu0 %v8089
    %8345 = vmatpush.bf16.msra.mxu0 %v8086
    %8346 = vmatpush.bf16.msra.mxu0 %v8083
    %8347 = vmatpush.bf16.msra.mxu0 %v8080
    %8348 = vmatpush.bf16.msra.mxu0 %v8077
    %8349 = vmatpush.bf16.msra.mxu0 %v8074
    %8350 = vmatpush.bf16.msra.mxu0 %v8071
    %8351 = vmatmul.bf16.gmra.mxu0 %v7548
    %v8352 = vpop.f32.mrf.mxu0
    %v8353 = vadd.f32 %v8339, %v8352
    %v8354 = vpop.f32.mrf.mxu0
    %v8355 = vadd.f32 %v8341, %v8354
    %8356 = vdwg.mxu0
    %v8357 = vpack.c.bf16 %v1208, %v1208
    %v8358 = vpack.c.bf16 %v1209, %v1209
    %v8359 = vpack.c.bf16 %v1210, %v1210
    %v8360 = vpack.c.bf16 %v1211, %v1211
    %v8361 = vpack.c.bf16 %v1212, %v1212
    %v8362 = vpack.c.bf16 %v1213, %v1213
    %v8363 = vpack.c.bf16 %v1214, %v1214
    %v8364 = vpack.c.bf16 %v1215, %v1215
    %v8365 = vpack.c.bf16 %v1216, %v1216
    %v8366 = vpack.c.bf16 %v1217, %v1217
    %v8367 = vpack.c.bf16 %v1218, %v1218
    %v8368 = vpack.c.bf16 %v1219, %v1219
    %v8369 = vpack.c.bf16 %v1220, %v1220
    %v8370 = vpack.c.bf16 %v1221, %v1221
    %v8371 = vpack.c.bf16 %v1222, %v1222
    %v8372 = vpack.c.bf16 %v1223, %v1223
    %v8373 = vpack.c.bf16 %v1224, %v1224
    %v8374 = vpack.c.bf16 %v1225, %v1225
    %v8375 = vpack.c.bf16 %v1226, %v1226
    %v8376 = vpack.c.bf16 %v1227, %v1227
    %v8377 = vpack.c.bf16 %v1228, %v1228
    %v8378 = vpack.c.bf16 %v1229, %v1229
    %v8379 = vpack.c.bf16 %v1230, %v1230
    %v8380 = vpack.c.bf16 %v1231, %v1231
    %v8381 = vpack.c.bf16 %v1232, %v1232
    %v8382 = vpack.c.bf16 %v1233, %v1233
    %v8383 = vpack.c.bf16 %v1234, %v1234
    %v8384 = vpack.c.bf16 %v1235, %v1235
    %v8385 = vpack.c.bf16 %v1236, %v1236
    %v8386 = vpack.c.bf16 %v1237, %v1237
    %v8387 = vpack.c.bf16 %v1238, %v1238
    %v8388 = vpack.c.bf16 %v1239, %v1239
    %v8389 = vld [vmem:[%s5] sm:$0xff]
    %v8390 = vld [vmem:[%s5 + $0x8] sm:$0xff]
    %v8391 = vld [vmem:[%s5 + $0x10] sm:$0xff]
    %v8392 = vld [vmem:[%s5 + $0x18] sm:$0xff]
    %v8393 = vld [vmem:[%s5 + $0x20] sm:$0xff]
    %v8394 = vld [vmem:[%s5 + $0x28] sm:$0xff]
    %v8395 = vld [vmem:[%s5 + $0x30] sm:$0xff]
    %v8396 = vld [vmem:[%s5 + $0x38] sm:$0xff]
    %v8397 = vld [vmem:[%s5 + $0x40] sm:$0xff]
    %v8398 = vld [vmem:[%s5 + $0x48] sm:$0xff]
    %v8399 = vld [vmem:[%s5 + $0x50] sm:$0xff]
    %v8400 = vld [vmem:[%s5 + $0x58] sm:$0xff]
    %v8401 = vld [vmem:[%s5 + $0x60] sm:$0xff]
    %v8402 = vld [vmem:[%s5 + $0x68] sm:$0xff]
    %v8403 = vld [vmem:[%s5 + $0x70] sm:$0xff]
    %v8404 = vld [vmem:[%s5 + $0x78] sm:$0xff]
    %v8405 = vld [vmem:[%s5 + $0x80] sm:$0xff]
    %v8406 = vld [vmem:[%s5 + $0x88] sm:$0xff]
    %v8407 = vld [vmem:[%s5 + $0x90] sm:$0xff]
    %v8408 = vld [vmem:[%s5 + $0x98] sm:$0xff]
    %v8409 = vld [vmem:[%s5 + $0xa0] sm:$0xff]
    %v8410 = vld [vmem:[%s5 + $0xa8] sm:$0xff]
    %v8411 = vld [vmem:[%s5 + $0xb0] sm:$0xff]
    %v8412 = vld [vmem:[%s5 + $0xb8] sm:$0xff]
    %v8413 = vld [vmem:[%s5 + $0xc0] sm:$0xff]
    %v8414 = vld [vmem:[%s5 + $0xc8] sm:$0xff]
    %v8415 = vld [vmem:[%s5 + $0xd0] sm:$0xff]
    %v8416 = vld [vmem:[%s5 + $0xd8] sm:$0xff]
    %v8417 = vld [vmem:[%s5 + $0xe0] sm:$0xff]
    %v8418 = vld [vmem:[%s5 + $0xe8] sm:$0xff]
    %v8419 = vld [vmem:[%s5 + $0xf0] sm:$0xff]
    %v8420 = vld [vmem:[%s5 + $0xf8] sm:$0xff]
    %v8421 = vld [vmem:[%s5 + $0x100] sm:$0xff]
    %v8422 = vld [vmem:[%s5 + $0x108] sm:$0xff]
    %v8423 = vld [vmem:[%s5 + $0x110] sm:$0xff]
    %v8424 = vld [vmem:[%s5 + $0x118] sm:$0xff]
    %v8425 = vld [vmem:[%s5 + $0x120] sm:$0xff]
    %v8426 = vld [vmem:[%s5 + $0x128] sm:$0xff]
    %v8427 = vld [vmem:[%s5 + $0x130] sm:$0xff]
    %v8428 = vld [vmem:[%s5 + $0x138] sm:$0xff]
    %v8429 = vld [vmem:[%s5 + $0x140] sm:$0xff]
    %v8430 = vld [vmem:[%s5 + $0x148] sm:$0xff]
    %v8431 = vld [vmem:[%s5 + $0x150] sm:$0xff]
    %v8432 = vld [vmem:[%s5 + $0x158] sm:$0xff]
    %v8433 = vld [vmem:[%s5 + $0x160] sm:$0xff]
    %v8434 = vld [vmem:[%s5 + $0x168] sm:$0xff]
    %v8435 = vld [vmem:[%s5 + $0x170] sm:$0xff]
    %v8436 = vld [vmem:[%s5 + $0x178] sm:$0xff]
    %v8437 = vld [vmem:[%s5 + $0x180] sm:$0xff]
    %v8438 = vld [vmem:[%s5 + $0x188] sm:$0xff]
    %v8439 = vld [vmem:[%s5 + $0x190] sm:$0xff]
    %v8440 = vld [vmem:[%s5 + $0x198] sm:$0xff]
    %v8441 = vld [vmem:[%s5 + $0x1a0] sm:$0xff]
    %v8442 = vld [vmem:[%s5 + $0x1a8] sm:$0xff]
    %v8443 = vld [vmem:[%s5 + $0x1b0] sm:$0xff]
    %v8444 = vld [vmem:[%s5 + $0x1b8] sm:$0xff]
    %v8445 = vld [vmem:[%s5 + $0x1c0] sm:$0xff]
    %v8446 = vld [vmem:[%s5 + $0x1c8] sm:$0xff]
    %v8447 = vld [vmem:[%s5 + $0x1d0] sm:$0xff]
    %v8448 = vld [vmem:[%s5 + $0x1d8] sm:$0xff]
    %v8449 = vld [vmem:[%s5 + $0x1e0] sm:$0xff]
    %v8450 = vld [vmem:[%s5 + $0x1e8] sm:$0xff]
    %v8451 = vld [vmem:[%s5 + $0x1f0] sm:$0xff]
    %v8452 = vld [vmem:[%s5 + $0x1f8] sm:$0xff]
    %v8485 = vunpack.c.l.b16 %v8357
    %v8486 = vunpack.c.l.b16 %v8358
    %v8487 = vunpack.c.l.b16 %v8359
    %v8488 = vunpack.c.l.b16 %v8360
    %v8489 = vunpack.c.l.b16 %v8361
    %v8490 = vunpack.c.l.b16 %v8362
    %v8491 = vunpack.c.l.b16 %v8363
    %v8492 = vunpack.c.l.b16 %v8364
    %v8493 = vunpack.c.l.b16 %v8365
    %v8494 = vunpack.c.l.b16 %v8366
    %v8495 = vunpack.c.l.b16 %v8367
    %v8496 = vunpack.c.l.b16 %v8368
    %v8497 = vunpack.c.l.b16 %v8369
    %v8498 = vunpack.c.l.b16 %v8370
    %v8499 = vunpack.c.l.b16 %v8371
    %v8500 = vunpack.c.l.b16 %v8372
    %v8501 = vunpack.c.l.b16 %v8373
    %v8502 = vunpack.c.l.b16 %v8374
    %v8503 = vunpack.c.l.b16 %v8375
    %v8504 = vunpack.c.l.b16 %v8376
    %v8505 = vunpack.c.l.b16 %v8377
    %v8506 = vunpack.c.l.b16 %v8378
    %v8507 = vunpack.c.l.b16 %v8379
    %v8508 = vunpack.c.l.b16 %v8380
    %v8509 = vunpack.c.l.b16 %v8381
    %v8510 = vunpack.c.l.b16 %v8382
    %v8511 = vunpack.c.l.b16 %v8383
    %v8512 = vunpack.c.l.b16 %v8384
    %v8513 = vunpack.c.l.b16 %v8385
    %v8514 = vunpack.c.l.b16 %v8386
    %v8515 = vunpack.c.l.b16 %v8387
    %v8516 = vunpack.c.l.b16 %v8388
    %v8517 = vsel %vm1272, %v8489, %v8485
    %v8518 = vsel %vm1274, %v8493, %v8517
    %v8519 = vsel %vm1276, %v8497, %v8518
    %v8520 = vsel %vm1278, %v8501, %v8519
    %v8521 = vsel %vm1280, %v8505, %v8520
    %v8522 = vsel %vm1282, %v8509, %v8521
    %v8523 = vsel %vm1284, %v8513, %v8522
    %v8524 = vsel %vm1272, %v8490, %v8486
    %v8525 = vsel %vm1274, %v8494, %v8524
    %v8526 = vsel %vm1276, %v8498, %v8525
    %v8527 = vsel %vm1278, %v8502, %v8526
    %v8528 = vsel %vm1280, %v8506, %v8527
    %v8529 = vsel %vm1282, %v8510, %v8528
    %v8530 = vsel %vm1284, %v8514, %v8529
    %v8531 = vsel %vm1272, %v8491, %v8487
    %v8532 = vsel %vm1274, %v8495, %v8531
    %v8533 = vsel %vm1276, %v8499, %v8532
    %v8534 = vsel %vm1278, %v8503, %v8533
    %v8535 = vsel %vm1280, %v8507, %v8534
    %v8536 = vsel %vm1282, %v8511, %v8535
    %v8537 = vsel %vm1284, %v8515, %v8536
    %v8538 = vsel %vm1272, %v8492, %v8488
    %v8539 = vsel %vm1274, %v8496, %v8538
    %v8540 = vsel %vm1276, %v8500, %v8539
    %v8541 = vsel %vm1278, %v8504, %v8540
    %v8542 = vsel %vm1280, %v8508, %v8541
    %v8543 = vsel %vm1282, %v8512, %v8542
    %v8544 = vsel %vm1284, %v8516, %v8543
    %v8545 = vpack.c.b16 %v8523, %v8523
    %v8546 = vpack.c.b16 %v8530, %v8530
    %v8547 = vpack.c.b16 %v8537, %v8537
    %v8548 = vpack.c.b16 %v8544, %v8544
    %v8617 = vunpack.c.l.b16 %v8389
    %v8618 = vunpack.c.h.b16 %v8389
    %v8619 = vunpack.c.l.b16 %v8390
    %v8620 = vunpack.c.h.b16 %v8390
    %v8621 = vunpack.c.l.b16 %v8391
    %v8622 = vunpack.c.h.b16 %v8391
    %v8623 = vunpack.c.l.b16 %v8392
    %v8624 = vunpack.c.h.b16 %v8392
    %v8625 = vunpack.c.l.b16 %v8393
    %v8626 = vunpack.c.h.b16 %v8393
    %v8627 = vunpack.c.l.b16 %v8394
    %v8628 = vunpack.c.h.b16 %v8394
    %v8629 = vunpack.c.l.b16 %v8395
    %v8630 = vunpack.c.h.b16 %v8395
    %v8631 = vunpack.c.l.b16 %v8396
    %v8632 = vunpack.c.h.b16 %v8396
    %v8633 = vunpack.c.l.b16 %v8397
    %v8634 = vunpack.c.h.b16 %v8397
    %v8635 = vunpack.c.l.b16 %v8398
    %v8636 = vunpack.c.h.b16 %v8398
    %v8637 = vunpack.c.l.b16 %v8399
    %v8638 = vunpack.c.h.b16 %v8399
    %v8639 = vunpack.c.l.b16 %v8400
    %v8640 = vunpack.c.h.b16 %v8400
    %v8641 = vunpack.c.l.b16 %v8401
    %v8642 = vunpack.c.h.b16 %v8401
    %v8643 = vunpack.c.l.b16 %v8402
    %v8644 = vunpack.c.h.b16 %v8402
    %v8645 = vunpack.c.l.b16 %v8403
    %v8646 = vunpack.c.h.b16 %v8403
    %v8647 = vunpack.c.l.b16 %v8404
    %v8648 = vunpack.c.h.b16 %v8404
    %v8649 = vunpack.c.l.b16 %v8405
    %v8650 = vunpack.c.h.b16 %v8405
    %v8651 = vunpack.c.l.b16 %v8406
    %v8652 = vunpack.c.h.b16 %v8406
    %v8653 = vunpack.c.l.b16 %v8407
    %v8654 = vunpack.c.h.b16 %v8407
    %v8655 = vunpack.c.l.b16 %v8408
    %v8656 = vunpack.c.h.b16 %v8408
    %v8657 = vunpack.c.l.b16 %v8409
    %v8658 = vunpack.c.h.b16 %v8409
    %v8659 = vunpack.c.l.b16 %v8410
    %v8660 = vunpack.c.h.b16 %v8410
    %v8661 = vunpack.c.l.b16 %v8411
    %v8662 = vunpack.c.h.b16 %v8411
    %v8663 = vunpack.c.l.b16 %v8412
    %v8664 = vunpack.c.h.b16 %v8412
    %v8665 = vunpack.c.l.b16 %v8413
    %v8666 = vunpack.c.h.b16 %v8413
    %v8667 = vunpack.c.l.b16 %v8414
    %v8668 = vunpack.c.h.b16 %v8414
    %v8669 = vunpack.c.l.b16 %v8415
    %v8670 = vunpack.c.h.b16 %v8415
    %v8671 = vunpack.c.l.b16 %v8416
    %v8672 = vunpack.c.h.b16 %v8416
    %v8673 = vunpack.c.l.b16 %v8417
    %v8674 = vunpack.c.h.b16 %v8417
    %v8675 = vunpack.c.l.b16 %v8418
    %v8676 = vunpack.c.h.b16 %v8418
    %v8677 = vunpack.c.l.b16 %v8419
    %v8678 = vunpack.c.h.b16 %v8419
    %v8679 = vunpack.c.l.b16 %v8420
    %v8680 = vunpack.c.h.b16 %v8420
    %v8681 = vunpack.c.l.b16 %v8421
    %v8682 = vunpack.c.h.b16 %v8421
    %v8683 = vunpack.c.l.b16 %v8422
    %v8684 = vunpack.c.h.b16 %v8422
    %v8685 = vunpack.c.l.b16 %v8423
    %v8686 = vunpack.c.h.b16 %v8423
    %v8687 = vunpack.c.l.b16 %v8424
    %v8688 = vunpack.c.h.b16 %v8424
    %v8689 = vunpack.c.l.b16 %v8425
    %v8690 = vunpack.c.h.b16 %v8425
    %v8691 = vunpack.c.l.b16 %v8426
    %v8692 = vunpack.c.h.b16 %v8426
    %v8693 = vunpack.c.l.b16 %v8427
    %v8694 = vunpack.c.h.b16 %v8427
    %v8695 = vunpack.c.l.b16 %v8428
    %v8696 = vunpack.c.h.b16 %v8428
    %v8697 = vunpack.c.l.b16 %v8429
    %v8698 = vunpack.c.h.b16 %v8429
    %v8699 = vunpack.c.l.b16 %v8430
    %v8700 = vunpack.c.h.b16 %v8430
    %v8701 = vunpack.c.l.b16 %v8431
    %v8702 = vunpack.c.h.b16 %v8431
    %v8703 = vunpack.c.l.b16 %v8432
    %v8704 = vunpack.c.h.b16 %v8432
    %v8705 = vunpack.c.l.b16 %v8433
    %v8706 = vunpack.c.h.b16 %v8433
    %v8707 = vunpack.c.l.b16 %v8434
    %v8708 = vunpack.c.h.b16 %v8434
    %v8709 = vunpack.c.l.b16 %v8435
    %v8710 = vunpack.c.h.b16 %v8435
    %v8711 = vunpack.c.l.b16 %v8436
    %v8712 = vunpack.c.h.b16 %v8436
    %v8713 = vunpack.c.l.b16 %v8437
    %v8714 = vunpack.c.h.b16 %v8437
    %v8715 = vunpack.c.l.b16 %v8438
    %v8716 = vunpack.c.h.b16 %v8438
    %v8717 = vunpack.c.l.b16 %v8439
    %v8718 = vunpack.c.h.b16 %v8439
    %v8719 = vunpack.c.l.b16 %v8440
    %v8720 = vunpack.c.h.b16 %v8440
    %v8721 = vunpack.c.l.b16 %v8441
    %v8722 = vunpack.c.h.b16 %v8441
    %v8723 = vunpack.c.l.b16 %v8442
    %v8724 = vunpack.c.h.b16 %v8442
    %v8725 = vunpack.c.l.b16 %v8443
    %v8726 = vunpack.c.h.b16 %v8443
    %v8727 = vunpack.c.l.b16 %v8444
    %v8728 = vunpack.c.h.b16 %v8444
    %v8729 = vunpack.c.l.b16 %v8445
    %v8730 = vunpack.c.h.b16 %v8445
    %v8731 = vunpack.c.l.b16 %v8446
    %v8732 = vunpack.c.h.b16 %v8446
    %v8733 = vunpack.c.l.b16 %v8447
    %v8734 = vunpack.c.h.b16 %v8447
    %v8735 = vunpack.c.l.b16 %v8448
    %v8736 = vunpack.c.h.b16 %v8448
    %v8737 = vunpack.c.l.b16 %v8449
    %v8738 = vunpack.c.h.b16 %v8449
    %v8739 = vunpack.c.l.b16 %v8450
    %v8740 = vunpack.c.h.b16 %v8450
    %v8741 = vunpack.c.l.b16 %v8451
    %v8742 = vunpack.c.h.b16 %v8451
    %v8743 = vunpack.c.l.b16 %v8452
    %v8744 = vunpack.c.h.b16 %v8452
    %v8745 = vpack.c.b16 %v8619, %v8617
    %v8746 = vpack.c.b16 %v8620, %v8618
    %v8747 = vpack.c.b16 %v8623, %v8621
    %v8748 = vpack.c.b16 %v8624, %v8622
    %v8749 = vpack.c.b16 %v8627, %v8625
    %v8750 = vpack.c.b16 %v8628, %v8626
    %v8751 = vpack.c.b16 %v8631, %v8629
    %v8752 = vpack.c.b16 %v8632, %v8630
    %v8753 = vpack.c.b16 %v8635, %v8633
    %v8754 = vpack.c.b16 %v8636, %v8634
    %v8755 = vpack.c.b16 %v8639, %v8637
    %v8756 = vpack.c.b16 %v8640, %v8638
    %v8757 = vpack.c.b16 %v8643, %v8641
    %v8758 = vpack.c.b16 %v8644, %v8642
    %v8759 = vpack.c.b16 %v8647, %v8645
    %v8760 = vpack.c.b16 %v8648, %v8646
    %v8761 = vpack.c.b16 %v8651, %v8649
    %v8762 = vpack.c.b16 %v8652, %v8650
    %v8763 = vpack.c.b16 %v8655, %v8653
    %v8764 = vpack.c.b16 %v8656, %v8654
    %v8765 = vpack.c.b16 %v8659, %v8657
    %v8766 = vpack.c.b16 %v8660, %v8658
    %v8767 = vpack.c.b16 %v8663, %v8661
    %v8768 = vpack.c.b16 %v8664, %v8662
    %v8769 = vpack.c.b16 %v8667, %v8665
    %v8770 = vpack.c.b16 %v8668, %v8666
    %v8771 = vpack.c.b16 %v8671, %v8669
    %v8772 = vpack.c.b16 %v8672, %v8670
    %v8773 = vpack.c.b16 %v8675, %v8673
    %v8774 = vpack.c.b16 %v8676, %v8674
    %v8775 = vpack.c.b16 %v8679, %v8677
    %v8776 = vpack.c.b16 %v8680, %v8678
    %v8777 = vpack.c.b16 %v8683, %v8681
    %v8778 = vpack.c.b16 %v8684, %v8682
    %v8779 = vpack.c.b16 %v8687, %v8685
    %v8780 = vpack.c.b16 %v8688, %v8686
    %v8781 = vpack.c.b16 %v8691, %v8689
    %v8782 = vpack.c.b16 %v8692, %v8690
    %v8783 = vpack.c.b16 %v8695, %v8693
    %v8784 = vpack.c.b16 %v8696, %v8694
    %v8785 = vpack.c.b16 %v8699, %v8697
    %v8786 = vpack.c.b16 %v8700, %v8698
    %v8787 = vpack.c.b16 %v8703, %v8701
    %v8788 = vpack.c.b16 %v8704, %v8702
    %v8789 = vpack.c.b16 %v8707, %v8705
    %v8790 = vpack.c.b16 %v8708, %v8706
    %v8791 = vpack.c.b16 %v8711, %v8709
    %v8792 = vpack.c.b16 %v8712, %v8710
    %v8793 = vpack.c.b16 %v8715, %v8713
    %v8794 = vpack.c.b16 %v8716, %v8714
    %v8795 = vpack.c.b16 %v8719, %v8717
    %v8796 = vpack.c.b16 %v8720, %v8718
    %v8797 = vpack.c.b16 %v8723, %v8721
    %v8798 = vpack.c.b16 %v8724, %v8722
    %v8799 = vpack.c.b16 %v8727, %v8725
    %v8800 = vpack.c.b16 %v8728, %v8726
    %v8801 = vpack.c.b16 %v8731, %v8729
    %v8802 = vpack.c.b16 %v8732, %v8730
    %v8803 = vpack.c.b16 %v8735, %v8733
    %v8804 = vpack.c.b16 %v8736, %v8734
    %v8805 = vpack.c.b16 %v8739, %v8737
    %v8806 = vpack.c.b16 %v8740, %v8738
    %v8807 = vpack.c.b16 %v8743, %v8741
    %v8808 = vpack.c.b16 %v8744, %v8742
    %8873 = vmatpush.bf16.msra.mxu0 %v8759
    %8874 = vmatpush.bf16.msra.mxu0 %v8757
    %8875 = vmatpush.bf16.msra.mxu0 %v8755
    %8876 = vmatpush.bf16.msra.mxu0 %v8753
    %8877 = vmatpush.bf16.msra.mxu0 %v8751
    %8878 = vmatpush.bf16.msra.mxu0 %v8749
    %8879 = vmatpush.bf16.msra.mxu0 %v8747
    %8880 = vmatpush.bf16.msra.mxu0 %v8745
    %8881 = vmatmul.bf16.gmra.mxu0 %v8545
    %v8882 = vpop.f32.mrf.mxu0
    %v8883 = vadd.f32 0.0, %v8882
    %v8884 = vpop.f32.mrf.mxu0
    %8885 = vdwg.mxu0
    %8886 = vmatpush.bf16.msra.mxu0 %v8775
    %8887 = vmatpush.bf16.msra.mxu0 %v8773
    %8888 = vmatpush.bf16.msra.mxu0 %v8771
    %8889 = vmatpush.bf16.msra.mxu0 %v8769
    %8890 = vmatpush.bf16.msra.mxu0 %v8767
    %8891 = vmatpush.bf16.msra.mxu0 %v8765
    %8892 = vmatpush.bf16.msra.mxu0 %v8763
    %8893 = vmatpush.bf16.msra.mxu0 %v8761
    %8894 = vmatmul.bf16.gmra.mxu0 %v8546
    %v8895 = vpop.f32.mrf.mxu0
    %v8896 = vadd.f32 %v8883, %v8895
    %v8897 = vpop.f32.mrf.mxu0
    %8898 = vdwg.mxu0
    %8899 = vmatpush.bf16.msra.mxu0 %v8791
    %8900 = vmatpush.bf16.msra.mxu0 %v8789
    %8901 = vmatpush.bf16.msra.mxu0 %v8787
    %8902 = vmatpush.bf16.msra.mxu0 %v8785
    %8903 = vmatpush.bf16.msra.mxu0 %v8783
    %8904 = vmatpush.bf16.msra.mxu0 %v8781
    %8905 = vmatpush.bf16.msra.mxu0 %v8779
    %8906 = vmatpush.bf16.msra.mxu0 %v8777
    %8907 = vmatmul.bf16.gmra.mxu0 %v8547
    %v8908 = vpop.f32.mrf.mxu0
    %v8909 = vadd.f32 %v8896, %v8908
    %v8910 = vpop.f32.mrf.mxu0
    %8911 = vdwg.mxu0
    %8912 = vmatpush.bf16.msra.mxu0 %v8807
    %8913 = vmatpush.bf16.msra.mxu0 %v8805
    %8914 = vmatpush.bf16.msra.mxu0 %v8803
    %8915 = vmatpush.bf16.msra.mxu0 %v8801
    %8916 = vmatpush.bf16.msra.mxu0 %v8799
    %8917 = vmatpush.bf16.msra.mxu0 %v8797
    %8918 = vmatpush.bf16.msra.mxu0 %v8795
    %8919 = vmatpush.bf16.msra.mxu0 %v8793
    %8920 = vmatmul.bf16.gmra.mxu0 %v8548
    %v8921 = vpop.f32.mrf.mxu0
    %v8922 = vadd.f32 %v8909, %v8921
    %v8923 = vpop.f32.mrf.mxu0
    %8924 = vdwg.mxu0
    %8925 = vmatpush.bf16.msra.mxu0 %v8760
    %8926 = vmatpush.bf16.msra.mxu0 %v8758
    %8927 = vmatpush.bf16.msra.mxu0 %v8756
    %8928 = vmatpush.bf16.msra.mxu0 %v8754
    %8929 = vmatpush.bf16.msra.mxu0 %v8752
    %8930 = vmatpush.bf16.msra.mxu0 %v8750
    %8931 = vmatpush.bf16.msra.mxu0 %v8748
    %8932 = vmatpush.bf16.msra.mxu0 %v8746
    %8933 = vmatmul.bf16.gmra.mxu0 %v8545
    %v8934 = vpop.f32.mrf.mxu0
    %v8935 = vadd.f32 0.0, %v8934
    %v8936 = vpop.f32.mrf.mxu0
    %8937 = vdwg.mxu0
    %8938 = vmatpush.bf16.msra.mxu0 %v8776
    %8939 = vmatpush.bf16.msra.mxu0 %v8774
    %8940 = vmatpush.bf16.msra.mxu0 %v8772
    %8941 = vmatpush.bf16.msra.mxu0 %v8770
    %8942 = vmatpush.bf16.msra.mxu0 %v8768
    %8943 = vmatpush.bf16.msra.mxu0 %v8766
    %8944 = vmatpush.bf16.msra.mxu0 %v8764
    %8945 = vmatpush.bf16.msra.mxu0 %v8762
    %8946 = vmatmul.bf16.gmra.mxu0 %v8546
    %v8947 = vpop.f32.mrf.mxu0
    %v8948 = vadd.f32 %v8935, %v8947
    %v8949 = vpop.f32.mrf.mxu0
    %8950 = vdwg.mxu0
    %8951 = vmatpush.bf16.msra.mxu0 %v8792
    %8952 = vmatpush.bf16.msra.mxu0 %v8790
    %8953 = vmatpush.bf16.msra.mxu0 %v8788
    %8954 = vmatpush.bf16.msra.mxu0 %v8786
    %8955 = vmatpush.bf16.msra.mxu0 %v8784
    %8956 = vmatpush.bf16.msra.mxu0 %v8782
    %8957 = vmatpush.bf16.msra.mxu0 %v8780
    %8958 = vmatpush.bf16.msra.mxu0 %v8778
    %8959 = vmatmul.bf16.gmra.mxu0 %v8547
    %v8960 = vpop.f32.mrf.mxu0
    %v8961 = vadd.f32 %v8948, %v8960
    %v8962 = vpop.f32.mrf.mxu0
    %8963 = vdwg.mxu0
    %8964 = vmatpush.bf16.msra.mxu0 %v8808
    %8965 = vmatpush.bf16.msra.mxu0 %v8806
    %8966 = vmatpush.bf16.msra.mxu0 %v8804
    %8967 = vmatpush.bf16.msra.mxu0 %v8802
    %8968 = vmatpush.bf16.msra.mxu0 %v8800
    %8969 = vmatpush.bf16.msra.mxu0 %v8798
    %8970 = vmatpush.bf16.msra.mxu0 %v8796
    %8971 = vmatpush.bf16.msra.mxu0 %v8794
    %8972 = vmatmul.bf16.gmra.mxu0 %v8548
    %v8973 = vpop.f32.mrf.mxu0
    %v8974 = vadd.f32 %v8961, %v8973
    %v8975 = vpop.f32.mrf.mxu0
    %8976 = vdwg.mxu0
    %8977 = vst [vmem:[#allocation2] sm:$0xff] %v8241
    %8978 = vst [vmem:[#allocation2 + $0x8] sm:$0xff] %v8297
    %8979 = vst [vmem:[#allocation2 + $0x10] sm:$0xff] %v8353
    %8980 = vst [vmem:[#allocation2 + $0x20] sm:$0xff] %v8243
    %8981 = vst [vmem:[#allocation2 + $0x28] sm:$0xff] %v8299
    %8982 = vst [vmem:[#allocation2 + $0x30] sm:$0xff] %v8355
    %8983 = vst [vmem:[#allocation2] sm:$0xff] %v8922
    %vm8984 = vcmask 523264
    %8985 = vst.msk [vmem:[#allocation2 + $0x8] sm:$0xff] %vm8984, %v8974
    %8986 = vst [vmem:[#allocation2 + $0x20] sm:$0xff] %v8922
    %8987 = vst.msk [vmem:[#allocation2 + $0x28] sm:$0xff] %vm8984, %v8974
    %s8988 = sld [smem:[#allocation4]]
    %s8989 = scalar_lea.vmem [#allocation8], %s8988
    %v8990 = vld [vmem:[%s8989] sm:$0x1]
    %s8991 = sld [smem:[#allocation4 + $0x1]]
    %s8992 = scalar_lea.vmem [#allocation8], %s8991
    %v8993 = vld [vmem:[%s8992] sm:$0x1]
    %s8994 = sld [smem:[#allocation4 + $0x2]]
    %s8995 = scalar_lea.vmem [#allocation8], %s8994
    %v8996 = vld [vmem:[%s8995] sm:$0x1]
    %s8997 = sld [smem:[#allocation4 + $0x3]]
    %s8998 = scalar_lea.vmem [#allocation8], %s8997
    %v8999 = vld [vmem:[%s8998] sm:$0x1]
    %s9000 = sld [smem:[#allocation4 + $0x4]]
    %s9001 = scalar_lea.vmem [#allocation8], %s9000
    %v9002 = vld [vmem:[%s9001] sm:$0x1]
    %s9003 = sld [smem:[#allocation4 + $0x5]]
    %s9004 = scalar_lea.vmem [#allocation8], %s9003
    %v9005 = vld [vmem:[%s9004] sm:$0x1]
    %s9006 = sld [smem:[#allocation4 + $0x6]]
    %s9007 = scalar_lea.vmem [#allocation8], %s9006
    %v9008 = vld [vmem:[%s9007] sm:$0x1]
    %s9009 = sld [smem:[#allocation4 + $0x7]]
    %s9010 = scalar_lea.vmem [#allocation8], %s9009
    %v9011 = vld [vmem:[%s9010] sm:$0x1]
    %v9013 = vrot.slane %v8993, 7
    %v9016 = vrot.slane %v8996, 6
    %v9019 = vrot.slane %v8999, 5
    %v9022 = vrot.slane %v9002, 4
    %v9025 = vrot.slane %v9005, 3
    %v9028 = vrot.slane %v9008, 2
    %v9031 = vrot.slane %v9011, 1
    %vm9033 = vcmask 1040384
    %v9034 = vsel %vm9033, %v8990, %v9013
    %v9035 = vsel %vm681, %v9034, %v9016
    %vm9036 = vcmask 1042432
    %v9037 = vsel %vm9036, %v9035, %v9019
    %vm9038 = vcmask 1043456
    %v9039 = vsel %vm9038, %v9037, %v9022
    %vm9040 = vcmask 1044480
    %v9041 = vsel %vm9040, %v9039, %v9025
    %v9042 = vsel %vm353, %v9041, %v9028
    %vm9043 = vcmask 1046528
    %v9044 = vsel %vm9043, %v9042, %v9031
    %9045 = vst [vmem:[#allocation2 + $0x18] sm:$0xff] %v9044
    %9046 = vst [vmem:[#allocation2 + $0x38] sm:$0xff] %v9044
    %v9047 = vld [vmem:[#allocation2] sm:$0xff]
    %v9048 = vld [vmem:[#allocation2 + $0x8] sm:$0xff]
    %v9049 = vld [vmem:[#allocation2 + $0x10] sm:$0xff]
    %v9050 = vld [vmem:[#allocation2 + $0x18] sm:$0xff]
    %v9051 = vld [vmem:[#allocation2 + $0x20] sm:$0xff]
    %v9052 = vld [vmem:[#allocation2 + $0x28] sm:$0xff]
    %v9053 = vld [vmem:[#allocation2 + $0x30] sm:$0xff]
    %v9054 = vld [vmem:[#allocation2 + $0x38] sm:$0xff]
    %v9055 = vpack.c.bf16 %v9051, %v9047
    %v9056 = vpack.c.bf16 %v9052, %v9048
    %v9057 = vpack.c.bf16 %v9053, %v9049
    %v9058 = vpack.c.bf16 %v9054, %v9050
    %v9059 = vld [vmem:[#allocation23] sm:$0xff]
    %v9060 = vld [vmem:[#allocation23 + $0x8] sm:$0xff]
    %v9061 = vld [vmem:[#allocation23 + $0x10] sm:$0xff]
    %v9062 = vld [vmem:[#allocation23 + $0x18] sm:$0xff]
    %v9063 = vld [vmem:[#allocation23 + $0x20] sm:$0xff]
    %v9064 = vld [vmem:[#allocation23 + $0x28] sm:$0xff]
    %v9065 = vld [vmem:[#allocation23 + $0x30] sm:$0xff]
    %v9066 = vld [vmem:[#allocation23 + $0x38] sm:$0xff]
    %v9067 = vld [vmem:[#allocation23 + $0x40] sm:$0xff]
    %v9068 = vld [vmem:[#allocation23 + $0x48] sm:$0xff]
    %v9069 = vld [vmem:[#allocation23 + $0x50] sm:$0xff]
    %v9070 = vld [vmem:[#allocation23 + $0x58] sm:$0xff]
    %v9071 = vld [vmem:[#allocation23 + $0x60] sm:$0xff]
    %v9072 = vld [vmem:[#allocation23 + $0x68] sm:$0xff]
    %v9073 = vld [vmem:[#allocation23 + $0x70] sm:$0xff]
    %v9074 = vld [vmem:[#allocation23 + $0x78] sm:$0xff]
    %v9075 = vld [vmem:[#allocation23 + $0x80] sm:$0xff]
    %v9076 = vld [vmem:[#allocation23 + $0x88] sm:$0xff]
    %v9077 = vld [vmem:[#allocation23 + $0x90] sm:$0xff]
    %v9078 = vld [vmem:[#allocation23 + $0x98] sm:$0xff]
    %v9079 = vld [vmem:[#allocation23 + $0xa0] sm:$0xff]
    %v9080 = vld [vmem:[#allocation23 + $0xa8] sm:$0xff]
    %v9081 = vld [vmem:[#allocation23 + $0xb0] sm:$0xff]
    %v9082 = vld [vmem:[#allocation23 + $0xb8] sm:$0xff]
    %v9083 = vld [vmem:[#allocation23 + $0xc0] sm:$0xff]
    %v9084 = vld [vmem:[#allocation23 + $0xc8] sm:$0xff]
    %v9085 = vld [vmem:[#allocation23 + $0xd0] sm:$0xff]
    %v9086 = vld [vmem:[#allocation23 + $0xd8] sm:$0xff]
    %v9087 = vld [vmem:[#allocation23 + $0xe0] sm:$0xff]
    %v9088 = vld [vmem:[#allocation23 + $0xe8] sm:$0xff]
    %v9089 = vld [vmem:[#allocation23 + $0xf0] sm:$0xff]
    %v9090 = vld [vmem:[#allocation23 + $0xf8] sm:$0xff]
    %v9091 = vld [vmem:[#allocation23 + $0x100] sm:$0xff]
    %v9092 = vld [vmem:[#allocation23 + $0x108] sm:$0xff]
    %v9093 = vld [vmem:[#allocation23 + $0x110] sm:$0xff]
    %v9094 = vld [vmem:[#allocation23 + $0x118] sm:$0xff]
    %v9095 = vld [vmem:[#allocation23 + $0x120] sm:$0xff]
    %v9096 = vld [vmem:[#allocation23 + $0x128] sm:$0xff]
    %v9097 = vld [vmem:[#allocation23 + $0x130] sm:$0xff]
    %v9098 = vld [vmem:[#allocation23 + $0x138] sm:$0xff]
    %v9099 = vld [vmem:[#allocation23 + $0x140] sm:$0xff]
    %v9100 = vld [vmem:[#allocation23 + $0x148] sm:$0xff]
    %v9101 = vld [vmem:[#allocation23 + $0x150] sm:$0xff]
    %v9102 = vld [vmem:[#allocation23 + $0x158] sm:$0xff]
    %v9103 = vld [vmem:[#allocation23 + $0x160] sm:$0xff]
    %v9104 = vld [vmem:[#allocation23 + $0x168] sm:$0xff]
    %v9105 = vld [vmem:[#allocation23 + $0x170] sm:$0xff]
    %v9106 = vld [vmem:[#allocation23 + $0x178] sm:$0xff]
    %v9107 = vld [vmem:[#allocation23 + $0x180] sm:$0xff]
    %v9108 = vld [vmem:[#allocation23 + $0x188] sm:$0xff]
    %v9109 = vld [vmem:[#allocation23 + $0x190] sm:$0xff]
    %v9110 = vld [vmem:[#allocation23 + $0x198] sm:$0xff]
    %v9111 = vld [vmem:[#allocation23 + $0x1a0] sm:$0xff]
    %v9112 = vld [vmem:[#allocation23 + $0x1a8] sm:$0xff]
    %v9113 = vld [vmem:[#allocation23 + $0x1b0] sm:$0xff]
    %v9114 = vld [vmem:[#allocation23 + $0x1b8] sm:$0xff]
    %v9115 = vld [vmem:[#allocation23 + $0x1c0] sm:$0xff]
    %v9116 = vld [vmem:[#allocation23 + $0x1c8] sm:$0xff]
    %v9117 = vld [vmem:[#allocation23 + $0x1d0] sm:$0xff]
    %v9118 = vld [vmem:[#allocation23 + $0x1d8] sm:$0xff]
    %v9119 = vld [vmem:[#allocation23 + $0x1e0] sm:$0xff]
    %v9120 = vld [vmem:[#allocation23 + $0x1e8] sm:$0xff]
    %v9121 = vld [vmem:[#allocation23 + $0x1f0] sm:$0xff]
    %v9122 = vld [vmem:[#allocation23 + $0x1f8] sm:$0xff]
    %v9123 = vld [vmem:[#allocation25] sm:$0x3]
    %v9125 = vperm.slane %v9123, 0
    %v9126 = vperm.slane %v9123, 1
    %v9193 = vunpack.c.l.b16 %v9059
    %v9194 = vunpack.c.h.b16 %v9059
    %v9195 = vunpack.c.l.b16 %v9060
    %v9196 = vunpack.c.h.b16 %v9060
    %v9197 = vunpack.c.l.b16 %v9061
    %v9198 = vunpack.c.h.b16 %v9061
    %v9199 = vunpack.c.l.b16 %v9062
    %v9200 = vunpack.c.h.b16 %v9062
    %v9201 = vunpack.c.l.b16 %v9063
    %v9202 = vunpack.c.h.b16 %v9063
    %v9203 = vunpack.c.l.b16 %v9064
    %v9204 = vunpack.c.h.b16 %v9064
    %v9205 = vunpack.c.l.b16 %v9065
    %v9206 = vunpack.c.h.b16 %v9065
    %v9207 = vunpack.c.l.b16 %v9066
    %v9208 = vunpack.c.h.b16 %v9066
    %v9209 = vunpack.c.l.b16 %v9067
    %v9210 = vunpack.c.h.b16 %v9067
    %v9211 = vunpack.c.l.b16 %v9068
    %v9212 = vunpack.c.h.b16 %v9068
    %v9213 = vunpack.c.l.b16 %v9069
    %v9214 = vunpack.c.h.b16 %v9069
    %v9215 = vunpack.c.l.b16 %v9070
    %v9216 = vunpack.c.h.b16 %v9070
    %v9217 = vunpack.c.l.b16 %v9071
    %v9218 = vunpack.c.h.b16 %v9071
    %v9219 = vunpack.c.l.b16 %v9072
    %v9220 = vunpack.c.h.b16 %v9072
    %v9221 = vunpack.c.l.b16 %v9073
    %v9222 = vunpack.c.h.b16 %v9073
    %v9223 = vunpack.c.l.b16 %v9074
    %v9224 = vunpack.c.h.b16 %v9074
    %v9225 = vunpack.c.l.b16 %v9075
    %v9226 = vunpack.c.h.b16 %v9075
    %v9227 = vunpack.c.l.b16 %v9076
    %v9228 = vunpack.c.h.b16 %v9076
    %v9229 = vunpack.c.l.b16 %v9077
    %v9230 = vunpack.c.h.b16 %v9077
    %v9231 = vunpack.c.l.b16 %v9078
    %v9232 = vunpack.c.h.b16 %v9078
    %v9233 = vunpack.c.l.b16 %v9079
    %v9234 = vunpack.c.h.b16 %v9079
    %v9235 = vunpack.c.l.b16 %v9080
    %v9236 = vunpack.c.h.b16 %v9080
    %v9237 = vunpack.c.l.b16 %v9081
    %v9238 = vunpack.c.h.b16 %v9081
    %v9239 = vunpack.c.l.b16 %v9082
    %v9240 = vunpack.c.h.b16 %v9082
    %v9241 = vunpack.c.l.b16 %v9083
    %v9242 = vunpack.c.h.b16 %v9083
    %v9243 = vunpack.c.l.b16 %v9084
    %v9244 = vunpack.c.h.b16 %v9084
    %v9245 = vunpack.c.l.b16 %v9085
    %v9246 = vunpack.c.h.b16 %v9085
    %v9247 = vunpack.c.l.b16 %v9086
    %v9248 = vunpack.c.h.b16 %v9086
    %v9249 = vunpack.c.l.b16 %v9087
    %v9250 = vunpack.c.h.b16 %v9087
    %v9251 = vunpack.c.l.b16 %v9088
    %v9252 = vunpack.c.h.b16 %v9088
    %v9253 = vunpack.c.l.b16 %v9089
    %v9254 = vunpack.c.h.b16 %v9089
    %v9255 = vunpack.c.l.b16 %v9090
    %v9256 = vunpack.c.h.b16 %v9090
    %v9257 = vunpack.c.l.b16 %v9091
    %v9258 = vunpack.c.h.b16 %v9091
    %v9259 = vunpack.c.l.b16 %v9092
    %v9260 = vunpack.c.h.b16 %v9092
    %v9261 = vunpack.c.l.b16 %v9093
    %v9262 = vunpack.c.h.b16 %v9093
    %v9263 = vunpack.c.l.b16 %v9094
    %v9264 = vunpack.c.h.b16 %v9094
    %v9265 = vunpack.c.l.b16 %v9095
    %v9266 = vunpack.c.h.b16 %v9095
    %v9267 = vunpack.c.l.b16 %v9096
    %v9268 = vunpack.c.h.b16 %v9096
    %v9269 = vunpack.c.l.b16 %v9097
    %v9270 = vunpack.c.h.b16 %v9097
    %v9271 = vunpack.c.l.b16 %v9098
    %v9272 = vunpack.c.h.b16 %v9098
    %v9273 = vunpack.c.l.b16 %v9099
    %v9274 = vunpack.c.h.b16 %v9099
    %v9275 = vunpack.c.l.b16 %v9100
    %v9276 = vunpack.c.h.b16 %v9100
    %v9277 = vunpack.c.l.b16 %v9101
    %v9278 = vunpack.c.h.b16 %v9101
    %v9279 = vunpack.c.l.b16 %v9102
    %v9280 = vunpack.c.h.b16 %v9102
    %v9281 = vunpack.c.l.b16 %v9103
    %v9282 = vunpack.c.h.b16 %v9103
    %v9283 = vunpack.c.l.b16 %v9104
    %v9284 = vunpack.c.h.b16 %v9104
    %v9285 = vunpack.c.l.b16 %v9105
    %v9286 = vunpack.c.h.b16 %v9105
    %v9287 = vunpack.c.l.b16 %v9106
    %v9288 = vunpack.c.h.b16 %v9106
    %v9289 = vunpack.c.l.b16 %v9107
    %v9290 = vunpack.c.h.b16 %v9107
    %v9291 = vunpack.c.l.b16 %v9108
    %v9292 = vunpack.c.h.b16 %v9108
    %v9293 = vunpack.c.l.b16 %v9109
    %v9294 = vunpack.c.h.b16 %v9109
    %v9295 = vunpack.c.l.b16 %v9110
    %v9296 = vunpack.c.h.b16 %v9110
    %v9297 = vunpack.c.l.b16 %v9111
    %v9298 = vunpack.c.h.b16 %v9111
    %v9299 = vunpack.c.l.b16 %v9112
    %v9300 = vunpack.c.h.b16 %v9112
    %v9301 = vunpack.c.l.b16 %v9113
    %v9302 = vunpack.c.h.b16 %v9113
    %v9303 = vunpack.c.l.b16 %v9114
    %v9304 = vunpack.c.h.b16 %v9114
    %v9305 = vunpack.c.l.b16 %v9115
    %v9306 = vunpack.c.h.b16 %v9115
    %v9307 = vunpack.c.l.b16 %v9116
    %v9308 = vunpack.c.h.b16 %v9116
    %v9309 = vunpack.c.l.b16 %v9117
    %v9310 = vunpack.c.h.b16 %v9117
    %v9311 = vunpack.c.l.b16 %v9118
    %v9312 = vunpack.c.h.b16 %v9118
    %v9313 = vunpack.c.l.b16 %v9119
    %v9314 = vunpack.c.h.b16 %v9119
    %v9315 = vunpack.c.l.b16 %v9120
    %v9316 = vunpack.c.h.b16 %v9120
    %v9317 = vunpack.c.l.b16 %v9121
    %v9318 = vunpack.c.h.b16 %v9121
    %v9319 = vunpack.c.l.b16 %v9122
    %v9320 = vunpack.c.h.b16 %v9122
    %v9321 = vpack.c.b16 %v9195, %v9193
    %v9322 = vpack.c.b16 %v9196, %v9194
    %v9323 = vpack.c.b16 %v9199, %v9197
    %v9324 = vpack.c.b16 %v9200, %v9198
    %v9325 = vpack.c.b16 %v9203, %v9201
    %v9326 = vpack.c.b16 %v9204, %v9202
    %v9327 = vpack.c.b16 %v9207, %v9205
    %v9328 = vpack.c.b16 %v9208, %v9206
    %v9329 = vpack.c.b16 %v9211, %v9209
    %v9330 = vpack.c.b16 %v9212, %v9210
    %v9331 = vpack.c.b16 %v9215, %v9213
    %v9332 = vpack.c.b16 %v9216, %v9214
    %v9333 = vpack.c.b16 %v9219, %v9217
    %v9334 = vpack.c.b16 %v9220, %v9218
    %v9335 = vpack.c.b16 %v9223, %v9221
    %v9336 = vpack.c.b16 %v9224, %v9222
    %v9337 = vpack.c.b16 %v9227, %v9225
    %v9338 = vpack.c.b16 %v9228, %v9226
    %v9339 = vpack.c.b16 %v9231, %v9229
    %v9340 = vpack.c.b16 %v9232, %v9230
    %v9341 = vpack.c.b16 %v9235, %v9233
    %v9342 = vpack.c.b16 %v9236, %v9234
    %v9343 = vpack.c.b16 %v9239, %v9237
    %v9344 = vpack.c.b16 %v9240, %v9238
    %v9345 = vpack.c.b16 %v9243, %v9241
    %v9346 = vpack.c.b16 %v9244, %v9242
    %v9347 = vpack.c.b16 %v9247, %v9245
    %v9348 = vpack.c.b16 %v9248, %v9246
    %v9349 = vpack.c.b16 %v9251, %v9249
    %v9350 = vpack.c.b16 %v9252, %v9250
    %v9351 = vpack.c.b16 %v9255, %v9253
    %v9352 = vpack.c.b16 %v9256, %v9254
    %v9353 = vpack.c.b16 %v9259, %v9257
    %v9354 = vpack.c.b16 %v9260, %v9258
    %v9355 = vpack.c.b16 %v9263, %v9261
    %v9356 = vpack.c.b16 %v9264, %v9262
    %v9357 = vpack.c.b16 %v9267, %v9265
    %v9358 = vpack.c.b16 %v9268, %v9266
    %v9359 = vpack.c.b16 %v9271, %v9269
    %v9360 = vpack.c.b16 %v9272, %v9270
    %v9361 = vpack.c.b16 %v9275, %v9273
    %v9362 = vpack.c.b16 %v9276, %v9274
    %v9363 = vpack.c.b16 %v9279, %v9277
    %v9364 = vpack.c.b16 %v9280, %v9278
    %v9365 = vpack.c.b16 %v9283, %v9281
    %v9366 = vpack.c.b16 %v9284, %v9282
    %v9367 = vpack.c.b16 %v9287, %v9285
    %v9368 = vpack.c.b16 %v9288, %v9286
    %v9369 = vpack.c.b16 %v9291, %v9289
    %v9370 = vpack.c.b16 %v9292, %v9290
    %v9371 = vpack.c.b16 %v9295, %v9293
    %v9372 = vpack.c.b16 %v9296, %v9294
    %v9373 = vpack.c.b16 %v9299, %v9297
    %v9374 = vpack.c.b16 %v9300, %v9298
    %v9375 = vpack.c.b16 %v9303, %v9301
    %v9376 = vpack.c.b16 %v9304, %v9302
    %v9377 = vpack.c.b16 %v9307, %v9305
    %v9378 = vpack.c.b16 %v9308, %v9306
    %v9379 = vpack.c.b16 %v9311, %v9309
    %v9380 = vpack.c.b16 %v9312, %v9310
    %v9381 = vpack.c.b16 %v9315, %v9313
    %v9382 = vpack.c.b16 %v9316, %v9314
    %v9383 = vpack.c.b16 %v9319, %v9317
    %v9384 = vpack.c.b16 %v9320, %v9318
    %9449 = vmatpush.bf16.msra.mxu0 %v9335
    %9450 = vmatpush.bf16.msra.mxu0 %v9333
    %9451 = vmatpush.bf16.msra.mxu0 %v9331
    %9452 = vmatpush.bf16.msra.mxu0 %v9329
    %9453 = vmatpush.bf16.msra.mxu0 %v9327
    %9454 = vmatpush.bf16.msra.mxu0 %v9325
    %9455 = vmatpush.bf16.msra.mxu0 %v9323
    %9456 = vmatpush.bf16.msra.mxu0 %v9321
    %9457 = vmatmul.bf16.gmra.mxu0 %v9055
    %v9458 = vpop.f32.mrf.mxu0
    %v9459 = vadd.f32 %v9125, %v9458
    %v9460 = vpop.f32.mrf.mxu0
    %v9461 = vadd.f32 %v9125, %v9460
    %9462 = vdwg.mxu0
    %9463 = vmatpush.bf16.msra.mxu0 %v9351
    %9464 = vmatpush.bf16.msra.mxu0 %v9349
    %9465 = vmatpush.bf16.msra.mxu0 %v9347
    %9466 = vmatpush.bf16.msra.mxu0 %v9345
    %9467 = vmatpush.bf16.msra.mxu0 %v9343
    %9468 = vmatpush.bf16.msra.mxu0 %v9341
    %9469 = vmatpush.bf16.msra.mxu0 %v9339
    %9470 = vmatpush.bf16.msra.mxu0 %v9337
    %9471 = vmatmul.bf16.gmra.mxu0 %v9056
    %v9472 = vpop.f32.mrf.mxu0
    %v9473 = vadd.f32 %v9459, %v9472
    %v9474 = vpop.f32.mrf.mxu0
    %v9475 = vadd.f32 %v9461, %v9474
    %9476 = vdwg.mxu0
    %9477 = vmatpush.bf16.msra.mxu0 %v9367
    %9478 = vmatpush.bf16.msra.mxu0 %v9365
    %9479 = vmatpush.bf16.msra.mxu0 %v9363
    %9480 = vmatpush.bf16.msra.mxu0 %v9361
    %9481 = vmatpush.bf16.msra.mxu0 %v9359
    %9482 = vmatpush.bf16.msra.mxu0 %v9357
    %9483 = vmatpush.bf16.msra.mxu0 %v9355
    %9484 = vmatpush.bf16.msra.mxu0 %v9353
    %9485 = vmatmul.bf16.gmra.mxu0 %v9057
    %v9486 = vpop.f32.mrf.mxu0
    %v9487 = vadd.f32 %v9473, %v9486
    %v9488 = vpop.f32.mrf.mxu0
    %v9489 = vadd.f32 %v9475, %v9488
    %9490 = vdwg.mxu0
    %9491 = vmatpush.bf16.msra.mxu0 %v9383
    %9492 = vmatpush.bf16.msra.mxu0 %v9381
    %9493 = vmatpush.bf16.msra.mxu0 %v9379
    %9494 = vmatpush.bf16.msra.mxu0 %v9377
    %9495 = vmatpush.bf16.msra.mxu0 %v9375
    %9496 = vmatpush.bf16.msra.mxu0 %v9373
    %9497 = vmatpush.bf16.msra.mxu0 %v9371
    %9498 = vmatpush.bf16.msra.mxu0 %v9369
    %9499 = vmatmul.bf16.gmra.mxu0 %v9058
    %v9500 = vpop.f32.mrf.mxu0
    %v9501 = vadd.f32 %v9487, %v9500
    %v9502 = vpop.f32.mrf.mxu0
    %v9503 = vadd.f32 %v9489, %v9502
    %9504 = vdwg.mxu0
    %9505 = vmatpush.bf16.msra.mxu0 %v9336
    %9506 = vmatpush.bf16.msra.mxu0 %v9334
    %9507 = vmatpush.bf16.msra.mxu0 %v9332
    %9508 = vmatpush.bf16.msra.mxu0 %v9330
    %9509 = vmatpush.bf16.msra.mxu0 %v9328
    %9510 = vmatpush.bf16.msra.mxu0 %v9326
    %9511 = vmatpush.bf16.msra.mxu0 %v9324
    %9512 = vmatpush.bf16.msra.mxu0 %v9322
    %9513 = vmatmul.bf16.gmra.mxu0 %v9055
    %v9514 = vpop.f32.mrf.mxu0
    %v9515 = vadd.f32 %v9126, %v9514
    %v9516 = vpop.f32.mrf.mxu0
    %v9517 = vadd.f32 %v9126, %v9516
    %9518 = vdwg.mxu0
    %9519 = vmatpush.bf16.msra.mxu0 %v9352
    %9520 = vmatpush.bf16.msra.mxu0 %v9350
    %9521 = vmatpush.bf16.msra.mxu0 %v9348
    %9522 = vmatpush.bf16.msra.mxu0 %v9346
    %9523 = vmatpush.bf16.msra.mxu0 %v9344
    %9524 = vmatpush.bf16.msra.mxu0 %v9342
    %9525 = vmatpush.bf16.msra.mxu0 %v9340
    %9526 = vmatpush.bf16.msra.mxu0 %v9338
    %9527 = vmatmul.bf16.gmra.mxu0 %v9056
    %v9528 = vpop.f32.mrf.mxu0
    %v9529 = vadd.f32 %v9515, %v9528
    %v9530 = vpop.f32.mrf.mxu0
    %v9531 = vadd.f32 %v9517, %v9530
    %9532 = vdwg.mxu0
    %9533 = vmatpush.bf16.msra.mxu0 %v9368
    %9534 = vmatpush.bf16.msra.mxu0 %v9366
    %9535 = vmatpush.bf16.msra.mxu0 %v9364
    %9536 = vmatpush.bf16.msra.mxu0 %v9362
    %9537 = vmatpush.bf16.msra.mxu0 %v9360
    %9538 = vmatpush.bf16.msra.mxu0 %v9358
    %9539 = vmatpush.bf16.msra.mxu0 %v9356
    %9540 = vmatpush.bf16.msra.mxu0 %v9354
    %9541 = vmatmul.bf16.gmra.mxu0 %v9057
    %v9542 = vpop.f32.mrf.mxu0
    %v9543 = vadd.f32 %v9529, %v9542
    %v9544 = vpop.f32.mrf.mxu0
    %v9545 = vadd.f32 %v9531, %v9544
    %9546 = vdwg.mxu0
    %9547 = vmatpush.bf16.msra.mxu0 %v9384
    %9548 = vmatpush.bf16.msra.mxu0 %v9382
    %9549 = vmatpush.bf16.msra.mxu0 %v9380
    %9550 = vmatpush.bf16.msra.mxu0 %v9378
    %9551 = vmatpush.bf16.msra.mxu0 %v9376
    %9552 = vmatpush.bf16.msra.mxu0 %v9374
    %9553 = vmatpush.bf16.msra.mxu0 %v9372
    %9554 = vmatpush.bf16.msra.mxu0 %v9370
    %9555 = vmatmul.bf16.gmra.mxu0 %v9058
    %v9556 = vpop.f32.mrf.mxu0
    %v9557 = vadd.f32 %v9543, %v9556
    %v9558 = vpop.f32.mrf.mxu0
    %v9559 = vadd.f32 %v9545, %v9558
    %9560 = vdwg.mxu0
    %v9561 = vmax.f32 %v9501, 0.0
    %v9562 = vmax.f32 %v9557, 0.0
    %v9563 = vmax.f32 %v9503, 0.0
    %v9564 = vmax.f32 %v9559, 0.0
    %v9565 = vpack.c.bf16 %v9563, %v9561
    %v9566 = vpack.c.bf16 %v9564, %v9562
    %v9567 = vld [vmem:[#allocation26] sm:$0xff]
    %v9568 = vld [vmem:[#allocation26 + $0x8] sm:$0xff]
    %v9569 = vld [vmem:[#allocation26 + $0x10] sm:$0xff]
    %v9570 = vld [vmem:[#allocation26 + $0x18] sm:$0xff]
    %v9571 = vld [vmem:[#allocation26 + $0x20] sm:$0xff]
    %v9572 = vld [vmem:[#allocation26 + $0x28] sm:$0xff]
    %v9573 = vld [vmem:[#allocation26 + $0x30] sm:$0xff]
    %v9574 = vld [vmem:[#allocation26 + $0x38] sm:$0xff]
    %v9575 = vld [vmem:[#allocation26 + $0x40] sm:$0xff]
    %v9576 = vld [vmem:[#allocation26 + $0x48] sm:$0xff]
    %v9577 = vld [vmem:[#allocation26 + $0x50] sm:$0xff]
    %v9578 = vld [vmem:[#allocation26 + $0x58] sm:$0xff]
    %v9579 = vld [vmem:[#allocation26 + $0x60] sm:$0xff]
    %v9580 = vld [vmem:[#allocation26 + $0x68] sm:$0xff]
    %v9581 = vld [vmem:[#allocation26 + $0x70] sm:$0xff]
    %v9582 = vld [vmem:[#allocation26 + $0x78] sm:$0xff]
    %v9583 = vld [vmem:[#allocation26 + $0x80] sm:$0xff]
    %v9584 = vld [vmem:[#allocation26 + $0x88] sm:$0xff]
    %v9585 = vld [vmem:[#allocation26 + $0x90] sm:$0xff]
    %v9586 = vld [vmem:[#allocation26 + $0x98] sm:$0xff]
    %v9587 = vld [vmem:[#allocation26 + $0xa0] sm:$0xff]
    %v9588 = vld [vmem:[#allocation26 + $0xa8] sm:$0xff]
    %v9589 = vld [vmem:[#allocation26 + $0xb0] sm:$0xff]
    %v9590 = vld [vmem:[#allocation26 + $0xb8] sm:$0xff]
    %v9591 = vld [vmem:[#allocation26 + $0xc0] sm:$0xff]
    %v9592 = vld [vmem:[#allocation26 + $0xc8] sm:$0xff]
    %v9593 = vld [vmem:[#allocation26 + $0xd0] sm:$0xff]
    %v9594 = vld [vmem:[#allocation26 + $0xd8] sm:$0xff]
    %v9595 = vld [vmem:[#allocation26 + $0xe0] sm:$0xff]
    %v9596 = vld [vmem:[#allocation26 + $0xe8] sm:$0xff]
    %v9597 = vld [vmem:[#allocation26 + $0xf0] sm:$0xff]
    %v9598 = vld [vmem:[#allocation26 + $0xf8] sm:$0xff]
    %v9599 = vld [vmem:[#allocation26 + $0x100] sm:$0xff]
    %v9600 = vld [vmem:[#allocation26 + $0x108] sm:$0xff]
    %v9601 = vld [vmem:[#allocation26 + $0x110] sm:$0xff]
    %v9602 = vld [vmem:[#allocation26 + $0x118] sm:$0xff]
    %v9603 = vld [vmem:[#allocation26 + $0x120] sm:$0xff]
    %v9604 = vld [vmem:[#allocation26 + $0x128] sm:$0xff]
    %v9605 = vld [vmem:[#allocation26 + $0x130] sm:$0xff]
    %v9606 = vld [vmem:[#allocation26 + $0x138] sm:$0xff]
    %v9607 = vld [vmem:[#allocation26 + $0x140] sm:$0xff]
    %v9608 = vld [vmem:[#allocation26 + $0x148] sm:$0xff]
    %v9609 = vld [vmem:[#allocation26 + $0x150] sm:$0xff]
    %v9610 = vld [vmem:[#allocation26 + $0x158] sm:$0xff]
    %v9611 = vld [vmem:[#allocation26 + $0x160] sm:$0xff]
    %v9612 = vld [vmem:[#allocation26 + $0x168] sm:$0xff]
    %v9613 = vld [vmem:[#allocation26 + $0x170] sm:$0xff]
    %v9614 = vld [vmem:[#allocation26 + $0x178] sm:$0xff]
    %v9615 = vld [vmem:[#allocation26 + $0x180] sm:$0xff]
    %v9616 = vld [vmem:[#allocation26 + $0x188] sm:$0xff]
    %v9617 = vld [vmem:[#allocation26 + $0x190] sm:$0xff]
    %v9618 = vld [vmem:[#allocation26 + $0x198] sm:$0xff]
    %v9619 = vld [vmem:[#allocation26 + $0x1a0] sm:$0xff]
    %v9620 = vld [vmem:[#allocation26 + $0x1a8] sm:$0xff]
    %v9621 = vld [vmem:[#allocation26 + $0x1b0] sm:$0xff]
    %v9622 = vld [vmem:[#allocation26 + $0x1b8] sm:$0xff]
    %v9623 = vld [vmem:[#allocation26 + $0x1c0] sm:$0xff]
    %v9624 = vld [vmem:[#allocation26 + $0x1c8] sm:$0xff]
    %v9625 = vld [vmem:[#allocation26 + $0x1d0] sm:$0xff]
    %v9626 = vld [vmem:[#allocation26 + $0x1d8] sm:$0xff]
    %v9627 = vld [vmem:[#allocation26 + $0x1e0] sm:$0xff]
    %v9628 = vld [vmem:[#allocation26 + $0x1e8] sm:$0xff]
    %v9629 = vld [vmem:[#allocation26 + $0x1f0] sm:$0xff]
    %v9630 = vld [vmem:[#allocation26 + $0x1f8] sm:$0xff]
    %v9631 = vld [vmem:[#allocation28] sm:$0xf]
    %v9633 = vperm.slane %v9631, 0
    %v9634 = vperm.slane %v9631, 1
    %v9635 = vperm.slane %v9631, 2
    %v9636 = vperm.slane %v9631, 3
    %v9705 = vunpack.c.l.b16 %v9567
    %v9706 = vunpack.c.h.b16 %v9567
    %v9707 = vunpack.c.l.b16 %v9568
    %v9708 = vunpack.c.h.b16 %v9568
    %v9709 = vunpack.c.l.b16 %v9569
    %v9710 = vunpack.c.h.b16 %v9569
    %v9711 = vunpack.c.l.b16 %v9570
    %v9712 = vunpack.c.h.b16 %v9570
    %v9713 = vunpack.c.l.b16 %v9571
    %v9714 = vunpack.c.h.b16 %v9571
    %v9715 = vunpack.c.l.b16 %v9572
    %v9716 = vunpack.c.h.b16 %v9572
    %v9717 = vunpack.c.l.b16 %v9573
    %v9718 = vunpack.c.h.b16 %v9573
    %v9719 = vunpack.c.l.b16 %v9574
    %v9720 = vunpack.c.h.b16 %v9574
    %v9721 = vunpack.c.l.b16 %v9575
    %v9722 = vunpack.c.h.b16 %v9575
    %v9723 = vunpack.c.l.b16 %v9576
    %v9724 = vunpack.c.h.b16 %v9576
    %v9725 = vunpack.c.l.b16 %v9577
    %v9726 = vunpack.c.h.b16 %v9577
    %v9727 = vunpack.c.l.b16 %v9578
    %v9728 = vunpack.c.h.b16 %v9578
    %v9729 = vunpack.c.l.b16 %v9579
    %v9730 = vunpack.c.h.b16 %v9579
    %v9731 = vunpack.c.l.b16 %v9580
    %v9732 = vunpack.c.h.b16 %v9580
    %v9733 = vunpack.c.l.b16 %v9581
    %v9734 = vunpack.c.h.b16 %v9581
    %v9735 = vunpack.c.l.b16 %v9582
    %v9736 = vunpack.c.h.b16 %v9582
    %v9737 = vunpack.c.l.b16 %v9583
    %v9738 = vunpack.c.h.b16 %v9583
    %v9739 = vunpack.c.l.b16 %v9584
    %v9740 = vunpack.c.h.b16 %v9584
    %v9741 = vunpack.c.l.b16 %v9585
    %v9742 = vunpack.c.h.b16 %v9585
    %v9743 = vunpack.c.l.b16 %v9586
    %v9744 = vunpack.c.h.b16 %v9586
    %v9745 = vunpack.c.l.b16 %v9587
    %v9746 = vunpack.c.h.b16 %v9587
    %v9747 = vunpack.c.l.b16 %v9588
    %v9748 = vunpack.c.h.b16 %v9588
    %v9749 = vunpack.c.l.b16 %v9589
    %v9750 = vunpack.c.h.b16 %v9589
    %v9751 = vunpack.c.l.b16 %v9590
    %v9752 = vunpack.c.h.b16 %v9590
    %v9753 = vunpack.c.l.b16 %v9591
    %v9754 = vunpack.c.h.b16 %v9591
    %v9755 = vunpack.c.l.b16 %v9592
    %v9756 = vunpack.c.h.b16 %v9592
    %v9757 = vunpack.c.l.b16 %v9593
    %v9758 = vunpack.c.h.b16 %v9593
    %v9759 = vunpack.c.l.b16 %v9594
    %v9760 = vunpack.c.h.b16 %v9594
    %v9761 = vunpack.c.l.b16 %v9595
    %v9762 = vunpack.c.h.b16 %v9595
    %v9763 = vunpack.c.l.b16 %v9596
    %v9764 = vunpack.c.h.b16 %v9596
    %v9765 = vunpack.c.l.b16 %v9597
    %v9766 = vunpack.c.h.b16 %v9597
    %v9767 = vunpack.c.l.b16 %v9598
    %v9768 = vunpack.c.h.b16 %v9598
    %v9769 = vunpack.c.l.b16 %v9599
    %v9770 = vunpack.c.h.b16 %v9599
    %v9771 = vunpack.c.l.b16 %v9600
    %v9772 = vunpack.c.h.b16 %v9600
    %v9773 = vunpack.c.l.b16 %v9601
    %v9774 = vunpack.c.h.b16 %v9601
    %v9775 = vunpack.c.l.b16 %v9602
    %v9776 = vunpack.c.h.b16 %v9602
    %v9777 = vunpack.c.l.b16 %v9603
    %v9778 = vunpack.c.h.b16 %v9603
    %v9779 = vunpack.c.l.b16 %v9604
    %v9780 = vunpack.c.h.b16 %v9604
    %v9781 = vunpack.c.l.b16 %v9605
    %v9782 = vunpack.c.h.b16 %v9605
    %v9783 = vunpack.c.l.b16 %v9606
    %v9784 = vunpack.c.h.b16 %v9606
    %v9785 = vunpack.c.l.b16 %v9607
    %v9786 = vunpack.c.h.b16 %v9607
    %v9787 = vunpack.c.l.b16 %v9608
    %v9788 = vunpack.c.h.b16 %v9608
    %v9789 = vunpack.c.l.b16 %v9609
    %v9790 = vunpack.c.h.b16 %v9609
    %v9791 = vunpack.c.l.b16 %v9610
    %v9792 = vunpack.c.h.b16 %v9610
    %v9793 = vunpack.c.l.b16 %v9611
    %v9794 = vunpack.c.h.b16 %v9611
    %v9795 = vunpack.c.l.b16 %v9612
    %v9796 = vunpack.c.h.b16 %v9612
    %v9797 = vunpack.c.l.b16 %v9613
    %v9798 = vunpack.c.h.b16 %v9613
    %v9799 = vunpack.c.l.b16 %v9614
    %v9800 = vunpack.c.h.b16 %v9614
    %v9801 = vunpack.c.l.b16 %v9615
    %v9802 = vunpack.c.h.b16 %v9615
    %v9803 = vunpack.c.l.b16 %v9616
    %v9804 = vunpack.c.h.b16 %v9616
    %v9805 = vunpack.c.l.b16 %v9617
    %v9806 = vunpack.c.h.b16 %v9617
    %v9807 = vunpack.c.l.b16 %v9618
    %v9808 = vunpack.c.h.b16 %v9618
    %v9809 = vunpack.c.l.b16 %v9619
    %v9810 = vunpack.c.h.b16 %v9619
    %v9811 = vunpack.c.l.b16 %v9620
    %v9812 = vunpack.c.h.b16 %v9620
    %v9813 = vunpack.c.l.b16 %v9621
    %v9814 = vunpack.c.h.b16 %v9621
    %v9815 = vunpack.c.l.b16 %v9622
    %v9816 = vunpack.c.h.b16 %v9622
    %v9817 = vunpack.c.l.b16 %v9623
    %v9818 = vunpack.c.h.b16 %v9623
    %v9819 = vunpack.c.l.b16 %v9624
    %v9820 = vunpack.c.h.b16 %v9624
    %v9821 = vunpack.c.l.b16 %v9625
    %v9822 = vunpack.c.h.b16 %v9625
    %v9823 = vunpack.c.l.b16 %v9626
    %v9824 = vunpack.c.h.b16 %v9626
    %v9825 = vunpack.c.l.b16 %v9627
    %v9826 = vunpack.c.h.b16 %v9627
    %v9827 = vunpack.c.l.b16 %v9628
    %v9828 = vunpack.c.h.b16 %v9628
    %v9829 = vunpack.c.l.b16 %v9629
    %v9830 = vunpack.c.h.b16 %v9629
    %v9831 = vunpack.c.l.b16 %v9630
    %v9832 = vunpack.c.h.b16 %v9630
    %v9833 = vpack.c.b16 %v9709, %v9705
    %v9834 = vpack.c.b16 %v9710, %v9706
    %v9835 = vpack.c.b16 %v9711, %v9707
    %v9836 = vpack.c.b16 %v9712, %v9708
    %v9837 = vpack.c.b16 %v9717, %v9713
    %v9838 = vpack.c.b16 %v9718, %v9714
    %v9839 = vpack.c.b16 %v9719, %v9715
    %v9840 = vpack.c.b16 %v9720, %v9716
    %v9841 = vpack.c.b16 %v9725, %v9721
    %v9842 = vpack.c.b16 %v9726, %v9722
    %v9843 = vpack.c.b16 %v9727, %v9723
    %v9844 = vpack.c.b16 %v9728, %v9724
    %v9845 = vpack.c.b16 %v9733, %v9729
    %v9846 = vpack.c.b16 %v9734, %v9730
    %v9847 = vpack.c.b16 %v9735, %v9731
    %v9848 = vpack.c.b16 %v9736, %v9732
    %v9849 = vpack.c.b16 %v9741, %v9737
    %v9850 = vpack.c.b16 %v9742, %v9738
    %v9851 = vpack.c.b16 %v9743, %v9739
    %v9852 = vpack.c.b16 %v9744, %v9740
    %v9853 = vpack.c.b16 %v9749, %v9745
    %v9854 = vpack.c.b16 %v9750, %v9746
    %v9855 = vpack.c.b16 %v9751, %v9747
    %v9856 = vpack.c.b16 %v9752, %v9748
    %v9857 = vpack.c.b16 %v9757, %v9753
    %v9858 = vpack.c.b16 %v9758, %v9754
    %v9859 = vpack.c.b16 %v9759, %v9755
    %v9860 = vpack.c.b16 %v9760, %v9756
    %v9861 = vpack.c.b16 %v9765, %v9761
    %v9862 = vpack.c.b16 %v9766, %v9762
    %v9863 = vpack.c.b16 %v9767, %v9763
    %v9864 = vpack.c.b16 %v9768, %v9764
    %v9865 = vpack.c.b16 %v9773, %v9769
    %v9866 = vpack.c.b16 %v9774, %v9770
    %v9867 = vpack.c.b16 %v9775, %v9771
    %v9868 = vpack.c.b16 %v9776, %v9772
    %v9869 = vpack.c.b16 %v9781, %v9777
    %v9870 = vpack.c.b16 %v9782, %v9778
    %v9871 = vpack.c.b16 %v9783, %v9779
    %v9872 = vpack.c.b16 %v9784, %v9780
    %v9873 = vpack.c.b16 %v9789, %v9785
    %v9874 = vpack.c.b16 %v9790, %v9786
    %v9875 = vpack.c.b16 %v9791, %v9787
    %v9876 = vpack.c.b16 %v9792, %v9788
    %v9877 = vpack.c.b16 %v9797, %v9793
    %v9878 = vpack.c.b16 %v9798, %v9794
    %v9879 = vpack.c.b16 %v9799, %v9795
    %v9880 = vpack.c.b16 %v9800, %v9796
    %v9881 = vpack.c.b16 %v9805, %v9801
    %v9882 = vpack.c.b16 %v9806, %v9802
    %v9883 = vpack.c.b16 %v9807, %v9803
    %v9884 = vpack.c.b16 %v9808, %v9804
    %v9885 = vpack.c.b16 %v9813, %v9809
    %v9886 = vpack.c.b16 %v9814, %v9810
    %v9887 = vpack.c.b16 %v9815, %v9811
    %v9888 = vpack.c.b16 %v9816, %v9812
    %v9889 = vpack.c.b16 %v9821, %v9817
    %v9890 = vpack.c.b16 %v9822, %v9818
    %v9891 = vpack.c.b16 %v9823, %v9819
    %v9892 = vpack.c.b16 %v9824, %v9820
    %v9893 = vpack.c.b16 %v9829, %v9825
    %v9894 = vpack.c.b16 %v9830, %v9826
    %v9895 = vpack.c.b16 %v9831, %v9827
    %v9896 = vpack.c.b16 %v9832, %v9828
    %9961 = vmatpush.bf16.msra.mxu0 %v9861
    %9962 = vmatpush.bf16.msra.mxu0 %v9857
    %9963 = vmatpush.bf16.msra.mxu0 %v9853
    %9964 = vmatpush.bf16.msra.mxu0 %v9849
    %9965 = vmatpush.bf16.msra.mxu0 %v9845
    %9966 = vmatpush.bf16.msra.mxu0 %v9841
    %9967 = vmatpush.bf16.msra.mxu0 %v9837
    %9968 = vmatpush.bf16.msra.mxu0 %v9833
    %9969 = vmatmul.bf16.gmra.mxu0 %v9565
    %v9970 = vpop.f32.mrf.mxu0
    %v9971 = vadd.f32 %v9633, %v9970
    %v9972 = vpop.f32.mrf.mxu0
    %v9973 = vadd.f32 %v9633, %v9972
    %9974 = vdwg.mxu0
    %9975 = vmatpush.bf16.msra.mxu0 %v9893
    %9976 = vmatpush.bf16.msra.mxu0 %v9889
    %9977 = vmatpush.bf16.msra.mxu0 %v9885
    %9978 = vmatpush.bf16.msra.mxu0 %v9881
    %9979 = vmatpush.bf16.msra.mxu0 %v9877
    %9980 = vmatpush.bf16.msra.mxu0 %v9873
    %9981 = vmatpush.bf16.msra.mxu0 %v9869
    %9982 = vmatpush.bf16.msra.mxu0 %v9865
    %9983 = vmatmul.bf16.gmra.mxu0 %v9566
    %v9984 = vpop.f32.mrf.mxu0
    %v9985 = vadd.f32 %v9971, %v9984
    %v9986 = vpop.f32.mrf.mxu0
    %v9987 = vadd.f32 %v9973, %v9986
    %9988 = vdwg.mxu0
    %9989 = vmatpush.bf16.msra.mxu0 %v9862
    %9990 = vmatpush.bf16.msra.mxu0 %v9858
    %9991 = vmatpush.bf16.msra.mxu0 %v9854
    %9992 = vmatpush.bf16.msra.mxu0 %v9850
    %9993 = vmatpush.bf16.msra.mxu0 %v9846
    %9994 = vmatpush.bf16.msra.mxu0 %v9842
    %9995 = vmatpush.bf16.msra.mxu0 %v9838
    %9996 = vmatpush.bf16.msra.mxu0 %v9834
    %9997 = vmatmul.bf16.gmra.mxu0 %v9565
    %v9998 = vpop.f32.mrf.mxu0
    %v9999 = vadd.f32 %v9634, %v9998
    %v10000 = vpop.f32.mrf.mxu0
    %v10001 = vadd.f32 %v9634, %v10000
    %10002 = vdwg.mxu0
    %10003 = vmatpush.bf16.msra.mxu0 %v9894
    %10004 = vmatpush.bf16.msra.mxu0 %v9890
    %10005 = vmatpush.bf16.msra.mxu0 %v9886
    %10006 = vmatpush.bf16.msra.mxu0 %v9882
    %10007 = vmatpush.bf16.msra.mxu0 %v9878
    %10008 = vmatpush.bf16.msra.mxu0 %v9874
    %10009 = vmatpush.bf16.msra.mxu0 %v9870
    %10010 = vmatpush.bf16.msra.mxu0 %v9866
    %10011 = vmatmul.bf16.gmra.mxu0 %v9566
    %v10012 = vpop.f32.mrf.mxu0
    %v10013 = vadd.f32 %v9999, %v10012
    %v10014 = vpop.f32.mrf.mxu0
    %v10015 = vadd.f32 %v10001, %v10014
    %10016 = vdwg.mxu0
    %10017 = vmatpush.bf16.msra.mxu0 %v9863
    %10018 = vmatpush.bf16.msra.mxu0 %v9859
    %10019 = vmatpush.bf16.msra.mxu0 %v9855
    %10020 = vmatpush.bf16.msra.mxu0 %v9851
    %10021 = vmatpush.bf16.msra.mxu0 %v9847
    %10022 = vmatpush.bf16.msra.mxu0 %v9843
    %10023 = vmatpush.bf16.msra.mxu0 %v9839
    %10024 = vmatpush.bf16.msra.mxu0 %v9835
    %10025 = vmatmul.bf16.gmra.mxu0 %v9565
    %v10026 = vpop.f32.mrf.mxu0
    %v10027 = vadd.f32 %v9635, %v10026
    %v10028 = vpop.f32.mrf.mxu0
    %v10029 = vadd.f32 %v9635, %v10028
    %10030 = vdwg.mxu0
    %10031 = vmatpush.bf16.msra.mxu0 %v9895
    %10032 = vmatpush.bf16.msra.mxu0 %v9891
    %10033 = vmatpush.bf16.msra.mxu0 %v9887
    %10034 = vmatpush.bf16.msra.mxu0 %v9883
    %10035 = vmatpush.bf16.msra.mxu0 %v9879
    %10036 = vmatpush.bf16.msra.mxu0 %v9875
    %10037 = vmatpush.bf16.msra.mxu0 %v9871
    %10038 = vmatpush.bf16.msra.mxu0 %v9867
    %10039 = vmatmul.bf16.gmra.mxu0 %v9566
    %v10040 = vpop.f32.mrf.mxu0
    %v10041 = vadd.f32 %v10027, %v10040
    %v10042 = vpop.f32.mrf.mxu0
    %v10043 = vadd.f32 %v10029, %v10042
    %10044 = vdwg.mxu0
    %10045 = vmatpush.bf16.msra.mxu0 %v9864
    %10046 = vmatpush.bf16.msra.mxu0 %v9860
    %10047 = vmatpush.bf16.msra.mxu0 %v9856
    %10048 = vmatpush.bf16.msra.mxu0 %v9852
    %10049 = vmatpush.bf16.msra.mxu0 %v9848
    %10050 = vmatpush.bf16.msra.mxu0 %v9844
    %10051 = vmatpush.bf16.msra.mxu0 %v9840
    %10052 = vmatpush.bf16.msra.mxu0 %v9836
    %10053 = vmatmul.bf16.gmra.mxu0 %v9565
    %v10054 = vpop.f32.mrf.mxu0
    %v10055 = vadd.f32 %v9636, %v10054
    %v10056 = vpop.f32.mrf.mxu0
    %v10057 = vadd.f32 %v9636, %v10056
    %10058 = vdwg.mxu0
    %10059 = vmatpush.bf16.msra.mxu0 %v9896
    %10060 = vmatpush.bf16.msra.mxu0 %v9892
    %10061 = vmatpush.bf16.msra.mxu0 %v9888
    %10062 = vmatpush.bf16.msra.mxu0 %v9884
    %10063 = vmatpush.bf16.msra.mxu0 %v9880
    %10064 = vmatpush.bf16.msra.mxu0 %v9876
    %10065 = vmatpush.bf16.msra.mxu0 %v9872
    %10066 = vmatpush.bf16.msra.mxu0 %v9868
    %10067 = vmatmul.bf16.gmra.mxu0 %v9566
    %v10068 = vpop.f32.mrf.mxu0
    %v10069 = vadd.f32 %v10055, %v10068
    %v10070 = vpop.f32.mrf.mxu0
    %v10071 = vadd.f32 %v10057, %v10070
    %10072 = vdwg.mxu0
    %v10073 = vadd.f32 %v9985, %v9047
    %v10074 = vadd.f32 %v10013, %v9048
    %v10075 = vadd.f32 %v10041, %v9049
    %v10076 = vadd.f32 %v10069, %v9050
    %v10077 = vadd.f32 %v9987, %v9051
    %v10078 = vadd.f32 %v10015, %v9052
    %v10079 = vadd.f32 %v10043, %v9053
    %v10080 = vadd.f32 %v10071, %v9054
    %v10081 = vld [vmem:[#allocation29] sm:$0xf]
    %v10082 = vld [vmem:[#allocation31] sm:$0xf]
    %v10083 = vadd.f32 %v10073, %v10074
    %v10084 = vadd.f32 %v10083, %v10075
    %v10085 = vadd.f32 %v10084, %v10076
    %10086 = vadd.xlane.f32.xlu0 %v10085
    %v10087 = vpop.xlane.xlu0 %10086
    %v10088 = vadd.f32 %v10077, %v10078
    %v10089 = vadd.f32 %v10088, %v10079
    %v10090 = vadd.f32 %v10089, %v10080
    %10091 = vadd.xlane.f32.xlu0 %v10090
    %v10092 = vpop.xlane.xlu0 %10091
    %v10093 = vrcp.pop 512.0
    %v10094 = vmul.f32 512.0, %v10093
    %v10095 = vsub.f32 1.0, %v10094
    %v10096 = vmul.f32 %v10093, %v10095
    %v10097 = vadd.f32 %v10093, %v10096
    %vm10098 = vweird.f32 %v10093
    %v10099 = vsel %vm10098, %v10093, %v10097
    %v10100 = vmul.f32 %v10087, %v10099
    %v10101 = vmul.f32 %v10092, %v10099
    %v10102 = vsub.f32 %v10073, %v10100
    %v10103 = vsub.f32 %v10074, %v10100
    %v10104 = vsub.f32 %v10075, %v10100
    %v10105 = vsub.f32 %v10076, %v10100
    %v10106 = vsub.f32 %v10077, %v10101
    %v10107 = vsub.f32 %v10078, %v10101
    %v10108 = vsub.f32 %v10079, %v10101
    %v10109 = vsub.f32 %v10080, %v10101
    %v10110 = vmul.f32 %v10102, %v10102
    %v10111 = vmul.f32 %v10103, %v10103
    %v10112 = vmul.f32 %v10104, %v10104
    %v10113 = vmul.f32 %v10105, %v10105
    %v10114 = vmul.f32 %v10106, %v10106
    %v10115 = vmul.f32 %v10107, %v10107
    %v10116 = vmul.f32 %v10108, %v10108
    %v10117 = vmul.f32 %v10109, %v10109
    %v10118 = vadd.f32 %v10110, %v10111
    %v10119 = vadd.f32 %v10118, %v10112
    %v10120 = vadd.f32 %v10119, %v10113
    %10121 = vadd.xlane.f32.xlu0 %v10120
    %v10122 = vpop.xlane.xlu0 %10121
    %v10123 = vadd.f32 %v10114, %v10115
    %v10124 = vadd.f32 %v10123, %v10116
    %v10125 = vadd.f32 %v10124, %v10117
    %10126 = vadd.xlane.f32.xlu0 %v10125
    %v10127 = vpop.xlane.xlu0 %10126
    %v10128 = vmul.f32 %v10122, %v10099
    %v10129 = vmul.f32 %v10127, %v10099
    %v10130 = vadd.f32 %v10128, 1e-06
    %v10131 = vadd.f32 %v10129, 1e-06
    %v10132 = vrsqrt.pop %v10130
    %v10133 = vmul.f32 %v10132, %v10130
    %v10134 = vmul.f32 %v10133, %v10132
    %v10135 = vmul.f32 0.5, %v10134
    %v10136 = vsub.f32 1.5, %v10135
    %v10137 = vmul.f32 %v10132, %v10136
    %vm10138 = vweird.f32 %v10130
    %vm10139 = vweird.f32 %v10132
    %vm10140 = vmor %vm10138, %vm10139
    %v10141 = vsel %vm10140, %v10132, %v10137
    %v10142 = vrsqrt.pop %v10131
    %v10143 = vmul.f32 %v10142, %v10131
    %v10144 = vmul.f32 %v10143, %v10142
    %v10145 = vmul.f32 0.5, %v10144
    %v10146 = vsub.f32 1.5, %v10145
    %v10147 = vmul.f32 %v10142, %v10146
    %vm10148 = vweird.f32 %v10131
    %vm10149 = vweird.f32 %v10142
    %vm10150 = vmor %vm10148, %vm10149
    %v10151 = vsel %vm10150, %v10142, %v10147
    %v10152 = vmul.f32 %v10102, %v10141
    %v10153 = vmul.f32 %v10103, %v10141
    %v10154 = vmul.f32 %v10104, %v10141
    %v10155 = vmul.f32 %v10105, %v10141
    %v10156 = vmul.f32 %v10106, %v10151
    %v10157 = vmul.f32 %v10107, %v10151
    %v10158 = vmul.f32 %v10108, %v10151
    %v10159 = vmul.f32 %v10109, %v10151
    %v10161 = vperm.slane %v10081, 0
    %v10162 = vperm.slane %v10081, 1
    %v10163 = vperm.slane %v10081, 2
    %v10164 = vperm.slane %v10081, 3
    %v10169 = vmul.f32 %v10152, %v10161
    %v10170 = vmul.f32 %v10153, %v10162
    %v10171 = vmul.f32 %v10154, %v10163
    %v10172 = vmul.f32 %v10155, %v10164
    %v10173 = vmul.f32 %v10156, %v10161
    %v10174 = vmul.f32 %v10157, %v10162
    %v10175 = vmul.f32 %v10158, %v10163
    %v10176 = vmul.f32 %v10159, %v10164
    %v10178 = vperm.slane %v10082, 0
    %v10179 = vperm.slane %v10082, 1
    %v10180 = vperm.slane %v10082, 2
    %v10181 = vperm.slane %v10082, 3
    %v10186 = vadd.f32 %v10169, %v10178
    %v10187 = vadd.f32 %v10170, %v10179
    %v10188 = vadd.f32 %v10171, %v10180
    %v10189 = vadd.f32 %v10172, %v10181
    %v10190 = vadd.f32 %v10173, %v10178
    %v10191 = vadd.f32 %v10174, %v10179
    %v10192 = vadd.f32 %v10175, %v10180
    %v10193 = vadd.f32 %v10176, %v10181
    %10194 = vst [vmem:[%s22] sm:$0xff] %v10186
    %10195 = vst [vmem:[%s22 + $0x8] sm:$0xff] %v10187
    %10196 = vst [vmem:[%s22 + $0x10] sm:$0xff] %v10188
    %10197 = vst [vmem:[%s22 + $0x18] sm:$0xff] %v10189
    %10198 = vst [vmem:[%s22 + $0x20] sm:$0xff] %v10190
    %10199 = vst [vmem:[%s22 + $0x28] sm:$0xff] %v10191
    %10200 = vst [vmem:[%s22 + $0x30] sm:$0xff] %v10192
    %10201 = vst [vmem:[%s22 + $0x38] sm:$0xff] %v10193
    // Predicated region
    $region150: #{decoder_forward.1} parent=1 // pred_check
      _
    $region151: #{decoder_forward.1} parent=1 // pred_check_branch
      %10203 = sbr.rel (0) target = $region153
    $region152: #{decoder_forward.1} parent=1 // pred_region
      %10205 = vsyncadd [#allocation7], 0
      %s10207 = sshll.u32 [#allocation32], 4
      %s10208 = int_to_ptr.vmem [resolvable:$true] %s10207
      %s10209 = sshll.u32 %s21, 4
      %s10210 = int_to_ptr.hbm [resolvable:$true] %s10209
      %10212 = dma.vmem_to_hbm [thread:$0]  %s10208, 512, %s10210, [#allocation7]
    $region153: #{decoder_forward.1} parent=1 // pred_fallthru
      _
    // Predicated region
    $region154: #{decoder_forward.1} parent=1 // pred_check
      _
    $region155: #{decoder_forward.1} parent=1 // pred_check_branch
      %10214 = sbr.rel (0) target = $region157
    $region156: #{decoder_forward.1} parent=1 // pred_region
      _
    $region157: #{decoder_forward.1} parent=1 // pred_fallthru
      _
    // Predicated region
    $region158: #{decoder_forward.1} parent=1 // pred_check
      _
    $region159: #{decoder_forward.1} parent=1 // pred_check_branch
      %10216 = sbr.rel (0) target = $region161
    $region160: #{decoder_forward.1} parent=1 // pred_region
      %10218 = dma.done [#allocation7], 512
    $region161: #{decoder_forward.1} parent=1 // pred_fallthru
      _
    // Predicated region
    $region162: #{decoder_forward.1} parent=1 // pred_check
      _
    $region163: #{decoder_forward.1} parent=1 // pred_check_branch
      %10220 = sbr.rel (0) target = $region165
    $region164: #{decoder_forward.1} parent=1 // pred_region
      _
    $region165: #{decoder_forward.1} parent=1 // pred_fallthru
      _
    %10221 = vsyncpa [#allocation6], 1
    %10222 = vsyncpa [#allocation9], 1
    %10223 = vsyncpa [#allocation12], 1
    %10224 = vsyncpa [#allocation15], 1
    %10225 = vsyncpa [#allocation18], 1
    %10226 = vsyncpa [#allocation21], 1
    %10227 = vsyncpa [#allocation24], 1
    %10228 = vsyncpa [#allocation27], 1
    %10229 = vsyncpa [#allocation30], 1
    %10230 = vsyncpa [#allocation7], 1

</llo_original>
